<compile_context>
chip_gen: v6e
topology: v6e:2x2x1
jax: 0.10.0
libtpu: 0.0.40
codegen_flags: <defaults>
</compile_context>

<pallas_src>
import jax
import jax.numpy as jnp
from jax import lax
from jax.experimental import pallas as pl
from jax.experimental.pallas import tpu as pltpu

LANE = 128        # Cout is zero-padded to a multiple of this (lane-dense stores)
COUT_TILE = 128   # Cout tile handled per grid step (second, "parallel" grid axis)


def _round_up(a, m):
    return (a + m - 1) // m * m


# ------------------------------- fused kernel --------------------------------

def _make_fused_kernel(wp, r1h, qr, resunet):
    """wp  : padded image width (W + 4) == row stride of the flattened layout
       r1h : number of h1 rows computed / held in VMEM (covers conv2's halo)
       qr  : number of conv2 output rows (H * wp; cols >= W are scrap, cut in glue)
    """
    n_in = 7 if resunet else 6

    def kernel(*refs):
        x_ref, w1_ref, b1_ref, mask_ref, w2_ref, b2_ref = refs[:6]
        wsc_ref = refs[6] if resunet else None
        o_ref = refs[n_in]
        h1_ref = refs[n_in + 1]

        # ---- conv1 (3x3, pad=1): 9 shifted-row MXU dots, BN scale pre-folded ----
        acc1 = None
        for t in range(9):
            dh, dw = divmod(t, 3)
            off = dh * wp + dw
            d = jnp.dot(x_ref[pl.ds(off, r1h), :], w1_ref[t],
                        preferred_element_type=jnp.float32)
            acc1 = d if acc1 is None else acc1 + d
        # BN shift + ReLU; mask zeroes the halo ring so it matches h1's zero padding
        h1 = jnp.maximum(acc1 + b1_ref[...], 0.0) * mask_ref[...]
        h1_ref[...] = h1.astype(h1_ref.dtype)

        # ---- conv2 (3x3, pad=1) on the VMEM-resident h1 ----
        acc2 = None
        for t in range(9):
            dh, dw = divmod(t, 3)
            off = dh * wp + dw
            d = jnp.dot(h1_ref[pl.ds(off, qr), :], w2_ref[t],
                        preferred_element_type=jnp.float32)
            acc2 = d if acc2 is None else acc2 + d
        y = jnp.maximum(acc2 + b2_ref[...], 0.0)

        # ---- optional 1x1-conv residual: reuse the x tile already in VMEM ----
        if resunet:
            y = y + jnp.dot(x_ref[pl.ds(2 * wp + 2, qr), :], wsc_ref[...],
                            preferred_element_type=jnp.float32)

        o_ref[...] = y.astype(o_ref.dtype)

    return kernel


# ----------------------------- DoubleConv forward -----------------------------

def double_conv(x_nchw, params, resunet=False, compute_dtype=jnp.bfloat16,
                eps=1e-5):
    x = jnp.transpose(x_nchw, (0, 2, 3, 1)).astype(jnp.float32)   # NCHW -> NHWC
    n, h, w, cin = x.shape
    w1 = params["w1"]                         # (3,3,Cin,Cmid)  HWIO
    w2 = params["w2"]                         # (3,3,Cmid,Cout) HWIO
    cmid, cout = w1.shape[-1], w2.shape[-1]

    # fold eval-mode BN: y = conv * scale + shift ; the scale goes into the weights
    s1 = params["gamma1"] / jnp.sqrt(params["var1"] + eps)
    b1 = params["beta1"] - params["mean1"] * s1
    s2 = params["gamma2"] / jnp.sqrt(params["var2"] + eps)
    b2 = params["beta2"] - params["mean2"] * s2

    # geometry of the flattened, zero-padded row layout
    wp = w + 4                         # width padded by 2 on each side
    r1 = (h + 2) * wp                  # h1 rows -1..H over the padded width
    r1h = _round_up(r1 + 2, 16)        # h1 rows computed / held in the VMEM scratch
    qr = h * wp                        # conv2 output rows (scrap cols cut in glue)
    rx = r1h + 2 * wp + 2              # x rows reached by the largest conv1 tap

    coutp = _round_up(cout, LANE)      # lane-dense, zero-padded output channels
    tco = min(COUT_TILE, coutp)
    n_co = coutp // tco

    # ---- operand prep (plain-JAX glue) ----
    xpad = jnp.pad(x, ((0, 0), (2, 2), (2, 2), (0, 0)))           # (N,H+4,W+4,Cin)
    x2 = xpad.reshape(n, (h + 4) * wp, cin)
    x2 = jnp.pad(x2, ((0, 0), (0, rx - (h + 4) * wp), (0, 0)))
    x2 = x2.astype(compute_dtype)

    w1f = (w1 * s1).reshape(9, cin, cmid).astype(compute_dtype)
    w2f = jnp.pad(w2 * s2, ((0, 0), (0, 0), (0, 0), (0, coutp - cout)))
    w2f = w2f.reshape(9, cmid, coutp).astype(compute_dtype)
    b1v = b1.reshape(1, cmid).astype(jnp.float32)
    b2v = jnp.pad(b2, (0, coutp - cout)).reshape(1, coutp).astype(jnp.float32)

    # halo-ring mask: zero the h1 positions that correspond to conv2's zero padding
    rr = jnp.arange(r1h)
    ii, jj = rr // wp, rr % wp
    mask = ((ii >= 1) & (ii <= h) & (jj >= 1) & (jj <= w))
    mask = mask.astype(jnp.float32).reshape(r1h, 1)

    in_specs = [
        pl.BlockSpec((None, rx, cin), lambda ni, co: (ni, 0, 0)),
        pl.BlockSpec((9, cin, cmid), lambda ni, co: (0, 0, 0)),
        pl.BlockSpec((1, cmid), lambda ni, co: (0, 0)),
        pl.BlockSpec((r1h, 1), lambda ni, co: (0, 0)),
        pl.BlockSpec((9, cmid, tco), lambda ni, co: (0, 0, co)),
        pl.BlockSpec((1, tco), lambda ni, co: (0, co)),
    ]
    args = [x2, w1f, b1v, mask, w2f, b2v]
    if resunet:
        wsc = params["wsc"].reshape(cin, cout)
        wscp = jnp.pad(wsc, ((0, 0), (0, coutp - cout))).astype(compute_dtype)
        in_specs.append(pl.BlockSpec((cin, tco), lambda ni, co: (0, co)))
        args.append(wscp)

    out = pl.pallas_call(
        _make_fused_kernel(wp, r1h, qr, resunet),
        out_shape=jax.ShapeDtypeStruct((n, qr, coutp), jnp.float32),
        grid=(n, n_co),
        in_specs=in_specs,
        out_specs=pl.BlockSpec((None, qr, tco), lambda ni, co: (ni, 0, co)),
        scratch_shapes=[pltpu.VMEM((r1h, cmid), compute_dtype)],
        compiler_params=pltpu.CompilerParams(
            dimension_semantics=("parallel", "parallel")),
    )(*args)

    y = out.reshape(n, h, wp, coutp)[:, :, :w, :cout]
    return jnp.transpose(y, (0, 3, 1, 2))                         # NHWC -> NCHW


# ------------------------------ pure-JAX reference ----------------------------

def ref_double_conv(x_nchw, params, resunet=False, eps=1e-5):
    x = jnp.transpose(x_nchw, (0, 2, 3, 1)).astype(jnp.float32)

    def conv(a, w):
        return lax.conv_general_dilated(
            a, w, window_strides=(1, 1), padding="SAME",
            dimension_numbers=("NHWC", "HWIO", "NHWC"),
            precision=lax.Precision.HIGHEST)

    s1 = params["gamma1"] / jnp.sqrt(params["var1"] + eps)
    b1 = params["beta1"] - params["mean1"] * s1
    s2 = params["gamma2"] / jnp.sqrt(params["var2"] + eps)
    b2 = params["beta2"] - params["mean2"] * s2
    h1 = jnp.maximum(conv(x, params["w1"]) * s1 + b1, 0.0)
    y = jnp.maximum(conv(h1, params["w2"]) * s2 + b2, 0.0)
    if resunet:
        y = y + conv(x, params["wsc"])
    return jnp.transpose(y, (0, 3, 1, 2))


# ------------------------------------ main ------------------------------------

if __name__ == "__main__":
    key = jax.random.PRNGKey(0)
    n, cin, hh, ww = 2, 4, 16, 16
    cout = 8
    cmid = cout    # mid_channels defaults to out_channels

    keys = jax.random.split(key, 12)
    params = {
        "w1":     0.1 * jax.random.normal(keys[0], (3, 3, cin, cmid), jnp.float32),
        "gamma1": 1.0 + 0.1 * jax.random.normal(keys[1], (cmid,), jnp.float32),
        "beta1":  0.1 * jax.random.normal(keys[2], (cmid,), jnp.float32),
        "mean1":  0.1 * jax.random.normal(keys[3], (cmid,), jnp.float32),
        "var1":   0.5 + jax.random.uniform(keys[4], (cmid,), jnp.float32),
        "w2":     0.1 * jax.random.normal(keys[5], (3, 3, cmid, cout), jnp.float32),
        "gamma2": 1.0 + 0.1 * jax.random.normal(keys[6], (cout,), jnp.float32),
        "beta2":  0.1 * jax.random.normal(keys[7], (cout,), jnp.float32),
        "mean2":  0.1 * jax.random.normal(keys[8], (cout,), jnp.float32),
        "var2":   0.5 + jax.random.uniform(keys[9], (cout,), jnp.float32),
        "wsc":    0.1 * jax.random.normal(keys[10], (1, 1, cin, cout), jnp.float32),
    }
    x = jax.random.normal(keys[11], (n, cin, hh, ww), jnp.float32)

    fused = jax.jit(double_conv, static_argnames=("resunet", "compute_dtype"))

    ok = True
    for resunet in (False, True):
        y_ref = ref_double_conv(x, params, resunet=resunet)

        # exact path (f32 MXU operands): tight structural correctness check
        y32 = jax.block_until_ready(
            fused(x, params, resunet=resunet, compute_dtype=jnp.float32))
        ok = ok and y32.shape == (n, cout, hh, ww)
        ok = ok and bool(jnp.allclose(y32, y_ref, atol=1e-4, rtol=1e-4))

        # fast path (bf16 MXU operands, f32 accumulation/epilogue): loose check
        ybf = jax.block_until_ready(
            fused(x, params, resunet=resunet, compute_dtype=jnp.bfloat16))
        ok = ok and ybf.shape == (n, cout, hh, ww)
        ok = ok and bool(jnp.allclose(ybf, y_ref, atol=1e-1, rtol=1e-1))

    print("KERNEL_OK" if ok else "MISMATCH")
</pallas_src>

<mosaic_0001>
module attributes {stable_mosaic.version = 11 : i64} {
  func.func @kernel(%arg0: i32, %arg1: i32, %arg2: memref<1x410x4xf32, #tpu.memory_space<vmem>>, %arg3: memref<9x4x8xf32, #tpu.memory_space<vmem>>, %arg4: memref<1x8xf32, #tpu.memory_space<vmem>>, %arg5: memref<368x1xf32, #tpu.memory_space<vmem>>, %arg6: memref<9x8x128xf32, #tpu.memory_space<vmem>>, %arg7: memref<1x128xf32, #tpu.memory_space<vmem>>, %arg8: memref<1x320x128xf32, #tpu.memory_space<vmem>>, %arg9: memref<368x8xf32, #tpu.memory_space<vmem>>) attributes {dimension_semantics = [#tpu.dimension_semantics<parallel>, #tpu.dimension_semantics<parallel>], iteration_bounds = array<i64: 2, 1>, scalar_prefetch = 0 : i64, scratch_operands = 1 : i64, tpu.core_type = #tpu.core_type<tc>, window_params = [{transform_indices = @transform_0, window_bounds = array<i64: 1, 410, 4>}, {pipeline_mode = #tpu.pipeline_mode<synchronous>, transform_indices = @transform_1, window_bounds = array<i64: 9, 4, 8>}, {pipeline_mode = #tpu.pipeline_mode<synchronous>, transform_indices = @transform_2, window_bounds = array<i64: 1, 8>}, {pipeline_mode = #tpu.pipeline_mode<synchronous>, transform_indices = @transform_3, window_bounds = array<i64: 368, 1>}, {transform_indices = @transform_4, window_bounds = array<i64: 9, 8, 128>}, {transform_indices = @transform_5, window_bounds = array<i64: 1, 128>}, {transform_indices = @transform_6, window_bounds = array<i64: 1, 320, 128>}]} {
    %c0 = arith.constant 0 : index
    %c0_0 = arith.constant 0 : index
    %c0_1 = arith.constant 0 : index
    %0 = vector.load %arg2[%c0, %c0_0, %c0_1] : memref<1x410x4xf32, #tpu.memory_space<vmem>>, vector<1x368x4xf32>
    %1 = vector.shape_cast %0 : vector<1x368x4xf32> to vector<368x4xf32>
    %c0_2 = arith.constant 0 : index
    %c0_3 = arith.constant 0 : index
    %c0_4 = arith.constant 0 : index
    %2 = vector.load %arg3[%c0_2, %c0_3, %c0_4] : memref<9x4x8xf32, #tpu.memory_space<vmem>>, vector<1x4x8xf32>
    %3 = vector.shape_cast %2 : vector<1x4x8xf32> to vector<4x8xf32>
    %cst = arith.constant dense<0.000000e+00> : vector<368x8xf32>
    %4 = tpu.matmul %1, %3, %cst {dimension_numbers = #tpu.dot_dimension_numbers<[1], [0], [0], [1], [0, 0, 1, 1], [], []>} : vector<368x4xf32>, vector<4x8xf32>, vector<368x8xf32> -> vector<368x8xf32>
    %c0_5 = arith.constant 0 : index
    %c1 = arith.constant 1 : index
    %c0_6 = arith.constant 0 : index
    %5 = vector.load %arg2[%c0_5, %c1, %c0_6] : memref<1x410x4xf32, #tpu.memory_space<vmem>>, vector<1x368x4xf32>
    %6 = vector.shape_cast %5 : vector<1x368x4xf32> to vector<368x4xf32>
    %c1_7 = arith.constant 1 : index
    %c0_8 = arith.constant 0 : index
    %c0_9 = arith.constant 0 : index
    %7 = vector.load %arg3[%c1_7, %c0_8, %c0_9] : memref<9x4x8xf32, #tpu.memory_space<vmem>>, vector<1x4x8xf32>
    %8 = vector.shape_cast %7 : vector<1x4x8xf32> to vector<4x8xf32>
    %cst_10 = arith.constant dense<0.000000e+00> : vector<368x8xf32>
    %9 = tpu.matmul %6, %8, %cst_10 {dimension_numbers = #tpu.dot_dimension_numbers<[1], [0], [0], [1], [0, 0, 1, 1], [], []>} : vector<368x4xf32>, vector<4x8xf32>, vector<368x8xf32> -> vector<368x8xf32>
    %10 = arith.addf %4, %9 : vector<368x8xf32>
    %c0_11 = arith.constant 0 : index
    %c2 = arith.constant 2 : index
    %c0_12 = arith.constant 0 : index
    %11 = vector.load %arg2[%c0_11, %c2, %c0_12] : memref<1x410x4xf32, #tpu.memory_space<vmem>>, vector<1x368x4xf32>
    %12 = vector.shape_cast %11 : vector<1x368x4xf32> to vector<368x4xf32>
    %c2_13 = arith.constant 2 : index
    %c0_14 = arith.constant 0 : index
    %c0_15 = arith.constant 0 : index
    %13 = vector.load %arg3[%c2_13, %c0_14, %c0_15] : memref<9x4x8xf32, #tpu.memory_space<vmem>>, vector<1x4x8xf32>
    %14 = vector.shape_cast %13 : vector<1x4x8xf32> to vector<4x8xf32>
    %cst_16 = arith.constant dense<0.000000e+00> : vector<368x8xf32>
    %15 = tpu.matmul %12, %14, %cst_16 {dimension_numbers = #tpu.dot_dimension_numbers<[1], [0], [0], [1], [0, 0, 1, 1], [], []>} : vector<368x4xf32>, vector<4x8xf32>, vector<368x8xf32> -> vector<368x8xf32>
    %16 = arith.addf %10, %15 : vector<368x8xf32>
    %c0_17 = arith.constant 0 : index
    %c20 = arith.constant 20 : index
    %c0_18 = arith.constant 0 : index
    %17 = vector.load %arg2[%c0_17, %c20, %c0_18] : memref<1x410x4xf32, #tpu.memory_space<vmem>>, vector<1x368x4xf32>
    %18 = vector.shape_cast %17 : vector<1x368x4xf32> to vector<368x4xf32>
    %c3 = arith.constant 3 : index
    %c0_19 = arith.constant 0 : index
    %c0_20 = arith.constant 0 : index
    %19 = vector.load %arg3[%c3, %c0_19, %c0_20] : memref<9x4x8xf32, #tpu.memory_space<vmem>>, vector<1x4x8xf32>
    %20 = vector.shape_cast %19 : vector<1x4x8xf32> to vector<4x8xf32>
    %cst_21 = arith.constant dense<0.000000e+00> : vector<368x8xf32>
    %21 = tpu.matmul %18, %20, %cst_21 {dimension_numbers = #tpu.dot_dimension_numbers<[1], [0], [0], [1], [0, 0, 1, 1], [], []>} : vector<368x4xf32>, vector<4x8xf32>, vector<368x8xf32> -> vector<368x8xf32>
    %22 = arith.addf %16, %21 : vector<368x8xf32>
    %c0_22 = arith.constant 0 : index
    %c21 = arith.constant 21 : index
    %c0_23 = arith.constant 0 : index
    %23 = vector.load %arg2[%c0_22, %c21, %c0_23] : memref<1x410x4xf32, #tpu.memory_space<vmem>>, vector<1x368x4xf32>
    %24 = vector.shape_cast %23 : vector<1x368x4xf32> to vector<368x4xf32>
    %c4 = arith.constant 4 : index
    %c0_24 = arith.constant 0 : index
    %c0_25 = arith.constant 0 : index
    %25 = vector.load %arg3[%c4, %c0_24, %c0_25] : memref<9x4x8xf32, #tpu.memory_space<vmem>>, vector<1x4x8xf32>
    %26 = vector.shape_cast %25 : vector<1x4x8xf32> to vector<4x8xf32>
    %cst_26 = arith.constant dense<0.000000e+00> : vector<368x8xf32>
    %27 = tpu.matmul %24, %26, %cst_26 {dimension_numbers = #tpu.dot_dimension_numbers<[1], [0], [0], [1], [0, 0, 1, 1], [], []>} : vector<368x4xf32>, vector<4x8xf32>, vector<368x8xf32> -> vector<368x8xf32>
    %28 = arith.addf %22, %27 : vector<368x8xf32>
    %c0_27 = arith.constant 0 : index
    %c22 = arith.constant 22 : index
    %c0_28 = arith.constant 0 : index
    %29 = vector.load %arg2[%c0_27, %c22, %c0_28] : memref<1x410x4xf32, #tpu.memory_space<vmem>>, vector<1x368x4xf32>
    %30 = vector.shape_cast %29 : vector<1x368x4xf32> to vector<368x4xf32>
    %c5 = arith.constant 5 : index
    %c0_29 = arith.constant 0 : index
    %c0_30 = arith.constant 0 : index
    %31 = vector.load %arg3[%c5, %c0_29, %c0_30] : memref<9x4x8xf32, #tpu.memory_space<vmem>>, vector<1x4x8xf32>
    %32 = vector.shape_cast %31 : vector<1x4x8xf32> to vector<4x8xf32>
    %cst_31 = arith.constant dense<0.000000e+00> : vector<368x8xf32>
    %33 = tpu.matmul %30, %32, %cst_31 {dimension_numbers = #tpu.dot_dimension_numbers<[1], [0], [0], [1], [0, 0, 1, 1], [], []>} : vector<368x4xf32>, vector<4x8xf32>, vector<368x8xf32> -> vector<368x8xf32>
    %34 = arith.addf %28, %33 : vector<368x8xf32>
    %c0_32 = arith.constant 0 : index
    %c40 = arith.constant 40 : index
    %c0_33 = arith.constant 0 : index
    %35 = vector.load %arg2[%c0_32, %c40, %c0_33] : memref<1x410x4xf32, #tpu.memory_space<vmem>>, vector<1x368x4xf32>
    %36 = vector.shape_cast %35 : vector<1x368x4xf32> to vector<368x4xf32>
    %c6 = arith.constant 6 : index
    %c0_34 = arith.constant 0 : index
    %c0_35 = arith.constant 0 : index
    %37 = vector.load %arg3[%c6, %c0_34, %c0_35] : memref<9x4x8xf32, #tpu.memory_space<vmem>>, vector<1x4x8xf32>
    %38 = vector.shape_cast %37 : vector<1x4x8xf32> to vector<4x8xf32>
    %cst_36 = arith.constant dense<0.000000e+00> : vector<368x8xf32>
    %39 = tpu.matmul %36, %38, %cst_36 {dimension_numbers = #tpu.dot_dimension_numbers<[1], [0], [0], [1], [0, 0, 1, 1], [], []>} : vector<368x4xf32>, vector<4x8xf32>, vector<368x8xf32> -> vector<368x8xf32>
    %40 = arith.addf %34, %39 : vector<368x8xf32>
    %c0_37 = arith.constant 0 : index
    %c41 = arith.constant 41 : index
    %c0_38 = arith.constant 0 : index
    %41 = vector.load %arg2[%c0_37, %c41, %c0_38] : memref<1x410x4xf32, #tpu.memory_space<vmem>>, vector<1x368x4xf32>
    %42 = vector.shape_cast %41 : vector<1x368x4xf32> to vector<368x4xf32>
    %c7 = arith.constant 7 : index
    %c0_39 = arith.constant 0 : index
    %c0_40 = arith.constant 0 : index
    %43 = vector.load %arg3[%c7, %c0_39, %c0_40] : memref<9x4x8xf32, #tpu.memory_space<vmem>>, vector<1x4x8xf32>
    %44 = vector.shape_cast %43 : vector<1x4x8xf32> to vector<4x8xf32>
    %cst_41 = arith.constant dense<0.000000e+00> : vector<368x8xf32>
    %45 = tpu.matmul %42, %44, %cst_41 {dimension_numbers = #tpu.dot_dimension_numbers<[1], [0], [0], [1], [0, 0, 1, 1], [], []>} : vector<368x4xf32>, vector<4x8xf32>, vector<368x8xf32> -> vector<368x8xf32>
    %46 = arith.addf %40, %45 : vector<368x8xf32>
    %c0_42 = arith.constant 0 : index
    %c42 = arith.constant 42 : index
    %c0_43 = arith.constant 0 : index
    %47 = vector.load %arg2[%c0_42, %c42, %c0_43] : memref<1x410x4xf32, #tpu.memory_space<vmem>>, vector<1x368x4xf32>
    %48 = vector.shape_cast %47 : vector<1x368x4xf32> to vector<368x4xf32>
    %c8 = arith.constant 8 : index
    %c0_44 = arith.constant 0 : index
    %c0_45 = arith.constant 0 : index
    %49 = vector.load %arg3[%c8, %c0_44, %c0_45] : memref<9x4x8xf32, #tpu.memory_space<vmem>>, vector<1x4x8xf32>
    %50 = vector.shape_cast %49 : vector<1x4x8xf32> to vector<4x8xf32>
    %cst_46 = arith.constant dense<0.000000e+00> : vector<368x8xf32>
    %51 = tpu.matmul %48, %50, %cst_46 {dimension_numbers = #tpu.dot_dimension_numbers<[1], [0], [0], [1], [0, 0, 1, 1], [], []>} : vector<368x4xf32>, vector<4x8xf32>, vector<368x8xf32> -> vector<368x8xf32>
    %52 = arith.addf %46, %51 : vector<368x8xf32>
    %c0_47 = arith.constant 0 : index
    %c0_48 = arith.constant 0 : index
    %53 = vector.load %arg4[%c0_47, %c0_48] : memref<1x8xf32, #tpu.memory_space<vmem>>, vector<1x8xf32>
    %54 = vector.broadcast %53 : vector<1x8xf32> to vector<368x8xf32>
    %55 = arith.addf %52, %54 : vector<368x8xf32>
    %cst_49 = arith.constant 0.000000e+00 : f32
    %56 = vector.broadcast %cst_49 : f32 to vector<368x8xf32>
    %57 = arith.maximumf %55, %56 : vector<368x8xf32>
    %c0_50 = arith.constant 0 : index
    %c0_51 = arith.constant 0 : index
    %58 = vector.load %arg5[%c0_50, %c0_51] : memref<368x1xf32, #tpu.memory_space<vmem>>, vector<368x1xf32>
    %59 = vector.broadcast %58 : vector<368x1xf32> to vector<368x8xf32>
    %60 = arith.mulf %57, %59 : vector<368x8xf32>
    %c0_52 = arith.constant 0 : index
    %c0_53 = arith.constant 0 : index
    %61 = vector.load %arg9[%c0_52, %c0_53] : memref<368x8xf32, #tpu.memory_space<vmem>>, vector<368x8xf32>
    tpu.vector_store %arg9[%c0_52, %c0_53], %60 {strides = array<i32>} : memref<368x8xf32, #tpu.memory_space<vmem>>, vector<368x8xf32>,
    %c0_54 = arith.constant 0 : index
    %c0_55 = arith.constant 0 : index
    %62 = vector.load %arg9[%c0_54, %c0_55] : memref<368x8xf32, #tpu.memory_space<vmem>>, vector<320x8xf32>
    %c0_56 = arith.constant 0 : index
    %c0_57 = arith.constant 0 : index
    %c0_58 = arith.constant 0 : index
    %63 = vector.load %arg6[%c0_56, %c0_57, %c0_58] : memref<9x8x128xf32, #tpu.memory_space<vmem>>, vector<1x8x128xf32>
    %64 = vector.shape_cast %63 : vector<1x8x128xf32> to vector<8x128xf32>
    %cst_59 = arith.constant dense<0.000000e+00> : vector<320x128xf32>
    %65 = tpu.matmul %62, %64, %cst_59 {dimension_numbers = #tpu.dot_dimension_numbers<[1], [0], [0], [1], [0, 0, 1, 1], [], []>} : vector<320x8xf32>, vector<8x128xf32>, vector<320x128xf32> -> vector<320x128xf32>
    %c1_60 = arith.constant 1 : index
    %c0_61 = arith.constant 0 : index
    %66 = vector.load %arg9[%c1_60, %c0_61] : memref<368x8xf32, #tpu.memory_space<vmem>>, vector<320x8xf32>
    %c1_62 = arith.constant 1 : index
    %c0_63 = arith.constant 0 : index
    %c0_64 = arith.constant 0 : index
    %67 = vector.load %arg6[%c1_62, %c0_63, %c0_64] : memref<9x8x128xf32, #tpu.memory_space<vmem>>, vector<1x8x128xf32>
    %68 = vector.shape_cast %67 : vector<1x8x128xf32> to vector<8x128xf32>
    %cst_65 = arith.constant dense<0.000000e+00> : vector<320x128xf32>
    %69 = tpu.matmul %66, %68, %cst_65 {dimension_numbers = #tpu.dot_dimension_numbers<[1], [0], [0], [1], [0, 0, 1, 1], [], []>} : vector<320x8xf32>, vector<8x128xf32>, vector<320x128xf32> -> vector<320x128xf32>
    %70 = arith.addf %65, %69 : vector<320x128xf32>
    %c2_66 = arith.constant 2 : index
    %c0_67 = arith.constant 0 : index
    %71 = vector.load %arg9[%c2_66, %c0_67] : memref<368x8xf32, #tpu.memory_space<vmem>>, vector<320x8xf32>
    %c2_68 = arith.constant 2 : index
    %c0_69 = arith.constant 0 : index
    %c0_70 = arith.constant 0 : index
    %72 = vector.load %arg6[%c2_68, %c0_69, %c0_70] : memref<9x8x128xf32, #tpu.memory_space<vmem>>, vector<1x8x128xf32>
    %73 = vector.shape_cast %72 : vector<1x8x128xf32> to vector<8x128xf32>
    %cst_71 = arith.constant dense<0.000000e+00> : vector<320x128xf32>
    %74 = tpu.matmul %71, %73, %cst_71 {dimension_numbers = #tpu.dot_dimension_numbers<[1], [0], [0], [1], [0, 0, 1, 1], [], []>} : vector<320x8xf32>, vector<8x128xf32>, vector<320x128xf32> -> vector<320x128xf32>
    %75 = arith.addf %70, %74 : vector<320x128xf32>
    %c20_72 = arith.constant 20 : index
    %c0_73 = arith.constant 0 : index
    %76 = vector.load %arg9[%c20_72, %c0_73] : memref<368x8xf32, #tpu.memory_space<vmem>>, vector<320x8xf32>
    %c3_74 = arith.constant 3 : index
    %c0_75 = arith.constant 0 : index
    %c0_76 = arith.constant 0 : index
    %77 = vector.load %arg6[%c3_74, %c0_75, %c0_76] : memref<9x8x128xf32, #tpu.memory_space<vmem>>, vector<1x8x128xf32>
    %78 = vector.shape_cast %77 : vector<1x8x128xf32> to vector<8x128xf32>
    %cst_77 = arith.constant dense<0.000000e+00> : vector<320x128xf32>
    %79 = tpu.matmul %76, %78, %cst_77 {dimension_numbers = #tpu.dot_dimension_numbers<[1], [0], [0], [1], [0, 0, 1, 1], [], []>} : vector<320x8xf32>, vector<8x128xf32>, vector<320x128xf32> -> vector<320x128xf32>
    %80 = arith.addf %75, %79 : vector<320x128xf32>
    %c21_78 = arith.constant 21 : index
    %c0_79 = arith.constant 0 : index
    %81 = vector.load %arg9[%c21_78, %c0_79] : memref<368x8xf32, #tpu.memory_space<vmem>>, vector<320x8xf32>
    %c4_80 = arith.constant 4 : index
    %c0_81 = arith.constant 0 : index
    %c0_82 = arith.constant 0 : index
    %82 = vector.load %arg6[%c4_80, %c0_81, %c0_82] : memref<9x8x128xf32, #tpu.memory_space<vmem>>, vector<1x8x128xf32>
    %83 = vector.shape_cast %82 : vector<1x8x128xf32> to vector<8x128xf32>
    %cst_83 = arith.constant dense<0.000000e+00> : vector<320x128xf32>
    %84 = tpu.matmul %81, %83, %cst_83 {dimension_numbers = #tpu.dot_dimension_numbers<[1], [0], [0], [1], [0, 0, 1, 1], [], []>} : vector<320x8xf32>, vector<8x128xf32>, vector<320x128xf32> -> vector<320x128xf32>
    %85 = arith.addf %80, %84 : vector<320x128xf32>
    %c22_84 = arith.constant 22 : index
    %c0_85 = arith.constant 0 : index
    %86 = vector.load %arg9[%c22_84, %c0_85] : memref<368x8xf32, #tpu.memory_space<vmem>>, vector<320x8xf32>
    %c5_86 = arith.constant 5 : index
    %c0_87 = arith.constant 0 : index
    %c0_88 = arith.constant 0 : index
    %87 = vector.load %arg6[%c5_86, %c0_87, %c0_88] : memref<9x8x128xf32, #tpu.memory_space<vmem>>, vector<1x8x128xf32>
    %88 = vector.shape_cast %87 : vector<1x8x128xf32> to vector<8x128xf32>
    %cst_89 = arith.constant dense<0.000000e+00> : vector<320x128xf32>
    %89 = tpu.matmul %86, %88, %cst_89 {dimension_numbers = #tpu.dot_dimension_numbers<[1], [0], [0], [1], [0, 0, 1, 1], [], []>} : vector<320x8xf32>, vector<8x128xf32>, vector<320x128xf32> -> vector<320x128xf32>
    %90 = arith.addf %85, %89 : vector<320x128xf32>
    %c40_90 = arith.constant 40 : index
    %c0_91 = arith.constant 0 : index
    %91 = vector.load %arg9[%c40_90, %c0_91] : memref<368x8xf32, #tpu.memory_space<vmem>>, vector<320x8xf32>
    %c6_92 = arith.constant 6 : index
    %c0_93 = arith.constant 0 : index
    %c0_94 = arith.constant 0 : index
    %92 = vector.load %arg6[%c6_92, %c0_93, %c0_94] : memref<9x8x128xf32, #tpu.memory_space<vmem>>, vector<1x8x128xf32>
    %93 = vector.shape_cast %92 : vector<1x8x128xf32> to vector<8x128xf32>
    %cst_95 = arith.constant dense<0.000000e+00> : vector<320x128xf32>
    %94 = tpu.matmul %91, %93, %cst_95 {dimension_numbers = #tpu.dot_dimension_numbers<[1], [0], [0], [1], [0, 0, 1, 1], [], []>} : vector<320x8xf32>, vector<8x128xf32>, vector<320x128xf32> -> vector<320x128xf32>
    %95 = arith.addf %90, %94 : vector<320x128xf32>
    %c41_96 = arith.constant 41 : index
    %c0_97 = arith.constant 0 : index
    %96 = vector.load %arg9[%c41_96, %c0_97] : memref<368x8xf32, #tpu.memory_space<vmem>>, vector<320x8xf32>
    %c7_98 = arith.constant 7 : index
    %c0_99 = arith.constant 0 : index
    %c0_100 = arith.constant 0 : index
    %97 = vector.load %arg6[%c7_98, %c0_99, %c0_100] : memref<9x8x128xf32, #tpu.memory_space<vmem>>, vector<1x8x128xf32>
    %98 = vector.shape_cast %97 : vector<1x8x128xf32> to vector<8x128xf32>
    %cst_101 = arith.constant dense<0.000000e+00> : vector<320x128xf32>
    %99 = tpu.matmul %96, %98, %cst_101 {dimension_numbers = #tpu.dot_dimension_numbers<[1], [0], [0], [1], [0, 0, 1, 1], [], []>} : vector<320x8xf32>, vector<8x128xf32>, vector<320x128xf32> -> vector<320x128xf32>
    %100 = arith.addf %95, %99 : vector<320x128xf32>
    %c42_102 = arith.constant 42 : index
    %c0_103 = arith.constant 0 : index
    %101 = vector.load %arg9[%c42_102, %c0_103] : memref<368x8xf32, #tpu.memory_space<vmem>>, vector<320x8xf32>
    %c8_104 = arith.constant 8 : index
    %c0_105 = arith.constant 0 : index
    %c0_106 = arith.constant 0 : index
    %102 = vector.load %arg6[%c8_104, %c0_105, %c0_106] : memref<9x8x128xf32, #tpu.memory_space<vmem>>, vector<1x8x128xf32>
    %103 = vector.shape_cast %102 : vector<1x8x128xf32> to vector<8x128xf32>
    %cst_107 = arith.constant dense<0.000000e+00> : vector<320x128xf32>
    %104 = tpu.matmul %101, %103, %cst_107 {dimension_numbers = #tpu.dot_dimension_numbers<[1], [0], [0], [1], [0, 0, 1, 1], [], []>} : vector<320x8xf32>, vector<8x128xf32>, vector<320x128xf32> -> vector<320x128xf32>
    %105 = arith.addf %100, %104 : vector<320x128xf32>
    %c0_108 = arith.constant 0 : index
    %c0_109 = arith.constant 0 : index
    %106 = vector.load %arg7[%c0_108, %c0_109] : memref<1x128xf32, #tpu.memory_space<vmem>>, vector<1x128xf32>
    %107 = vector.broadcast %106 : vector<1x128xf32> to vector<320x128xf32>
    %108 = arith.addf %105, %107 : vector<320x128xf32>
    %cst_110 = arith.constant 0.000000e+00 : f32
    %109 = vector.broadcast %cst_110 : f32 to vector<320x128xf32>
    %110 = arith.maximumf %108, %109 : vector<320x128xf32>
    %c0_111 = arith.constant 0 : index
    %c0_112 = arith.constant 0 : index
    %c0_113 = arith.constant 0 : index
    %111 = vector.load %arg8[%c0_111, %c0_112, %c0_113] : memref<1x320x128xf32, #tpu.memory_space<vmem>>, vector<1x320x128xf32>
    %112 = vector.shape_cast %111 : vector<1x320x128xf32> to vector<320x128xf32>
    %113 = vector.shape_cast %110 : vector<320x128xf32> to vector<1x320x128xf32>
    tpu.vector_store %arg8[%c0_111, %c0_112, %c0_113], %113 {strides = array<i32>} : memref<1x320x128xf32, #tpu.memory_space<vmem>>, vector<1x320x128xf32>,
    return
  }
  func.func @transform_0(%arg0: i32, %arg1: i32) -> (i32, i32, i32) {
    %c0_i32 = arith.constant 0 : i32
    %c0_i32_0 = arith.constant 0 : i32
    %c0_i32_1 = arith.constant 0 : i32
    return %arg0, %c0_i32, %c0_i32_0 : i32, i32, i32
  }
  func.func @transform_1(%arg0: i32, %arg1: i32) -> (i32, i32, i32) {
    %c0_i32 = arith.constant 0 : i32
    %c0_i32_0 = arith.constant 0 : i32
    %c0_i32_1 = arith.constant 0 : i32
    %c0_i32_2 = arith.constant 0 : i32
    return %c0_i32, %c0_i32_0, %c0_i32_1 : i32, i32, i32
  }
  func.func @transform_2(%arg0: i32, %arg1: i32) -> (i32, i32) {
    %c0_i32 = arith.constant 0 : i32
    %c0_i32_0 = arith.constant 0 : i32
    %c0_i32_1 = arith.constant 0 : i32
    return %c0_i32, %c0_i32_0 : i32, i32
  }
  func.func @transform_3(%arg0: i32, %arg1: i32) -> (i32, i32) {
    %c0_i32 = arith.constant 0 : i32
    %c0_i32_0 = arith.constant 0 : i32
    %c0_i32_1 = arith.constant 0 : i32
    return %c0_i32, %c0_i32_0 : i32, i32
  }
  func.func @transform_4(%arg0: i32, %arg1: i32) -> (i32, i32, i32) {
    %c0_i32 = arith.constant 0 : i32
    %c0_i32_0 = arith.constant 0 : i32
    %c0_i32_1 = arith.constant 0 : i32
    return %c0_i32, %c0_i32_0, %arg1 : i32, i32, i32
  }
  func.func @transform_5(%arg0: i32, %arg1: i32) -> (i32, i32) {
    %c0_i32 = arith.constant 0 : i32
    %c0_i32_0 = arith.constant 0 : i32
    return %c0_i32, %arg1 : i32, i32
  }
  func.func @transform_6(%arg0: i32, %arg1: i32) -> (i32, i32, i32) {
    %c0_i32 = arith.constant 0 : i32
    %c0_i32_0 = arith.constant 0 : i32
    return %arg0, %c0_i32, %arg1 : i32, i32, i32
  }
}

</mosaic_0001>

<llo_original>
// kernel: double_conv.1
$region0: #{double_conv.1}
  #allocation0 [shape = 'u32[]', space=smem, size = 0x4, offset = 0x4, fixed_abs, tag = 'smem constant byte address 0x4 - core index']
  #allocation1 [shape = 'u32[144,128]{1,0:T(1,128)}', space=vmem, size = 0x12000, scoped, tag = 'internal scratch']
  #allocation2 [shape = 'f32[368,8]{1,0:T(8,128)}', space=vmem, size = 0x2e000, scoped, tag = 'scratch operand']
  %s0 = inlined_call_operand.vmem [shape: f32[2,410,4], index: 0, kind: input, shape index: {}]
  %s1 = inlined_call_operand.vmem [shape: f32[9,4,8], index: 1, kind: input, shape index: {}]
  %s2 = inlined_call_operand.vmem [shape: f32[1,8], index: 2, kind: input, shape index: {}]
  %s3 = inlined_call_operand.vmem [shape: f32[368,1], index: 3, kind: input, shape index: {}]
  %s4 = inlined_call_operand.vmem [shape: f32[9,8,128], index: 4, kind: input, shape index: {}]
  %s5 = inlined_call_operand.vmem [shape: f32[1,128], index: 5, kind: input, shape index: {}]
  %s6 = inlined_call_operand.vmem [shape: f32[2,320,128], index: 6, kind: output, shape index: {}]
  %s7 = sld [smem:[#allocation0]]
  $region57: #{double_conv.1} parent=0
    _
  %s9 = ssub.s32 1, %s7
  %s10 = scalar_select 0, %s9, %s7
  loop: start=0, step=1, limit=4
  $region2: #{double_conv.1} parent=0 // loop_pre_header
    _
  $region3: #{double_conv.1} parent=0 // loop_header
    %s12 = sphi 0, %s16
    %p13 = scmp.ge.s32.totalorder %s12, 4
    %s19 = sphi 0, %s31
    %s20 = sphi 0, %s27
    %s21 = sphi 0, %s19
    %s22 = sphi 0, %s20
    %s23 = sphi 0, %s21
    %s24 = sphi 0, %s22
    %s34 = sphi 0, %s36
    %s37 = sphi 0, %s34
    %s38 = sphi 0, %s37
    %s54 = sphi 0, %s38
    %s58 = sphi 0, %s58
    %s60 = sphi 0, %s58
    %s61 = sphi 0, %s60
    %s75 = sphi 0, %s61
    %s79 = sphi 0, %s79
    %s81 = sphi 0, %s79
    %s82 = sphi 0, %s81
    %s96 = sphi 0, %s82
    %s100 = sphi 0, %s100
    %s102 = sphi 0, %s100
    %s103 = sphi 0, %s102
    %s117 = sphi 0, %s103
    %s123 = sphi 0, %s125
    %s126 = sphi 0, %s123
    %s127 = sphi 0, %s126
    %s143 = sphi 0, %s127
    %s149 = sphi 0, %s151
    %s152 = sphi 0, %s149
    %s153 = sphi 0, %s152
    %s169 = sphi 0, %s153
    %s177 = sphi 0, %s179
    %s180 = sphi 0, %s177
    %s181 = sphi 0, %s180
    %s197 = sphi 0, %s181
  $region4: #{double_conv.1} parent=0 // loop_header_branch
    %15 = sbr.rel (%p13) target = $region8
  $region5: #{double_conv.1} parent=0 // loop_body
    %s17 = ssub.s32 %s12, 1
    %s18 = ssub.s32 %s12, 2
    %s25 = sadd.s32 1, %s20
    %p26 = scmp.ge.s32.totalorder %s25, 1
    %s27 = scalar_select %p26, 0, %s25
    %s28 = sadd.s32 1, %s19
    %s29 = scalar_select %p26, %s28, %s19
    %p30 = scmp.ge.s32.totalorder %s29, 2
    %s31 = scalar_select %p30, 0, %s29
    %s32 = ssub.s32 %s19, %s31
    %p33 = scmp.eq.s32.totalorder %s32, 0
    %s35 = sadd.s32 %s34, 1
    %s36 = scalar_select %p33, %s34, %s35
    %p39 = pneg %p33
    %p40 = scmp.eq.s32.totalorder %s12, 1
    %p41 = por %p39, %p40
    %p42 = scmp.ne.s32.totalorder %s34, %s37
    %p43 = scmp.eq.s32.totalorder %s12, 0
    %p44 = por %p42, %p43
    %p45 = scmp.ne.s32.totalorder %s34, %s37
    %p46 = scmp.eq.s32.totalorder %s17, 1
    %p47 = por %p45, %p46
    %p48 = scmp.ne.s32.totalorder %s37, %s38
    %p49 = scmp.eq.s32.totalorder %s17, 0
    %p50 = por %p48, %p49
    %p51 = scmp.ne.s32.totalorder %s37, %s38
    %p52 = scmp.eq.s32.totalorder %s18, 1
    %p53 = por %p51, %p52
    %p55 = scmp.ne.s32.totalorder %s38, %s54
    %p56 = scmp.eq.s32.totalorder %s18, 0
    %p57 = por %p55, %p56
    %s59 = sadd.s32 %s58, 1
    %p62 = scmp.eq.s32.totalorder %s12, 1
    %p63 = scmp.ne.s32.totalorder %s58, %s60
    %p64 = scmp.eq.s32.totalorder %s12, 0
    %p65 = por %p63, %p64
    %p66 = scmp.ne.s32.totalorder %s58, %s60
    %p67 = scmp.eq.s32.totalorder %s17, 1
    %p68 = por %p66, %p67
    %p69 = scmp.ne.s32.totalorder %s60, %s61
    %p70 = scmp.eq.s32.totalorder %s17, 0
    %p71 = por %p69, %p70
    %p72 = scmp.ne.s32.totalorder %s60, %s61
    %p73 = scmp.eq.s32.totalorder %s18, 1
    %p74 = por %p72, %p73
    %p76 = scmp.ne.s32.totalorder %s61, %s75
    %p77 = scmp.eq.s32.totalorder %s18, 0
    %p78 = por %p76, %p77
    %s80 = sadd.s32 %s79, 1
    %p83 = scmp.eq.s32.totalorder %s12, 1
    %p84 = scmp.ne.s32.totalorder %s79, %s81
    %p85 = scmp.eq.s32.totalorder %s12, 0
    %p86 = por %p84, %p85
    %p87 = scmp.ne.s32.totalorder %s79, %s81
    %p88 = scmp.eq.s32.totalorder %s17, 1
    %p89 = por %p87, %p88
    %p90 = scmp.ne.s32.totalorder %s81, %s82
    %p91 = scmp.eq.s32.totalorder %s17, 0
    %p92 = por %p90, %p91
    %p93 = scmp.ne.s32.totalorder %s81, %s82
    %p94 = scmp.eq.s32.totalorder %s18, 1
    %p95 = por %p93, %p94
    %p97 = scmp.ne.s32.totalorder %s82, %s96
    %p98 = scmp.eq.s32.totalorder %s18, 0
    %p99 = por %p97, %p98
    %s101 = sadd.s32 %s100, 1
    %p104 = scmp.eq.s32.totalorder %s12, 1
    %p105 = scmp.ne.s32.totalorder %s100, %s102
    %p106 = scmp.eq.s32.totalorder %s12, 0
    %p107 = por %p105, %p106
    %p108 = scmp.ne.s32.totalorder %s100, %s102
    %p109 = scmp.eq.s32.totalorder %s17, 1
    %p110 = por %p108, %p109
    %p111 = scmp.ne.s32.totalorder %s102, %s103
    %p112 = scmp.eq.s32.totalorder %s17, 0
    %p113 = por %p111, %p112
    %p114 = scmp.ne.s32.totalorder %s102, %s103
    %p115 = scmp.eq.s32.totalorder %s18, 1
    %p116 = por %p114, %p115
    %p118 = scmp.ne.s32.totalorder %s103, %s117
    %p119 = scmp.eq.s32.totalorder %s18, 0
    %p120 = por %p118, %p119
    %s121 = ssub.s32 %s20, %s27
    %p122 = scmp.eq.s32.totalorder %s121, 0
    %s124 = sadd.s32 %s123, 1
    %s125 = scalar_select %p122, %s123, %s124
    %p128 = pneg %p122
    %p129 = scmp.eq.s32.totalorder %s12, 1
    %p130 = por %p128, %p129
    %p131 = scmp.ne.s32.totalorder %s123, %s126
    %p132 = scmp.eq.s32.totalorder %s12, 0
    %p133 = por %p131, %p132
    %p134 = scmp.ne.s32.totalorder %s123, %s126
    %p135 = scmp.eq.s32.totalorder %s17, 1
    %p136 = por %p134, %p135
    %p137 = scmp.ne.s32.totalorder %s126, %s127
    %p138 = scmp.eq.s32.totalorder %s17, 0
    %p139 = por %p137, %p138
    %p140 = scmp.ne.s32.totalorder %s126, %s127
    %p141 = scmp.eq.s32.totalorder %s18, 1
    %p142 = por %p140, %p141
    %p144 = scmp.ne.s32.totalorder %s127, %s143
    %p145 = scmp.eq.s32.totalorder %s18, 0
    %p146 = por %p144, %p145
    %s147 = ssub.s32 %s20, %s27
    %p148 = scmp.eq.s32.totalorder %s147, 0
    %s150 = sadd.s32 %s149, 1
    %s151 = scalar_select %p148, %s149, %s150
    %p154 = pneg %p148
    %p155 = scmp.eq.s32.totalorder %s12, 1
    %p156 = por %p154, %p155
    %p157 = scmp.ne.s32.totalorder %s149, %s152
    %p158 = scmp.eq.s32.totalorder %s12, 0
    %p159 = por %p157, %p158
    %p160 = scmp.ne.s32.totalorder %s149, %s152
    %p161 = scmp.eq.s32.totalorder %s17, 1
    %p162 = por %p160, %p161
    %p163 = scmp.ne.s32.totalorder %s152, %s153
    %p164 = scmp.eq.s32.totalorder %s17, 0
    %p165 = por %p163, %p164
    %p166 = scmp.ne.s32.totalorder %s152, %s153
    %p167 = scmp.eq.s32.totalorder %s18, 1
    %p168 = por %p166, %p167
    %p170 = scmp.ne.s32.totalorder %s153, %s169
    %p171 = scmp.eq.s32.totalorder %s18, 0
    %p172 = por %p170, %p171
    %s173 = ssub.s32 %s19, %s31
    %s174 = ssub.s32 %s20, %s27
    %s175 = sor.u32 %s173, %s174
    %p176 = scmp.eq.s32.totalorder %s175, 0
    %s178 = sadd.s32 %s177, 1
    %s179 = scalar_select %p176, %s177, %s178
    %p182 = pneg %p176
    %p183 = scmp.eq.s32.totalorder %s12, 1
    %p184 = por %p182, %p183
    %p185 = scmp.ne.s32.totalorder %s177, %s180
    %p186 = scmp.eq.s32.totalorder %s12, 0
    %p187 = por %p185, %p186
    %p188 = scmp.ne.s32.totalorder %s177, %s180
    %p189 = scmp.eq.s32.totalorder %s17, 1
    %p190 = por %p188, %p189
    %p191 = scmp.ne.s32.totalorder %s180, %s181
    %p192 = scmp.eq.s32.totalorder %s17, 0
    %p193 = por %p191, %p192
    %p194 = scmp.ne.s32.totalorder %s180, %s181
    %p195 = scmp.eq.s32.totalorder %s18, 1
    %p196 = por %p194, %p195
    %p198 = scmp.ne.s32.totalorder %s181, %s197
    %p199 = scmp.eq.s32.totalorder %s18, 0
    %p200 = por %p198, %p199
    %p201 = scmp.le.s32.totalorder 1, %s12
    %p202 = scmp.lt.s32.totalorder %s12, 3
    %p203 = pnand %p201, %p202
    %p204 = pneg %p203
    // Predicated region
    $region9: #{double_conv.1} parent=5 // pred_check
      _
    $region10: #{double_conv.1} parent=5 // pred_check_branch
      %206 = sbr.rel (%p203) target = $region12
    $region11: #{double_conv.1} parent=5 // pred_region
      %s207 = ssub.s32 %s12, 1
      // Predicated region
      $region13: #{double_conv.1} parent=11 // pred_check
        %p208 = pneg %p71
      $region14: #{double_conv.1} parent=11 // pred_check_branch
        %210 = sbr.rel (%p208) target = $region16
      $region15: #{double_conv.1} parent=11 // pred_region
        _
      $region16: #{double_conv.1} parent=11 // pred_fallthru
        _
      // Predicated region
      $region17: #{double_conv.1} parent=11 // pred_check
        %p211 = pneg %p92
      $region18: #{double_conv.1} parent=11 // pred_check_branch
        %213 = sbr.rel (%p211) target = $region20
      $region19: #{double_conv.1} parent=11 // pred_region
        _
      $region20: #{double_conv.1} parent=11 // pred_fallthru
        _
      // Predicated region
      $region21: #{double_conv.1} parent=11 // pred_check
        %p214 = pneg %p113
      $region22: #{double_conv.1} parent=11 // pred_check_branch
        %216 = sbr.rel (%p214) target = $region24
      $region23: #{double_conv.1} parent=11 // pred_region
        _
      $region24: #{double_conv.1} parent=11 // pred_fallthru
        _
      // Predicated region
      $region25: #{double_conv.1} parent=11 // pred_check
        %p217 = pneg %p139
      $region26: #{double_conv.1} parent=11 // pred_check_branch
        %219 = sbr.rel (%p217) target = $region28
      $region27: #{double_conv.1} parent=11 // pred_region
        %p220 = scmp.lt.s32.totalorder %s22, 0
        %s221 = scalar_select %p220, %s22, 0
        %s222 = smul.addr %s221, 8
        %s223 = scalar_lea.vmem %s4, %s222
      $region28: #{double_conv.1} parent=11 // pred_fallthru
        _
      // Predicated region
      $region29: #{double_conv.1} parent=11 // pred_check
        %p224 = pneg %p165
      $region30: #{double_conv.1} parent=11 // pred_check_branch
        %226 = sbr.rel (%p224) target = $region32
      $region31: #{double_conv.1} parent=11 // pred_region
        %p227 = scmp.lt.s32.totalorder %s22, 0
        %s228 = scalar_select %p227, %s22, 0
        %s229 = scalar_lea.vmem %s5, %s228
      $region32: #{double_conv.1} parent=11 // pred_fallthru
        _
    $region12: #{double_conv.1} parent=5 // pred_fallthru
      _
    %p230 = scmp.lt.s32.totalorder %s12, 2
    // Predicated region
    $region33: #{double_conv.1} parent=5 // pred_check
      %p231 = pneg %p230
    $region34: #{double_conv.1} parent=5 // pred_check_branch
      %233 = sbr.rel (%p231) target = $region36
    $region35: #{double_conv.1} parent=5 // pred_region
      // Predicated region
      $region37: #{double_conv.1} parent=35 // pred_check
        %p234 = pneg %p44
      $region38: #{double_conv.1} parent=35 // pred_check_branch
        %236 = sbr.rel (%p234) target = $region40
      $region39: #{double_conv.1} parent=35 // pred_region
        %p237 = scmp.lt.s32.totalorder %s19, 1
        %s238 = scalar_select %p237, %s19, 1
        %s239 = smul.addr %s238, 52
        %s240 = smul.addr %s239, 8
        %s241 = scalar_lea.vmem %s0, %s240
      $region40: #{double_conv.1} parent=35 // pred_fallthru
        _
    $region36: #{double_conv.1} parent=5 // pred_fallthru
      _
    %p242 = scmp.le.s32.totalorder 1, %s12
    %p243 = scmp.lt.s32.totalorder %s12, 3
    %p244 = pnand %p242, %p243
    %p245 = pneg %p244
    // Predicated region
    $region41: #{double_conv.1} parent=5 // pred_check
      _
    $region42: #{double_conv.1} parent=5 // pred_check_branch
      %247 = sbr.rel (%p244) target = $region44
    $region43: #{double_conv.1} parent=5 // pred_region
      %s248 = ssub.s32 %s12, 1
      %p249 = scmp.lt.s32.totalorder %s21, 1
      %s250 = scalar_select %p249, %s21, 1
      %s251 = smul.addr %s250, 52
      %s252 = smul.addr %s251, 8
      %s253 = scalar_lea.vmem %s0, %s252
      %p254 = pneg %p50
      %p255 = pneg %p47
      %p256 = pneg %p71
      %p257 = pneg %p68
      %p258 = pneg %p92
      %p259 = pneg %p89
      %p260 = pneg %p113
      %p261 = pneg %p110
      %p262 = scmp.lt.s32.totalorder %s22, 0
      %s263 = scalar_select %p262, %s22, 0
      %s264 = smul.addr %s263, 8
      %s265 = scalar_lea.vmem %s4, %s264
      %p266 = pneg %p139
      %p267 = pneg %p136
      %p268 = scmp.lt.s32.totalorder %s22, 0
      %s269 = scalar_select %p268, %s22, 0
      %s270 = scalar_lea.vmem %s5, %s269
      %p271 = pneg %p165
      %p272 = pneg %p162
      %p273 = pneg %p193
      %p274 = pneg %p190
      %p275 = scmp.lt.s32.totalorder %s21, 1
      %s276 = scalar_select %p275, %s21, 1
      %p277 = scmp.lt.s32.totalorder %s22, 0
      %s278 = scalar_select %p277, %s22, 0
      %s279 = smul.addr %s276, 40
      %s280 = sadd.s32 %s278, %s279
      %s281 = smul.addr %s280, 8
      %s282 = scalar_lea.vmem %s6, %s281
      %p283 = scmp.lt.s32.totalorder %s21, 1
      %s284 = scalar_select %p283, %s21, 1
      %s285 = smul.addr %s284, 52
      %s286 = smul.addr %s285, 8
      %s287 = scalar_lea.vmem %s0, %s286
      %p288 = scmp.lt.s32.totalorder %s22, 0
      %s289 = scalar_select %p288, %s22, 0
      %s290 = smul.addr %s289, 8
      %s291 = scalar_lea.vmem %s4, %s290
      %p292 = scmp.lt.s32.totalorder %s22, 0
      %s293 = scalar_select %p292, %s22, 0
      %s294 = scalar_lea.vmem %s5, %s293
      %p295 = scmp.lt.s32.totalorder %s21, 1
      %s296 = scalar_select %p295, %s21, 1
      %p297 = scmp.lt.s32.totalorder %s22, 0
      %s298 = scalar_select %p297, %s22, 0
      %s299 = smul.addr %s296, 40
      %s300 = sadd.s32 %s298, %s299
      %s301 = smul.addr %s300, 8
      %s302 = scalar_lea.vmem %s6, %s301
      %v303 = vld [vmem:[%s287] sm:$0xff]
      %v304 = vld [vmem:[%s287 + $0x8] sm:$0xff]
      %v305 = vld [vmem:[%s287 + $0x10] sm:$0xff]
      %v306 = vld [vmem:[%s287 + $0x18] sm:$0xff]
      %v307 = vld [vmem:[%s287 + $0x20] sm:$0xff]
      %v308 = vld [vmem:[%s287 + $0x28] sm:$0xff]
      %v309 = vld [vmem:[%s287 + $0x30] sm:$0xff]
      %v310 = vld [vmem:[%s287 + $0x38] sm:$0xff]
      %v311 = vld [vmem:[%s287 + $0x40] sm:$0xff]
      %v312 = vld [vmem:[%s287 + $0x48] sm:$0xff]
      %v313 = vld [vmem:[%s287 + $0x50] sm:$0xff]
      %v314 = vld [vmem:[%s287 + $0x58] sm:$0xff]
      %v315 = vld [vmem:[%s287 + $0x60] sm:$0xff]
      %v316 = vld [vmem:[%s287 + $0x68] sm:$0xff]
      %v317 = vld [vmem:[%s287 + $0x70] sm:$0xff]
      %v318 = vld [vmem:[%s287 + $0x78] sm:$0xff]
      %v319 = vld [vmem:[%s287 + $0x80] sm:$0xff]
      %v320 = vld [vmem:[%s287 + $0x88] sm:$0xff]
      %v321 = vld [vmem:[%s287 + $0x90] sm:$0xff]
      %v322 = vld [vmem:[%s287 + $0x98] sm:$0xff]
      %v323 = vld [vmem:[%s287 + $0xa0] sm:$0xff]
      %v324 = vld [vmem:[%s287 + $0xa8] sm:$0xff]
      %v325 = vld [vmem:[%s287 + $0xb0] sm:$0xff]
      %v326 = vld [vmem:[%s287 + $0xb8] sm:$0xff]
      %v327 = vld [vmem:[%s287 + $0xc0] sm:$0xff]
      %v328 = vld [vmem:[%s287 + $0xc8] sm:$0xff]
      %v329 = vld [vmem:[%s287 + $0xd0] sm:$0xff]
      %v330 = vld [vmem:[%s287 + $0xd8] sm:$0xff]
      %v331 = vld [vmem:[%s287 + $0xe0] sm:$0xff]
      %v332 = vld [vmem:[%s287 + $0xe8] sm:$0xff]
      %v333 = vld [vmem:[%s287 + $0xf0] sm:$0xff]
      %v334 = vld [vmem:[%s287 + $0xf8] sm:$0xff]
      %v335 = vld [vmem:[%s287 + $0x100] sm:$0xff]
      %v336 = vld [vmem:[%s287 + $0x108] sm:$0xff]
      %v337 = vld [vmem:[%s287 + $0x110] sm:$0xff]
      %v338 = vld [vmem:[%s287 + $0x118] sm:$0xff]
      %v339 = vld [vmem:[%s287 + $0x120] sm:$0xff]
      %v340 = vld [vmem:[%s287 + $0x128] sm:$0xff]
      %v341 = vld [vmem:[%s287 + $0x130] sm:$0xff]
      %v342 = vld [vmem:[%s287 + $0x138] sm:$0xff]
      %v343 = vld [vmem:[%s287 + $0x140] sm:$0xff]
      %v344 = vld [vmem:[%s287 + $0x148] sm:$0xff]
      %v345 = vld [vmem:[%s287 + $0x150] sm:$0xff]
      %v346 = vld [vmem:[%s287 + $0x158] sm:$0xff]
      %v347 = vld [vmem:[%s287 + $0x160] sm:$0xff]
      %v348 = vld [vmem:[%s287 + $0x168] sm:$0xff]
      %v349 = vld [vmem:[%s1] sm:$0xf]
      %v350 = vld [vmem:[%s287 + $0x1] sm:$0xff]
      %v351 = vld [vmem:[%s287 + $0x9] sm:$0xff]
      %v352 = vld [vmem:[%s287 + $0x11] sm:$0xff]
      %v353 = vld [vmem:[%s287 + $0x19] sm:$0xff]
      %v354 = vld [vmem:[%s287 + $0x21] sm:$0xff]
      %v355 = vld [vmem:[%s287 + $0x29] sm:$0xff]
      %v356 = vld [vmem:[%s287 + $0x31] sm:$0xff]
      %v357 = vld [vmem:[%s287 + $0x39] sm:$0xff]
      %v358 = vld [vmem:[%s287 + $0x41] sm:$0xff]
      %v359 = vld [vmem:[%s287 + $0x49] sm:$0xff]
      %v360 = vld [vmem:[%s287 + $0x51] sm:$0xff]
      %v361 = vld [vmem:[%s287 + $0x59] sm:$0xff]
      %v362 = vld [vmem:[%s287 + $0x61] sm:$0xff]
      %v363 = vld [vmem:[%s287 + $0x69] sm:$0xff]
      %v364 = vld [vmem:[%s287 + $0x71] sm:$0xff]
      %v365 = vld [vmem:[%s287 + $0x79] sm:$0xff]
      %v366 = vld [vmem:[%s287 + $0x81] sm:$0xff]
      %v367 = vld [vmem:[%s287 + $0x89] sm:$0xff]
      %v368 = vld [vmem:[%s287 + $0x91] sm:$0xff]
      %v369 = vld [vmem:[%s287 + $0x99] sm:$0xff]
      %v370 = vld [vmem:[%s287 + $0xa1] sm:$0xff]
      %v371 = vld [vmem:[%s287 + $0xa9] sm:$0xff]
      %v372 = vld [vmem:[%s287 + $0xb1] sm:$0xff]
      %v373 = vld [vmem:[%s287 + $0xb9] sm:$0xff]
      %v374 = vld [vmem:[%s287 + $0xc1] sm:$0xff]
      %v375 = vld [vmem:[%s287 + $0xc9] sm:$0xff]
      %v376 = vld [vmem:[%s287 + $0xd1] sm:$0xff]
      %v377 = vld [vmem:[%s287 + $0xd9] sm:$0xff]
      %v378 = vld [vmem:[%s287 + $0xe1] sm:$0xff]
      %v379 = vld [vmem:[%s287 + $0xe9] sm:$0xff]
      %v380 = vld [vmem:[%s287 + $0xf1] sm:$0xff]
      %v381 = vld [vmem:[%s287 + $0xf9] sm:$0xff]
      %v382 = vld [vmem:[%s287 + $0x101] sm:$0xff]
      %v383 = vld [vmem:[%s287 + $0x109] sm:$0xff]
      %v384 = vld [vmem:[%s287 + $0x111] sm:$0xff]
      %v385 = vld [vmem:[%s287 + $0x119] sm:$0xff]
      %v386 = vld [vmem:[%s287 + $0x121] sm:$0xff]
      %v387 = vld [vmem:[%s287 + $0x129] sm:$0xff]
      %v388 = vld [vmem:[%s287 + $0x131] sm:$0xff]
      %v389 = vld [vmem:[%s287 + $0x139] sm:$0xff]
      %v390 = vld [vmem:[%s287 + $0x141] sm:$0xff]
      %v391 = vld [vmem:[%s287 + $0x149] sm:$0xff]
      %v392 = vld [vmem:[%s287 + $0x151] sm:$0xff]
      %v393 = vld [vmem:[%s287 + $0x159] sm:$0xff]
      %v394 = vld [vmem:[%s287 + $0x161] sm:$0xff]
      %v395 = vld [vmem:[%s287 + $0x169] sm:$0xff]
      %s396 = scalar_lea.vmem %s1, 4
      %v397 = vld [vmem:[%s396] sm:$0xf]
      %vm398 = vcmask 31744
      %v400 = vsel %vm398, %v350, 0
      %v403 = vsel %vm398, %v351, 0
      %v406 = vsel %vm398, %v352, 0
      %v409 = vsel %vm398, %v353, 0
      %v412 = vsel %vm398, %v354, 0
      %v415 = vsel %vm398, %v355, 0
      %v418 = vsel %vm398, %v356, 0
      %v421 = vsel %vm398, %v357, 0
      %v424 = vsel %vm398, %v358, 0
      %v427 = vsel %vm398, %v359, 0
      %v430 = vsel %vm398, %v360, 0
      %v433 = vsel %vm398, %v361, 0
      %v436 = vsel %vm398, %v362, 0
      %v439 = vsel %vm398, %v363, 0
      %v442 = vsel %vm398, %v364, 0
      %v445 = vsel %vm398, %v365, 0
      %v448 = vsel %vm398, %v366, 0
      %v451 = vsel %vm398, %v367, 0
      %v454 = vsel %vm398, %v368, 0
      %v457 = vsel %vm398, %v369, 0
      %v460 = vsel %vm398, %v370, 0
      %v463 = vsel %vm398, %v371, 0
      %v466 = vsel %vm398, %v372, 0
      %v469 = vsel %vm398, %v373, 0
      %v472 = vsel %vm398, %v374, 0
      %v475 = vsel %vm398, %v375, 0
      %v478 = vsel %vm398, %v376, 0
      %v481 = vsel %vm398, %v377, 0
      %v484 = vsel %vm398, %v378, 0
      %v487 = vsel %vm398, %v379, 0
      %v490 = vsel %vm398, %v380, 0
      %v493 = vsel %vm398, %v381, 0
      %v496 = vsel %vm398, %v382, 0
      %v499 = vsel %vm398, %v383, 0
      %v502 = vsel %vm398, %v384, 0
      %v505 = vsel %vm398, %v385, 0
      %v508 = vsel %vm398, %v386, 0
      %v511 = vsel %vm398, %v387, 0
      %v514 = vsel %vm398, %v388, 0
      %v517 = vsel %vm398, %v389, 0
      %v520 = vsel %vm398, %v390, 0
      %v523 = vsel %vm398, %v391, 0
      %v526 = vsel %vm398, %v392, 0
      %v529 = vsel %vm398, %v393, 0
      %v532 = vsel %vm398, %v394, 0
      %v535 = vsel %vm398, %v395, 0
      %vm537 = vcmask 1043456
      %v539 = vsel %vm537, %v397, 0
      %541 = vmatprep.subr.mxu0 0.0
      %542 = vmatpush1.msra.mxu0 0.0
      %543 = vmatprep.subr.mxu0 0.0
      %544 = vmatpush1.msra.mxu0 0.0
      %545 = vmatprep.subr.mxu0 0.0
      %546 = vmatpush1.msra.mxu0 0.0
      %547 = vmatprep.subr.mxu0 0.0
      %548 = vmatpush1.msra.mxu0 0.0
      %549 = vmatprep.subr.mxu0 0.0
      %550 = vmatpush1.msra.mxu0 0.0
      %551 = vmatprep.subr.mxu0 0.0
      %552 = vmatpush1.msra.mxu0 0.0
      %553 = vmatprep.subr.mxu0 0.0
      %554 = vmatpush1.msra.mxu0 0.0
      %555 = vmatprep.subr.mxu0 0.0
      %556 = vmatpush1.msra.mxu0 0.0
      %557 = vmatprep.subr.mxu0 0.0
      %558 = vmatpush1.msra.mxu0 0.0
      %559 = vmatprep.subr.mxu0 0.0
      %560 = vmatpush1.msra.mxu0 0.0
      %561 = vmatprep.subr.mxu0 0.0
      %562 = vmatpush1.msra.mxu0 0.0
      %563 = vmatprep.subr.mxu0 0.0
      %564 = vmatpush1.msra.mxu0 0.0
      %565 = vmatprep.subr.mxu0 0.0
      %566 = vmatpush1.msra.mxu0 0.0
      %567 = vmatprep.subr.mxu0 0.0
      %568 = vmatpush1.msra.mxu0 0.0
      %569 = vmatprep.subr.mxu0 0.0
      %570 = vmatpush1.msra.mxu0 0.0
      %571 = vmatprep.subr.mxu0 0.0
      %572 = vmatpush1.msra.mxu0 %v539
      %573 = vmatprep.subr.mxu0 0.0
      %574 = vmatpush2.msra.mxu0 0.0
      %575 = vmatprep.subr.mxu0 0.0
      %576 = vmatpush2.msra.mxu0 0.0
      %577 = vmatprep.subr.mxu0 0.0
      %578 = vmatpush2.msra.mxu0 0.0
      %579 = vmatprep.subr.mxu0 0.0
      %580 = vmatpush2.msra.mxu0 0.0
      %581 = vmatprep.subr.mxu0 0.0
      %582 = vmatpush2.msra.mxu0 0.0
      %583 = vmatprep.subr.mxu0 0.0
      %584 = vmatpush2.msra.mxu0 0.0
      %585 = vmatprep.subr.mxu0 0.0
      %586 = vmatpush2.msra.mxu0 0.0
      %587 = vmatprep.subr.mxu0 0.0
      %588 = vmatpush2.msra.mxu0 0.0
      %589 = vmatprep.subr.mxu0 0.0
      %590 = vmatpush2.msra.mxu0 0.0
      %591 = vmatprep.subr.mxu0 0.0
      %592 = vmatpush2.msra.mxu0 0.0
      %593 = vmatprep.subr.mxu0 0.0
      %594 = vmatpush2.msra.mxu0 0.0
      %595 = vmatprep.subr.mxu0 0.0
      %596 = vmatpush2.msra.mxu0 0.0
      %597 = vmatprep.subr.mxu0 0.0
      %598 = vmatpush2.msra.mxu0 0.0
      %599 = vmatprep.subr.mxu0 0.0
      %600 = vmatpush2.msra.mxu0 0.0
      %601 = vmatprep.subr.mxu0 0.0
      %602 = vmatpush2.msra.mxu0 0.0
      %603 = vmatprep.subr.mxu0 0.0
      %604 = vmatpush2.msra.mxu0 0.0
      %605 = vmatprep.mubr.f32.mxu0 0.0
      %606 = vmatmul.mubr.f32.gmra.mxu0 %v400
      %v607 = vpop.f32.mrf.mxu0
      %v608 = vadd.f32 0.0, %v607
      %v609 = vpop.f32.mrf.mxu0
      %610 = vmatprep.mubr.f32.mxu0 0.0
      %611 = vmatmul.mubr.f32.gmra.mxu0 %v403
      %v612 = vpop.f32.mrf.mxu0
      %v613 = vadd.f32 0.0, %v612
      %v614 = vpop.f32.mrf.mxu0
      %615 = vmatprep.mubr.f32.mxu0 0.0
      %616 = vmatmul.mubr.f32.gmra.mxu0 %v406
      %v617 = vpop.f32.mrf.mxu0
      %v618 = vadd.f32 0.0, %v617
      %v619 = vpop.f32.mrf.mxu0
      %620 = vmatprep.mubr.f32.mxu0 0.0
      %621 = vmatmul.mubr.f32.gmra.mxu0 %v409
      %v622 = vpop.f32.mrf.mxu0
      %v623 = vadd.f32 0.0, %v622
      %v624 = vpop.f32.mrf.mxu0
      %625 = vmatprep.mubr.f32.mxu0 0.0
      %626 = vmatmul.mubr.f32.gmra.mxu0 %v412
      %v627 = vpop.f32.mrf.mxu0
      %v628 = vadd.f32 0.0, %v627
      %v629 = vpop.f32.mrf.mxu0
      %630 = vmatprep.mubr.f32.mxu0 0.0
      %631 = vmatmul.mubr.f32.gmra.mxu0 %v415
      %v632 = vpop.f32.mrf.mxu0
      %v633 = vadd.f32 0.0, %v632
      %v634 = vpop.f32.mrf.mxu0
      %635 = vmatprep.mubr.f32.mxu0 0.0
      %636 = vmatmul.mubr.f32.gmra.mxu0 %v418
      %v637 = vpop.f32.mrf.mxu0
      %v638 = vadd.f32 0.0, %v637
      %v639 = vpop.f32.mrf.mxu0
      %640 = vmatprep.mubr.f32.mxu0 0.0
      %641 = vmatmul.mubr.f32.gmra.mxu0 %v421
      %v642 = vpop.f32.mrf.mxu0
      %v643 = vadd.f32 0.0, %v642
      %v644 = vpop.f32.mrf.mxu0
      %645 = vmatprep.mubr.f32.mxu0 0.0
      %646 = vmatmul.mubr.f32.gmra.mxu0 %v424
      %v647 = vpop.f32.mrf.mxu0
      %v648 = vadd.f32 0.0, %v647
      %v649 = vpop.f32.mrf.mxu0
      %650 = vmatprep.mubr.f32.mxu0 0.0
      %651 = vmatmul.mubr.f32.gmra.mxu0 %v427
      %v652 = vpop.f32.mrf.mxu0
      %v653 = vadd.f32 0.0, %v652
      %v654 = vpop.f32.mrf.mxu0
      %655 = vmatprep.mubr.f32.mxu0 0.0
      %656 = vmatmul.mubr.f32.gmra.mxu0 %v430
      %v657 = vpop.f32.mrf.mxu0
      %v658 = vadd.f32 0.0, %v657
      %v659 = vpop.f32.mrf.mxu0
      %660 = vmatprep.mubr.f32.mxu0 0.0
      %661 = vmatmul.mubr.f32.gmra.mxu0 %v433
      %v662 = vpop.f32.mrf.mxu0
      %v663 = vadd.f32 0.0, %v662
      %v664 = vpop.f32.mrf.mxu0
      %665 = vmatprep.mubr.f32.mxu0 0.0
      %666 = vmatmul.mubr.f32.gmra.mxu0 %v436
      %v667 = vpop.f32.mrf.mxu0
      %v668 = vadd.f32 0.0, %v667
      %v669 = vpop.f32.mrf.mxu0
      %670 = vmatprep.mubr.f32.mxu0 0.0
      %671 = vmatmul.mubr.f32.gmra.mxu0 %v439
      %v672 = vpop.f32.mrf.mxu0
      %v673 = vadd.f32 0.0, %v672
      %v674 = vpop.f32.mrf.mxu0
      %675 = vmatprep.mubr.f32.mxu0 0.0
      %676 = vmatmul.mubr.f32.gmra.mxu0 %v442
      %v677 = vpop.f32.mrf.mxu0
      %v678 = vadd.f32 0.0, %v677
      %v679 = vpop.f32.mrf.mxu0
      %680 = vmatprep.mubr.f32.mxu0 0.0
      %681 = vmatmul.mubr.f32.gmra.mxu0 %v445
      %v682 = vpop.f32.mrf.mxu0
      %v683 = vadd.f32 0.0, %v682
      %v684 = vpop.f32.mrf.mxu0
      %685 = vmatprep.mubr.f32.mxu0 0.0
      %686 = vmatmul.mubr.f32.gmra.mxu0 %v448
      %v687 = vpop.f32.mrf.mxu0
      %v688 = vadd.f32 0.0, %v687
      %v689 = vpop.f32.mrf.mxu0
      %690 = vmatprep.mubr.f32.mxu0 0.0
      %691 = vmatmul.mubr.f32.gmra.mxu0 %v451
      %v692 = vpop.f32.mrf.mxu0
      %v693 = vadd.f32 0.0, %v692
      %v694 = vpop.f32.mrf.mxu0
      %695 = vmatprep.mubr.f32.mxu0 0.0
      %696 = vmatmul.mubr.f32.gmra.mxu0 %v454
      %v697 = vpop.f32.mrf.mxu0
      %v698 = vadd.f32 0.0, %v697
      %v699 = vpop.f32.mrf.mxu0
      %700 = vmatprep.mubr.f32.mxu0 0.0
      %701 = vmatmul.mubr.f32.gmra.mxu0 %v457
      %v702 = vpop.f32.mrf.mxu0
      %v703 = vadd.f32 0.0, %v702
      %v704 = vpop.f32.mrf.mxu0
      %705 = vmatprep.mubr.f32.mxu0 0.0
      %706 = vmatmul.mubr.f32.gmra.mxu0 %v460
      %v707 = vpop.f32.mrf.mxu0
      %v708 = vadd.f32 0.0, %v707
      %v709 = vpop.f32.mrf.mxu0
      %710 = vmatprep.mubr.f32.mxu0 0.0
      %711 = vmatmul.mubr.f32.gmra.mxu0 %v463
      %v712 = vpop.f32.mrf.mxu0
      %v713 = vadd.f32 0.0, %v712
      %v714 = vpop.f32.mrf.mxu0
      %715 = vmatprep.mubr.f32.mxu0 0.0
      %716 = vmatmul.mubr.f32.gmra.mxu0 %v466
      %v717 = vpop.f32.mrf.mxu0
      %v718 = vadd.f32 0.0, %v717
      %v719 = vpop.f32.mrf.mxu0
      %720 = vmatprep.mubr.f32.mxu0 0.0
      %721 = vmatmul.mubr.f32.gmra.mxu0 %v469
      %v722 = vpop.f32.mrf.mxu0
      %v723 = vadd.f32 0.0, %v722
      %v724 = vpop.f32.mrf.mxu0
      %725 = vmatprep.mubr.f32.mxu0 0.0
      %726 = vmatmul.mubr.f32.gmra.mxu0 %v472
      %v727 = vpop.f32.mrf.mxu0
      %v728 = vadd.f32 0.0, %v727
      %v729 = vpop.f32.mrf.mxu0
      %730 = vmatprep.mubr.f32.mxu0 0.0
      %731 = vmatmul.mubr.f32.gmra.mxu0 %v475
      %v732 = vpop.f32.mrf.mxu0
      %v733 = vadd.f32 0.0, %v732
      %v734 = vpop.f32.mrf.mxu0
      %735 = vmatprep.mubr.f32.mxu0 0.0
      %736 = vmatmul.mubr.f32.gmra.mxu0 %v478
      %v737 = vpop.f32.mrf.mxu0
      %v738 = vadd.f32 0.0, %v737
      %v739 = vpop.f32.mrf.mxu0
      %740 = vmatprep.mubr.f32.mxu0 0.0
      %741 = vmatmul.mubr.f32.gmra.mxu0 %v481
      %v742 = vpop.f32.mrf.mxu0
      %v743 = vadd.f32 0.0, %v742
      %v744 = vpop.f32.mrf.mxu0
      %745 = vmatprep.mubr.f32.mxu0 0.0
      %746 = vmatmul.mubr.f32.gmra.mxu0 %v484
      %v747 = vpop.f32.mrf.mxu0
      %v748 = vadd.f32 0.0, %v747
      %v749 = vpop.f32.mrf.mxu0
      %750 = vmatprep.mubr.f32.mxu0 0.0
      %751 = vmatmul.mubr.f32.gmra.mxu0 %v487
      %v752 = vpop.f32.mrf.mxu0
      %v753 = vadd.f32 0.0, %v752
      %v754 = vpop.f32.mrf.mxu0
      %755 = vmatprep.mubr.f32.mxu0 0.0
      %756 = vmatmul.mubr.f32.gmra.mxu0 %v490
      %v757 = vpop.f32.mrf.mxu0
      %v758 = vadd.f32 0.0, %v757
      %v759 = vpop.f32.mrf.mxu0
      %760 = vmatprep.mubr.f32.mxu0 0.0
      %761 = vmatmul.mubr.f32.gmra.mxu0 %v493
      %v762 = vpop.f32.mrf.mxu0
      %v763 = vadd.f32 0.0, %v762
      %v764 = vpop.f32.mrf.mxu0
      %765 = vmatprep.mubr.f32.mxu0 0.0
      %766 = vmatmul.mubr.f32.gmra.mxu0 %v496
      %v767 = vpop.f32.mrf.mxu0
      %v768 = vadd.f32 0.0, %v767
      %v769 = vpop.f32.mrf.mxu0
      %770 = vmatprep.mubr.f32.mxu0 0.0
      %771 = vmatmul.mubr.f32.gmra.mxu0 %v499
      %v772 = vpop.f32.mrf.mxu0
      %v773 = vadd.f32 0.0, %v772
      %v774 = vpop.f32.mrf.mxu0
      %775 = vmatprep.mubr.f32.mxu0 0.0
      %776 = vmatmul.mubr.f32.gmra.mxu0 %v502
      %v777 = vpop.f32.mrf.mxu0
      %v778 = vadd.f32 0.0, %v777
      %v779 = vpop.f32.mrf.mxu0
      %780 = vmatprep.mubr.f32.mxu0 0.0
      %781 = vmatmul.mubr.f32.gmra.mxu0 %v505
      %v782 = vpop.f32.mrf.mxu0
      %v783 = vadd.f32 0.0, %v782
      %v784 = vpop.f32.mrf.mxu0
      %785 = vmatprep.mubr.f32.mxu0 0.0
      %786 = vmatmul.mubr.f32.gmra.mxu0 %v508
      %v787 = vpop.f32.mrf.mxu0
      %v788 = vadd.f32 0.0, %v787
      %v789 = vpop.f32.mrf.mxu0
      %790 = vmatprep.mubr.f32.mxu0 0.0
      %791 = vmatmul.mubr.f32.gmra.mxu0 %v511
      %v792 = vpop.f32.mrf.mxu0
      %v793 = vadd.f32 0.0, %v792
      %v794 = vpop.f32.mrf.mxu0
      %795 = vmatprep.mubr.f32.mxu0 0.0
      %796 = vmatmul.mubr.f32.gmra.mxu0 %v514
      %v797 = vpop.f32.mrf.mxu0
      %v798 = vadd.f32 0.0, %v797
      %v799 = vpop.f32.mrf.mxu0
      %800 = vmatprep.mubr.f32.mxu0 0.0
      %801 = vmatmul.mubr.f32.gmra.mxu0 %v517
      %v802 = vpop.f32.mrf.mxu0
      %v803 = vadd.f32 0.0, %v802
      %v804 = vpop.f32.mrf.mxu0
      %805 = vmatprep.mubr.f32.mxu0 0.0
      %806 = vmatmul.mubr.f32.gmra.mxu0 %v520
      %v807 = vpop.f32.mrf.mxu0
      %v808 = vadd.f32 0.0, %v807
      %v809 = vpop.f32.mrf.mxu0
      %810 = vmatprep.mubr.f32.mxu0 0.0
      %811 = vmatmul.mubr.f32.gmra.mxu0 %v523
      %v812 = vpop.f32.mrf.mxu0
      %v813 = vadd.f32 0.0, %v812
      %v814 = vpop.f32.mrf.mxu0
      %815 = vmatprep.mubr.f32.mxu0 0.0
      %816 = vmatmul.mubr.f32.gmra.mxu0 %v526
      %v817 = vpop.f32.mrf.mxu0
      %v818 = vadd.f32 0.0, %v817
      %v819 = vpop.f32.mrf.mxu0
      %820 = vmatprep.mubr.f32.mxu0 0.0
      %821 = vmatmul.mubr.f32.gmra.mxu0 %v529
      %v822 = vpop.f32.mrf.mxu0
      %v823 = vadd.f32 0.0, %v822
      %v824 = vpop.f32.mrf.mxu0
      %825 = vmatprep.mubr.f32.mxu0 0.0
      %826 = vmatmul.mubr.f32.gmra.mxu0 %v532
      %v827 = vpop.f32.mrf.mxu0
      %v828 = vadd.f32 0.0, %v827
      %v829 = vpop.f32.mrf.mxu0
      %830 = vmatprep.mubr.f32.mxu0 0.0
      %831 = vmatmul.mubr.f32.gmra.mxu0 %v535
      %v832 = vpop.f32.mrf.mxu0
      %v833 = vadd.f32 0.0, %v832
      %v834 = vpop.f32.mrf.mxu0
      %835 = vdwg.mxu0
      %v837 = vsel %vm398, %v303, 0
      %v840 = vsel %vm398, %v304, 0
      %v843 = vsel %vm398, %v305, 0
      %v846 = vsel %vm398, %v306, 0
      %v849 = vsel %vm398, %v307, 0
      %v852 = vsel %vm398, %v308, 0
      %v855 = vsel %vm398, %v309, 0
      %v858 = vsel %vm398, %v310, 0
      %v861 = vsel %vm398, %v311, 0
      %v864 = vsel %vm398, %v312, 0
      %v867 = vsel %vm398, %v313, 0
      %v870 = vsel %vm398, %v314, 0
      %v873 = vsel %vm398, %v315, 0
      %v876 = vsel %vm398, %v316, 0
      %v879 = vsel %vm398, %v317, 0
      %v882 = vsel %vm398, %v318, 0
      %v885 = vsel %vm398, %v319, 0
      %v888 = vsel %vm398, %v320, 0
      %v891 = vsel %vm398, %v321, 0
      %v894 = vsel %vm398, %v322, 0
      %v897 = vsel %vm398, %v323, 0
      %v900 = vsel %vm398, %v324, 0
      %v903 = vsel %vm398, %v325, 0
      %v906 = vsel %vm398, %v326, 0
      %v909 = vsel %vm398, %v327, 0
      %v912 = vsel %vm398, %v328, 0
      %v915 = vsel %vm398, %v329, 0
      %v918 = vsel %vm398, %v330, 0
      %v921 = vsel %vm398, %v331, 0
      %v924 = vsel %vm398, %v332, 0
      %v927 = vsel %vm398, %v333, 0
      %v930 = vsel %vm398, %v334, 0
      %v933 = vsel %vm398, %v335, 0
      %v936 = vsel %vm398, %v336, 0
      %v939 = vsel %vm398, %v337, 0
      %v942 = vsel %vm398, %v338, 0
      %v945 = vsel %vm398, %v339, 0
      %v948 = vsel %vm398, %v340, 0
      %v951 = vsel %vm398, %v341, 0
      %v954 = vsel %vm398, %v342, 0
      %v957 = vsel %vm398, %v343, 0
      %v960 = vsel %vm398, %v344, 0
      %v963 = vsel %vm398, %v345, 0
      %v966 = vsel %vm398, %v346, 0
      %v969 = vsel %vm398, %v347, 0
      %v972 = vsel %vm398, %v348, 0
      %v975 = vsel %vm537, %v349, 0
      %977 = vmatprep.subr.mxu0 0.0
      %978 = vmatpush1.msra.mxu0 0.0
      %979 = vmatprep.subr.mxu0 0.0
      %980 = vmatpush1.msra.mxu0 0.0
      %981 = vmatprep.subr.mxu0 0.0
      %982 = vmatpush1.msra.mxu0 0.0
      %983 = vmatprep.subr.mxu0 0.0
      %984 = vmatpush1.msra.mxu0 0.0
      %985 = vmatprep.subr.mxu0 0.0
      %986 = vmatpush1.msra.mxu0 0.0
      %987 = vmatprep.subr.mxu0 0.0
      %988 = vmatpush1.msra.mxu0 0.0
      %989 = vmatprep.subr.mxu0 0.0
      %990 = vmatpush1.msra.mxu0 0.0
      %991 = vmatprep.subr.mxu0 0.0
      %992 = vmatpush1.msra.mxu0 0.0
      %993 = vmatprep.subr.mxu0 0.0
      %994 = vmatpush1.msra.mxu0 0.0
      %995 = vmatprep.subr.mxu0 0.0
      %996 = vmatpush1.msra.mxu0 0.0
      %997 = vmatprep.subr.mxu0 0.0
      %998 = vmatpush1.msra.mxu0 0.0
      %999 = vmatprep.subr.mxu0 0.0
      %1000 = vmatpush1.msra.mxu0 0.0
      %1001 = vmatprep.subr.mxu0 0.0
      %1002 = vmatpush1.msra.mxu0 0.0
      %1003 = vmatprep.subr.mxu0 0.0
      %1004 = vmatpush1.msra.mxu0 0.0
      %1005 = vmatprep.subr.mxu0 0.0
      %1006 = vmatpush1.msra.mxu0 0.0
      %1007 = vmatprep.subr.mxu0 0.0
      %1008 = vmatpush1.msra.mxu0 %v975
      %1009 = vmatprep.subr.mxu0 0.0
      %1010 = vmatpush2.msra.mxu0 0.0
      %1011 = vmatprep.subr.mxu0 0.0
      %1012 = vmatpush2.msra.mxu0 0.0
      %1013 = vmatprep.subr.mxu0 0.0
      %1014 = vmatpush2.msra.mxu0 0.0
      %1015 = vmatprep.subr.mxu0 0.0
      %1016 = vmatpush2.msra.mxu0 0.0
      %1017 = vmatprep.subr.mxu0 0.0
      %1018 = vmatpush2.msra.mxu0 0.0
      %1019 = vmatprep.subr.mxu0 0.0
      %1020 = vmatpush2.msra.mxu0 0.0
      %1021 = vmatprep.subr.mxu0 0.0
      %1022 = vmatpush2.msra.mxu0 0.0
      %1023 = vmatprep.subr.mxu0 0.0
      %1024 = vmatpush2.msra.mxu0 0.0
      %1025 = vmatprep.subr.mxu0 0.0
      %1026 = vmatpush2.msra.mxu0 0.0
      %1027 = vmatprep.subr.mxu0 0.0
      %1028 = vmatpush2.msra.mxu0 0.0
      %1029 = vmatprep.subr.mxu0 0.0
      %1030 = vmatpush2.msra.mxu0 0.0
      %1031 = vmatprep.subr.mxu0 0.0
      %1032 = vmatpush2.msra.mxu0 0.0
      %1033 = vmatprep.subr.mxu0 0.0
      %1034 = vmatpush2.msra.mxu0 0.0
      %1035 = vmatprep.subr.mxu0 0.0
      %1036 = vmatpush2.msra.mxu0 0.0
      %1037 = vmatprep.subr.mxu0 0.0
      %1038 = vmatpush2.msra.mxu0 0.0
      %1039 = vmatprep.subr.mxu0 0.0
      %1040 = vmatpush2.msra.mxu0 0.0
      %1041 = vmatprep.mubr.f32.mxu0 0.0
      %1042 = vmatmul.mubr.f32.gmra.mxu0 %v837
      %v1043 = vpop.f32.mrf.mxu0
      %v1044 = vadd.f32 %v608, %v1043
      %v1045 = vpop.f32.mrf.mxu0
      %1046 = vmatprep.mubr.f32.mxu0 0.0
      %1047 = vmatmul.mubr.f32.gmra.mxu0 %v840
      %v1048 = vpop.f32.mrf.mxu0
      %v1049 = vadd.f32 %v613, %v1048
      %v1050 = vpop.f32.mrf.mxu0
      %1051 = vmatprep.mubr.f32.mxu0 0.0
      %1052 = vmatmul.mubr.f32.gmra.mxu0 %v843
      %v1053 = vpop.f32.mrf.mxu0
      %v1054 = vadd.f32 %v618, %v1053
      %v1055 = vpop.f32.mrf.mxu0
      %1056 = vmatprep.mubr.f32.mxu0 0.0
      %1057 = vmatmul.mubr.f32.gmra.mxu0 %v846
      %v1058 = vpop.f32.mrf.mxu0
      %v1059 = vadd.f32 %v623, %v1058
      %v1060 = vpop.f32.mrf.mxu0
      %1061 = vmatprep.mubr.f32.mxu0 0.0
      %1062 = vmatmul.mubr.f32.gmra.mxu0 %v849
      %v1063 = vpop.f32.mrf.mxu0
      %v1064 = vadd.f32 %v628, %v1063
      %v1065 = vpop.f32.mrf.mxu0
      %1066 = vmatprep.mubr.f32.mxu0 0.0
      %1067 = vmatmul.mubr.f32.gmra.mxu0 %v852
      %v1068 = vpop.f32.mrf.mxu0
      %v1069 = vadd.f32 %v633, %v1068
      %v1070 = vpop.f32.mrf.mxu0
      %1071 = vmatprep.mubr.f32.mxu0 0.0
      %1072 = vmatmul.mubr.f32.gmra.mxu0 %v855
      %v1073 = vpop.f32.mrf.mxu0
      %v1074 = vadd.f32 %v638, %v1073
      %v1075 = vpop.f32.mrf.mxu0
      %1076 = vmatprep.mubr.f32.mxu0 0.0
      %1077 = vmatmul.mubr.f32.gmra.mxu0 %v858
      %v1078 = vpop.f32.mrf.mxu0
      %v1079 = vadd.f32 %v643, %v1078
      %v1080 = vpop.f32.mrf.mxu0
      %1081 = vmatprep.mubr.f32.mxu0 0.0
      %1082 = vmatmul.mubr.f32.gmra.mxu0 %v861
      %v1083 = vpop.f32.mrf.mxu0
      %v1084 = vadd.f32 %v648, %v1083
      %v1085 = vpop.f32.mrf.mxu0
      %1086 = vmatprep.mubr.f32.mxu0 0.0
      %1087 = vmatmul.mubr.f32.gmra.mxu0 %v864
      %v1088 = vpop.f32.mrf.mxu0
      %v1089 = vadd.f32 %v653, %v1088
      %v1090 = vpop.f32.mrf.mxu0
      %1091 = vmatprep.mubr.f32.mxu0 0.0
      %1092 = vmatmul.mubr.f32.gmra.mxu0 %v867
      %v1093 = vpop.f32.mrf.mxu0
      %v1094 = vadd.f32 %v658, %v1093
      %v1095 = vpop.f32.mrf.mxu0
      %1096 = vmatprep.mubr.f32.mxu0 0.0
      %1097 = vmatmul.mubr.f32.gmra.mxu0 %v870
      %v1098 = vpop.f32.mrf.mxu0
      %v1099 = vadd.f32 %v663, %v1098
      %v1100 = vpop.f32.mrf.mxu0
      %1101 = vmatprep.mubr.f32.mxu0 0.0
      %1102 = vmatmul.mubr.f32.gmra.mxu0 %v873
      %v1103 = vpop.f32.mrf.mxu0
      %v1104 = vadd.f32 %v668, %v1103
      %v1105 = vpop.f32.mrf.mxu0
      %1106 = vmatprep.mubr.f32.mxu0 0.0
      %1107 = vmatmul.mubr.f32.gmra.mxu0 %v876
      %v1108 = vpop.f32.mrf.mxu0
      %v1109 = vadd.f32 %v673, %v1108
      %v1110 = vpop.f32.mrf.mxu0
      %1111 = vmatprep.mubr.f32.mxu0 0.0
      %1112 = vmatmul.mubr.f32.gmra.mxu0 %v879
      %v1113 = vpop.f32.mrf.mxu0
      %v1114 = vadd.f32 %v678, %v1113
      %v1115 = vpop.f32.mrf.mxu0
      %1116 = vmatprep.mubr.f32.mxu0 0.0
      %1117 = vmatmul.mubr.f32.gmra.mxu0 %v882
      %v1118 = vpop.f32.mrf.mxu0
      %v1119 = vadd.f32 %v683, %v1118
      %v1120 = vpop.f32.mrf.mxu0
      %1121 = vmatprep.mubr.f32.mxu0 0.0
      %1122 = vmatmul.mubr.f32.gmra.mxu0 %v885
      %v1123 = vpop.f32.mrf.mxu0
      %v1124 = vadd.f32 %v688, %v1123
      %v1125 = vpop.f32.mrf.mxu0
      %1126 = vmatprep.mubr.f32.mxu0 0.0
      %1127 = vmatmul.mubr.f32.gmra.mxu0 %v888
      %v1128 = vpop.f32.mrf.mxu0
      %v1129 = vadd.f32 %v693, %v1128
      %v1130 = vpop.f32.mrf.mxu0
      %1131 = vmatprep.mubr.f32.mxu0 0.0
      %1132 = vmatmul.mubr.f32.gmra.mxu0 %v891
      %v1133 = vpop.f32.mrf.mxu0
      %v1134 = vadd.f32 %v698, %v1133
      %v1135 = vpop.f32.mrf.mxu0
      %1136 = vmatprep.mubr.f32.mxu0 0.0
      %1137 = vmatmul.mubr.f32.gmra.mxu0 %v894
      %v1138 = vpop.f32.mrf.mxu0
      %v1139 = vadd.f32 %v703, %v1138
      %v1140 = vpop.f32.mrf.mxu0
      %1141 = vmatprep.mubr.f32.mxu0 0.0
      %1142 = vmatmul.mubr.f32.gmra.mxu0 %v897
      %v1143 = vpop.f32.mrf.mxu0
      %v1144 = vadd.f32 %v708, %v1143
      %v1145 = vpop.f32.mrf.mxu0
      %1146 = vmatprep.mubr.f32.mxu0 0.0
      %1147 = vmatmul.mubr.f32.gmra.mxu0 %v900
      %v1148 = vpop.f32.mrf.mxu0
      %v1149 = vadd.f32 %v713, %v1148
      %v1150 = vpop.f32.mrf.mxu0
      %1151 = vmatprep.mubr.f32.mxu0 0.0
      %1152 = vmatmul.mubr.f32.gmra.mxu0 %v903
      %v1153 = vpop.f32.mrf.mxu0
      %v1154 = vadd.f32 %v718, %v1153
      %v1155 = vpop.f32.mrf.mxu0
      %1156 = vmatprep.mubr.f32.mxu0 0.0
      %1157 = vmatmul.mubr.f32.gmra.mxu0 %v906
      %v1158 = vpop.f32.mrf.mxu0
      %v1159 = vadd.f32 %v723, %v1158
      %v1160 = vpop.f32.mrf.mxu0
      %1161 = vmatprep.mubr.f32.mxu0 0.0
      %1162 = vmatmul.mubr.f32.gmra.mxu0 %v909
      %v1163 = vpop.f32.mrf.mxu0
      %v1164 = vadd.f32 %v728, %v1163
      %v1165 = vpop.f32.mrf.mxu0
      %1166 = vmatprep.mubr.f32.mxu0 0.0
      %1167 = vmatmul.mubr.f32.gmra.mxu0 %v912
      %v1168 = vpop.f32.mrf.mxu0
      %v1169 = vadd.f32 %v733, %v1168
      %v1170 = vpop.f32.mrf.mxu0
      %1171 = vmatprep.mubr.f32.mxu0 0.0
      %1172 = vmatmul.mubr.f32.gmra.mxu0 %v915
      %v1173 = vpop.f32.mrf.mxu0
      %v1174 = vadd.f32 %v738, %v1173
      %v1175 = vpop.f32.mrf.mxu0
      %1176 = vmatprep.mubr.f32.mxu0 0.0
      %1177 = vmatmul.mubr.f32.gmra.mxu0 %v918
      %v1178 = vpop.f32.mrf.mxu0
      %v1179 = vadd.f32 %v743, %v1178
      %v1180 = vpop.f32.mrf.mxu0
      %1181 = vmatprep.mubr.f32.mxu0 0.0
      %1182 = vmatmul.mubr.f32.gmra.mxu0 %v921
      %v1183 = vpop.f32.mrf.mxu0
      %v1184 = vadd.f32 %v748, %v1183
      %v1185 = vpop.f32.mrf.mxu0
      %1186 = vmatprep.mubr.f32.mxu0 0.0
      %1187 = vmatmul.mubr.f32.gmra.mxu0 %v924
      %v1188 = vpop.f32.mrf.mxu0
      %v1189 = vadd.f32 %v753, %v1188
      %v1190 = vpop.f32.mrf.mxu0
      %1191 = vmatprep.mubr.f32.mxu0 0.0
      %1192 = vmatmul.mubr.f32.gmra.mxu0 %v927
      %v1193 = vpop.f32.mrf.mxu0
      %v1194 = vadd.f32 %v758, %v1193
      %v1195 = vpop.f32.mrf.mxu0
      %1196 = vmatprep.mubr.f32.mxu0 0.0
      %1197 = vmatmul.mubr.f32.gmra.mxu0 %v930
      %v1198 = vpop.f32.mrf.mxu0
      %v1199 = vadd.f32 %v763, %v1198
      %v1200 = vpop.f32.mrf.mxu0
      %1201 = vmatprep.mubr.f32.mxu0 0.0
      %1202 = vmatmul.mubr.f32.gmra.mxu0 %v933
      %v1203 = vpop.f32.mrf.mxu0
      %v1204 = vadd.f32 %v768, %v1203
      %v1205 = vpop.f32.mrf.mxu0
      %1206 = vmatprep.mubr.f32.mxu0 0.0
      %1207 = vmatmul.mubr.f32.gmra.mxu0 %v936
      %v1208 = vpop.f32.mrf.mxu0
      %v1209 = vadd.f32 %v773, %v1208
      %v1210 = vpop.f32.mrf.mxu0
      %1211 = vmatprep.mubr.f32.mxu0 0.0
      %1212 = vmatmul.mubr.f32.gmra.mxu0 %v939
      %v1213 = vpop.f32.mrf.mxu0
      %v1214 = vadd.f32 %v778, %v1213
      %v1215 = vpop.f32.mrf.mxu0
      %1216 = vmatprep.mubr.f32.mxu0 0.0
      %1217 = vmatmul.mubr.f32.gmra.mxu0 %v942
      %v1218 = vpop.f32.mrf.mxu0
      %v1219 = vadd.f32 %v783, %v1218
      %v1220 = vpop.f32.mrf.mxu0
      %1221 = vmatprep.mubr.f32.mxu0 0.0
      %1222 = vmatmul.mubr.f32.gmra.mxu0 %v945
      %v1223 = vpop.f32.mrf.mxu0
      %v1224 = vadd.f32 %v788, %v1223
      %v1225 = vpop.f32.mrf.mxu0
      %1226 = vmatprep.mubr.f32.mxu0 0.0
      %1227 = vmatmul.mubr.f32.gmra.mxu0 %v948
      %v1228 = vpop.f32.mrf.mxu0
      %v1229 = vadd.f32 %v793, %v1228
      %v1230 = vpop.f32.mrf.mxu0
      %1231 = vmatprep.mubr.f32.mxu0 0.0
      %1232 = vmatmul.mubr.f32.gmra.mxu0 %v951
      %v1233 = vpop.f32.mrf.mxu0
      %v1234 = vadd.f32 %v798, %v1233
      %v1235 = vpop.f32.mrf.mxu0
      %1236 = vmatprep.mubr.f32.mxu0 0.0
      %1237 = vmatmul.mubr.f32.gmra.mxu0 %v954
      %v1238 = vpop.f32.mrf.mxu0
      %v1239 = vadd.f32 %v803, %v1238
      %v1240 = vpop.f32.mrf.mxu0
      %1241 = vmatprep.mubr.f32.mxu0 0.0
      %1242 = vmatmul.mubr.f32.gmra.mxu0 %v957
      %v1243 = vpop.f32.mrf.mxu0
      %v1244 = vadd.f32 %v808, %v1243
      %v1245 = vpop.f32.mrf.mxu0
      %1246 = vmatprep.mubr.f32.mxu0 0.0
      %1247 = vmatmul.mubr.f32.gmra.mxu0 %v960
      %v1248 = vpop.f32.mrf.mxu0
      %v1249 = vadd.f32 %v813, %v1248
      %v1250 = vpop.f32.mrf.mxu0
      %1251 = vmatprep.mubr.f32.mxu0 0.0
      %1252 = vmatmul.mubr.f32.gmra.mxu0 %v963
      %v1253 = vpop.f32.mrf.mxu0
      %v1254 = vadd.f32 %v818, %v1253
      %v1255 = vpop.f32.mrf.mxu0
      %1256 = vmatprep.mubr.f32.mxu0 0.0
      %1257 = vmatmul.mubr.f32.gmra.mxu0 %v966
      %v1258 = vpop.f32.mrf.mxu0
      %v1259 = vadd.f32 %v823, %v1258
      %v1260 = vpop.f32.mrf.mxu0
      %1261 = vmatprep.mubr.f32.mxu0 0.0
      %1262 = vmatmul.mubr.f32.gmra.mxu0 %v969
      %v1263 = vpop.f32.mrf.mxu0
      %v1264 = vadd.f32 %v828, %v1263
      %v1265 = vpop.f32.mrf.mxu0
      %1266 = vmatprep.mubr.f32.mxu0 0.0
      %1267 = vmatmul.mubr.f32.gmra.mxu0 %v972
      %v1268 = vpop.f32.mrf.mxu0
      %v1269 = vadd.f32 %v833, %v1268
      %v1270 = vpop.f32.mrf.mxu0
      %1271 = vdwg.mxu0
      %v1272 = vld [vmem:[%s287 + $0x2] sm:$0xff]
      %v1273 = vld [vmem:[%s287 + $0xa] sm:$0xff]
      %v1274 = vld [vmem:[%s287 + $0x12] sm:$0xff]
      %v1275 = vld [vmem:[%s287 + $0x1a] sm:$0xff]
      %v1276 = vld [vmem:[%s287 + $0x22] sm:$0xff]
      %v1277 = vld [vmem:[%s287 + $0x2a] sm:$0xff]
      %v1278 = vld [vmem:[%s287 + $0x32] sm:$0xff]
      %v1279 = vld [vmem:[%s287 + $0x3a] sm:$0xff]
      %v1280 = vld [vmem:[%s287 + $0x42] sm:$0xff]
      %v1281 = vld [vmem:[%s287 + $0x4a] sm:$0xff]
      %v1282 = vld [vmem:[%s287 + $0x52] sm:$0xff]
      %v1283 = vld [vmem:[%s287 + $0x5a] sm:$0xff]
      %v1284 = vld [vmem:[%s287 + $0x62] sm:$0xff]
      %v1285 = vld [vmem:[%s287 + $0x6a] sm:$0xff]
      %v1286 = vld [vmem:[%s287 + $0x72] sm:$0xff]
      %v1287 = vld [vmem:[%s287 + $0x7a] sm:$0xff]
      %v1288 = vld [vmem:[%s287 + $0x82] sm:$0xff]
      %v1289 = vld [vmem:[%s287 + $0x8a] sm:$0xff]
      %v1290 = vld [vmem:[%s287 + $0x92] sm:$0xff]
      %v1291 = vld [vmem:[%s287 + $0x9a] sm:$0xff]
      %v1292 = vld [vmem:[%s287 + $0xa2] sm:$0xff]
      %v1293 = vld [vmem:[%s287 + $0xaa] sm:$0xff]
      %v1294 = vld [vmem:[%s287 + $0xb2] sm:$0xff]
      %v1295 = vld [vmem:[%s287 + $0xba] sm:$0xff]
      %v1296 = vld [vmem:[%s287 + $0xc2] sm:$0xff]
      %v1297 = vld [vmem:[%s287 + $0xca] sm:$0xff]
      %v1298 = vld [vmem:[%s287 + $0xd2] sm:$0xff]
      %v1299 = vld [vmem:[%s287 + $0xda] sm:$0xff]
      %v1300 = vld [vmem:[%s287 + $0xe2] sm:$0xff]
      %v1301 = vld [vmem:[%s287 + $0xea] sm:$0xff]
      %v1302 = vld [vmem:[%s287 + $0xf2] sm:$0xff]
      %v1303 = vld [vmem:[%s287 + $0xfa] sm:$0xff]
      %v1304 = vld [vmem:[%s287 + $0x102] sm:$0xff]
      %v1305 = vld [vmem:[%s287 + $0x10a] sm:$0xff]
      %v1306 = vld [vmem:[%s287 + $0x112] sm:$0xff]
      %v1307 = vld [vmem:[%s287 + $0x11a] sm:$0xff]
      %v1308 = vld [vmem:[%s287 + $0x122] sm:$0xff]
      %v1309 = vld [vmem:[%s287 + $0x12a] sm:$0xff]
      %v1310 = vld [vmem:[%s287 + $0x132] sm:$0xff]
      %v1311 = vld [vmem:[%s287 + $0x13a] sm:$0xff]
      %v1312 = vld [vmem:[%s287 + $0x142] sm:$0xff]
      %v1313 = vld [vmem:[%s287 + $0x14a] sm:$0xff]
      %v1314 = vld [vmem:[%s287 + $0x152] sm:$0xff]
      %v1315 = vld [vmem:[%s287 + $0x15a] sm:$0xff]
      %v1316 = vld [vmem:[%s287 + $0x162] sm:$0xff]
      %v1317 = vld [vmem:[%s287 + $0x16a] sm:$0xff]
      %s1318 = scalar_lea.vmem %s1, 8
      %v1319 = vld [vmem:[%s1318] sm:$0xf]
      %v1321 = vsel %vm398, %v1272, 0
      %v1324 = vsel %vm398, %v1273, 0
      %v1327 = vsel %vm398, %v1274, 0
      %v1330 = vsel %vm398, %v1275, 0
      %v1333 = vsel %vm398, %v1276, 0
      %v1336 = vsel %vm398, %v1277, 0
      %v1339 = vsel %vm398, %v1278, 0
      %v1342 = vsel %vm398, %v1279, 0
      %v1345 = vsel %vm398, %v1280, 0
      %v1348 = vsel %vm398, %v1281, 0
      %v1351 = vsel %vm398, %v1282, 0
      %v1354 = vsel %vm398, %v1283, 0
      %v1357 = vsel %vm398, %v1284, 0
      %v1360 = vsel %vm398, %v1285, 0
      %v1363 = vsel %vm398, %v1286, 0
      %v1366 = vsel %vm398, %v1287, 0
      %v1369 = vsel %vm398, %v1288, 0
      %v1372 = vsel %vm398, %v1289, 0
      %v1375 = vsel %vm398, %v1290, 0
      %v1378 = vsel %vm398, %v1291, 0
      %v1381 = vsel %vm398, %v1292, 0
      %v1384 = vsel %vm398, %v1293, 0
      %v1387 = vsel %vm398, %v1294, 0
      %v1390 = vsel %vm398, %v1295, 0
      %v1393 = vsel %vm398, %v1296, 0
      %v1396 = vsel %vm398, %v1297, 0
      %v1399 = vsel %vm398, %v1298, 0
      %v1402 = vsel %vm398, %v1299, 0
      %v1405 = vsel %vm398, %v1300, 0
      %v1408 = vsel %vm398, %v1301, 0
      %v1411 = vsel %vm398, %v1302, 0
      %v1414 = vsel %vm398, %v1303, 0
      %v1417 = vsel %vm398, %v1304, 0
      %v1420 = vsel %vm398, %v1305, 0
      %v1423 = vsel %vm398, %v1306, 0
      %v1426 = vsel %vm398, %v1307, 0
      %v1429 = vsel %vm398, %v1308, 0
      %v1432 = vsel %vm398, %v1309, 0
      %v1435 = vsel %vm398, %v1310, 0
      %v1438 = vsel %vm398, %v1311, 0
      %v1441 = vsel %vm398, %v1312, 0
      %v1444 = vsel %vm398, %v1313, 0
      %v1447 = vsel %vm398, %v1314, 0
      %v1450 = vsel %vm398, %v1315, 0
      %v1453 = vsel %vm398, %v1316, 0
      %v1456 = vsel %vm398, %v1317, 0
      %v1459 = vsel %vm537, %v1319, 0
      %1461 = vmatprep.subr.mxu0 0.0
      %1462 = vmatpush1.msra.mxu0 0.0
      %1463 = vmatprep.subr.mxu0 0.0
      %1464 = vmatpush1.msra.mxu0 0.0
      %1465 = vmatprep.subr.mxu0 0.0
      %1466 = vmatpush1.msra.mxu0 0.0
      %1467 = vmatprep.subr.mxu0 0.0
      %1468 = vmatpush1.msra.mxu0 0.0
      %1469 = vmatprep.subr.mxu0 0.0
      %1470 = vmatpush1.msra.mxu0 0.0
      %1471 = vmatprep.subr.mxu0 0.0
      %1472 = vmatpush1.msra.mxu0 0.0
      %1473 = vmatprep.subr.mxu0 0.0
      %1474 = vmatpush1.msra.mxu0 0.0
      %1475 = vmatprep.subr.mxu0 0.0
      %1476 = vmatpush1.msra.mxu0 0.0
      %1477 = vmatprep.subr.mxu0 0.0
      %1478 = vmatpush1.msra.mxu0 0.0
      %1479 = vmatprep.subr.mxu0 0.0
      %1480 = vmatpush1.msra.mxu0 0.0
      %1481 = vmatprep.subr.mxu0 0.0
      %1482 = vmatpush1.msra.mxu0 0.0
      %1483 = vmatprep.subr.mxu0 0.0
      %1484 = vmatpush1.msra.mxu0 0.0
      %1485 = vmatprep.subr.mxu0 0.0
      %1486 = vmatpush1.msra.mxu0 0.0
      %1487 = vmatprep.subr.mxu0 0.0
      %1488 = vmatpush1.msra.mxu0 0.0
      %1489 = vmatprep.subr.mxu0 0.0
      %1490 = vmatpush1.msra.mxu0 0.0
      %1491 = vmatprep.subr.mxu0 0.0
      %1492 = vmatpush1.msra.mxu0 %v1459
      %1493 = vmatprep.subr.mxu0 0.0
      %1494 = vmatpush2.msra.mxu0 0.0
      %1495 = vmatprep.subr.mxu0 0.0
      %1496 = vmatpush2.msra.mxu0 0.0
      %1497 = vmatprep.subr.mxu0 0.0
      %1498 = vmatpush2.msra.mxu0 0.0
      %1499 = vmatprep.subr.mxu0 0.0
      %1500 = vmatpush2.msra.mxu0 0.0
      %1501 = vmatprep.subr.mxu0 0.0
      %1502 = vmatpush2.msra.mxu0 0.0
      %1503 = vmatprep.subr.mxu0 0.0
      %1504 = vmatpush2.msra.mxu0 0.0
      %1505 = vmatprep.subr.mxu0 0.0
      %1506 = vmatpush2.msra.mxu0 0.0
      %1507 = vmatprep.subr.mxu0 0.0
      %1508 = vmatpush2.msra.mxu0 0.0
      %1509 = vmatprep.subr.mxu0 0.0
      %1510 = vmatpush2.msra.mxu0 0.0
      %1511 = vmatprep.subr.mxu0 0.0
      %1512 = vmatpush2.msra.mxu0 0.0
      %1513 = vmatprep.subr.mxu0 0.0
      %1514 = vmatpush2.msra.mxu0 0.0
      %1515 = vmatprep.subr.mxu0 0.0
      %1516 = vmatpush2.msra.mxu0 0.0
      %1517 = vmatprep.subr.mxu0 0.0
      %1518 = vmatpush2.msra.mxu0 0.0
      %1519 = vmatprep.subr.mxu0 0.0
      %1520 = vmatpush2.msra.mxu0 0.0
      %1521 = vmatprep.subr.mxu0 0.0
      %1522 = vmatpush2.msra.mxu0 0.0
      %1523 = vmatprep.subr.mxu0 0.0
      %1524 = vmatpush2.msra.mxu0 0.0
      %1525 = vmatprep.mubr.f32.mxu0 0.0
      %1526 = vmatmul.mubr.f32.gmra.mxu0 %v1321
      %v1527 = vpop.f32.mrf.mxu0
      %v1528 = vadd.f32 0.0, %v1527
      %v1529 = vpop.f32.mrf.mxu0
      %1530 = vmatprep.mubr.f32.mxu0 0.0
      %1531 = vmatmul.mubr.f32.gmra.mxu0 %v1324
      %v1532 = vpop.f32.mrf.mxu0
      %v1533 = vadd.f32 0.0, %v1532
      %v1534 = vpop.f32.mrf.mxu0
      %1535 = vmatprep.mubr.f32.mxu0 0.0
      %1536 = vmatmul.mubr.f32.gmra.mxu0 %v1327
      %v1537 = vpop.f32.mrf.mxu0
      %v1538 = vadd.f32 0.0, %v1537
      %v1539 = vpop.f32.mrf.mxu0
      %1540 = vmatprep.mubr.f32.mxu0 0.0
      %1541 = vmatmul.mubr.f32.gmra.mxu0 %v1330
      %v1542 = vpop.f32.mrf.mxu0
      %v1543 = vadd.f32 0.0, %v1542
      %v1544 = vpop.f32.mrf.mxu0
      %1545 = vmatprep.mubr.f32.mxu0 0.0
      %1546 = vmatmul.mubr.f32.gmra.mxu0 %v1333
      %v1547 = vpop.f32.mrf.mxu0
      %v1548 = vadd.f32 0.0, %v1547
      %v1549 = vpop.f32.mrf.mxu0
      %1550 = vmatprep.mubr.f32.mxu0 0.0
      %1551 = vmatmul.mubr.f32.gmra.mxu0 %v1336
      %v1552 = vpop.f32.mrf.mxu0
      %v1553 = vadd.f32 0.0, %v1552
      %v1554 = vpop.f32.mrf.mxu0
      %1555 = vmatprep.mubr.f32.mxu0 0.0
      %1556 = vmatmul.mubr.f32.gmra.mxu0 %v1339
      %v1557 = vpop.f32.mrf.mxu0
      %v1558 = vadd.f32 0.0, %v1557
      %v1559 = vpop.f32.mrf.mxu0
      %1560 = vmatprep.mubr.f32.mxu0 0.0
      %1561 = vmatmul.mubr.f32.gmra.mxu0 %v1342
      %v1562 = vpop.f32.mrf.mxu0
      %v1563 = vadd.f32 0.0, %v1562
      %v1564 = vpop.f32.mrf.mxu0
      %1565 = vmatprep.mubr.f32.mxu0 0.0
      %1566 = vmatmul.mubr.f32.gmra.mxu0 %v1345
      %v1567 = vpop.f32.mrf.mxu0
      %v1568 = vadd.f32 0.0, %v1567
      %v1569 = vpop.f32.mrf.mxu0
      %1570 = vmatprep.mubr.f32.mxu0 0.0
      %1571 = vmatmul.mubr.f32.gmra.mxu0 %v1348
      %v1572 = vpop.f32.mrf.mxu0
      %v1573 = vadd.f32 0.0, %v1572
      %v1574 = vpop.f32.mrf.mxu0
      %1575 = vmatprep.mubr.f32.mxu0 0.0
      %1576 = vmatmul.mubr.f32.gmra.mxu0 %v1351
      %v1577 = vpop.f32.mrf.mxu0
      %v1578 = vadd.f32 0.0, %v1577
      %v1579 = vpop.f32.mrf.mxu0
      %1580 = vmatprep.mubr.f32.mxu0 0.0
      %1581 = vmatmul.mubr.f32.gmra.mxu0 %v1354
      %v1582 = vpop.f32.mrf.mxu0
      %v1583 = vadd.f32 0.0, %v1582
      %v1584 = vpop.f32.mrf.mxu0
      %1585 = vmatprep.mubr.f32.mxu0 0.0
      %1586 = vmatmul.mubr.f32.gmra.mxu0 %v1357
      %v1587 = vpop.f32.mrf.mxu0
      %v1588 = vadd.f32 0.0, %v1587
      %v1589 = vpop.f32.mrf.mxu0
      %1590 = vmatprep.mubr.f32.mxu0 0.0
      %1591 = vmatmul.mubr.f32.gmra.mxu0 %v1360
      %v1592 = vpop.f32.mrf.mxu0
      %v1593 = vadd.f32 0.0, %v1592
      %v1594 = vpop.f32.mrf.mxu0
      %1595 = vmatprep.mubr.f32.mxu0 0.0
      %1596 = vmatmul.mubr.f32.gmra.mxu0 %v1363
      %v1597 = vpop.f32.mrf.mxu0
      %v1598 = vadd.f32 0.0, %v1597
      %v1599 = vpop.f32.mrf.mxu0
      %1600 = vmatprep.mubr.f32.mxu0 0.0
      %1601 = vmatmul.mubr.f32.gmra.mxu0 %v1366
      %v1602 = vpop.f32.mrf.mxu0
      %v1603 = vadd.f32 0.0, %v1602
      %v1604 = vpop.f32.mrf.mxu0
      %1605 = vmatprep.mubr.f32.mxu0 0.0
      %1606 = vmatmul.mubr.f32.gmra.mxu0 %v1369
      %v1607 = vpop.f32.mrf.mxu0
      %v1608 = vadd.f32 0.0, %v1607
      %v1609 = vpop.f32.mrf.mxu0
      %1610 = vmatprep.mubr.f32.mxu0 0.0
      %1611 = vmatmul.mubr.f32.gmra.mxu0 %v1372
      %v1612 = vpop.f32.mrf.mxu0
      %v1613 = vadd.f32 0.0, %v1612
      %v1614 = vpop.f32.mrf.mxu0
      %1615 = vmatprep.mubr.f32.mxu0 0.0
      %1616 = vmatmul.mubr.f32.gmra.mxu0 %v1375
      %v1617 = vpop.f32.mrf.mxu0
      %v1618 = vadd.f32 0.0, %v1617
      %v1619 = vpop.f32.mrf.mxu0
      %1620 = vmatprep.mubr.f32.mxu0 0.0
      %1621 = vmatmul.mubr.f32.gmra.mxu0 %v1378
      %v1622 = vpop.f32.mrf.mxu0
      %v1623 = vadd.f32 0.0, %v1622
      %v1624 = vpop.f32.mrf.mxu0
      %1625 = vmatprep.mubr.f32.mxu0 0.0
      %1626 = vmatmul.mubr.f32.gmra.mxu0 %v1381
      %v1627 = vpop.f32.mrf.mxu0
      %v1628 = vadd.f32 0.0, %v1627
      %v1629 = vpop.f32.mrf.mxu0
      %1630 = vmatprep.mubr.f32.mxu0 0.0
      %1631 = vmatmul.mubr.f32.gmra.mxu0 %v1384
      %v1632 = vpop.f32.mrf.mxu0
      %v1633 = vadd.f32 0.0, %v1632
      %v1634 = vpop.f32.mrf.mxu0
      %1635 = vmatprep.mubr.f32.mxu0 0.0
      %1636 = vmatmul.mubr.f32.gmra.mxu0 %v1387
      %v1637 = vpop.f32.mrf.mxu0
      %v1638 = vadd.f32 0.0, %v1637
      %v1639 = vpop.f32.mrf.mxu0
      %1640 = vmatprep.mubr.f32.mxu0 0.0
      %1641 = vmatmul.mubr.f32.gmra.mxu0 %v1390
      %v1642 = vpop.f32.mrf.mxu0
      %v1643 = vadd.f32 0.0, %v1642
      %v1644 = vpop.f32.mrf.mxu0
      %1645 = vmatprep.mubr.f32.mxu0 0.0
      %1646 = vmatmul.mubr.f32.gmra.mxu0 %v1393
      %v1647 = vpop.f32.mrf.mxu0
      %v1648 = vadd.f32 0.0, %v1647
      %v1649 = vpop.f32.mrf.mxu0
      %1650 = vmatprep.mubr.f32.mxu0 0.0
      %1651 = vmatmul.mubr.f32.gmra.mxu0 %v1396
      %v1652 = vpop.f32.mrf.mxu0
      %v1653 = vadd.f32 0.0, %v1652
      %v1654 = vpop.f32.mrf.mxu0
      %1655 = vmatprep.mubr.f32.mxu0 0.0
      %1656 = vmatmul.mubr.f32.gmra.mxu0 %v1399
      %v1657 = vpop.f32.mrf.mxu0
      %v1658 = vadd.f32 0.0, %v1657
      %v1659 = vpop.f32.mrf.mxu0
      %1660 = vmatprep.mubr.f32.mxu0 0.0
      %1661 = vmatmul.mubr.f32.gmra.mxu0 %v1402
      %v1662 = vpop.f32.mrf.mxu0
      %v1663 = vadd.f32 0.0, %v1662
      %v1664 = vpop.f32.mrf.mxu0
      %1665 = vmatprep.mubr.f32.mxu0 0.0
      %1666 = vmatmul.mubr.f32.gmra.mxu0 %v1405
      %v1667 = vpop.f32.mrf.mxu0
      %v1668 = vadd.f32 0.0, %v1667
      %v1669 = vpop.f32.mrf.mxu0
      %1670 = vmatprep.mubr.f32.mxu0 0.0
      %1671 = vmatmul.mubr.f32.gmra.mxu0 %v1408
      %v1672 = vpop.f32.mrf.mxu0
      %v1673 = vadd.f32 0.0, %v1672
      %v1674 = vpop.f32.mrf.mxu0
      %1675 = vmatprep.mubr.f32.mxu0 0.0
      %1676 = vmatmul.mubr.f32.gmra.mxu0 %v1411
      %v1677 = vpop.f32.mrf.mxu0
      %v1678 = vadd.f32 0.0, %v1677
      %v1679 = vpop.f32.mrf.mxu0
      %1680 = vmatprep.mubr.f32.mxu0 0.0
      %1681 = vmatmul.mubr.f32.gmra.mxu0 %v1414
      %v1682 = vpop.f32.mrf.mxu0
      %v1683 = vadd.f32 0.0, %v1682
      %v1684 = vpop.f32.mrf.mxu0
      %1685 = vmatprep.mubr.f32.mxu0 0.0
      %1686 = vmatmul.mubr.f32.gmra.mxu0 %v1417
      %v1687 = vpop.f32.mrf.mxu0
      %v1688 = vadd.f32 0.0, %v1687
      %v1689 = vpop.f32.mrf.mxu0
      %1690 = vmatprep.mubr.f32.mxu0 0.0
      %1691 = vmatmul.mubr.f32.gmra.mxu0 %v1420
      %v1692 = vpop.f32.mrf.mxu0
      %v1693 = vadd.f32 0.0, %v1692
      %v1694 = vpop.f32.mrf.mxu0
      %1695 = vmatprep.mubr.f32.mxu0 0.0
      %1696 = vmatmul.mubr.f32.gmra.mxu0 %v1423
      %v1697 = vpop.f32.mrf.mxu0
      %v1698 = vadd.f32 0.0, %v1697
      %v1699 = vpop.f32.mrf.mxu0
      %1700 = vmatprep.mubr.f32.mxu0 0.0
      %1701 = vmatmul.mubr.f32.gmra.mxu0 %v1426
      %v1702 = vpop.f32.mrf.mxu0
      %v1703 = vadd.f32 0.0, %v1702
      %v1704 = vpop.f32.mrf.mxu0
      %1705 = vmatprep.mubr.f32.mxu0 0.0
      %1706 = vmatmul.mubr.f32.gmra.mxu0 %v1429
      %v1707 = vpop.f32.mrf.mxu0
      %v1708 = vadd.f32 0.0, %v1707
      %v1709 = vpop.f32.mrf.mxu0
      %1710 = vmatprep.mubr.f32.mxu0 0.0
      %1711 = vmatmul.mubr.f32.gmra.mxu0 %v1432
      %v1712 = vpop.f32.mrf.mxu0
      %v1713 = vadd.f32 0.0, %v1712
      %v1714 = vpop.f32.mrf.mxu0
      %1715 = vmatprep.mubr.f32.mxu0 0.0
      %1716 = vmatmul.mubr.f32.gmra.mxu0 %v1435
      %v1717 = vpop.f32.mrf.mxu0
      %v1718 = vadd.f32 0.0, %v1717
      %v1719 = vpop.f32.mrf.mxu0
      %1720 = vmatprep.mubr.f32.mxu0 0.0
      %1721 = vmatmul.mubr.f32.gmra.mxu0 %v1438
      %v1722 = vpop.f32.mrf.mxu0
      %v1723 = vadd.f32 0.0, %v1722
      %v1724 = vpop.f32.mrf.mxu0
      %1725 = vmatprep.mubr.f32.mxu0 0.0
      %1726 = vmatmul.mubr.f32.gmra.mxu0 %v1441
      %v1727 = vpop.f32.mrf.mxu0
      %v1728 = vadd.f32 0.0, %v1727
      %v1729 = vpop.f32.mrf.mxu0
      %1730 = vmatprep.mubr.f32.mxu0 0.0
      %1731 = vmatmul.mubr.f32.gmra.mxu0 %v1444
      %v1732 = vpop.f32.mrf.mxu0
      %v1733 = vadd.f32 0.0, %v1732
      %v1734 = vpop.f32.mrf.mxu0
      %1735 = vmatprep.mubr.f32.mxu0 0.0
      %1736 = vmatmul.mubr.f32.gmra.mxu0 %v1447
      %v1737 = vpop.f32.mrf.mxu0
      %v1738 = vadd.f32 0.0, %v1737
      %v1739 = vpop.f32.mrf.mxu0
      %1740 = vmatprep.mubr.f32.mxu0 0.0
      %1741 = vmatmul.mubr.f32.gmra.mxu0 %v1450
      %v1742 = vpop.f32.mrf.mxu0
      %v1743 = vadd.f32 0.0, %v1742
      %v1744 = vpop.f32.mrf.mxu0
      %1745 = vmatprep.mubr.f32.mxu0 0.0
      %1746 = vmatmul.mubr.f32.gmra.mxu0 %v1453
      %v1747 = vpop.f32.mrf.mxu0
      %v1748 = vadd.f32 0.0, %v1747
      %v1749 = vpop.f32.mrf.mxu0
      %1750 = vmatprep.mubr.f32.mxu0 0.0
      %1751 = vmatmul.mubr.f32.gmra.mxu0 %v1456
      %v1752 = vpop.f32.mrf.mxu0
      %v1753 = vadd.f32 0.0, %v1752
      %v1754 = vpop.f32.mrf.mxu0
      %1755 = vdwg.mxu0
      %v1756 = vadd.f32 %v1044, %v1528
      %v1757 = vadd.f32 %v1049, %v1533
      %v1758 = vadd.f32 %v1054, %v1538
      %v1759 = vadd.f32 %v1059, %v1543
      %v1760 = vadd.f32 %v1064, %v1548
      %v1761 = vadd.f32 %v1069, %v1553
      %v1762 = vadd.f32 %v1074, %v1558
      %v1763 = vadd.f32 %v1079, %v1563
      %v1764 = vadd.f32 %v1084, %v1568
      %v1765 = vadd.f32 %v1089, %v1573
      %v1766 = vadd.f32 %v1094, %v1578
      %v1767 = vadd.f32 %v1099, %v1583
      %v1768 = vadd.f32 %v1104, %v1588
      %v1769 = vadd.f32 %v1109, %v1593
      %v1770 = vadd.f32 %v1114, %v1598
      %v1771 = vadd.f32 %v1119, %v1603
      %v1772 = vadd.f32 %v1124, %v1608
      %v1773 = vadd.f32 %v1129, %v1613
      %v1774 = vadd.f32 %v1134, %v1618
      %v1775 = vadd.f32 %v1139, %v1623
      %v1776 = vadd.f32 %v1144, %v1628
      %v1777 = vadd.f32 %v1149, %v1633
      %v1778 = vadd.f32 %v1154, %v1638
      %v1779 = vadd.f32 %v1159, %v1643
      %v1780 = vadd.f32 %v1164, %v1648
      %v1781 = vadd.f32 %v1169, %v1653
      %v1782 = vadd.f32 %v1174, %v1658
      %v1783 = vadd.f32 %v1179, %v1663
      %v1784 = vadd.f32 %v1184, %v1668
      %v1785 = vadd.f32 %v1189, %v1673
      %v1786 = vadd.f32 %v1194, %v1678
      %v1787 = vadd.f32 %v1199, %v1683
      %v1788 = vadd.f32 %v1204, %v1688
      %v1789 = vadd.f32 %v1209, %v1693
      %v1790 = vadd.f32 %v1214, %v1698
      %v1791 = vadd.f32 %v1219, %v1703
      %v1792 = vadd.f32 %v1224, %v1708
      %v1793 = vadd.f32 %v1229, %v1713
      %v1794 = vadd.f32 %v1234, %v1718
      %v1795 = vadd.f32 %v1239, %v1723
      %v1796 = vadd.f32 %v1244, %v1728
      %v1797 = vadd.f32 %v1249, %v1733
      %v1798 = vadd.f32 %v1254, %v1738
      %v1799 = vadd.f32 %v1259, %v1743
      %v1800 = vadd.f32 %v1264, %v1748
      %v1801 = vadd.f32 %v1269, %v1753
      %v1802 = vld [vmem:[%s287 + $0x14] sm:$0xff]
      %v1803 = vld [vmem:[%s287 + $0x1c] sm:$0xff]
      %v1804 = vld [vmem:[%s287 + $0x24] sm:$0xff]
      %v1805 = vld [vmem:[%s287 + $0x2c] sm:$0xff]
      %v1806 = vld [vmem:[%s287 + $0x34] sm:$0xff]
      %v1807 = vld [vmem:[%s287 + $0x3c] sm:$0xff]
      %v1808 = vld [vmem:[%s287 + $0x44] sm:$0xff]
      %v1809 = vld [vmem:[%s287 + $0x4c] sm:$0xff]
      %v1810 = vld [vmem:[%s287 + $0x54] sm:$0xff]
      %v1811 = vld [vmem:[%s287 + $0x5c] sm:$0xff]
      %v1812 = vld [vmem:[%s287 + $0x64] sm:$0xff]
      %v1813 = vld [vmem:[%s287 + $0x6c] sm:$0xff]
      %v1814 = vld [vmem:[%s287 + $0x74] sm:$0xff]
      %v1815 = vld [vmem:[%s287 + $0x7c] sm:$0xff]
      %v1816 = vld [vmem:[%s287 + $0x84] sm:$0xff]
      %v1817 = vld [vmem:[%s287 + $0x8c] sm:$0xff]
      %v1818 = vld [vmem:[%s287 + $0x94] sm:$0xff]
      %v1819 = vld [vmem:[%s287 + $0x9c] sm:$0xff]
      %v1820 = vld [vmem:[%s287 + $0xa4] sm:$0xff]
      %v1821 = vld [vmem:[%s287 + $0xac] sm:$0xff]
      %v1822 = vld [vmem:[%s287 + $0xb4] sm:$0xff]
      %v1823 = vld [vmem:[%s287 + $0xbc] sm:$0xff]
      %v1824 = vld [vmem:[%s287 + $0xc4] sm:$0xff]
      %v1825 = vld [vmem:[%s287 + $0xcc] sm:$0xff]
      %v1826 = vld [vmem:[%s287 + $0xd4] sm:$0xff]
      %v1827 = vld [vmem:[%s287 + $0xdc] sm:$0xff]
      %v1828 = vld [vmem:[%s287 + $0xe4] sm:$0xff]
      %v1829 = vld [vmem:[%s287 + $0xec] sm:$0xff]
      %v1830 = vld [vmem:[%s287 + $0xf4] sm:$0xff]
      %v1831 = vld [vmem:[%s287 + $0xfc] sm:$0xff]
      %v1832 = vld [vmem:[%s287 + $0x104] sm:$0xff]
      %v1833 = vld [vmem:[%s287 + $0x10c] sm:$0xff]
      %v1834 = vld [vmem:[%s287 + $0x114] sm:$0xff]
      %v1835 = vld [vmem:[%s287 + $0x11c] sm:$0xff]
      %v1836 = vld [vmem:[%s287 + $0x124] sm:$0xff]
      %v1837 = vld [vmem:[%s287 + $0x12c] sm:$0xff]
      %v1838 = vld [vmem:[%s287 + $0x134] sm:$0xff]
      %v1839 = vld [vmem:[%s287 + $0x13c] sm:$0xff]
      %v1840 = vld [vmem:[%s287 + $0x144] sm:$0xff]
      %v1841 = vld [vmem:[%s287 + $0x14c] sm:$0xff]
      %v1842 = vld [vmem:[%s287 + $0x154] sm:$0xff]
      %v1843 = vld [vmem:[%s287 + $0x15c] sm:$0xff]
      %v1844 = vld [vmem:[%s287 + $0x164] sm:$0xff]
      %v1845 = vld [vmem:[%s287 + $0x16c] sm:$0xff]
      %v1846 = vld [vmem:[%s287 + $0x174] sm:$0xff]
      %v1847 = vld [vmem:[%s287 + $0x17c] sm:$0xff]
      %s1848 = scalar_lea.vmem %s1, 12
      %v1849 = vld [vmem:[%s1848] sm:$0xf]
      %v1851 = vsel %vm398, %v1802, 0
      %v1854 = vsel %vm398, %v1803, 0
      %v1857 = vsel %vm398, %v1804, 0
      %v1860 = vsel %vm398, %v1805, 0
      %v1863 = vsel %vm398, %v1806, 0
      %v1866 = vsel %vm398, %v1807, 0
      %v1869 = vsel %vm398, %v1808, 0
      %v1872 = vsel %vm398, %v1809, 0
      %v1875 = vsel %vm398, %v1810, 0
      %v1878 = vsel %vm398, %v1811, 0
      %v1881 = vsel %vm398, %v1812, 0
      %v1884 = vsel %vm398, %v1813, 0
      %v1887 = vsel %vm398, %v1814, 0
      %v1890 = vsel %vm398, %v1815, 0
      %v1893 = vsel %vm398, %v1816, 0
      %v1896 = vsel %vm398, %v1817, 0
      %v1899 = vsel %vm398, %v1818, 0
      %v1902 = vsel %vm398, %v1819, 0
      %v1905 = vsel %vm398, %v1820, 0
      %v1908 = vsel %vm398, %v1821, 0
      %v1911 = vsel %vm398, %v1822, 0
      %v1914 = vsel %vm398, %v1823, 0
      %v1917 = vsel %vm398, %v1824, 0
      %v1920 = vsel %vm398, %v1825, 0
      %v1923 = vsel %vm398, %v1826, 0
      %v1926 = vsel %vm398, %v1827, 0
      %v1929 = vsel %vm398, %v1828, 0
      %v1932 = vsel %vm398, %v1829, 0
      %v1935 = vsel %vm398, %v1830, 0
      %v1938 = vsel %vm398, %v1831, 0
      %v1941 = vsel %vm398, %v1832, 0
      %v1944 = vsel %vm398, %v1833, 0
      %v1947 = vsel %vm398, %v1834, 0
      %v1950 = vsel %vm398, %v1835, 0
      %v1953 = vsel %vm398, %v1836, 0
      %v1956 = vsel %vm398, %v1837, 0
      %v1959 = vsel %vm398, %v1838, 0
      %v1962 = vsel %vm398, %v1839, 0
      %v1965 = vsel %vm398, %v1840, 0
      %v1968 = vsel %vm398, %v1841, 0
      %v1971 = vsel %vm398, %v1842, 0
      %v1974 = vsel %vm398, %v1843, 0
      %v1977 = vsel %vm398, %v1844, 0
      %v1980 = vsel %vm398, %v1845, 0
      %v1983 = vsel %vm398, %v1846, 0
      %v1986 = vsel %vm398, %v1847, 0
      %v1989 = vsel %vm537, %v1849, 0
      %1991 = vmatprep.subr.mxu0 0.0
      %1992 = vmatpush1.msra.mxu0 0.0
      %1993 = vmatprep.subr.mxu0 0.0
      %1994 = vmatpush1.msra.mxu0 0.0
      %1995 = vmatprep.subr.mxu0 0.0
      %1996 = vmatpush1.msra.mxu0 0.0
      %1997 = vmatprep.subr.mxu0 0.0
      %1998 = vmatpush1.msra.mxu0 0.0
      %1999 = vmatprep.subr.mxu0 0.0
      %2000 = vmatpush1.msra.mxu0 0.0
      %2001 = vmatprep.subr.mxu0 0.0
      %2002 = vmatpush1.msra.mxu0 0.0
      %2003 = vmatprep.subr.mxu0 0.0
      %2004 = vmatpush1.msra.mxu0 0.0
      %2005 = vmatprep.subr.mxu0 0.0
      %2006 = vmatpush1.msra.mxu0 0.0
      %2007 = vmatprep.subr.mxu0 0.0
      %2008 = vmatpush1.msra.mxu0 0.0
      %2009 = vmatprep.subr.mxu0 0.0
      %2010 = vmatpush1.msra.mxu0 0.0
      %2011 = vmatprep.subr.mxu0 0.0
      %2012 = vmatpush1.msra.mxu0 0.0
      %2013 = vmatprep.subr.mxu0 0.0
      %2014 = vmatpush1.msra.mxu0 0.0
      %2015 = vmatprep.subr.mxu0 0.0
      %2016 = vmatpush1.msra.mxu0 0.0
      %2017 = vmatprep.subr.mxu0 0.0
      %2018 = vmatpush1.msra.mxu0 0.0
      %2019 = vmatprep.subr.mxu0 0.0
      %2020 = vmatpush1.msra.mxu0 0.0
      %2021 = vmatprep.subr.mxu0 0.0
      %2022 = vmatpush1.msra.mxu0 %v1989
      %2023 = vmatprep.subr.mxu0 0.0
      %2024 = vmatpush2.msra.mxu0 0.0
      %2025 = vmatprep.subr.mxu0 0.0
      %2026 = vmatpush2.msra.mxu0 0.0
      %2027 = vmatprep.subr.mxu0 0.0
      %2028 = vmatpush2.msra.mxu0 0.0
      %2029 = vmatprep.subr.mxu0 0.0
      %2030 = vmatpush2.msra.mxu0 0.0
      %2031 = vmatprep.subr.mxu0 0.0
      %2032 = vmatpush2.msra.mxu0 0.0
      %2033 = vmatprep.subr.mxu0 0.0
      %2034 = vmatpush2.msra.mxu0 0.0
      %2035 = vmatprep.subr.mxu0 0.0
      %2036 = vmatpush2.msra.mxu0 0.0
      %2037 = vmatprep.subr.mxu0 0.0
      %2038 = vmatpush2.msra.mxu0 0.0
      %2039 = vmatprep.subr.mxu0 0.0
      %2040 = vmatpush2.msra.mxu0 0.0
      %2041 = vmatprep.subr.mxu0 0.0
      %2042 = vmatpush2.msra.mxu0 0.0
      %2043 = vmatprep.subr.mxu0 0.0
      %2044 = vmatpush2.msra.mxu0 0.0
      %2045 = vmatprep.subr.mxu0 0.0
      %2046 = vmatpush2.msra.mxu0 0.0
      %2047 = vmatprep.subr.mxu0 0.0
      %2048 = vmatpush2.msra.mxu0 0.0
      %2049 = vmatprep.subr.mxu0 0.0
      %2050 = vmatpush2.msra.mxu0 0.0
      %2051 = vmatprep.subr.mxu0 0.0
      %2052 = vmatpush2.msra.mxu0 0.0
      %2053 = vmatprep.subr.mxu0 0.0
      %2054 = vmatpush2.msra.mxu0 0.0
      %2055 = vmatprep.mubr.f32.mxu0 0.0
      %2056 = vmatmul.mubr.f32.gmra.mxu0 %v1851
      %v2057 = vpop.f32.mrf.mxu0
      %v2058 = vadd.f32 0.0, %v2057
      %v2059 = vpop.f32.mrf.mxu0
      %2060 = vmatprep.mubr.f32.mxu0 0.0
      %2061 = vmatmul.mubr.f32.gmra.mxu0 %v1854
      %v2062 = vpop.f32.mrf.mxu0
      %v2063 = vadd.f32 0.0, %v2062
      %v2064 = vpop.f32.mrf.mxu0
      %2065 = vmatprep.mubr.f32.mxu0 0.0
      %2066 = vmatmul.mubr.f32.gmra.mxu0 %v1857
      %v2067 = vpop.f32.mrf.mxu0
      %v2068 = vadd.f32 0.0, %v2067
      %v2069 = vpop.f32.mrf.mxu0
      %2070 = vmatprep.mubr.f32.mxu0 0.0
      %2071 = vmatmul.mubr.f32.gmra.mxu0 %v1860
      %v2072 = vpop.f32.mrf.mxu0
      %v2073 = vadd.f32 0.0, %v2072
      %v2074 = vpop.f32.mrf.mxu0
      %2075 = vmatprep.mubr.f32.mxu0 0.0
      %2076 = vmatmul.mubr.f32.gmra.mxu0 %v1863
      %v2077 = vpop.f32.mrf.mxu0
      %v2078 = vadd.f32 0.0, %v2077
      %v2079 = vpop.f32.mrf.mxu0
      %2080 = vmatprep.mubr.f32.mxu0 0.0
      %2081 = vmatmul.mubr.f32.gmra.mxu0 %v1866
      %v2082 = vpop.f32.mrf.mxu0
      %v2083 = vadd.f32 0.0, %v2082
      %v2084 = vpop.f32.mrf.mxu0
      %2085 = vmatprep.mubr.f32.mxu0 0.0
      %2086 = vmatmul.mubr.f32.gmra.mxu0 %v1869
      %v2087 = vpop.f32.mrf.mxu0
      %v2088 = vadd.f32 0.0, %v2087
      %v2089 = vpop.f32.mrf.mxu0
      %2090 = vmatprep.mubr.f32.mxu0 0.0
      %2091 = vmatmul.mubr.f32.gmra.mxu0 %v1872
      %v2092 = vpop.f32.mrf.mxu0
      %v2093 = vadd.f32 0.0, %v2092
      %v2094 = vpop.f32.mrf.mxu0
      %2095 = vmatprep.mubr.f32.mxu0 0.0
      %2096 = vmatmul.mubr.f32.gmra.mxu0 %v1875
      %v2097 = vpop.f32.mrf.mxu0
      %v2098 = vadd.f32 0.0, %v2097
      %v2099 = vpop.f32.mrf.mxu0
      %2100 = vmatprep.mubr.f32.mxu0 0.0
      %2101 = vmatmul.mubr.f32.gmra.mxu0 %v1878
      %v2102 = vpop.f32.mrf.mxu0
      %v2103 = vadd.f32 0.0, %v2102
      %v2104 = vpop.f32.mrf.mxu0
      %2105 = vmatprep.mubr.f32.mxu0 0.0
      %2106 = vmatmul.mubr.f32.gmra.mxu0 %v1881
      %v2107 = vpop.f32.mrf.mxu0
      %v2108 = vadd.f32 0.0, %v2107
      %v2109 = vpop.f32.mrf.mxu0
      %2110 = vmatprep.mubr.f32.mxu0 0.0
      %2111 = vmatmul.mubr.f32.gmra.mxu0 %v1884
      %v2112 = vpop.f32.mrf.mxu0
      %v2113 = vadd.f32 0.0, %v2112
      %v2114 = vpop.f32.mrf.mxu0
      %2115 = vmatprep.mubr.f32.mxu0 0.0
      %2116 = vmatmul.mubr.f32.gmra.mxu0 %v1887
      %v2117 = vpop.f32.mrf.mxu0
      %v2118 = vadd.f32 0.0, %v2117
      %v2119 = vpop.f32.mrf.mxu0
      %2120 = vmatprep.mubr.f32.mxu0 0.0
      %2121 = vmatmul.mubr.f32.gmra.mxu0 %v1890
      %v2122 = vpop.f32.mrf.mxu0
      %v2123 = vadd.f32 0.0, %v2122
      %v2124 = vpop.f32.mrf.mxu0
      %2125 = vmatprep.mubr.f32.mxu0 0.0
      %2126 = vmatmul.mubr.f32.gmra.mxu0 %v1893
      %v2127 = vpop.f32.mrf.mxu0
      %v2128 = vadd.f32 0.0, %v2127
      %v2129 = vpop.f32.mrf.mxu0
      %2130 = vmatprep.mubr.f32.mxu0 0.0
      %2131 = vmatmul.mubr.f32.gmra.mxu0 %v1896
      %v2132 = vpop.f32.mrf.mxu0
      %v2133 = vadd.f32 0.0, %v2132
      %v2134 = vpop.f32.mrf.mxu0
      %2135 = vmatprep.mubr.f32.mxu0 0.0
      %2136 = vmatmul.mubr.f32.gmra.mxu0 %v1899
      %v2137 = vpop.f32.mrf.mxu0
      %v2138 = vadd.f32 0.0, %v2137
      %v2139 = vpop.f32.mrf.mxu0
      %2140 = vmatprep.mubr.f32.mxu0 0.0
      %2141 = vmatmul.mubr.f32.gmra.mxu0 %v1902
      %v2142 = vpop.f32.mrf.mxu0
      %v2143 = vadd.f32 0.0, %v2142
      %v2144 = vpop.f32.mrf.mxu0
      %2145 = vmatprep.mubr.f32.mxu0 0.0
      %2146 = vmatmul.mubr.f32.gmra.mxu0 %v1905
      %v2147 = vpop.f32.mrf.mxu0
      %v2148 = vadd.f32 0.0, %v2147
      %v2149 = vpop.f32.mrf.mxu0
      %2150 = vmatprep.mubr.f32.mxu0 0.0
      %2151 = vmatmul.mubr.f32.gmra.mxu0 %v1908
      %v2152 = vpop.f32.mrf.mxu0
      %v2153 = vadd.f32 0.0, %v2152
      %v2154 = vpop.f32.mrf.mxu0
      %2155 = vmatprep.mubr.f32.mxu0 0.0
      %2156 = vmatmul.mubr.f32.gmra.mxu0 %v1911
      %v2157 = vpop.f32.mrf.mxu0
      %v2158 = vadd.f32 0.0, %v2157
      %v2159 = vpop.f32.mrf.mxu0
      %2160 = vmatprep.mubr.f32.mxu0 0.0
      %2161 = vmatmul.mubr.f32.gmra.mxu0 %v1914
      %v2162 = vpop.f32.mrf.mxu0
      %v2163 = vadd.f32 0.0, %v2162
      %v2164 = vpop.f32.mrf.mxu0
      %2165 = vmatprep.mubr.f32.mxu0 0.0
      %2166 = vmatmul.mubr.f32.gmra.mxu0 %v1917
      %v2167 = vpop.f32.mrf.mxu0
      %v2168 = vadd.f32 0.0, %v2167
      %v2169 = vpop.f32.mrf.mxu0
      %2170 = vmatprep.mubr.f32.mxu0 0.0
      %2171 = vmatmul.mubr.f32.gmra.mxu0 %v1920
      %v2172 = vpop.f32.mrf.mxu0
      %v2173 = vadd.f32 0.0, %v2172
      %v2174 = vpop.f32.mrf.mxu0
      %2175 = vmatprep.mubr.f32.mxu0 0.0
      %2176 = vmatmul.mubr.f32.gmra.mxu0 %v1923
      %v2177 = vpop.f32.mrf.mxu0
      %v2178 = vadd.f32 0.0, %v2177
      %v2179 = vpop.f32.mrf.mxu0
      %2180 = vmatprep.mubr.f32.mxu0 0.0
      %2181 = vmatmul.mubr.f32.gmra.mxu0 %v1926
      %v2182 = vpop.f32.mrf.mxu0
      %v2183 = vadd.f32 0.0, %v2182
      %v2184 = vpop.f32.mrf.mxu0
      %2185 = vmatprep.mubr.f32.mxu0 0.0
      %2186 = vmatmul.mubr.f32.gmra.mxu0 %v1929
      %v2187 = vpop.f32.mrf.mxu0
      %v2188 = vadd.f32 0.0, %v2187
      %v2189 = vpop.f32.mrf.mxu0
      %2190 = vmatprep.mubr.f32.mxu0 0.0
      %2191 = vmatmul.mubr.f32.gmra.mxu0 %v1932
      %v2192 = vpop.f32.mrf.mxu0
      %v2193 = vadd.f32 0.0, %v2192
      %v2194 = vpop.f32.mrf.mxu0
      %2195 = vmatprep.mubr.f32.mxu0 0.0
      %2196 = vmatmul.mubr.f32.gmra.mxu0 %v1935
      %v2197 = vpop.f32.mrf.mxu0
      %v2198 = vadd.f32 0.0, %v2197
      %v2199 = vpop.f32.mrf.mxu0
      %2200 = vmatprep.mubr.f32.mxu0 0.0
      %2201 = vmatmul.mubr.f32.gmra.mxu0 %v1938
      %v2202 = vpop.f32.mrf.mxu0
      %v2203 = vadd.f32 0.0, %v2202
      %v2204 = vpop.f32.mrf.mxu0
      %2205 = vmatprep.mubr.f32.mxu0 0.0
      %2206 = vmatmul.mubr.f32.gmra.mxu0 %v1941
      %v2207 = vpop.f32.mrf.mxu0
      %v2208 = vadd.f32 0.0, %v2207
      %v2209 = vpop.f32.mrf.mxu0
      %2210 = vmatprep.mubr.f32.mxu0 0.0
      %2211 = vmatmul.mubr.f32.gmra.mxu0 %v1944
      %v2212 = vpop.f32.mrf.mxu0
      %v2213 = vadd.f32 0.0, %v2212
      %v2214 = vpop.f32.mrf.mxu0
      %2215 = vmatprep.mubr.f32.mxu0 0.0
      %2216 = vmatmul.mubr.f32.gmra.mxu0 %v1947
      %v2217 = vpop.f32.mrf.mxu0
      %v2218 = vadd.f32 0.0, %v2217
      %v2219 = vpop.f32.mrf.mxu0
      %2220 = vmatprep.mubr.f32.mxu0 0.0
      %2221 = vmatmul.mubr.f32.gmra.mxu0 %v1950
      %v2222 = vpop.f32.mrf.mxu0
      %v2223 = vadd.f32 0.0, %v2222
      %v2224 = vpop.f32.mrf.mxu0
      %2225 = vmatprep.mubr.f32.mxu0 0.0
      %2226 = vmatmul.mubr.f32.gmra.mxu0 %v1953
      %v2227 = vpop.f32.mrf.mxu0
      %v2228 = vadd.f32 0.0, %v2227
      %v2229 = vpop.f32.mrf.mxu0
      %2230 = vmatprep.mubr.f32.mxu0 0.0
      %2231 = vmatmul.mubr.f32.gmra.mxu0 %v1956
      %v2232 = vpop.f32.mrf.mxu0
      %v2233 = vadd.f32 0.0, %v2232
      %v2234 = vpop.f32.mrf.mxu0
      %2235 = vmatprep.mubr.f32.mxu0 0.0
      %2236 = vmatmul.mubr.f32.gmra.mxu0 %v1959
      %v2237 = vpop.f32.mrf.mxu0
      %v2238 = vadd.f32 0.0, %v2237
      %v2239 = vpop.f32.mrf.mxu0
      %2240 = vmatprep.mubr.f32.mxu0 0.0
      %2241 = vmatmul.mubr.f32.gmra.mxu0 %v1962
      %v2242 = vpop.f32.mrf.mxu0
      %v2243 = vadd.f32 0.0, %v2242
      %v2244 = vpop.f32.mrf.mxu0
      %2245 = vmatprep.mubr.f32.mxu0 0.0
      %2246 = vmatmul.mubr.f32.gmra.mxu0 %v1965
      %v2247 = vpop.f32.mrf.mxu0
      %v2248 = vadd.f32 0.0, %v2247
      %v2249 = vpop.f32.mrf.mxu0
      %2250 = vmatprep.mubr.f32.mxu0 0.0
      %2251 = vmatmul.mubr.f32.gmra.mxu0 %v1968
      %v2252 = vpop.f32.mrf.mxu0
      %v2253 = vadd.f32 0.0, %v2252
      %v2254 = vpop.f32.mrf.mxu0
      %2255 = vmatprep.mubr.f32.mxu0 0.0
      %2256 = vmatmul.mubr.f32.gmra.mxu0 %v1971
      %v2257 = vpop.f32.mrf.mxu0
      %v2258 = vadd.f32 0.0, %v2257
      %v2259 = vpop.f32.mrf.mxu0
      %2260 = vmatprep.mubr.f32.mxu0 0.0
      %2261 = vmatmul.mubr.f32.gmra.mxu0 %v1974
      %v2262 = vpop.f32.mrf.mxu0
      %v2263 = vadd.f32 0.0, %v2262
      %v2264 = vpop.f32.mrf.mxu0
      %2265 = vmatprep.mubr.f32.mxu0 0.0
      %2266 = vmatmul.mubr.f32.gmra.mxu0 %v1977
      %v2267 = vpop.f32.mrf.mxu0
      %v2268 = vadd.f32 0.0, %v2267
      %v2269 = vpop.f32.mrf.mxu0
      %2270 = vmatprep.mubr.f32.mxu0 0.0
      %2271 = vmatmul.mubr.f32.gmra.mxu0 %v1980
      %v2272 = vpop.f32.mrf.mxu0
      %v2273 = vadd.f32 0.0, %v2272
      %v2274 = vpop.f32.mrf.mxu0
      %2275 = vmatprep.mubr.f32.mxu0 0.0
      %2276 = vmatmul.mubr.f32.gmra.mxu0 %v1983
      %v2277 = vpop.f32.mrf.mxu0
      %v2278 = vadd.f32 0.0, %v2277
      %v2279 = vpop.f32.mrf.mxu0
      %2280 = vmatprep.mubr.f32.mxu0 0.0
      %2281 = vmatmul.mubr.f32.gmra.mxu0 %v1986
      %v2282 = vpop.f32.mrf.mxu0
      %v2283 = vadd.f32 0.0, %v2282
      %v2284 = vpop.f32.mrf.mxu0
      %2285 = vdwg.mxu0
      %v2286 = vadd.f32 %v1756, %v2058
      %v2287 = vadd.f32 %v1757, %v2063
      %v2288 = vadd.f32 %v1758, %v2068
      %v2289 = vadd.f32 %v1759, %v2073
      %v2290 = vadd.f32 %v1760, %v2078
      %v2291 = vadd.f32 %v1761, %v2083
      %v2292 = vadd.f32 %v1762, %v2088
      %v2293 = vadd.f32 %v1763, %v2093
      %v2294 = vadd.f32 %v1764, %v2098
      %v2295 = vadd.f32 %v1765, %v2103
      %v2296 = vadd.f32 %v1766, %v2108
      %v2297 = vadd.f32 %v1767, %v2113
      %v2298 = vadd.f32 %v1768, %v2118
      %v2299 = vadd.f32 %v1769, %v2123
      %v2300 = vadd.f32 %v1770, %v2128
      %v2301 = vadd.f32 %v1771, %v2133
      %v2302 = vadd.f32 %v1772, %v2138
      %v2303 = vadd.f32 %v1773, %v2143
      %v2304 = vadd.f32 %v1774, %v2148
      %v2305 = vadd.f32 %v1775, %v2153
      %v2306 = vadd.f32 %v1776, %v2158
      %v2307 = vadd.f32 %v1777, %v2163
      %v2308 = vadd.f32 %v1778, %v2168
      %v2309 = vadd.f32 %v1779, %v2173
      %v2310 = vadd.f32 %v1780, %v2178
      %v2311 = vadd.f32 %v1781, %v2183
      %v2312 = vadd.f32 %v1782, %v2188
      %v2313 = vadd.f32 %v1783, %v2193
      %v2314 = vadd.f32 %v1784, %v2198
      %v2315 = vadd.f32 %v1785, %v2203
      %v2316 = vadd.f32 %v1786, %v2208
      %v2317 = vadd.f32 %v1787, %v2213
      %v2318 = vadd.f32 %v1788, %v2218
      %v2319 = vadd.f32 %v1789, %v2223
      %v2320 = vadd.f32 %v1790, %v2228
      %v2321 = vadd.f32 %v1791, %v2233
      %v2322 = vadd.f32 %v1792, %v2238
      %v2323 = vadd.f32 %v1793, %v2243
      %v2324 = vadd.f32 %v1794, %v2248
      %v2325 = vadd.f32 %v1795, %v2253
      %v2326 = vadd.f32 %v1796, %v2258
      %v2327 = vadd.f32 %v1797, %v2263
      %v2328 = vadd.f32 %v1798, %v2268
      %v2329 = vadd.f32 %v1799, %v2273
      %v2330 = vadd.f32 %v1800, %v2278
      %v2331 = vadd.f32 %v1801, %v2283
      %v2332 = vld [vmem:[%s287 + $0x15] sm:$0xff]
      %v2333 = vld [vmem:[%s287 + $0x1d] sm:$0xff]
      %v2334 = vld [vmem:[%s287 + $0x25] sm:$0xff]
      %v2335 = vld [vmem:[%s287 + $0x2d] sm:$0xff]
      %v2336 = vld [vmem:[%s287 + $0x35] sm:$0xff]
      %v2337 = vld [vmem:[%s287 + $0x3d] sm:$0xff]
      %v2338 = vld [vmem:[%s287 + $0x45] sm:$0xff]
      %v2339 = vld [vmem:[%s287 + $0x4d] sm:$0xff]
      %v2340 = vld [vmem:[%s287 + $0x55] sm:$0xff]
      %v2341 = vld [vmem:[%s287 + $0x5d] sm:$0xff]
      %v2342 = vld [vmem:[%s287 + $0x65] sm:$0xff]
      %v2343 = vld [vmem:[%s287 + $0x6d] sm:$0xff]
      %v2344 = vld [vmem:[%s287 + $0x75] sm:$0xff]
      %v2345 = vld [vmem:[%s287 + $0x7d] sm:$0xff]
      %v2346 = vld [vmem:[%s287 + $0x85] sm:$0xff]
      %v2347 = vld [vmem:[%s287 + $0x8d] sm:$0xff]
      %v2348 = vld [vmem:[%s287 + $0x95] sm:$0xff]
      %v2349 = vld [vmem:[%s287 + $0x9d] sm:$0xff]
      %v2350 = vld [vmem:[%s287 + $0xa5] sm:$0xff]
      %v2351 = vld [vmem:[%s287 + $0xad] sm:$0xff]
      %v2352 = vld [vmem:[%s287 + $0xb5] sm:$0xff]
      %v2353 = vld [vmem:[%s287 + $0xbd] sm:$0xff]
      %v2354 = vld [vmem:[%s287 + $0xc5] sm:$0xff]
      %v2355 = vld [vmem:[%s287 + $0xcd] sm:$0xff]
      %v2356 = vld [vmem:[%s287 + $0xd5] sm:$0xff]
      %v2357 = vld [vmem:[%s287 + $0xdd] sm:$0xff]
      %v2358 = vld [vmem:[%s287 + $0xe5] sm:$0xff]
      %v2359 = vld [vmem:[%s287 + $0xed] sm:$0xff]
      %v2360 = vld [vmem:[%s287 + $0xf5] sm:$0xff]
      %v2361 = vld [vmem:[%s287 + $0xfd] sm:$0xff]
      %v2362 = vld [vmem:[%s287 + $0x105] sm:$0xff]
      %v2363 = vld [vmem:[%s287 + $0x10d] sm:$0xff]
      %v2364 = vld [vmem:[%s287 + $0x115] sm:$0xff]
      %v2365 = vld [vmem:[%s287 + $0x11d] sm:$0xff]
      %v2366 = vld [vmem:[%s287 + $0x125] sm:$0xff]
      %v2367 = vld [vmem:[%s287 + $0x12d] sm:$0xff]
      %v2368 = vld [vmem:[%s287 + $0x135] sm:$0xff]
      %v2369 = vld [vmem:[%s287 + $0x13d] sm:$0xff]
      %v2370 = vld [vmem:[%s287 + $0x145] sm:$0xff]
      %v2371 = vld [vmem:[%s287 + $0x14d] sm:$0xff]
      %v2372 = vld [vmem:[%s287 + $0x155] sm:$0xff]
      %v2373 = vld [vmem:[%s287 + $0x15d] sm:$0xff]
      %v2374 = vld [vmem:[%s287 + $0x165] sm:$0xff]
      %v2375 = vld [vmem:[%s287 + $0x16d] sm:$0xff]
      %v2376 = vld [vmem:[%s287 + $0x175] sm:$0xff]
      %v2377 = vld [vmem:[%s287 + $0x17d] sm:$0xff]
      %s2378 = scalar_lea.vmem %s1, 16
      %v2379 = vld [vmem:[%s2378] sm:$0xf]
      %v2381 = vsel %vm398, %v2332, 0
      %v2384 = vsel %vm398, %v2333, 0
      %v2387 = vsel %vm398, %v2334, 0
      %v2390 = vsel %vm398, %v2335, 0
      %v2393 = vsel %vm398, %v2336, 0
      %v2396 = vsel %vm398, %v2337, 0
      %v2399 = vsel %vm398, %v2338, 0
      %v2402 = vsel %vm398, %v2339, 0
      %v2405 = vsel %vm398, %v2340, 0
      %v2408 = vsel %vm398, %v2341, 0
      %v2411 = vsel %vm398, %v2342, 0
      %v2414 = vsel %vm398, %v2343, 0
      %v2417 = vsel %vm398, %v2344, 0
      %v2420 = vsel %vm398, %v2345, 0
      %v2423 = vsel %vm398, %v2346, 0
      %v2426 = vsel %vm398, %v2347, 0
      %v2429 = vsel %vm398, %v2348, 0
      %v2432 = vsel %vm398, %v2349, 0
      %v2435 = vsel %vm398, %v2350, 0
      %v2438 = vsel %vm398, %v2351, 0
      %v2441 = vsel %vm398, %v2352, 0
      %v2444 = vsel %vm398, %v2353, 0
      %v2447 = vsel %vm398, %v2354, 0
      %v2450 = vsel %vm398, %v2355, 0
      %v2453 = vsel %vm398, %v2356, 0
      %v2456 = vsel %vm398, %v2357, 0
      %v2459 = vsel %vm398, %v2358, 0
      %v2462 = vsel %vm398, %v2359, 0
      %v2465 = vsel %vm398, %v2360, 0
      %v2468 = vsel %vm398, %v2361, 0
      %v2471 = vsel %vm398, %v2362, 0
      %v2474 = vsel %vm398, %v2363, 0
      %v2477 = vsel %vm398, %v2364, 0
      %v2480 = vsel %vm398, %v2365, 0
      %v2483 = vsel %vm398, %v2366, 0
      %v2486 = vsel %vm398, %v2367, 0
      %v2489 = vsel %vm398, %v2368, 0
      %v2492 = vsel %vm398, %v2369, 0
      %v2495 = vsel %vm398, %v2370, 0
      %v2498 = vsel %vm398, %v2371, 0
      %v2501 = vsel %vm398, %v2372, 0
      %v2504 = vsel %vm398, %v2373, 0
      %v2507 = vsel %vm398, %v2374, 0
      %v2510 = vsel %vm398, %v2375, 0
      %v2513 = vsel %vm398, %v2376, 0
      %v2516 = vsel %vm398, %v2377, 0
      %v2519 = vsel %vm537, %v2379, 0
      %2521 = vmatprep.subr.mxu0 0.0
      %2522 = vmatpush1.msra.mxu0 0.0
      %2523 = vmatprep.subr.mxu0 0.0
      %2524 = vmatpush1.msra.mxu0 0.0
      %2525 = vmatprep.subr.mxu0 0.0
      %2526 = vmatpush1.msra.mxu0 0.0
      %2527 = vmatprep.subr.mxu0 0.0
      %2528 = vmatpush1.msra.mxu0 0.0
      %2529 = vmatprep.subr.mxu0 0.0
      %2530 = vmatpush1.msra.mxu0 0.0
      %2531 = vmatprep.subr.mxu0 0.0
      %2532 = vmatpush1.msra.mxu0 0.0
      %2533 = vmatprep.subr.mxu0 0.0
      %2534 = vmatpush1.msra.mxu0 0.0
      %2535 = vmatprep.subr.mxu0 0.0
      %2536 = vmatpush1.msra.mxu0 0.0
      %2537 = vmatprep.subr.mxu0 0.0
      %2538 = vmatpush1.msra.mxu0 0.0
      %2539 = vmatprep.subr.mxu0 0.0
      %2540 = vmatpush1.msra.mxu0 0.0
      %2541 = vmatprep.subr.mxu0 0.0
      %2542 = vmatpush1.msra.mxu0 0.0
      %2543 = vmatprep.subr.mxu0 0.0
      %2544 = vmatpush1.msra.mxu0 0.0
      %2545 = vmatprep.subr.mxu0 0.0
      %2546 = vmatpush1.msra.mxu0 0.0
      %2547 = vmatprep.subr.mxu0 0.0
      %2548 = vmatpush1.msra.mxu0 0.0
      %2549 = vmatprep.subr.mxu0 0.0
      %2550 = vmatpush1.msra.mxu0 0.0
      %2551 = vmatprep.subr.mxu0 0.0
      %2552 = vmatpush1.msra.mxu0 %v2519
      %2553 = vmatprep.subr.mxu0 0.0
      %2554 = vmatpush2.msra.mxu0 0.0
      %2555 = vmatprep.subr.mxu0 0.0
      %2556 = vmatpush2.msra.mxu0 0.0
      %2557 = vmatprep.subr.mxu0 0.0
      %2558 = vmatpush2.msra.mxu0 0.0
      %2559 = vmatprep.subr.mxu0 0.0
      %2560 = vmatpush2.msra.mxu0 0.0
      %2561 = vmatprep.subr.mxu0 0.0
      %2562 = vmatpush2.msra.mxu0 0.0
      %2563 = vmatprep.subr.mxu0 0.0
      %2564 = vmatpush2.msra.mxu0 0.0
      %2565 = vmatprep.subr.mxu0 0.0
      %2566 = vmatpush2.msra.mxu0 0.0
      %2567 = vmatprep.subr.mxu0 0.0
      %2568 = vmatpush2.msra.mxu0 0.0
      %2569 = vmatprep.subr.mxu0 0.0
      %2570 = vmatpush2.msra.mxu0 0.0
      %2571 = vmatprep.subr.mxu0 0.0
      %2572 = vmatpush2.msra.mxu0 0.0
      %2573 = vmatprep.subr.mxu0 0.0
      %2574 = vmatpush2.msra.mxu0 0.0
      %2575 = vmatprep.subr.mxu0 0.0
      %2576 = vmatpush2.msra.mxu0 0.0
      %2577 = vmatprep.subr.mxu0 0.0
      %2578 = vmatpush2.msra.mxu0 0.0
      %2579 = vmatprep.subr.mxu0 0.0
      %2580 = vmatpush2.msra.mxu0 0.0
      %2581 = vmatprep.subr.mxu0 0.0
      %2582 = vmatpush2.msra.mxu0 0.0
      %2583 = vmatprep.subr.mxu0 0.0
      %2584 = vmatpush2.msra.mxu0 0.0
      %2585 = vmatprep.mubr.f32.mxu0 0.0
      %2586 = vmatmul.mubr.f32.gmra.mxu0 %v2381
      %v2587 = vpop.f32.mrf.mxu0
      %v2588 = vadd.f32 0.0, %v2587
      %v2589 = vpop.f32.mrf.mxu0
      %2590 = vmatprep.mubr.f32.mxu0 0.0
      %2591 = vmatmul.mubr.f32.gmra.mxu0 %v2384
      %v2592 = vpop.f32.mrf.mxu0
      %v2593 = vadd.f32 0.0, %v2592
      %v2594 = vpop.f32.mrf.mxu0
      %2595 = vmatprep.mubr.f32.mxu0 0.0
      %2596 = vmatmul.mubr.f32.gmra.mxu0 %v2387
      %v2597 = vpop.f32.mrf.mxu0
      %v2598 = vadd.f32 0.0, %v2597
      %v2599 = vpop.f32.mrf.mxu0
      %2600 = vmatprep.mubr.f32.mxu0 0.0
      %2601 = vmatmul.mubr.f32.gmra.mxu0 %v2390
      %v2602 = vpop.f32.mrf.mxu0
      %v2603 = vadd.f32 0.0, %v2602
      %v2604 = vpop.f32.mrf.mxu0
      %2605 = vmatprep.mubr.f32.mxu0 0.0
      %2606 = vmatmul.mubr.f32.gmra.mxu0 %v2393
      %v2607 = vpop.f32.mrf.mxu0
      %v2608 = vadd.f32 0.0, %v2607
      %v2609 = vpop.f32.mrf.mxu0
      %2610 = vmatprep.mubr.f32.mxu0 0.0
      %2611 = vmatmul.mubr.f32.gmra.mxu0 %v2396
      %v2612 = vpop.f32.mrf.mxu0
      %v2613 = vadd.f32 0.0, %v2612
      %v2614 = vpop.f32.mrf.mxu0
      %2615 = vmatprep.mubr.f32.mxu0 0.0
      %2616 = vmatmul.mubr.f32.gmra.mxu0 %v2399
      %v2617 = vpop.f32.mrf.mxu0
      %v2618 = vadd.f32 0.0, %v2617
      %v2619 = vpop.f32.mrf.mxu0
      %2620 = vmatprep.mubr.f32.mxu0 0.0
      %2621 = vmatmul.mubr.f32.gmra.mxu0 %v2402
      %v2622 = vpop.f32.mrf.mxu0
      %v2623 = vadd.f32 0.0, %v2622
      %v2624 = vpop.f32.mrf.mxu0
      %2625 = vmatprep.mubr.f32.mxu0 0.0
      %2626 = vmatmul.mubr.f32.gmra.mxu0 %v2405
      %v2627 = vpop.f32.mrf.mxu0
      %v2628 = vadd.f32 0.0, %v2627
      %v2629 = vpop.f32.mrf.mxu0
      %2630 = vmatprep.mubr.f32.mxu0 0.0
      %2631 = vmatmul.mubr.f32.gmra.mxu0 %v2408
      %v2632 = vpop.f32.mrf.mxu0
      %v2633 = vadd.f32 0.0, %v2632
      %v2634 = vpop.f32.mrf.mxu0
      %2635 = vmatprep.mubr.f32.mxu0 0.0
      %2636 = vmatmul.mubr.f32.gmra.mxu0 %v2411
      %v2637 = vpop.f32.mrf.mxu0
      %v2638 = vadd.f32 0.0, %v2637
      %v2639 = vpop.f32.mrf.mxu0
      %2640 = vmatprep.mubr.f32.mxu0 0.0
      %2641 = vmatmul.mubr.f32.gmra.mxu0 %v2414
      %v2642 = vpop.f32.mrf.mxu0
      %v2643 = vadd.f32 0.0, %v2642
      %v2644 = vpop.f32.mrf.mxu0
      %2645 = vmatprep.mubr.f32.mxu0 0.0
      %2646 = vmatmul.mubr.f32.gmra.mxu0 %v2417
      %v2647 = vpop.f32.mrf.mxu0
      %v2648 = vadd.f32 0.0, %v2647
      %v2649 = vpop.f32.mrf.mxu0
      %2650 = vmatprep.mubr.f32.mxu0 0.0
      %2651 = vmatmul.mubr.f32.gmra.mxu0 %v2420
      %v2652 = vpop.f32.mrf.mxu0
      %v2653 = vadd.f32 0.0, %v2652
      %v2654 = vpop.f32.mrf.mxu0
      %2655 = vmatprep.mubr.f32.mxu0 0.0
      %2656 = vmatmul.mubr.f32.gmra.mxu0 %v2423
      %v2657 = vpop.f32.mrf.mxu0
      %v2658 = vadd.f32 0.0, %v2657
      %v2659 = vpop.f32.mrf.mxu0
      %2660 = vmatprep.mubr.f32.mxu0 0.0
      %2661 = vmatmul.mubr.f32.gmra.mxu0 %v2426
      %v2662 = vpop.f32.mrf.mxu0
      %v2663 = vadd.f32 0.0, %v2662
      %v2664 = vpop.f32.mrf.mxu0
      %2665 = vmatprep.mubr.f32.mxu0 0.0
      %2666 = vmatmul.mubr.f32.gmra.mxu0 %v2429
      %v2667 = vpop.f32.mrf.mxu0
      %v2668 = vadd.f32 0.0, %v2667
      %v2669 = vpop.f32.mrf.mxu0
      %2670 = vmatprep.mubr.f32.mxu0 0.0
      %2671 = vmatmul.mubr.f32.gmra.mxu0 %v2432
      %v2672 = vpop.f32.mrf.mxu0
      %v2673 = vadd.f32 0.0, %v2672
      %v2674 = vpop.f32.mrf.mxu0
      %2675 = vmatprep.mubr.f32.mxu0 0.0
      %2676 = vmatmul.mubr.f32.gmra.mxu0 %v2435
      %v2677 = vpop.f32.mrf.mxu0
      %v2678 = vadd.f32 0.0, %v2677
      %v2679 = vpop.f32.mrf.mxu0
      %2680 = vmatprep.mubr.f32.mxu0 0.0
      %2681 = vmatmul.mubr.f32.gmra.mxu0 %v2438
      %v2682 = vpop.f32.mrf.mxu0
      %v2683 = vadd.f32 0.0, %v2682
      %v2684 = vpop.f32.mrf.mxu0
      %2685 = vmatprep.mubr.f32.mxu0 0.0
      %2686 = vmatmul.mubr.f32.gmra.mxu0 %v2441
      %v2687 = vpop.f32.mrf.mxu0
      %v2688 = vadd.f32 0.0, %v2687
      %v2689 = vpop.f32.mrf.mxu0
      %2690 = vmatprep.mubr.f32.mxu0 0.0
      %2691 = vmatmul.mubr.f32.gmra.mxu0 %v2444
      %v2692 = vpop.f32.mrf.mxu0
      %v2693 = vadd.f32 0.0, %v2692
      %v2694 = vpop.f32.mrf.mxu0
      %2695 = vmatprep.mubr.f32.mxu0 0.0
      %2696 = vmatmul.mubr.f32.gmra.mxu0 %v2447
      %v2697 = vpop.f32.mrf.mxu0
      %v2698 = vadd.f32 0.0, %v2697
      %v2699 = vpop.f32.mrf.mxu0
      %2700 = vmatprep.mubr.f32.mxu0 0.0
      %2701 = vmatmul.mubr.f32.gmra.mxu0 %v2450
      %v2702 = vpop.f32.mrf.mxu0
      %v2703 = vadd.f32 0.0, %v2702
      %v2704 = vpop.f32.mrf.mxu0
      %2705 = vmatprep.mubr.f32.mxu0 0.0
      %2706 = vmatmul.mubr.f32.gmra.mxu0 %v2453
      %v2707 = vpop.f32.mrf.mxu0
      %v2708 = vadd.f32 0.0, %v2707
      %v2709 = vpop.f32.mrf.mxu0
      %2710 = vmatprep.mubr.f32.mxu0 0.0
      %2711 = vmatmul.mubr.f32.gmra.mxu0 %v2456
      %v2712 = vpop.f32.mrf.mxu0
      %v2713 = vadd.f32 0.0, %v2712
      %v2714 = vpop.f32.mrf.mxu0
      %2715 = vmatprep.mubr.f32.mxu0 0.0
      %2716 = vmatmul.mubr.f32.gmra.mxu0 %v2459
      %v2717 = vpop.f32.mrf.mxu0
      %v2718 = vadd.f32 0.0, %v2717
      %v2719 = vpop.f32.mrf.mxu0
      %2720 = vmatprep.mubr.f32.mxu0 0.0
      %2721 = vmatmul.mubr.f32.gmra.mxu0 %v2462
      %v2722 = vpop.f32.mrf.mxu0
      %v2723 = vadd.f32 0.0, %v2722
      %v2724 = vpop.f32.mrf.mxu0
      %2725 = vmatprep.mubr.f32.mxu0 0.0
      %2726 = vmatmul.mubr.f32.gmra.mxu0 %v2465
      %v2727 = vpop.f32.mrf.mxu0
      %v2728 = vadd.f32 0.0, %v2727
      %v2729 = vpop.f32.mrf.mxu0
      %2730 = vmatprep.mubr.f32.mxu0 0.0
      %2731 = vmatmul.mubr.f32.gmra.mxu0 %v2468
      %v2732 = vpop.f32.mrf.mxu0
      %v2733 = vadd.f32 0.0, %v2732
      %v2734 = vpop.f32.mrf.mxu0
      %2735 = vmatprep.mubr.f32.mxu0 0.0
      %2736 = vmatmul.mubr.f32.gmra.mxu0 %v2471
      %v2737 = vpop.f32.mrf.mxu0
      %v2738 = vadd.f32 0.0, %v2737
      %v2739 = vpop.f32.mrf.mxu0
      %2740 = vmatprep.mubr.f32.mxu0 0.0
      %2741 = vmatmul.mubr.f32.gmra.mxu0 %v2474
      %v2742 = vpop.f32.mrf.mxu0
      %v2743 = vadd.f32 0.0, %v2742
      %v2744 = vpop.f32.mrf.mxu0
      %2745 = vmatprep.mubr.f32.mxu0 0.0
      %2746 = vmatmul.mubr.f32.gmra.mxu0 %v2477
      %v2747 = vpop.f32.mrf.mxu0
      %v2748 = vadd.f32 0.0, %v2747
      %v2749 = vpop.f32.mrf.mxu0
      %2750 = vmatprep.mubr.f32.mxu0 0.0
      %2751 = vmatmul.mubr.f32.gmra.mxu0 %v2480
      %v2752 = vpop.f32.mrf.mxu0
      %v2753 = vadd.f32 0.0, %v2752
      %v2754 = vpop.f32.mrf.mxu0
      %2755 = vmatprep.mubr.f32.mxu0 0.0
      %2756 = vmatmul.mubr.f32.gmra.mxu0 %v2483
      %v2757 = vpop.f32.mrf.mxu0
      %v2758 = vadd.f32 0.0, %v2757
      %v2759 = vpop.f32.mrf.mxu0
      %2760 = vmatprep.mubr.f32.mxu0 0.0
      %2761 = vmatmul.mubr.f32.gmra.mxu0 %v2486
      %v2762 = vpop.f32.mrf.mxu0
      %v2763 = vadd.f32 0.0, %v2762
      %v2764 = vpop.f32.mrf.mxu0
      %2765 = vmatprep.mubr.f32.mxu0 0.0
      %2766 = vmatmul.mubr.f32.gmra.mxu0 %v2489
      %v2767 = vpop.f32.mrf.mxu0
      %v2768 = vadd.f32 0.0, %v2767
      %v2769 = vpop.f32.mrf.mxu0
      %2770 = vmatprep.mubr.f32.mxu0 0.0
      %2771 = vmatmul.mubr.f32.gmra.mxu0 %v2492
      %v2772 = vpop.f32.mrf.mxu0
      %v2773 = vadd.f32 0.0, %v2772
      %v2774 = vpop.f32.mrf.mxu0
      %2775 = vmatprep.mubr.f32.mxu0 0.0
      %2776 = vmatmul.mubr.f32.gmra.mxu0 %v2495
      %v2777 = vpop.f32.mrf.mxu0
      %v2778 = vadd.f32 0.0, %v2777
      %v2779 = vpop.f32.mrf.mxu0
      %2780 = vmatprep.mubr.f32.mxu0 0.0
      %2781 = vmatmul.mubr.f32.gmra.mxu0 %v2498
      %v2782 = vpop.f32.mrf.mxu0
      %v2783 = vadd.f32 0.0, %v2782
      %v2784 = vpop.f32.mrf.mxu0
      %2785 = vmatprep.mubr.f32.mxu0 0.0
      %2786 = vmatmul.mubr.f32.gmra.mxu0 %v2501
      %v2787 = vpop.f32.mrf.mxu0
      %v2788 = vadd.f32 0.0, %v2787
      %v2789 = vpop.f32.mrf.mxu0
      %2790 = vmatprep.mubr.f32.mxu0 0.0
      %2791 = vmatmul.mubr.f32.gmra.mxu0 %v2504
      %v2792 = vpop.f32.mrf.mxu0
      %v2793 = vadd.f32 0.0, %v2792
      %v2794 = vpop.f32.mrf.mxu0
      %2795 = vmatprep.mubr.f32.mxu0 0.0
      %2796 = vmatmul.mubr.f32.gmra.mxu0 %v2507
      %v2797 = vpop.f32.mrf.mxu0
      %v2798 = vadd.f32 0.0, %v2797
      %v2799 = vpop.f32.mrf.mxu0
      %2800 = vmatprep.mubr.f32.mxu0 0.0
      %2801 = vmatmul.mubr.f32.gmra.mxu0 %v2510
      %v2802 = vpop.f32.mrf.mxu0
      %v2803 = vadd.f32 0.0, %v2802
      %v2804 = vpop.f32.mrf.mxu0
      %2805 = vmatprep.mubr.f32.mxu0 0.0
      %2806 = vmatmul.mubr.f32.gmra.mxu0 %v2513
      %v2807 = vpop.f32.mrf.mxu0
      %v2808 = vadd.f32 0.0, %v2807
      %v2809 = vpop.f32.mrf.mxu0
      %2810 = vmatprep.mubr.f32.mxu0 0.0
      %2811 = vmatmul.mubr.f32.gmra.mxu0 %v2516
      %v2812 = vpop.f32.mrf.mxu0
      %v2813 = vadd.f32 0.0, %v2812
      %v2814 = vpop.f32.mrf.mxu0
      %2815 = vdwg.mxu0
      %v2816 = vadd.f32 %v2286, %v2588
      %v2817 = vadd.f32 %v2287, %v2593
      %v2818 = vadd.f32 %v2288, %v2598
      %v2819 = vadd.f32 %v2289, %v2603
      %v2820 = vadd.f32 %v2290, %v2608
      %v2821 = vadd.f32 %v2291, %v2613
      %v2822 = vadd.f32 %v2292, %v2618
      %v2823 = vadd.f32 %v2293, %v2623
      %v2824 = vadd.f32 %v2294, %v2628
      %v2825 = vadd.f32 %v2295, %v2633
      %v2826 = vadd.f32 %v2296, %v2638
      %v2827 = vadd.f32 %v2297, %v2643
      %v2828 = vadd.f32 %v2298, %v2648
      %v2829 = vadd.f32 %v2299, %v2653
      %v2830 = vadd.f32 %v2300, %v2658
      %v2831 = vadd.f32 %v2301, %v2663
      %v2832 = vadd.f32 %v2302, %v2668
      %v2833 = vadd.f32 %v2303, %v2673
      %v2834 = vadd.f32 %v2304, %v2678
      %v2835 = vadd.f32 %v2305, %v2683
      %v2836 = vadd.f32 %v2306, %v2688
      %v2837 = vadd.f32 %v2307, %v2693
      %v2838 = vadd.f32 %v2308, %v2698
      %v2839 = vadd.f32 %v2309, %v2703
      %v2840 = vadd.f32 %v2310, %v2708
      %v2841 = vadd.f32 %v2311, %v2713
      %v2842 = vadd.f32 %v2312, %v2718
      %v2843 = vadd.f32 %v2313, %v2723
      %v2844 = vadd.f32 %v2314, %v2728
      %v2845 = vadd.f32 %v2315, %v2733
      %v2846 = vadd.f32 %v2316, %v2738
      %v2847 = vadd.f32 %v2317, %v2743
      %v2848 = vadd.f32 %v2318, %v2748
      %v2849 = vadd.f32 %v2319, %v2753
      %v2850 = vadd.f32 %v2320, %v2758
      %v2851 = vadd.f32 %v2321, %v2763
      %v2852 = vadd.f32 %v2322, %v2768
      %v2853 = vadd.f32 %v2323, %v2773
      %v2854 = vadd.f32 %v2324, %v2778
      %v2855 = vadd.f32 %v2325, %v2783
      %v2856 = vadd.f32 %v2326, %v2788
      %v2857 = vadd.f32 %v2327, %v2793
      %v2858 = vadd.f32 %v2328, %v2798
      %v2859 = vadd.f32 %v2329, %v2803
      %v2860 = vadd.f32 %v2330, %v2808
      %v2861 = vadd.f32 %v2331, %v2813
      %v2862 = vld [vmem:[%s287 + $0x16] sm:$0xff]
      %v2863 = vld [vmem:[%s287 + $0x1e] sm:$0xff]
      %v2864 = vld [vmem:[%s287 + $0x26] sm:$0xff]
      %v2865 = vld [vmem:[%s287 + $0x2e] sm:$0xff]
      %v2866 = vld [vmem:[%s287 + $0x36] sm:$0xff]
      %v2867 = vld [vmem:[%s287 + $0x3e] sm:$0xff]
      %v2868 = vld [vmem:[%s287 + $0x46] sm:$0xff]
      %v2869 = vld [vmem:[%s287 + $0x4e] sm:$0xff]
      %v2870 = vld [vmem:[%s287 + $0x56] sm:$0xff]
      %v2871 = vld [vmem:[%s287 + $0x5e] sm:$0xff]
      %v2872 = vld [vmem:[%s287 + $0x66] sm:$0xff]
      %v2873 = vld [vmem:[%s287 + $0x6e] sm:$0xff]
      %v2874 = vld [vmem:[%s287 + $0x76] sm:$0xff]
      %v2875 = vld [vmem:[%s287 + $0x7e] sm:$0xff]
      %v2876 = vld [vmem:[%s287 + $0x86] sm:$0xff]
      %v2877 = vld [vmem:[%s287 + $0x8e] sm:$0xff]
      %v2878 = vld [vmem:[%s287 + $0x96] sm:$0xff]
      %v2879 = vld [vmem:[%s287 + $0x9e] sm:$0xff]
      %v2880 = vld [vmem:[%s287 + $0xa6] sm:$0xff]
      %v2881 = vld [vmem:[%s287 + $0xae] sm:$0xff]
      %v2882 = vld [vmem:[%s287 + $0xb6] sm:$0xff]
      %v2883 = vld [vmem:[%s287 + $0xbe] sm:$0xff]
      %v2884 = vld [vmem:[%s287 + $0xc6] sm:$0xff]
      %v2885 = vld [vmem:[%s287 + $0xce] sm:$0xff]
      %v2886 = vld [vmem:[%s287 + $0xd6] sm:$0xff]
      %v2887 = vld [vmem:[%s287 + $0xde] sm:$0xff]
      %v2888 = vld [vmem:[%s287 + $0xe6] sm:$0xff]
      %v2889 = vld [vmem:[%s287 + $0xee] sm:$0xff]
      %v2890 = vld [vmem:[%s287 + $0xf6] sm:$0xff]
      %v2891 = vld [vmem:[%s287 + $0xfe] sm:$0xff]
      %v2892 = vld [vmem:[%s287 + $0x106] sm:$0xff]
      %v2893 = vld [vmem:[%s287 + $0x10e] sm:$0xff]
      %v2894 = vld [vmem:[%s287 + $0x116] sm:$0xff]
      %v2895 = vld [vmem:[%s287 + $0x11e] sm:$0xff]
      %v2896 = vld [vmem:[%s287 + $0x126] sm:$0xff]
      %v2897 = vld [vmem:[%s287 + $0x12e] sm:$0xff]
      %v2898 = vld [vmem:[%s287 + $0x136] sm:$0xff]
      %v2899 = vld [vmem:[%s287 + $0x13e] sm:$0xff]
      %v2900 = vld [vmem:[%s287 + $0x146] sm:$0xff]
      %v2901 = vld [vmem:[%s287 + $0x14e] sm:$0xff]
      %v2902 = vld [vmem:[%s287 + $0x156] sm:$0xff]
      %v2903 = vld [vmem:[%s287 + $0x15e] sm:$0xff]
      %v2904 = vld [vmem:[%s287 + $0x166] sm:$0xff]
      %v2905 = vld [vmem:[%s287 + $0x16e] sm:$0xff]
      %v2906 = vld [vmem:[%s287 + $0x176] sm:$0xff]
      %v2907 = vld [vmem:[%s287 + $0x17e] sm:$0xff]
      %s2908 = scalar_lea.vmem %s1, 20
      %v2909 = vld [vmem:[%s2908] sm:$0xf]
      %v2911 = vsel %vm398, %v2862, 0
      %v2914 = vsel %vm398, %v2863, 0
      %v2917 = vsel %vm398, %v2864, 0
      %v2920 = vsel %vm398, %v2865, 0
      %v2923 = vsel %vm398, %v2866, 0
      %v2926 = vsel %vm398, %v2867, 0
      %v2929 = vsel %vm398, %v2868, 0
      %v2932 = vsel %vm398, %v2869, 0
      %v2935 = vsel %vm398, %v2870, 0
      %v2938 = vsel %vm398, %v2871, 0
      %v2941 = vsel %vm398, %v2872, 0
      %v2944 = vsel %vm398, %v2873, 0
      %v2947 = vsel %vm398, %v2874, 0
      %v2950 = vsel %vm398, %v2875, 0
      %v2953 = vsel %vm398, %v2876, 0
      %v2956 = vsel %vm398, %v2877, 0
      %v2959 = vsel %vm398, %v2878, 0
      %v2962 = vsel %vm398, %v2879, 0
      %v2965 = vsel %vm398, %v2880, 0
      %v2968 = vsel %vm398, %v2881, 0
      %v2971 = vsel %vm398, %v2882, 0
      %v2974 = vsel %vm398, %v2883, 0
      %v2977 = vsel %vm398, %v2884, 0
      %v2980 = vsel %vm398, %v2885, 0
      %v2983 = vsel %vm398, %v2886, 0
      %v2986 = vsel %vm398, %v2887, 0
      %v2989 = vsel %vm398, %v2888, 0
      %v2992 = vsel %vm398, %v2889, 0
      %v2995 = vsel %vm398, %v2890, 0
      %v2998 = vsel %vm398, %v2891, 0
      %v3001 = vsel %vm398, %v2892, 0
      %v3004 = vsel %vm398, %v2893, 0
      %v3007 = vsel %vm398, %v2894, 0
      %v3010 = vsel %vm398, %v2895, 0
      %v3013 = vsel %vm398, %v2896, 0
      %v3016 = vsel %vm398, %v2897, 0
      %v3019 = vsel %vm398, %v2898, 0
      %v3022 = vsel %vm398, %v2899, 0
      %v3025 = vsel %vm398, %v2900, 0
      %v3028 = vsel %vm398, %v2901, 0
      %v3031 = vsel %vm398, %v2902, 0
      %v3034 = vsel %vm398, %v2903, 0
      %v3037 = vsel %vm398, %v2904, 0
      %v3040 = vsel %vm398, %v2905, 0
      %v3043 = vsel %vm398, %v2906, 0
      %v3046 = vsel %vm398, %v2907, 0
      %v3049 = vsel %vm537, %v2909, 0
      %3051 = vmatprep.subr.mxu0 0.0
      %3052 = vmatpush1.msra.mxu0 0.0
      %3053 = vmatprep.subr.mxu0 0.0
      %3054 = vmatpush1.msra.mxu0 0.0
      %3055 = vmatprep.subr.mxu0 0.0
      %3056 = vmatpush1.msra.mxu0 0.0
      %3057 = vmatprep.subr.mxu0 0.0
      %3058 = vmatpush1.msra.mxu0 0.0
      %3059 = vmatprep.subr.mxu0 0.0
      %3060 = vmatpush1.msra.mxu0 0.0
      %3061 = vmatprep.subr.mxu0 0.0
      %3062 = vmatpush1.msra.mxu0 0.0
      %3063 = vmatprep.subr.mxu0 0.0
      %3064 = vmatpush1.msra.mxu0 0.0
      %3065 = vmatprep.subr.mxu0 0.0
      %3066 = vmatpush1.msra.mxu0 0.0
      %3067 = vmatprep.subr.mxu0 0.0
      %3068 = vmatpush1.msra.mxu0 0.0
      %3069 = vmatprep.subr.mxu0 0.0
      %3070 = vmatpush1.msra.mxu0 0.0
      %3071 = vmatprep.subr.mxu0 0.0
      %3072 = vmatpush1.msra.mxu0 0.0
      %3073 = vmatprep.subr.mxu0 0.0
      %3074 = vmatpush1.msra.mxu0 0.0
      %3075 = vmatprep.subr.mxu0 0.0
      %3076 = vmatpush1.msra.mxu0 0.0
      %3077 = vmatprep.subr.mxu0 0.0
      %3078 = vmatpush1.msra.mxu0 0.0
      %3079 = vmatprep.subr.mxu0 0.0
      %3080 = vmatpush1.msra.mxu0 0.0
      %3081 = vmatprep.subr.mxu0 0.0
      %3082 = vmatpush1.msra.mxu0 %v3049
      %3083 = vmatprep.subr.mxu0 0.0
      %3084 = vmatpush2.msra.mxu0 0.0
      %3085 = vmatprep.subr.mxu0 0.0
      %3086 = vmatpush2.msra.mxu0 0.0
      %3087 = vmatprep.subr.mxu0 0.0
      %3088 = vmatpush2.msra.mxu0 0.0
      %3089 = vmatprep.subr.mxu0 0.0
      %3090 = vmatpush2.msra.mxu0 0.0
      %3091 = vmatprep.subr.mxu0 0.0
      %3092 = vmatpush2.msra.mxu0 0.0
      %3093 = vmatprep.subr.mxu0 0.0
      %3094 = vmatpush2.msra.mxu0 0.0
      %3095 = vmatprep.subr.mxu0 0.0
      %3096 = vmatpush2.msra.mxu0 0.0
      %3097 = vmatprep.subr.mxu0 0.0
      %3098 = vmatpush2.msra.mxu0 0.0
      %3099 = vmatprep.subr.mxu0 0.0
      %3100 = vmatpush2.msra.mxu0 0.0
      %3101 = vmatprep.subr.mxu0 0.0
      %3102 = vmatpush2.msra.mxu0 0.0
      %3103 = vmatprep.subr.mxu0 0.0
      %3104 = vmatpush2.msra.mxu0 0.0
      %3105 = vmatprep.subr.mxu0 0.0
      %3106 = vmatpush2.msra.mxu0 0.0
      %3107 = vmatprep.subr.mxu0 0.0
      %3108 = vmatpush2.msra.mxu0 0.0
      %3109 = vmatprep.subr.mxu0 0.0
      %3110 = vmatpush2.msra.mxu0 0.0
      %3111 = vmatprep.subr.mxu0 0.0
      %3112 = vmatpush2.msra.mxu0 0.0
      %3113 = vmatprep.subr.mxu0 0.0
      %3114 = vmatpush2.msra.mxu0 0.0
      %3115 = vmatprep.mubr.f32.mxu0 0.0
      %3116 = vmatmul.mubr.f32.gmra.mxu0 %v2911
      %v3117 = vpop.f32.mrf.mxu0
      %v3118 = vadd.f32 0.0, %v3117
      %v3119 = vpop.f32.mrf.mxu0
      %3120 = vmatprep.mubr.f32.mxu0 0.0
      %3121 = vmatmul.mubr.f32.gmra.mxu0 %v2914
      %v3122 = vpop.f32.mrf.mxu0
      %v3123 = vadd.f32 0.0, %v3122
      %v3124 = vpop.f32.mrf.mxu0
      %3125 = vmatprep.mubr.f32.mxu0 0.0
      %3126 = vmatmul.mubr.f32.gmra.mxu0 %v2917
      %v3127 = vpop.f32.mrf.mxu0
      %v3128 = vadd.f32 0.0, %v3127
      %v3129 = vpop.f32.mrf.mxu0
      %3130 = vmatprep.mubr.f32.mxu0 0.0
      %3131 = vmatmul.mubr.f32.gmra.mxu0 %v2920
      %v3132 = vpop.f32.mrf.mxu0
      %v3133 = vadd.f32 0.0, %v3132
      %v3134 = vpop.f32.mrf.mxu0
      %3135 = vmatprep.mubr.f32.mxu0 0.0
      %3136 = vmatmul.mubr.f32.gmra.mxu0 %v2923
      %v3137 = vpop.f32.mrf.mxu0
      %v3138 = vadd.f32 0.0, %v3137
      %v3139 = vpop.f32.mrf.mxu0
      %3140 = vmatprep.mubr.f32.mxu0 0.0
      %3141 = vmatmul.mubr.f32.gmra.mxu0 %v2926
      %v3142 = vpop.f32.mrf.mxu0
      %v3143 = vadd.f32 0.0, %v3142
      %v3144 = vpop.f32.mrf.mxu0
      %3145 = vmatprep.mubr.f32.mxu0 0.0
      %3146 = vmatmul.mubr.f32.gmra.mxu0 %v2929
      %v3147 = vpop.f32.mrf.mxu0
      %v3148 = vadd.f32 0.0, %v3147
      %v3149 = vpop.f32.mrf.mxu0
      %3150 = vmatprep.mubr.f32.mxu0 0.0
      %3151 = vmatmul.mubr.f32.gmra.mxu0 %v2932
      %v3152 = vpop.f32.mrf.mxu0
      %v3153 = vadd.f32 0.0, %v3152
      %v3154 = vpop.f32.mrf.mxu0
      %3155 = vmatprep.mubr.f32.mxu0 0.0
      %3156 = vmatmul.mubr.f32.gmra.mxu0 %v2935
      %v3157 = vpop.f32.mrf.mxu0
      %v3158 = vadd.f32 0.0, %v3157
      %v3159 = vpop.f32.mrf.mxu0
      %3160 = vmatprep.mubr.f32.mxu0 0.0
      %3161 = vmatmul.mubr.f32.gmra.mxu0 %v2938
      %v3162 = vpop.f32.mrf.mxu0
      %v3163 = vadd.f32 0.0, %v3162
      %v3164 = vpop.f32.mrf.mxu0
      %3165 = vmatprep.mubr.f32.mxu0 0.0
      %3166 = vmatmul.mubr.f32.gmra.mxu0 %v2941
      %v3167 = vpop.f32.mrf.mxu0
      %v3168 = vadd.f32 0.0, %v3167
      %v3169 = vpop.f32.mrf.mxu0
      %3170 = vmatprep.mubr.f32.mxu0 0.0
      %3171 = vmatmul.mubr.f32.gmra.mxu0 %v2944
      %v3172 = vpop.f32.mrf.mxu0
      %v3173 = vadd.f32 0.0, %v3172
      %v3174 = vpop.f32.mrf.mxu0
      %3175 = vmatprep.mubr.f32.mxu0 0.0
      %3176 = vmatmul.mubr.f32.gmra.mxu0 %v2947
      %v3177 = vpop.f32.mrf.mxu0
      %v3178 = vadd.f32 0.0, %v3177
      %v3179 = vpop.f32.mrf.mxu0
      %3180 = vmatprep.mubr.f32.mxu0 0.0
      %3181 = vmatmul.mubr.f32.gmra.mxu0 %v2950
      %v3182 = vpop.f32.mrf.mxu0
      %v3183 = vadd.f32 0.0, %v3182
      %v3184 = vpop.f32.mrf.mxu0
      %3185 = vmatprep.mubr.f32.mxu0 0.0
      %3186 = vmatmul.mubr.f32.gmra.mxu0 %v2953
      %v3187 = vpop.f32.mrf.mxu0
      %v3188 = vadd.f32 0.0, %v3187
      %v3189 = vpop.f32.mrf.mxu0
      %3190 = vmatprep.mubr.f32.mxu0 0.0
      %3191 = vmatmul.mubr.f32.gmra.mxu0 %v2956
      %v3192 = vpop.f32.mrf.mxu0
      %v3193 = vadd.f32 0.0, %v3192
      %v3194 = vpop.f32.mrf.mxu0
      %3195 = vmatprep.mubr.f32.mxu0 0.0
      %3196 = vmatmul.mubr.f32.gmra.mxu0 %v2959
      %v3197 = vpop.f32.mrf.mxu0
      %v3198 = vadd.f32 0.0, %v3197
      %v3199 = vpop.f32.mrf.mxu0
      %3200 = vmatprep.mubr.f32.mxu0 0.0
      %3201 = vmatmul.mubr.f32.gmra.mxu0 %v2962
      %v3202 = vpop.f32.mrf.mxu0
      %v3203 = vadd.f32 0.0, %v3202
      %v3204 = vpop.f32.mrf.mxu0
      %3205 = vmatprep.mubr.f32.mxu0 0.0
      %3206 = vmatmul.mubr.f32.gmra.mxu0 %v2965
      %v3207 = vpop.f32.mrf.mxu0
      %v3208 = vadd.f32 0.0, %v3207
      %v3209 = vpop.f32.mrf.mxu0
      %3210 = vmatprep.mubr.f32.mxu0 0.0
      %3211 = vmatmul.mubr.f32.gmra.mxu0 %v2968
      %v3212 = vpop.f32.mrf.mxu0
      %v3213 = vadd.f32 0.0, %v3212
      %v3214 = vpop.f32.mrf.mxu0
      %3215 = vmatprep.mubr.f32.mxu0 0.0
      %3216 = vmatmul.mubr.f32.gmra.mxu0 %v2971
      %v3217 = vpop.f32.mrf.mxu0
      %v3218 = vadd.f32 0.0, %v3217
      %v3219 = vpop.f32.mrf.mxu0
      %3220 = vmatprep.mubr.f32.mxu0 0.0
      %3221 = vmatmul.mubr.f32.gmra.mxu0 %v2974
      %v3222 = vpop.f32.mrf.mxu0
      %v3223 = vadd.f32 0.0, %v3222
      %v3224 = vpop.f32.mrf.mxu0
      %3225 = vmatprep.mubr.f32.mxu0 0.0
      %3226 = vmatmul.mubr.f32.gmra.mxu0 %v2977
      %v3227 = vpop.f32.mrf.mxu0
      %v3228 = vadd.f32 0.0, %v3227
      %v3229 = vpop.f32.mrf.mxu0
      %3230 = vmatprep.mubr.f32.mxu0 0.0
      %3231 = vmatmul.mubr.f32.gmra.mxu0 %v2980
      %v3232 = vpop.f32.mrf.mxu0
      %v3233 = vadd.f32 0.0, %v3232
      %v3234 = vpop.f32.mrf.mxu0
      %3235 = vmatprep.mubr.f32.mxu0 0.0
      %3236 = vmatmul.mubr.f32.gmra.mxu0 %v2983
      %v3237 = vpop.f32.mrf.mxu0
      %v3238 = vadd.f32 0.0, %v3237
      %v3239 = vpop.f32.mrf.mxu0
      %3240 = vmatprep.mubr.f32.mxu0 0.0
      %3241 = vmatmul.mubr.f32.gmra.mxu0 %v2986
      %v3242 = vpop.f32.mrf.mxu0
      %v3243 = vadd.f32 0.0, %v3242
      %v3244 = vpop.f32.mrf.mxu0
      %3245 = vmatprep.mubr.f32.mxu0 0.0
      %3246 = vmatmul.mubr.f32.gmra.mxu0 %v2989
      %v3247 = vpop.f32.mrf.mxu0
      %v3248 = vadd.f32 0.0, %v3247
      %v3249 = vpop.f32.mrf.mxu0
      %3250 = vmatprep.mubr.f32.mxu0 0.0
      %3251 = vmatmul.mubr.f32.gmra.mxu0 %v2992
      %v3252 = vpop.f32.mrf.mxu0
      %v3253 = vadd.f32 0.0, %v3252
      %v3254 = vpop.f32.mrf.mxu0
      %3255 = vmatprep.mubr.f32.mxu0 0.0
      %3256 = vmatmul.mubr.f32.gmra.mxu0 %v2995
      %v3257 = vpop.f32.mrf.mxu0
      %v3258 = vadd.f32 0.0, %v3257
      %v3259 = vpop.f32.mrf.mxu0
      %3260 = vmatprep.mubr.f32.mxu0 0.0
      %3261 = vmatmul.mubr.f32.gmra.mxu0 %v2998
      %v3262 = vpop.f32.mrf.mxu0
      %v3263 = vadd.f32 0.0, %v3262
      %v3264 = vpop.f32.mrf.mxu0
      %3265 = vmatprep.mubr.f32.mxu0 0.0
      %3266 = vmatmul.mubr.f32.gmra.mxu0 %v3001
      %v3267 = vpop.f32.mrf.mxu0
      %v3268 = vadd.f32 0.0, %v3267
      %v3269 = vpop.f32.mrf.mxu0
      %3270 = vmatprep.mubr.f32.mxu0 0.0
      %3271 = vmatmul.mubr.f32.gmra.mxu0 %v3004
      %v3272 = vpop.f32.mrf.mxu0
      %v3273 = vadd.f32 0.0, %v3272
      %v3274 = vpop.f32.mrf.mxu0
      %3275 = vmatprep.mubr.f32.mxu0 0.0
      %3276 = vmatmul.mubr.f32.gmra.mxu0 %v3007
      %v3277 = vpop.f32.mrf.mxu0
      %v3278 = vadd.f32 0.0, %v3277
      %v3279 = vpop.f32.mrf.mxu0
      %3280 = vmatprep.mubr.f32.mxu0 0.0
      %3281 = vmatmul.mubr.f32.gmra.mxu0 %v3010
      %v3282 = vpop.f32.mrf.mxu0
      %v3283 = vadd.f32 0.0, %v3282
      %v3284 = vpop.f32.mrf.mxu0
      %3285 = vmatprep.mubr.f32.mxu0 0.0
      %3286 = vmatmul.mubr.f32.gmra.mxu0 %v3013
      %v3287 = vpop.f32.mrf.mxu0
      %v3288 = vadd.f32 0.0, %v3287
      %v3289 = vpop.f32.mrf.mxu0
      %3290 = vmatprep.mubr.f32.mxu0 0.0
      %3291 = vmatmul.mubr.f32.gmra.mxu0 %v3016
      %v3292 = vpop.f32.mrf.mxu0
      %v3293 = vadd.f32 0.0, %v3292
      %v3294 = vpop.f32.mrf.mxu0
      %3295 = vmatprep.mubr.f32.mxu0 0.0
      %3296 = vmatmul.mubr.f32.gmra.mxu0 %v3019
      %v3297 = vpop.f32.mrf.mxu0
      %v3298 = vadd.f32 0.0, %v3297
      %v3299 = vpop.f32.mrf.mxu0
      %3300 = vmatprep.mubr.f32.mxu0 0.0
      %3301 = vmatmul.mubr.f32.gmra.mxu0 %v3022
      %v3302 = vpop.f32.mrf.mxu0
      %v3303 = vadd.f32 0.0, %v3302
      %v3304 = vpop.f32.mrf.mxu0
      %3305 = vmatprep.mubr.f32.mxu0 0.0
      %3306 = vmatmul.mubr.f32.gmra.mxu0 %v3025
      %v3307 = vpop.f32.mrf.mxu0
      %v3308 = vadd.f32 0.0, %v3307
      %v3309 = vpop.f32.mrf.mxu0
      %3310 = vmatprep.mubr.f32.mxu0 0.0
      %3311 = vmatmul.mubr.f32.gmra.mxu0 %v3028
      %v3312 = vpop.f32.mrf.mxu0
      %v3313 = vadd.f32 0.0, %v3312
      %v3314 = vpop.f32.mrf.mxu0
      %3315 = vmatprep.mubr.f32.mxu0 0.0
      %3316 = vmatmul.mubr.f32.gmra.mxu0 %v3031
      %v3317 = vpop.f32.mrf.mxu0
      %v3318 = vadd.f32 0.0, %v3317
      %v3319 = vpop.f32.mrf.mxu0
      %3320 = vmatprep.mubr.f32.mxu0 0.0
      %3321 = vmatmul.mubr.f32.gmra.mxu0 %v3034
      %v3322 = vpop.f32.mrf.mxu0
      %v3323 = vadd.f32 0.0, %v3322
      %v3324 = vpop.f32.mrf.mxu0
      %3325 = vmatprep.mubr.f32.mxu0 0.0
      %3326 = vmatmul.mubr.f32.gmra.mxu0 %v3037
      %v3327 = vpop.f32.mrf.mxu0
      %v3328 = vadd.f32 0.0, %v3327
      %v3329 = vpop.f32.mrf.mxu0
      %3330 = vmatprep.mubr.f32.mxu0 0.0
      %3331 = vmatmul.mubr.f32.gmra.mxu0 %v3040
      %v3332 = vpop.f32.mrf.mxu0
      %v3333 = vadd.f32 0.0, %v3332
      %v3334 = vpop.f32.mrf.mxu0
      %3335 = vmatprep.mubr.f32.mxu0 0.0
      %3336 = vmatmul.mubr.f32.gmra.mxu0 %v3043
      %v3337 = vpop.f32.mrf.mxu0
      %v3338 = vadd.f32 0.0, %v3337
      %v3339 = vpop.f32.mrf.mxu0
      %3340 = vmatprep.mubr.f32.mxu0 0.0
      %3341 = vmatmul.mubr.f32.gmra.mxu0 %v3046
      %v3342 = vpop.f32.mrf.mxu0
      %v3343 = vadd.f32 0.0, %v3342
      %v3344 = vpop.f32.mrf.mxu0
      %3345 = vdwg.mxu0
      %v3346 = vadd.f32 %v2816, %v3118
      %v3347 = vadd.f32 %v2817, %v3123
      %v3348 = vadd.f32 %v2818, %v3128
      %v3349 = vadd.f32 %v2819, %v3133
      %v3350 = vadd.f32 %v2820, %v3138
      %v3351 = vadd.f32 %v2821, %v3143
      %v3352 = vadd.f32 %v2822, %v3148
      %v3353 = vadd.f32 %v2823, %v3153
      %v3354 = vadd.f32 %v2824, %v3158
      %v3355 = vadd.f32 %v2825, %v3163
      %v3356 = vadd.f32 %v2826, %v3168
      %v3357 = vadd.f32 %v2827, %v3173
      %v3358 = vadd.f32 %v2828, %v3178
      %v3359 = vadd.f32 %v2829, %v3183
      %v3360 = vadd.f32 %v2830, %v3188
      %v3361 = vadd.f32 %v2831, %v3193
      %v3362 = vadd.f32 %v2832, %v3198
      %v3363 = vadd.f32 %v2833, %v3203
      %v3364 = vadd.f32 %v2834, %v3208
      %v3365 = vadd.f32 %v2835, %v3213
      %v3366 = vadd.f32 %v2836, %v3218
      %v3367 = vadd.f32 %v2837, %v3223
      %v3368 = vadd.f32 %v2838, %v3228
      %v3369 = vadd.f32 %v2839, %v3233
      %v3370 = vadd.f32 %v2840, %v3238
      %v3371 = vadd.f32 %v2841, %v3243
      %v3372 = vadd.f32 %v2842, %v3248
      %v3373 = vadd.f32 %v2843, %v3253
      %v3374 = vadd.f32 %v2844, %v3258
      %v3375 = vadd.f32 %v2845, %v3263
      %v3376 = vadd.f32 %v2846, %v3268
      %v3377 = vadd.f32 %v2847, %v3273
      %v3378 = vadd.f32 %v2848, %v3278
      %v3379 = vadd.f32 %v2849, %v3283
      %v3380 = vadd.f32 %v2850, %v3288
      %v3381 = vadd.f32 %v2851, %v3293
      %v3382 = vadd.f32 %v2852, %v3298
      %v3383 = vadd.f32 %v2853, %v3303
      %v3384 = vadd.f32 %v2854, %v3308
      %v3385 = vadd.f32 %v2855, %v3313
      %v3386 = vadd.f32 %v2856, %v3318
      %v3387 = vadd.f32 %v2857, %v3323
      %v3388 = vadd.f32 %v2858, %v3328
      %v3389 = vadd.f32 %v2859, %v3333
      %v3390 = vadd.f32 %v2860, %v3338
      %v3391 = vadd.f32 %v2861, %v3343
      %v3392 = vld [vmem:[%s287 + $0x28] sm:$0xff]
      %v3393 = vld [vmem:[%s287 + $0x30] sm:$0xff]
      %v3394 = vld [vmem:[%s287 + $0x38] sm:$0xff]
      %v3395 = vld [vmem:[%s287 + $0x40] sm:$0xff]
      %v3396 = vld [vmem:[%s287 + $0x48] sm:$0xff]
      %v3397 = vld [vmem:[%s287 + $0x50] sm:$0xff]
      %v3398 = vld [vmem:[%s287 + $0x58] sm:$0xff]
      %v3399 = vld [vmem:[%s287 + $0x60] sm:$0xff]
      %v3400 = vld [vmem:[%s287 + $0x68] sm:$0xff]
      %v3401 = vld [vmem:[%s287 + $0x70] sm:$0xff]
      %v3402 = vld [vmem:[%s287 + $0x78] sm:$0xff]
      %v3403 = vld [vmem:[%s287 + $0x80] sm:$0xff]
      %v3404 = vld [vmem:[%s287 + $0x88] sm:$0xff]
      %v3405 = vld [vmem:[%s287 + $0x90] sm:$0xff]
      %v3406 = vld [vmem:[%s287 + $0x98] sm:$0xff]
      %v3407 = vld [vmem:[%s287 + $0xa0] sm:$0xff]
      %v3408 = vld [vmem:[%s287 + $0xa8] sm:$0xff]
      %v3409 = vld [vmem:[%s287 + $0xb0] sm:$0xff]
      %v3410 = vld [vmem:[%s287 + $0xb8] sm:$0xff]
      %v3411 = vld [vmem:[%s287 + $0xc0] sm:$0xff]
      %v3412 = vld [vmem:[%s287 + $0xc8] sm:$0xff]
      %v3413 = vld [vmem:[%s287 + $0xd0] sm:$0xff]
      %v3414 = vld [vmem:[%s287 + $0xd8] sm:$0xff]
      %v3415 = vld [vmem:[%s287 + $0xe0] sm:$0xff]
      %v3416 = vld [vmem:[%s287 + $0xe8] sm:$0xff]
      %v3417 = vld [vmem:[%s287 + $0xf0] sm:$0xff]
      %v3418 = vld [vmem:[%s287 + $0xf8] sm:$0xff]
      %v3419 = vld [vmem:[%s287 + $0x100] sm:$0xff]
      %v3420 = vld [vmem:[%s287 + $0x108] sm:$0xff]
      %v3421 = vld [vmem:[%s287 + $0x110] sm:$0xff]
      %v3422 = vld [vmem:[%s287 + $0x118] sm:$0xff]
      %v3423 = vld [vmem:[%s287 + $0x120] sm:$0xff]
      %v3424 = vld [vmem:[%s287 + $0x128] sm:$0xff]
      %v3425 = vld [vmem:[%s287 + $0x130] sm:$0xff]
      %v3426 = vld [vmem:[%s287 + $0x138] sm:$0xff]
      %v3427 = vld [vmem:[%s287 + $0x140] sm:$0xff]
      %v3428 = vld [vmem:[%s287 + $0x148] sm:$0xff]
      %v3429 = vld [vmem:[%s287 + $0x150] sm:$0xff]
      %v3430 = vld [vmem:[%s287 + $0x158] sm:$0xff]
      %v3431 = vld [vmem:[%s287 + $0x160] sm:$0xff]
      %v3432 = vld [vmem:[%s287 + $0x168] sm:$0xff]
      %v3433 = vld [vmem:[%s287 + $0x170] sm:$0xff]
      %v3434 = vld [vmem:[%s287 + $0x178] sm:$0xff]
      %v3435 = vld [vmem:[%s287 + $0x180] sm:$0xff]
      %v3436 = vld [vmem:[%s287 + $0x188] sm:$0xff]
      %v3437 = vld [vmem:[%s287 + $0x190] sm:$0xff]
      %s3438 = scalar_lea.vmem %s1, 24
      %v3439 = vld [vmem:[%s3438] sm:$0xf]
      %v3441 = vsel %vm398, %v3392, 0
      %v3444 = vsel %vm398, %v3393, 0
      %v3447 = vsel %vm398, %v3394, 0
      %v3450 = vsel %vm398, %v3395, 0
      %v3453 = vsel %vm398, %v3396, 0
      %v3456 = vsel %vm398, %v3397, 0
      %v3459 = vsel %vm398, %v3398, 0
      %v3462 = vsel %vm398, %v3399, 0
      %v3465 = vsel %vm398, %v3400, 0
      %v3468 = vsel %vm398, %v3401, 0
      %v3471 = vsel %vm398, %v3402, 0
      %v3474 = vsel %vm398, %v3403, 0
      %v3477 = vsel %vm398, %v3404, 0
      %v3480 = vsel %vm398, %v3405, 0
      %v3483 = vsel %vm398, %v3406, 0
      %v3486 = vsel %vm398, %v3407, 0
      %v3489 = vsel %vm398, %v3408, 0
      %v3492 = vsel %vm398, %v3409, 0
      %v3495 = vsel %vm398, %v3410, 0
      %v3498 = vsel %vm398, %v3411, 0
      %v3501 = vsel %vm398, %v3412, 0
      %v3504 = vsel %vm398, %v3413, 0
      %v3507 = vsel %vm398, %v3414, 0
      %v3510 = vsel %vm398, %v3415, 0
      %v3513 = vsel %vm398, %v3416, 0
      %v3516 = vsel %vm398, %v3417, 0
      %v3519 = vsel %vm398, %v3418, 0
      %v3522 = vsel %vm398, %v3419, 0
      %v3525 = vsel %vm398, %v3420, 0
      %v3528 = vsel %vm398, %v3421, 0
      %v3531 = vsel %vm398, %v3422, 0
      %v3534 = vsel %vm398, %v3423, 0
      %v3537 = vsel %vm398, %v3424, 0
      %v3540 = vsel %vm398, %v3425, 0
      %v3543 = vsel %vm398, %v3426, 0
      %v3546 = vsel %vm398, %v3427, 0
      %v3549 = vsel %vm398, %v3428, 0
      %v3552 = vsel %vm398, %v3429, 0
      %v3555 = vsel %vm398, %v3430, 0
      %v3558 = vsel %vm398, %v3431, 0
      %v3561 = vsel %vm398, %v3432, 0
      %v3564 = vsel %vm398, %v3433, 0
      %v3567 = vsel %vm398, %v3434, 0
      %v3570 = vsel %vm398, %v3435, 0
      %v3573 = vsel %vm398, %v3436, 0
      %v3576 = vsel %vm398, %v3437, 0
      %v3579 = vsel %vm537, %v3439, 0
      %3581 = vmatprep.subr.mxu0 0.0
      %3582 = vmatpush1.msra.mxu0 0.0
      %3583 = vmatprep.subr.mxu0 0.0
      %3584 = vmatpush1.msra.mxu0 0.0
      %3585 = vmatprep.subr.mxu0 0.0
      %3586 = vmatpush1.msra.mxu0 0.0
      %3587 = vmatprep.subr.mxu0 0.0
      %3588 = vmatpush1.msra.mxu0 0.0
      %3589 = vmatprep.subr.mxu0 0.0
      %3590 = vmatpush1.msra.mxu0 0.0
      %3591 = vmatprep.subr.mxu0 0.0
      %3592 = vmatpush1.msra.mxu0 0.0
      %3593 = vmatprep.subr.mxu0 0.0
      %3594 = vmatpush1.msra.mxu0 0.0
      %3595 = vmatprep.subr.mxu0 0.0
      %3596 = vmatpush1.msra.mxu0 0.0
      %3597 = vmatprep.subr.mxu0 0.0
      %3598 = vmatpush1.msra.mxu0 0.0
      %3599 = vmatprep.subr.mxu0 0.0
      %3600 = vmatpush1.msra.mxu0 0.0
      %3601 = vmatprep.subr.mxu0 0.0
      %3602 = vmatpush1.msra.mxu0 0.0
      %3603 = vmatprep.subr.mxu0 0.0
      %3604 = vmatpush1.msra.mxu0 0.0
      %3605 = vmatprep.subr.mxu0 0.0
      %3606 = vmatpush1.msra.mxu0 0.0
      %3607 = vmatprep.subr.mxu0 0.0
      %3608 = vmatpush1.msra.mxu0 0.0
      %3609 = vmatprep.subr.mxu0 0.0
      %3610 = vmatpush1.msra.mxu0 0.0
      %3611 = vmatprep.subr.mxu0 0.0
      %3612 = vmatpush1.msra.mxu0 %v3579
      %3613 = vmatprep.subr.mxu0 0.0
      %3614 = vmatpush2.msra.mxu0 0.0
      %3615 = vmatprep.subr.mxu0 0.0
      %3616 = vmatpush2.msra.mxu0 0.0
      %3617 = vmatprep.subr.mxu0 0.0
      %3618 = vmatpush2.msra.mxu0 0.0
      %3619 = vmatprep.subr.mxu0 0.0
      %3620 = vmatpush2.msra.mxu0 0.0
      %3621 = vmatprep.subr.mxu0 0.0
      %3622 = vmatpush2.msra.mxu0 0.0
      %3623 = vmatprep.subr.mxu0 0.0
      %3624 = vmatpush2.msra.mxu0 0.0
      %3625 = vmatprep.subr.mxu0 0.0
      %3626 = vmatpush2.msra.mxu0 0.0
      %3627 = vmatprep.subr.mxu0 0.0
      %3628 = vmatpush2.msra.mxu0 0.0
      %3629 = vmatprep.subr.mxu0 0.0
      %3630 = vmatpush2.msra.mxu0 0.0
      %3631 = vmatprep.subr.mxu0 0.0
      %3632 = vmatpush2.msra.mxu0 0.0
      %3633 = vmatprep.subr.mxu0 0.0
      %3634 = vmatpush2.msra.mxu0 0.0
      %3635 = vmatprep.subr.mxu0 0.0
      %3636 = vmatpush2.msra.mxu0 0.0
      %3637 = vmatprep.subr.mxu0 0.0
      %3638 = vmatpush2.msra.mxu0 0.0
      %3639 = vmatprep.subr.mxu0 0.0
      %3640 = vmatpush2.msra.mxu0 0.0
      %3641 = vmatprep.subr.mxu0 0.0
      %3642 = vmatpush2.msra.mxu0 0.0
      %3643 = vmatprep.subr.mxu0 0.0
      %3644 = vmatpush2.msra.mxu0 0.0
      %3645 = vmatprep.mubr.f32.mxu0 0.0
      %3646 = vmatmul.mubr.f32.gmra.mxu0 %v3441
      %v3647 = vpop.f32.mrf.mxu0
      %v3648 = vadd.f32 0.0, %v3647
      %v3649 = vpop.f32.mrf.mxu0
      %3650 = vmatprep.mubr.f32.mxu0 0.0
      %3651 = vmatmul.mubr.f32.gmra.mxu0 %v3444
      %v3652 = vpop.f32.mrf.mxu0
      %v3653 = vadd.f32 0.0, %v3652
      %v3654 = vpop.f32.mrf.mxu0
      %3655 = vmatprep.mubr.f32.mxu0 0.0
      %3656 = vmatmul.mubr.f32.gmra.mxu0 %v3447
      %v3657 = vpop.f32.mrf.mxu0
      %v3658 = vadd.f32 0.0, %v3657
      %v3659 = vpop.f32.mrf.mxu0
      %3660 = vmatprep.mubr.f32.mxu0 0.0
      %3661 = vmatmul.mubr.f32.gmra.mxu0 %v3450
      %v3662 = vpop.f32.mrf.mxu0
      %v3663 = vadd.f32 0.0, %v3662
      %v3664 = vpop.f32.mrf.mxu0
      %3665 = vmatprep.mubr.f32.mxu0 0.0
      %3666 = vmatmul.mubr.f32.gmra.mxu0 %v3453
      %v3667 = vpop.f32.mrf.mxu0
      %v3668 = vadd.f32 0.0, %v3667
      %v3669 = vpop.f32.mrf.mxu0
      %3670 = vmatprep.mubr.f32.mxu0 0.0
      %3671 = vmatmul.mubr.f32.gmra.mxu0 %v3456
      %v3672 = vpop.f32.mrf.mxu0
      %v3673 = vadd.f32 0.0, %v3672
      %v3674 = vpop.f32.mrf.mxu0
      %3675 = vmatprep.mubr.f32.mxu0 0.0
      %3676 = vmatmul.mubr.f32.gmra.mxu0 %v3459
      %v3677 = vpop.f32.mrf.mxu0
      %v3678 = vadd.f32 0.0, %v3677
      %v3679 = vpop.f32.mrf.mxu0
      %3680 = vmatprep.mubr.f32.mxu0 0.0
      %3681 = vmatmul.mubr.f32.gmra.mxu0 %v3462
      %v3682 = vpop.f32.mrf.mxu0
      %v3683 = vadd.f32 0.0, %v3682
      %v3684 = vpop.f32.mrf.mxu0
      %3685 = vmatprep.mubr.f32.mxu0 0.0
      %3686 = vmatmul.mubr.f32.gmra.mxu0 %v3465
      %v3687 = vpop.f32.mrf.mxu0
      %v3688 = vadd.f32 0.0, %v3687
      %v3689 = vpop.f32.mrf.mxu0
      %3690 = vmatprep.mubr.f32.mxu0 0.0
      %3691 = vmatmul.mubr.f32.gmra.mxu0 %v3468
      %v3692 = vpop.f32.mrf.mxu0
      %v3693 = vadd.f32 0.0, %v3692
      %v3694 = vpop.f32.mrf.mxu0
      %3695 = vmatprep.mubr.f32.mxu0 0.0
      %3696 = vmatmul.mubr.f32.gmra.mxu0 %v3471
      %v3697 = vpop.f32.mrf.mxu0
      %v3698 = vadd.f32 0.0, %v3697
      %v3699 = vpop.f32.mrf.mxu0
      %3700 = vmatprep.mubr.f32.mxu0 0.0
      %3701 = vmatmul.mubr.f32.gmra.mxu0 %v3474
      %v3702 = vpop.f32.mrf.mxu0
      %v3703 = vadd.f32 0.0, %v3702
      %v3704 = vpop.f32.mrf.mxu0
      %3705 = vmatprep.mubr.f32.mxu0 0.0
      %3706 = vmatmul.mubr.f32.gmra.mxu0 %v3477
      %v3707 = vpop.f32.mrf.mxu0
      %v3708 = vadd.f32 0.0, %v3707
      %v3709 = vpop.f32.mrf.mxu0
      %3710 = vmatprep.mubr.f32.mxu0 0.0
      %3711 = vmatmul.mubr.f32.gmra.mxu0 %v3480
      %v3712 = vpop.f32.mrf.mxu0
      %v3713 = vadd.f32 0.0, %v3712
      %v3714 = vpop.f32.mrf.mxu0
      %3715 = vmatprep.mubr.f32.mxu0 0.0
      %3716 = vmatmul.mubr.f32.gmra.mxu0 %v3483
      %v3717 = vpop.f32.mrf.mxu0
      %v3718 = vadd.f32 0.0, %v3717
      %v3719 = vpop.f32.mrf.mxu0
      %3720 = vmatprep.mubr.f32.mxu0 0.0
      %3721 = vmatmul.mubr.f32.gmra.mxu0 %v3486
      %v3722 = vpop.f32.mrf.mxu0
      %v3723 = vadd.f32 0.0, %v3722
      %v3724 = vpop.f32.mrf.mxu0
      %3725 = vmatprep.mubr.f32.mxu0 0.0
      %3726 = vmatmul.mubr.f32.gmra.mxu0 %v3489
      %v3727 = vpop.f32.mrf.mxu0
      %v3728 = vadd.f32 0.0, %v3727
      %v3729 = vpop.f32.mrf.mxu0
      %3730 = vmatprep.mubr.f32.mxu0 0.0
      %3731 = vmatmul.mubr.f32.gmra.mxu0 %v3492
      %v3732 = vpop.f32.mrf.mxu0
      %v3733 = vadd.f32 0.0, %v3732
      %v3734 = vpop.f32.mrf.mxu0
      %3735 = vmatprep.mubr.f32.mxu0 0.0
      %3736 = vmatmul.mubr.f32.gmra.mxu0 %v3495
      %v3737 = vpop.f32.mrf.mxu0
      %v3738 = vadd.f32 0.0, %v3737
      %v3739 = vpop.f32.mrf.mxu0
      %3740 = vmatprep.mubr.f32.mxu0 0.0
      %3741 = vmatmul.mubr.f32.gmra.mxu0 %v3498
      %v3742 = vpop.f32.mrf.mxu0
      %v3743 = vadd.f32 0.0, %v3742
      %v3744 = vpop.f32.mrf.mxu0
      %3745 = vmatprep.mubr.f32.mxu0 0.0
      %3746 = vmatmul.mubr.f32.gmra.mxu0 %v3501
      %v3747 = vpop.f32.mrf.mxu0
      %v3748 = vadd.f32 0.0, %v3747
      %v3749 = vpop.f32.mrf.mxu0
      %3750 = vmatprep.mubr.f32.mxu0 0.0
      %3751 = vmatmul.mubr.f32.gmra.mxu0 %v3504
      %v3752 = vpop.f32.mrf.mxu0
      %v3753 = vadd.f32 0.0, %v3752
      %v3754 = vpop.f32.mrf.mxu0
      %3755 = vmatprep.mubr.f32.mxu0 0.0
      %3756 = vmatmul.mubr.f32.gmra.mxu0 %v3507
      %v3757 = vpop.f32.mrf.mxu0
      %v3758 = vadd.f32 0.0, %v3757
      %v3759 = vpop.f32.mrf.mxu0
      %3760 = vmatprep.mubr.f32.mxu0 0.0
      %3761 = vmatmul.mubr.f32.gmra.mxu0 %v3510
      %v3762 = vpop.f32.mrf.mxu0
      %v3763 = vadd.f32 0.0, %v3762
      %v3764 = vpop.f32.mrf.mxu0
      %3765 = vmatprep.mubr.f32.mxu0 0.0
      %3766 = vmatmul.mubr.f32.gmra.mxu0 %v3513
      %v3767 = vpop.f32.mrf.mxu0
      %v3768 = vadd.f32 0.0, %v3767
      %v3769 = vpop.f32.mrf.mxu0
      %3770 = vmatprep.mubr.f32.mxu0 0.0
      %3771 = vmatmul.mubr.f32.gmra.mxu0 %v3516
      %v3772 = vpop.f32.mrf.mxu0
      %v3773 = vadd.f32 0.0, %v3772
      %v3774 = vpop.f32.mrf.mxu0
      %3775 = vmatprep.mubr.f32.mxu0 0.0
      %3776 = vmatmul.mubr.f32.gmra.mxu0 %v3519
      %v3777 = vpop.f32.mrf.mxu0
      %v3778 = vadd.f32 0.0, %v3777
      %v3779 = vpop.f32.mrf.mxu0
      %3780 = vmatprep.mubr.f32.mxu0 0.0
      %3781 = vmatmul.mubr.f32.gmra.mxu0 %v3522
      %v3782 = vpop.f32.mrf.mxu0
      %v3783 = vadd.f32 0.0, %v3782
      %v3784 = vpop.f32.mrf.mxu0
      %3785 = vmatprep.mubr.f32.mxu0 0.0
      %3786 = vmatmul.mubr.f32.gmra.mxu0 %v3525
      %v3787 = vpop.f32.mrf.mxu0
      %v3788 = vadd.f32 0.0, %v3787
      %v3789 = vpop.f32.mrf.mxu0
      %3790 = vmatprep.mubr.f32.mxu0 0.0
      %3791 = vmatmul.mubr.f32.gmra.mxu0 %v3528
      %v3792 = vpop.f32.mrf.mxu0
      %v3793 = vadd.f32 0.0, %v3792
      %v3794 = vpop.f32.mrf.mxu0
      %3795 = vmatprep.mubr.f32.mxu0 0.0
      %3796 = vmatmul.mubr.f32.gmra.mxu0 %v3531
      %v3797 = vpop.f32.mrf.mxu0
      %v3798 = vadd.f32 0.0, %v3797
      %v3799 = vpop.f32.mrf.mxu0
      %3800 = vmatprep.mubr.f32.mxu0 0.0
      %3801 = vmatmul.mubr.f32.gmra.mxu0 %v3534
      %v3802 = vpop.f32.mrf.mxu0
      %v3803 = vadd.f32 0.0, %v3802
      %v3804 = vpop.f32.mrf.mxu0
      %3805 = vmatprep.mubr.f32.mxu0 0.0
      %3806 = vmatmul.mubr.f32.gmra.mxu0 %v3537
      %v3807 = vpop.f32.mrf.mxu0
      %v3808 = vadd.f32 0.0, %v3807
      %v3809 = vpop.f32.mrf.mxu0
      %3810 = vmatprep.mubr.f32.mxu0 0.0
      %3811 = vmatmul.mubr.f32.gmra.mxu0 %v3540
      %v3812 = vpop.f32.mrf.mxu0
      %v3813 = vadd.f32 0.0, %v3812
      %v3814 = vpop.f32.mrf.mxu0
      %3815 = vmatprep.mubr.f32.mxu0 0.0
      %3816 = vmatmul.mubr.f32.gmra.mxu0 %v3543
      %v3817 = vpop.f32.mrf.mxu0
      %v3818 = vadd.f32 0.0, %v3817
      %v3819 = vpop.f32.mrf.mxu0
      %3820 = vmatprep.mubr.f32.mxu0 0.0
      %3821 = vmatmul.mubr.f32.gmra.mxu0 %v3546
      %v3822 = vpop.f32.mrf.mxu0
      %v3823 = vadd.f32 0.0, %v3822
      %v3824 = vpop.f32.mrf.mxu0
      %3825 = vmatprep.mubr.f32.mxu0 0.0
      %3826 = vmatmul.mubr.f32.gmra.mxu0 %v3549
      %v3827 = vpop.f32.mrf.mxu0
      %v3828 = vadd.f32 0.0, %v3827
      %v3829 = vpop.f32.mrf.mxu0
      %3830 = vmatprep.mubr.f32.mxu0 0.0
      %3831 = vmatmul.mubr.f32.gmra.mxu0 %v3552
      %v3832 = vpop.f32.mrf.mxu0
      %v3833 = vadd.f32 0.0, %v3832
      %v3834 = vpop.f32.mrf.mxu0
      %3835 = vmatprep.mubr.f32.mxu0 0.0
      %3836 = vmatmul.mubr.f32.gmra.mxu0 %v3555
      %v3837 = vpop.f32.mrf.mxu0
      %v3838 = vadd.f32 0.0, %v3837
      %v3839 = vpop.f32.mrf.mxu0
      %3840 = vmatprep.mubr.f32.mxu0 0.0
      %3841 = vmatmul.mubr.f32.gmra.mxu0 %v3558
      %v3842 = vpop.f32.mrf.mxu0
      %v3843 = vadd.f32 0.0, %v3842
      %v3844 = vpop.f32.mrf.mxu0
      %3845 = vmatprep.mubr.f32.mxu0 0.0
      %3846 = vmatmul.mubr.f32.gmra.mxu0 %v3561
      %v3847 = vpop.f32.mrf.mxu0
      %v3848 = vadd.f32 0.0, %v3847
      %v3849 = vpop.f32.mrf.mxu0
      %3850 = vmatprep.mubr.f32.mxu0 0.0
      %3851 = vmatmul.mubr.f32.gmra.mxu0 %v3564
      %v3852 = vpop.f32.mrf.mxu0
      %v3853 = vadd.f32 0.0, %v3852
      %v3854 = vpop.f32.mrf.mxu0
      %3855 = vmatprep.mubr.f32.mxu0 0.0
      %3856 = vmatmul.mubr.f32.gmra.mxu0 %v3567
      %v3857 = vpop.f32.mrf.mxu0
      %v3858 = vadd.f32 0.0, %v3857
      %v3859 = vpop.f32.mrf.mxu0
      %3860 = vmatprep.mubr.f32.mxu0 0.0
      %3861 = vmatmul.mubr.f32.gmra.mxu0 %v3570
      %v3862 = vpop.f32.mrf.mxu0
      %v3863 = vadd.f32 0.0, %v3862
      %v3864 = vpop.f32.mrf.mxu0
      %3865 = vmatprep.mubr.f32.mxu0 0.0
      %3866 = vmatmul.mubr.f32.gmra.mxu0 %v3573
      %v3867 = vpop.f32.mrf.mxu0
      %v3868 = vadd.f32 0.0, %v3867
      %v3869 = vpop.f32.mrf.mxu0
      %3870 = vmatprep.mubr.f32.mxu0 0.0
      %3871 = vmatmul.mubr.f32.gmra.mxu0 %v3576
      %v3872 = vpop.f32.mrf.mxu0
      %v3873 = vadd.f32 0.0, %v3872
      %v3874 = vpop.f32.mrf.mxu0
      %3875 = vdwg.mxu0
      %v3876 = vadd.f32 %v3346, %v3648
      %v3877 = vadd.f32 %v3347, %v3653
      %v3878 = vadd.f32 %v3348, %v3658
      %v3879 = vadd.f32 %v3349, %v3663
      %v3880 = vadd.f32 %v3350, %v3668
      %v3881 = vadd.f32 %v3351, %v3673
      %v3882 = vadd.f32 %v3352, %v3678
      %v3883 = vadd.f32 %v3353, %v3683
      %v3884 = vadd.f32 %v3354, %v3688
      %v3885 = vadd.f32 %v3355, %v3693
      %v3886 = vadd.f32 %v3356, %v3698
      %v3887 = vadd.f32 %v3357, %v3703
      %v3888 = vadd.f32 %v3358, %v3708
      %v3889 = vadd.f32 %v3359, %v3713
      %v3890 = vadd.f32 %v3360, %v3718
      %v3891 = vadd.f32 %v3361, %v3723
      %v3892 = vadd.f32 %v3362, %v3728
      %v3893 = vadd.f32 %v3363, %v3733
      %v3894 = vadd.f32 %v3364, %v3738
      %v3895 = vadd.f32 %v3365, %v3743
      %v3896 = vadd.f32 %v3366, %v3748
      %v3897 = vadd.f32 %v3367, %v3753
      %v3898 = vadd.f32 %v3368, %v3758
      %v3899 = vadd.f32 %v3369, %v3763
      %v3900 = vadd.f32 %v3370, %v3768
      %v3901 = vadd.f32 %v3371, %v3773
      %v3902 = vadd.f32 %v3372, %v3778
      %v3903 = vadd.f32 %v3373, %v3783
      %v3904 = vadd.f32 %v3374, %v3788
      %v3905 = vadd.f32 %v3375, %v3793
      %v3906 = vadd.f32 %v3376, %v3798
      %v3907 = vadd.f32 %v3377, %v3803
      %v3908 = vadd.f32 %v3378, %v3808
      %v3909 = vadd.f32 %v3379, %v3813
      %v3910 = vadd.f32 %v3380, %v3818
      %v3911 = vadd.f32 %v3381, %v3823
      %v3912 = vadd.f32 %v3382, %v3828
      %v3913 = vadd.f32 %v3383, %v3833
      %v3914 = vadd.f32 %v3384, %v3838
      %v3915 = vadd.f32 %v3385, %v3843
      %v3916 = vadd.f32 %v3386, %v3848
      %v3917 = vadd.f32 %v3387, %v3853
      %v3918 = vadd.f32 %v3388, %v3858
      %v3919 = vadd.f32 %v3389, %v3863
      %v3920 = vadd.f32 %v3390, %v3868
      %v3921 = vadd.f32 %v3391, %v3873
      %v3922 = vld [vmem:[%s287 + $0x29] sm:$0xff]
      %v3923 = vld [vmem:[%s287 + $0x31] sm:$0xff]
      %v3924 = vld [vmem:[%s287 + $0x39] sm:$0xff]
      %v3925 = vld [vmem:[%s287 + $0x41] sm:$0xff]
      %v3926 = vld [vmem:[%s287 + $0x49] sm:$0xff]
      %v3927 = vld [vmem:[%s287 + $0x51] sm:$0xff]
      %v3928 = vld [vmem:[%s287 + $0x59] sm:$0xff]
      %v3929 = vld [vmem:[%s287 + $0x61] sm:$0xff]
      %v3930 = vld [vmem:[%s287 + $0x69] sm:$0xff]
      %v3931 = vld [vmem:[%s287 + $0x71] sm:$0xff]
      %v3932 = vld [vmem:[%s287 + $0x79] sm:$0xff]
      %v3933 = vld [vmem:[%s287 + $0x81] sm:$0xff]
      %v3934 = vld [vmem:[%s287 + $0x89] sm:$0xff]
      %v3935 = vld [vmem:[%s287 + $0x91] sm:$0xff]
      %v3936 = vld [vmem:[%s287 + $0x99] sm:$0xff]
      %v3937 = vld [vmem:[%s287 + $0xa1] sm:$0xff]
      %v3938 = vld [vmem:[%s287 + $0xa9] sm:$0xff]
      %v3939 = vld [vmem:[%s287 + $0xb1] sm:$0xff]
      %v3940 = vld [vmem:[%s287 + $0xb9] sm:$0xff]
      %v3941 = vld [vmem:[%s287 + $0xc1] sm:$0xff]
      %v3942 = vld [vmem:[%s287 + $0xc9] sm:$0xff]
      %v3943 = vld [vmem:[%s287 + $0xd1] sm:$0xff]
      %v3944 = vld [vmem:[%s287 + $0xd9] sm:$0xff]
      %v3945 = vld [vmem:[%s287 + $0xe1] sm:$0xff]
      %v3946 = vld [vmem:[%s287 + $0xe9] sm:$0xff]
      %v3947 = vld [vmem:[%s287 + $0xf1] sm:$0xff]
      %v3948 = vld [vmem:[%s287 + $0xf9] sm:$0xff]
      %v3949 = vld [vmem:[%s287 + $0x101] sm:$0xff]
      %v3950 = vld [vmem:[%s287 + $0x109] sm:$0xff]
      %v3951 = vld [vmem:[%s287 + $0x111] sm:$0xff]
      %v3952 = vld [vmem:[%s287 + $0x119] sm:$0xff]
      %v3953 = vld [vmem:[%s287 + $0x121] sm:$0xff]
      %v3954 = vld [vmem:[%s287 + $0x129] sm:$0xff]
      %v3955 = vld [vmem:[%s287 + $0x131] sm:$0xff]
      %v3956 = vld [vmem:[%s287 + $0x139] sm:$0xff]
      %v3957 = vld [vmem:[%s287 + $0x141] sm:$0xff]
      %v3958 = vld [vmem:[%s287 + $0x149] sm:$0xff]
      %v3959 = vld [vmem:[%s287 + $0x151] sm:$0xff]
      %v3960 = vld [vmem:[%s287 + $0x159] sm:$0xff]
      %v3961 = vld [vmem:[%s287 + $0x161] sm:$0xff]
      %v3962 = vld [vmem:[%s287 + $0x169] sm:$0xff]
      %v3963 = vld [vmem:[%s287 + $0x171] sm:$0xff]
      %v3964 = vld [vmem:[%s287 + $0x179] sm:$0xff]
      %v3965 = vld [vmem:[%s287 + $0x181] sm:$0xff]
      %v3966 = vld [vmem:[%s287 + $0x189] sm:$0xff]
      %v3967 = vld [vmem:[%s287 + $0x191] sm:$0xff]
      %s3968 = scalar_lea.vmem %s1, 28
      %v3969 = vld [vmem:[%s3968] sm:$0xf]
      %v3971 = vsel %vm398, %v3922, 0
      %v3974 = vsel %vm398, %v3923, 0
      %v3977 = vsel %vm398, %v3924, 0
      %v3980 = vsel %vm398, %v3925, 0
      %v3983 = vsel %vm398, %v3926, 0
      %v3986 = vsel %vm398, %v3927, 0
      %v3989 = vsel %vm398, %v3928, 0
      %v3992 = vsel %vm398, %v3929, 0
      %v3995 = vsel %vm398, %v3930, 0
      %v3998 = vsel %vm398, %v3931, 0
      %v4001 = vsel %vm398, %v3932, 0
      %v4004 = vsel %vm398, %v3933, 0
      %v4007 = vsel %vm398, %v3934, 0
      %v4010 = vsel %vm398, %v3935, 0
      %v4013 = vsel %vm398, %v3936, 0
      %v4016 = vsel %vm398, %v3937, 0
      %v4019 = vsel %vm398, %v3938, 0
      %v4022 = vsel %vm398, %v3939, 0
      %v4025 = vsel %vm398, %v3940, 0
      %v4028 = vsel %vm398, %v3941, 0
      %v4031 = vsel %vm398, %v3942, 0
      %v4034 = vsel %vm398, %v3943, 0
      %v4037 = vsel %vm398, %v3944, 0
      %v4040 = vsel %vm398, %v3945, 0
      %v4043 = vsel %vm398, %v3946, 0
      %v4046 = vsel %vm398, %v3947, 0
      %v4049 = vsel %vm398, %v3948, 0
      %v4052 = vsel %vm398, %v3949, 0
      %v4055 = vsel %vm398, %v3950, 0
      %v4058 = vsel %vm398, %v3951, 0
      %v4061 = vsel %vm398, %v3952, 0
      %v4064 = vsel %vm398, %v3953, 0
      %v4067 = vsel %vm398, %v3954, 0
      %v4070 = vsel %vm398, %v3955, 0
      %v4073 = vsel %vm398, %v3956, 0
      %v4076 = vsel %vm398, %v3957, 0
      %v4079 = vsel %vm398, %v3958, 0
      %v4082 = vsel %vm398, %v3959, 0
      %v4085 = vsel %vm398, %v3960, 0
      %v4088 = vsel %vm398, %v3961, 0
      %v4091 = vsel %vm398, %v3962, 0
      %v4094 = vsel %vm398, %v3963, 0
      %v4097 = vsel %vm398, %v3964, 0
      %v4100 = vsel %vm398, %v3965, 0
      %v4103 = vsel %vm398, %v3966, 0
      %v4106 = vsel %vm398, %v3967, 0
      %v4109 = vsel %vm537, %v3969, 0
      %4111 = vmatprep.subr.mxu0 0.0
      %4112 = vmatpush1.msra.mxu0 0.0
      %4113 = vmatprep.subr.mxu0 0.0
      %4114 = vmatpush1.msra.mxu0 0.0
      %4115 = vmatprep.subr.mxu0 0.0
      %4116 = vmatpush1.msra.mxu0 0.0
      %4117 = vmatprep.subr.mxu0 0.0
      %4118 = vmatpush1.msra.mxu0 0.0
      %4119 = vmatprep.subr.mxu0 0.0
      %4120 = vmatpush1.msra.mxu0 0.0
      %4121 = vmatprep.subr.mxu0 0.0
      %4122 = vmatpush1.msra.mxu0 0.0
      %4123 = vmatprep.subr.mxu0 0.0
      %4124 = vmatpush1.msra.mxu0 0.0
      %4125 = vmatprep.subr.mxu0 0.0
      %4126 = vmatpush1.msra.mxu0 0.0
      %4127 = vmatprep.subr.mxu0 0.0
      %4128 = vmatpush1.msra.mxu0 0.0
      %4129 = vmatprep.subr.mxu0 0.0
      %4130 = vmatpush1.msra.mxu0 0.0
      %4131 = vmatprep.subr.mxu0 0.0
      %4132 = vmatpush1.msra.mxu0 0.0
      %4133 = vmatprep.subr.mxu0 0.0
      %4134 = vmatpush1.msra.mxu0 0.0
      %4135 = vmatprep.subr.mxu0 0.0
      %4136 = vmatpush1.msra.mxu0 0.0
      %4137 = vmatprep.subr.mxu0 0.0
      %4138 = vmatpush1.msra.mxu0 0.0
      %4139 = vmatprep.subr.mxu0 0.0
      %4140 = vmatpush1.msra.mxu0 0.0
      %4141 = vmatprep.subr.mxu0 0.0
      %4142 = vmatpush1.msra.mxu0 %v4109
      %4143 = vmatprep.subr.mxu0 0.0
      %4144 = vmatpush2.msra.mxu0 0.0
      %4145 = vmatprep.subr.mxu0 0.0
      %4146 = vmatpush2.msra.mxu0 0.0
      %4147 = vmatprep.subr.mxu0 0.0
      %4148 = vmatpush2.msra.mxu0 0.0
      %4149 = vmatprep.subr.mxu0 0.0
      %4150 = vmatpush2.msra.mxu0 0.0
      %4151 = vmatprep.subr.mxu0 0.0
      %4152 = vmatpush2.msra.mxu0 0.0
      %4153 = vmatprep.subr.mxu0 0.0
      %4154 = vmatpush2.msra.mxu0 0.0
      %4155 = vmatprep.subr.mxu0 0.0
      %4156 = vmatpush2.msra.mxu0 0.0
      %4157 = vmatprep.subr.mxu0 0.0
      %4158 = vmatpush2.msra.mxu0 0.0
      %4159 = vmatprep.subr.mxu0 0.0
      %4160 = vmatpush2.msra.mxu0 0.0
      %4161 = vmatprep.subr.mxu0 0.0
      %4162 = vmatpush2.msra.mxu0 0.0
      %4163 = vmatprep.subr.mxu0 0.0
      %4164 = vmatpush2.msra.mxu0 0.0
      %4165 = vmatprep.subr.mxu0 0.0
      %4166 = vmatpush2.msra.mxu0 0.0
      %4167 = vmatprep.subr.mxu0 0.0
      %4168 = vmatpush2.msra.mxu0 0.0
      %4169 = vmatprep.subr.mxu0 0.0
      %4170 = vmatpush2.msra.mxu0 0.0
      %4171 = vmatprep.subr.mxu0 0.0
      %4172 = vmatpush2.msra.mxu0 0.0
      %4173 = vmatprep.subr.mxu0 0.0
      %4174 = vmatpush2.msra.mxu0 0.0
      %4175 = vmatprep.mubr.f32.mxu0 0.0
      %4176 = vmatmul.mubr.f32.gmra.mxu0 %v3971
      %v4177 = vpop.f32.mrf.mxu0
      %v4178 = vadd.f32 0.0, %v4177
      %v4179 = vpop.f32.mrf.mxu0
      %4180 = vmatprep.mubr.f32.mxu0 0.0
      %4181 = vmatmul.mubr.f32.gmra.mxu0 %v3974
      %v4182 = vpop.f32.mrf.mxu0
      %v4183 = vadd.f32 0.0, %v4182
      %v4184 = vpop.f32.mrf.mxu0
      %4185 = vmatprep.mubr.f32.mxu0 0.0
      %4186 = vmatmul.mubr.f32.gmra.mxu0 %v3977
      %v4187 = vpop.f32.mrf.mxu0
      %v4188 = vadd.f32 0.0, %v4187
      %v4189 = vpop.f32.mrf.mxu0
      %4190 = vmatprep.mubr.f32.mxu0 0.0
      %4191 = vmatmul.mubr.f32.gmra.mxu0 %v3980
      %v4192 = vpop.f32.mrf.mxu0
      %v4193 = vadd.f32 0.0, %v4192
      %v4194 = vpop.f32.mrf.mxu0
      %4195 = vmatprep.mubr.f32.mxu0 0.0
      %4196 = vmatmul.mubr.f32.gmra.mxu0 %v3983
      %v4197 = vpop.f32.mrf.mxu0
      %v4198 = vadd.f32 0.0, %v4197
      %v4199 = vpop.f32.mrf.mxu0
      %4200 = vmatprep.mubr.f32.mxu0 0.0
      %4201 = vmatmul.mubr.f32.gmra.mxu0 %v3986
      %v4202 = vpop.f32.mrf.mxu0
      %v4203 = vadd.f32 0.0, %v4202
      %v4204 = vpop.f32.mrf.mxu0
      %4205 = vmatprep.mubr.f32.mxu0 0.0
      %4206 = vmatmul.mubr.f32.gmra.mxu0 %v3989
      %v4207 = vpop.f32.mrf.mxu0
      %v4208 = vadd.f32 0.0, %v4207
      %v4209 = vpop.f32.mrf.mxu0
      %4210 = vmatprep.mubr.f32.mxu0 0.0
      %4211 = vmatmul.mubr.f32.gmra.mxu0 %v3992
      %v4212 = vpop.f32.mrf.mxu0
      %v4213 = vadd.f32 0.0, %v4212
      %v4214 = vpop.f32.mrf.mxu0
      %4215 = vmatprep.mubr.f32.mxu0 0.0
      %4216 = vmatmul.mubr.f32.gmra.mxu0 %v3995
      %v4217 = vpop.f32.mrf.mxu0
      %v4218 = vadd.f32 0.0, %v4217
      %v4219 = vpop.f32.mrf.mxu0
      %4220 = vmatprep.mubr.f32.mxu0 0.0
      %4221 = vmatmul.mubr.f32.gmra.mxu0 %v3998
      %v4222 = vpop.f32.mrf.mxu0
      %v4223 = vadd.f32 0.0, %v4222
      %v4224 = vpop.f32.mrf.mxu0
      %4225 = vmatprep.mubr.f32.mxu0 0.0
      %4226 = vmatmul.mubr.f32.gmra.mxu0 %v4001
      %v4227 = vpop.f32.mrf.mxu0
      %v4228 = vadd.f32 0.0, %v4227
      %v4229 = vpop.f32.mrf.mxu0
      %4230 = vmatprep.mubr.f32.mxu0 0.0
      %4231 = vmatmul.mubr.f32.gmra.mxu0 %v4004
      %v4232 = vpop.f32.mrf.mxu0
      %v4233 = vadd.f32 0.0, %v4232
      %v4234 = vpop.f32.mrf.mxu0
      %4235 = vmatprep.mubr.f32.mxu0 0.0
      %4236 = vmatmul.mubr.f32.gmra.mxu0 %v4007
      %v4237 = vpop.f32.mrf.mxu0
      %v4238 = vadd.f32 0.0, %v4237
      %v4239 = vpop.f32.mrf.mxu0
      %4240 = vmatprep.mubr.f32.mxu0 0.0
      %4241 = vmatmul.mubr.f32.gmra.mxu0 %v4010
      %v4242 = vpop.f32.mrf.mxu0
      %v4243 = vadd.f32 0.0, %v4242
      %v4244 = vpop.f32.mrf.mxu0
      %4245 = vmatprep.mubr.f32.mxu0 0.0
      %4246 = vmatmul.mubr.f32.gmra.mxu0 %v4013
      %v4247 = vpop.f32.mrf.mxu0
      %v4248 = vadd.f32 0.0, %v4247
      %v4249 = vpop.f32.mrf.mxu0
      %4250 = vmatprep.mubr.f32.mxu0 0.0
      %4251 = vmatmul.mubr.f32.gmra.mxu0 %v4016
      %v4252 = vpop.f32.mrf.mxu0
      %v4253 = vadd.f32 0.0, %v4252
      %v4254 = vpop.f32.mrf.mxu0
      %4255 = vmatprep.mubr.f32.mxu0 0.0
      %4256 = vmatmul.mubr.f32.gmra.mxu0 %v4019
      %v4257 = vpop.f32.mrf.mxu0
      %v4258 = vadd.f32 0.0, %v4257
      %v4259 = vpop.f32.mrf.mxu0
      %4260 = vmatprep.mubr.f32.mxu0 0.0
      %4261 = vmatmul.mubr.f32.gmra.mxu0 %v4022
      %v4262 = vpop.f32.mrf.mxu0
      %v4263 = vadd.f32 0.0, %v4262
      %v4264 = vpop.f32.mrf.mxu0
      %4265 = vmatprep.mubr.f32.mxu0 0.0
      %4266 = vmatmul.mubr.f32.gmra.mxu0 %v4025
      %v4267 = vpop.f32.mrf.mxu0
      %v4268 = vadd.f32 0.0, %v4267
      %v4269 = vpop.f32.mrf.mxu0
      %4270 = vmatprep.mubr.f32.mxu0 0.0
      %4271 = vmatmul.mubr.f32.gmra.mxu0 %v4028
      %v4272 = vpop.f32.mrf.mxu0
      %v4273 = vadd.f32 0.0, %v4272
      %v4274 = vpop.f32.mrf.mxu0
      %4275 = vmatprep.mubr.f32.mxu0 0.0
      %4276 = vmatmul.mubr.f32.gmra.mxu0 %v4031
      %v4277 = vpop.f32.mrf.mxu0
      %v4278 = vadd.f32 0.0, %v4277
      %v4279 = vpop.f32.mrf.mxu0
      %4280 = vmatprep.mubr.f32.mxu0 0.0
      %4281 = vmatmul.mubr.f32.gmra.mxu0 %v4034
      %v4282 = vpop.f32.mrf.mxu0
      %v4283 = vadd.f32 0.0, %v4282
      %v4284 = vpop.f32.mrf.mxu0
      %4285 = vmatprep.mubr.f32.mxu0 0.0
      %4286 = vmatmul.mubr.f32.gmra.mxu0 %v4037
      %v4287 = vpop.f32.mrf.mxu0
      %v4288 = vadd.f32 0.0, %v4287
      %v4289 = vpop.f32.mrf.mxu0
      %4290 = vmatprep.mubr.f32.mxu0 0.0
      %4291 = vmatmul.mubr.f32.gmra.mxu0 %v4040
      %v4292 = vpop.f32.mrf.mxu0
      %v4293 = vadd.f32 0.0, %v4292
      %v4294 = vpop.f32.mrf.mxu0
      %4295 = vmatprep.mubr.f32.mxu0 0.0
      %4296 = vmatmul.mubr.f32.gmra.mxu0 %v4043
      %v4297 = vpop.f32.mrf.mxu0
      %v4298 = vadd.f32 0.0, %v4297
      %v4299 = vpop.f32.mrf.mxu0
      %4300 = vmatprep.mubr.f32.mxu0 0.0
      %4301 = vmatmul.mubr.f32.gmra.mxu0 %v4046
      %v4302 = vpop.f32.mrf.mxu0
      %v4303 = vadd.f32 0.0, %v4302
      %v4304 = vpop.f32.mrf.mxu0
      %4305 = vmatprep.mubr.f32.mxu0 0.0
      %4306 = vmatmul.mubr.f32.gmra.mxu0 %v4049
      %v4307 = vpop.f32.mrf.mxu0
      %v4308 = vadd.f32 0.0, %v4307
      %v4309 = vpop.f32.mrf.mxu0
      %4310 = vmatprep.mubr.f32.mxu0 0.0
      %4311 = vmatmul.mubr.f32.gmra.mxu0 %v4052
      %v4312 = vpop.f32.mrf.mxu0
      %v4313 = vadd.f32 0.0, %v4312
      %v4314 = vpop.f32.mrf.mxu0
      %4315 = vmatprep.mubr.f32.mxu0 0.0
      %4316 = vmatmul.mubr.f32.gmra.mxu0 %v4055
      %v4317 = vpop.f32.mrf.mxu0
      %v4318 = vadd.f32 0.0, %v4317
      %v4319 = vpop.f32.mrf.mxu0
      %4320 = vmatprep.mubr.f32.mxu0 0.0
      %4321 = vmatmul.mubr.f32.gmra.mxu0 %v4058
      %v4322 = vpop.f32.mrf.mxu0
      %v4323 = vadd.f32 0.0, %v4322
      %v4324 = vpop.f32.mrf.mxu0
      %4325 = vmatprep.mubr.f32.mxu0 0.0
      %4326 = vmatmul.mubr.f32.gmra.mxu0 %v4061
      %v4327 = vpop.f32.mrf.mxu0
      %v4328 = vadd.f32 0.0, %v4327
      %v4329 = vpop.f32.mrf.mxu0
      %4330 = vmatprep.mubr.f32.mxu0 0.0
      %4331 = vmatmul.mubr.f32.gmra.mxu0 %v4064
      %v4332 = vpop.f32.mrf.mxu0
      %v4333 = vadd.f32 0.0, %v4332
      %v4334 = vpop.f32.mrf.mxu0
      %4335 = vmatprep.mubr.f32.mxu0 0.0
      %4336 = vmatmul.mubr.f32.gmra.mxu0 %v4067
      %v4337 = vpop.f32.mrf.mxu0
      %v4338 = vadd.f32 0.0, %v4337
      %v4339 = vpop.f32.mrf.mxu0
      %4340 = vmatprep.mubr.f32.mxu0 0.0
      %4341 = vmatmul.mubr.f32.gmra.mxu0 %v4070
      %v4342 = vpop.f32.mrf.mxu0
      %v4343 = vadd.f32 0.0, %v4342
      %v4344 = vpop.f32.mrf.mxu0
      %4345 = vmatprep.mubr.f32.mxu0 0.0
      %4346 = vmatmul.mubr.f32.gmra.mxu0 %v4073
      %v4347 = vpop.f32.mrf.mxu0
      %v4348 = vadd.f32 0.0, %v4347
      %v4349 = vpop.f32.mrf.mxu0
      %4350 = vmatprep.mubr.f32.mxu0 0.0
      %4351 = vmatmul.mubr.f32.gmra.mxu0 %v4076
      %v4352 = vpop.f32.mrf.mxu0
      %v4353 = vadd.f32 0.0, %v4352
      %v4354 = vpop.f32.mrf.mxu0
      %4355 = vmatprep.mubr.f32.mxu0 0.0
      %4356 = vmatmul.mubr.f32.gmra.mxu0 %v4079
      %v4357 = vpop.f32.mrf.mxu0
      %v4358 = vadd.f32 0.0, %v4357
      %v4359 = vpop.f32.mrf.mxu0
      %4360 = vmatprep.mubr.f32.mxu0 0.0
      %4361 = vmatmul.mubr.f32.gmra.mxu0 %v4082
      %v4362 = vpop.f32.mrf.mxu0
      %v4363 = vadd.f32 0.0, %v4362
      %v4364 = vpop.f32.mrf.mxu0
      %4365 = vmatprep.mubr.f32.mxu0 0.0
      %4366 = vmatmul.mubr.f32.gmra.mxu0 %v4085
      %v4367 = vpop.f32.mrf.mxu0
      %v4368 = vadd.f32 0.0, %v4367
      %v4369 = vpop.f32.mrf.mxu0
      %4370 = vmatprep.mubr.f32.mxu0 0.0
      %4371 = vmatmul.mubr.f32.gmra.mxu0 %v4088
      %v4372 = vpop.f32.mrf.mxu0
      %v4373 = vadd.f32 0.0, %v4372
      %v4374 = vpop.f32.mrf.mxu0
      %4375 = vmatprep.mubr.f32.mxu0 0.0
      %4376 = vmatmul.mubr.f32.gmra.mxu0 %v4091
      %v4377 = vpop.f32.mrf.mxu0
      %v4378 = vadd.f32 0.0, %v4377
      %v4379 = vpop.f32.mrf.mxu0
      %4380 = vmatprep.mubr.f32.mxu0 0.0
      %4381 = vmatmul.mubr.f32.gmra.mxu0 %v4094
      %v4382 = vpop.f32.mrf.mxu0
      %v4383 = vadd.f32 0.0, %v4382
      %v4384 = vpop.f32.mrf.mxu0
      %4385 = vmatprep.mubr.f32.mxu0 0.0
      %4386 = vmatmul.mubr.f32.gmra.mxu0 %v4097
      %v4387 = vpop.f32.mrf.mxu0
      %v4388 = vadd.f32 0.0, %v4387
      %v4389 = vpop.f32.mrf.mxu0
      %4390 = vmatprep.mubr.f32.mxu0 0.0
      %4391 = vmatmul.mubr.f32.gmra.mxu0 %v4100
      %v4392 = vpop.f32.mrf.mxu0
      %v4393 = vadd.f32 0.0, %v4392
      %v4394 = vpop.f32.mrf.mxu0
      %4395 = vmatprep.mubr.f32.mxu0 0.0
      %4396 = vmatmul.mubr.f32.gmra.mxu0 %v4103
      %v4397 = vpop.f32.mrf.mxu0
      %v4398 = vadd.f32 0.0, %v4397
      %v4399 = vpop.f32.mrf.mxu0
      %4400 = vmatprep.mubr.f32.mxu0 0.0
      %4401 = vmatmul.mubr.f32.gmra.mxu0 %v4106
      %v4402 = vpop.f32.mrf.mxu0
      %v4403 = vadd.f32 0.0, %v4402
      %v4404 = vpop.f32.mrf.mxu0
      %4405 = vdwg.mxu0
      %v4406 = vadd.f32 %v3876, %v4178
      %v4407 = vadd.f32 %v3877, %v4183
      %v4408 = vadd.f32 %v3878, %v4188
      %v4409 = vadd.f32 %v3879, %v4193
      %v4410 = vadd.f32 %v3880, %v4198
      %v4411 = vadd.f32 %v3881, %v4203
      %v4412 = vadd.f32 %v3882, %v4208
      %v4413 = vadd.f32 %v3883, %v4213
      %v4414 = vadd.f32 %v3884, %v4218
      %v4415 = vadd.f32 %v3885, %v4223
      %v4416 = vadd.f32 %v3886, %v4228
      %v4417 = vadd.f32 %v3887, %v4233
      %v4418 = vadd.f32 %v3888, %v4238
      %v4419 = vadd.f32 %v3889, %v4243
      %v4420 = vadd.f32 %v3890, %v4248
      %v4421 = vadd.f32 %v3891, %v4253
      %v4422 = vadd.f32 %v3892, %v4258
      %v4423 = vadd.f32 %v3893, %v4263
      %v4424 = vadd.f32 %v3894, %v4268
      %v4425 = vadd.f32 %v3895, %v4273
      %v4426 = vadd.f32 %v3896, %v4278
      %v4427 = vadd.f32 %v3897, %v4283
      %v4428 = vadd.f32 %v3898, %v4288
      %v4429 = vadd.f32 %v3899, %v4293
      %v4430 = vadd.f32 %v3900, %v4298
      %v4431 = vadd.f32 %v3901, %v4303
      %v4432 = vadd.f32 %v3902, %v4308
      %v4433 = vadd.f32 %v3903, %v4313
      %v4434 = vadd.f32 %v3904, %v4318
      %v4435 = vadd.f32 %v3905, %v4323
      %v4436 = vadd.f32 %v3906, %v4328
      %v4437 = vadd.f32 %v3907, %v4333
      %v4438 = vadd.f32 %v3908, %v4338
      %v4439 = vadd.f32 %v3909, %v4343
      %v4440 = vadd.f32 %v3910, %v4348
      %v4441 = vadd.f32 %v3911, %v4353
      %v4442 = vadd.f32 %v3912, %v4358
      %v4443 = vadd.f32 %v3913, %v4363
      %v4444 = vadd.f32 %v3914, %v4368
      %v4445 = vadd.f32 %v3915, %v4373
      %v4446 = vadd.f32 %v3916, %v4378
      %v4447 = vadd.f32 %v3917, %v4383
      %v4448 = vadd.f32 %v3918, %v4388
      %v4449 = vadd.f32 %v3919, %v4393
      %v4450 = vadd.f32 %v3920, %v4398
      %v4451 = vadd.f32 %v3921, %v4403
      %v4452 = vld [vmem:[%s287 + $0x2a] sm:$0xff]
      %v4453 = vld [vmem:[%s287 + $0x32] sm:$0xff]
      %v4454 = vld [vmem:[%s287 + $0x3a] sm:$0xff]
      %v4455 = vld [vmem:[%s287 + $0x42] sm:$0xff]
      %v4456 = vld [vmem:[%s287 + $0x4a] sm:$0xff]
      %v4457 = vld [vmem:[%s287 + $0x52] sm:$0xff]
      %v4458 = vld [vmem:[%s287 + $0x5a] sm:$0xff]
      %v4459 = vld [vmem:[%s287 + $0x62] sm:$0xff]
      %v4460 = vld [vmem:[%s287 + $0x6a] sm:$0xff]
      %v4461 = vld [vmem:[%s287 + $0x72] sm:$0xff]
      %v4462 = vld [vmem:[%s287 + $0x7a] sm:$0xff]
      %v4463 = vld [vmem:[%s287 + $0x82] sm:$0xff]
      %v4464 = vld [vmem:[%s287 + $0x8a] sm:$0xff]
      %v4465 = vld [vmem:[%s287 + $0x92] sm:$0xff]
      %v4466 = vld [vmem:[%s287 + $0x9a] sm:$0xff]
      %v4467 = vld [vmem:[%s287 + $0xa2] sm:$0xff]
      %v4468 = vld [vmem:[%s287 + $0xaa] sm:$0xff]
      %v4469 = vld [vmem:[%s287 + $0xb2] sm:$0xff]
      %v4470 = vld [vmem:[%s287 + $0xba] sm:$0xff]
      %v4471 = vld [vmem:[%s287 + $0xc2] sm:$0xff]
      %v4472 = vld [vmem:[%s287 + $0xca] sm:$0xff]
      %v4473 = vld [vmem:[%s287 + $0xd2] sm:$0xff]
      %v4474 = vld [vmem:[%s287 + $0xda] sm:$0xff]
      %v4475 = vld [vmem:[%s287 + $0xe2] sm:$0xff]
      %v4476 = vld [vmem:[%s287 + $0xea] sm:$0xff]
      %v4477 = vld [vmem:[%s287 + $0xf2] sm:$0xff]
      %v4478 = vld [vmem:[%s287 + $0xfa] sm:$0xff]
      %v4479 = vld [vmem:[%s287 + $0x102] sm:$0xff]
      %v4480 = vld [vmem:[%s287 + $0x10a] sm:$0xff]
      %v4481 = vld [vmem:[%s287 + $0x112] sm:$0xff]
      %v4482 = vld [vmem:[%s287 + $0x11a] sm:$0xff]
      %v4483 = vld [vmem:[%s287 + $0x122] sm:$0xff]
      %v4484 = vld [vmem:[%s287 + $0x12a] sm:$0xff]
      %v4485 = vld [vmem:[%s287 + $0x132] sm:$0xff]
      %v4486 = vld [vmem:[%s287 + $0x13a] sm:$0xff]
      %v4487 = vld [vmem:[%s287 + $0x142] sm:$0xff]
      %v4488 = vld [vmem:[%s287 + $0x14a] sm:$0xff]
      %v4489 = vld [vmem:[%s287 + $0x152] sm:$0xff]
      %v4490 = vld [vmem:[%s287 + $0x15a] sm:$0xff]
      %v4491 = vld [vmem:[%s287 + $0x162] sm:$0xff]
      %v4492 = vld [vmem:[%s287 + $0x16a] sm:$0xff]
      %v4493 = vld [vmem:[%s287 + $0x172] sm:$0xff]
      %v4494 = vld [vmem:[%s287 + $0x17a] sm:$0xff]
      %v4495 = vld [vmem:[%s287 + $0x182] sm:$0xff]
      %v4496 = vld [vmem:[%s287 + $0x18a] sm:$0xff]
      %v4497 = vld [vmem:[%s287 + $0x192] sm:$0xff]
      %s4498 = scalar_lea.vmem %s1, 32
      %v4499 = vld [vmem:[%s4498] sm:$0xf]
      %v4501 = vsel %vm398, %v4452, 0
      %v4504 = vsel %vm398, %v4453, 0
      %v4507 = vsel %vm398, %v4454, 0
      %v4510 = vsel %vm398, %v4455, 0
      %v4513 = vsel %vm398, %v4456, 0
      %v4516 = vsel %vm398, %v4457, 0
      %v4519 = vsel %vm398, %v4458, 0
      %v4522 = vsel %vm398, %v4459, 0
      %v4525 = vsel %vm398, %v4460, 0
      %v4528 = vsel %vm398, %v4461, 0
      %v4531 = vsel %vm398, %v4462, 0
      %v4534 = vsel %vm398, %v4463, 0
      %v4537 = vsel %vm398, %v4464, 0
      %v4540 = vsel %vm398, %v4465, 0
      %v4543 = vsel %vm398, %v4466, 0
      %v4546 = vsel %vm398, %v4467, 0
      %v4549 = vsel %vm398, %v4468, 0
      %v4552 = vsel %vm398, %v4469, 0
      %v4555 = vsel %vm398, %v4470, 0
      %v4558 = vsel %vm398, %v4471, 0
      %v4561 = vsel %vm398, %v4472, 0
      %v4564 = vsel %vm398, %v4473, 0
      %v4567 = vsel %vm398, %v4474, 0
      %v4570 = vsel %vm398, %v4475, 0
      %v4573 = vsel %vm398, %v4476, 0
      %v4576 = vsel %vm398, %v4477, 0
      %v4579 = vsel %vm398, %v4478, 0
      %v4582 = vsel %vm398, %v4479, 0
      %v4585 = vsel %vm398, %v4480, 0
      %v4588 = vsel %vm398, %v4481, 0
      %v4591 = vsel %vm398, %v4482, 0
      %v4594 = vsel %vm398, %v4483, 0
      %v4597 = vsel %vm398, %v4484, 0
      %v4600 = vsel %vm398, %v4485, 0
      %v4603 = vsel %vm398, %v4486, 0
      %v4606 = vsel %vm398, %v4487, 0
      %v4609 = vsel %vm398, %v4488, 0
      %v4612 = vsel %vm398, %v4489, 0
      %v4615 = vsel %vm398, %v4490, 0
      %v4618 = vsel %vm398, %v4491, 0
      %v4621 = vsel %vm398, %v4492, 0
      %v4624 = vsel %vm398, %v4493, 0
      %v4627 = vsel %vm398, %v4494, 0
      %v4630 = vsel %vm398, %v4495, 0
      %v4633 = vsel %vm398, %v4496, 0
      %v4636 = vsel %vm398, %v4497, 0
      %v4639 = vsel %vm537, %v4499, 0
      %4641 = vmatprep.subr.mxu0 0.0
      %4642 = vmatpush1.msra.mxu0 0.0
      %4643 = vmatprep.subr.mxu0 0.0
      %4644 = vmatpush1.msra.mxu0 0.0
      %4645 = vmatprep.subr.mxu0 0.0
      %4646 = vmatpush1.msra.mxu0 0.0
      %4647 = vmatprep.subr.mxu0 0.0
      %4648 = vmatpush1.msra.mxu0 0.0
      %4649 = vmatprep.subr.mxu0 0.0
      %4650 = vmatpush1.msra.mxu0 0.0
      %4651 = vmatprep.subr.mxu0 0.0
      %4652 = vmatpush1.msra.mxu0 0.0
      %4653 = vmatprep.subr.mxu0 0.0
      %4654 = vmatpush1.msra.mxu0 0.0
      %4655 = vmatprep.subr.mxu0 0.0
      %4656 = vmatpush1.msra.mxu0 0.0
      %4657 = vmatprep.subr.mxu0 0.0
      %4658 = vmatpush1.msra.mxu0 0.0
      %4659 = vmatprep.subr.mxu0 0.0
      %4660 = vmatpush1.msra.mxu0 0.0
      %4661 = vmatprep.subr.mxu0 0.0
      %4662 = vmatpush1.msra.mxu0 0.0
      %4663 = vmatprep.subr.mxu0 0.0
      %4664 = vmatpush1.msra.mxu0 0.0
      %4665 = vmatprep.subr.mxu0 0.0
      %4666 = vmatpush1.msra.mxu0 0.0
      %4667 = vmatprep.subr.mxu0 0.0
      %4668 = vmatpush1.msra.mxu0 0.0
      %4669 = vmatprep.subr.mxu0 0.0
      %4670 = vmatpush1.msra.mxu0 0.0
      %4671 = vmatprep.subr.mxu0 0.0
      %4672 = vmatpush1.msra.mxu0 %v4639
      %4673 = vmatprep.subr.mxu0 0.0
      %4674 = vmatpush2.msra.mxu0 0.0
      %4675 = vmatprep.subr.mxu0 0.0
      %4676 = vmatpush2.msra.mxu0 0.0
      %4677 = vmatprep.subr.mxu0 0.0
      %4678 = vmatpush2.msra.mxu0 0.0
      %4679 = vmatprep.subr.mxu0 0.0
      %4680 = vmatpush2.msra.mxu0 0.0
      %4681 = vmatprep.subr.mxu0 0.0
      %4682 = vmatpush2.msra.mxu0 0.0
      %4683 = vmatprep.subr.mxu0 0.0
      %4684 = vmatpush2.msra.mxu0 0.0
      %4685 = vmatprep.subr.mxu0 0.0
      %4686 = vmatpush2.msra.mxu0 0.0
      %4687 = vmatprep.subr.mxu0 0.0
      %4688 = vmatpush2.msra.mxu0 0.0
      %4689 = vmatprep.subr.mxu0 0.0
      %4690 = vmatpush2.msra.mxu0 0.0
      %4691 = vmatprep.subr.mxu0 0.0
      %4692 = vmatpush2.msra.mxu0 0.0
      %4693 = vmatprep.subr.mxu0 0.0
      %4694 = vmatpush2.msra.mxu0 0.0
      %4695 = vmatprep.subr.mxu0 0.0
      %4696 = vmatpush2.msra.mxu0 0.0
      %4697 = vmatprep.subr.mxu0 0.0
      %4698 = vmatpush2.msra.mxu0 0.0
      %4699 = vmatprep.subr.mxu0 0.0
      %4700 = vmatpush2.msra.mxu0 0.0
      %4701 = vmatprep.subr.mxu0 0.0
      %4702 = vmatpush2.msra.mxu0 0.0
      %4703 = vmatprep.subr.mxu0 0.0
      %4704 = vmatpush2.msra.mxu0 0.0
      %4705 = vmatprep.mubr.f32.mxu0 0.0
      %4706 = vmatmul.mubr.f32.gmra.mxu0 %v4501
      %v4707 = vpop.f32.mrf.mxu0
      %v4708 = vadd.f32 0.0, %v4707
      %v4709 = vpop.f32.mrf.mxu0
      %4710 = vmatprep.mubr.f32.mxu0 0.0
      %4711 = vmatmul.mubr.f32.gmra.mxu0 %v4504
      %v4712 = vpop.f32.mrf.mxu0
      %v4713 = vadd.f32 0.0, %v4712
      %v4714 = vpop.f32.mrf.mxu0
      %4715 = vmatprep.mubr.f32.mxu0 0.0
      %4716 = vmatmul.mubr.f32.gmra.mxu0 %v4507
      %v4717 = vpop.f32.mrf.mxu0
      %v4718 = vadd.f32 0.0, %v4717
      %v4719 = vpop.f32.mrf.mxu0
      %4720 = vmatprep.mubr.f32.mxu0 0.0
      %4721 = vmatmul.mubr.f32.gmra.mxu0 %v4510
      %v4722 = vpop.f32.mrf.mxu0
      %v4723 = vadd.f32 0.0, %v4722
      %v4724 = vpop.f32.mrf.mxu0
      %4725 = vmatprep.mubr.f32.mxu0 0.0
      %4726 = vmatmul.mubr.f32.gmra.mxu0 %v4513
      %v4727 = vpop.f32.mrf.mxu0
      %v4728 = vadd.f32 0.0, %v4727
      %v4729 = vpop.f32.mrf.mxu0
      %4730 = vmatprep.mubr.f32.mxu0 0.0
      %4731 = vmatmul.mubr.f32.gmra.mxu0 %v4516
      %v4732 = vpop.f32.mrf.mxu0
      %v4733 = vadd.f32 0.0, %v4732
      %v4734 = vpop.f32.mrf.mxu0
      %4735 = vmatprep.mubr.f32.mxu0 0.0
      %4736 = vmatmul.mubr.f32.gmra.mxu0 %v4519
      %v4737 = vpop.f32.mrf.mxu0
      %v4738 = vadd.f32 0.0, %v4737
      %v4739 = vpop.f32.mrf.mxu0
      %4740 = vmatprep.mubr.f32.mxu0 0.0
      %4741 = vmatmul.mubr.f32.gmra.mxu0 %v4522
      %v4742 = vpop.f32.mrf.mxu0
      %v4743 = vadd.f32 0.0, %v4742
      %v4744 = vpop.f32.mrf.mxu0
      %4745 = vmatprep.mubr.f32.mxu0 0.0
      %4746 = vmatmul.mubr.f32.gmra.mxu0 %v4525
      %v4747 = vpop.f32.mrf.mxu0
      %v4748 = vadd.f32 0.0, %v4747
      %v4749 = vpop.f32.mrf.mxu0
      %4750 = vmatprep.mubr.f32.mxu0 0.0
      %4751 = vmatmul.mubr.f32.gmra.mxu0 %v4528
      %v4752 = vpop.f32.mrf.mxu0
      %v4753 = vadd.f32 0.0, %v4752
      %v4754 = vpop.f32.mrf.mxu0
      %4755 = vmatprep.mubr.f32.mxu0 0.0
      %4756 = vmatmul.mubr.f32.gmra.mxu0 %v4531
      %v4757 = vpop.f32.mrf.mxu0
      %v4758 = vadd.f32 0.0, %v4757
      %v4759 = vpop.f32.mrf.mxu0
      %4760 = vmatprep.mubr.f32.mxu0 0.0
      %4761 = vmatmul.mubr.f32.gmra.mxu0 %v4534
      %v4762 = vpop.f32.mrf.mxu0
      %v4763 = vadd.f32 0.0, %v4762
      %v4764 = vpop.f32.mrf.mxu0
      %4765 = vmatprep.mubr.f32.mxu0 0.0
      %4766 = vmatmul.mubr.f32.gmra.mxu0 %v4537
      %v4767 = vpop.f32.mrf.mxu0
      %v4768 = vadd.f32 0.0, %v4767
      %v4769 = vpop.f32.mrf.mxu0
      %4770 = vmatprep.mubr.f32.mxu0 0.0
      %4771 = vmatmul.mubr.f32.gmra.mxu0 %v4540
      %v4772 = vpop.f32.mrf.mxu0
      %v4773 = vadd.f32 0.0, %v4772
      %v4774 = vpop.f32.mrf.mxu0
      %4775 = vmatprep.mubr.f32.mxu0 0.0
      %4776 = vmatmul.mubr.f32.gmra.mxu0 %v4543
      %v4777 = vpop.f32.mrf.mxu0
      %v4778 = vadd.f32 0.0, %v4777
      %v4779 = vpop.f32.mrf.mxu0
      %4780 = vmatprep.mubr.f32.mxu0 0.0
      %4781 = vmatmul.mubr.f32.gmra.mxu0 %v4546
      %v4782 = vpop.f32.mrf.mxu0
      %v4783 = vadd.f32 0.0, %v4782
      %v4784 = vpop.f32.mrf.mxu0
      %4785 = vmatprep.mubr.f32.mxu0 0.0
      %4786 = vmatmul.mubr.f32.gmra.mxu0 %v4549
      %v4787 = vpop.f32.mrf.mxu0
      %v4788 = vadd.f32 0.0, %v4787
      %v4789 = vpop.f32.mrf.mxu0
      %4790 = vmatprep.mubr.f32.mxu0 0.0
      %4791 = vmatmul.mubr.f32.gmra.mxu0 %v4552
      %v4792 = vpop.f32.mrf.mxu0
      %v4793 = vadd.f32 0.0, %v4792
      %v4794 = vpop.f32.mrf.mxu0
      %4795 = vmatprep.mubr.f32.mxu0 0.0
      %4796 = vmatmul.mubr.f32.gmra.mxu0 %v4555
      %v4797 = vpop.f32.mrf.mxu0
      %v4798 = vadd.f32 0.0, %v4797
      %v4799 = vpop.f32.mrf.mxu0
      %4800 = vmatprep.mubr.f32.mxu0 0.0
      %4801 = vmatmul.mubr.f32.gmra.mxu0 %v4558
      %v4802 = vpop.f32.mrf.mxu0
      %v4803 = vadd.f32 0.0, %v4802
      %v4804 = vpop.f32.mrf.mxu0
      %4805 = vmatprep.mubr.f32.mxu0 0.0
      %4806 = vmatmul.mubr.f32.gmra.mxu0 %v4561
      %v4807 = vpop.f32.mrf.mxu0
      %v4808 = vadd.f32 0.0, %v4807
      %v4809 = vpop.f32.mrf.mxu0
      %4810 = vmatprep.mubr.f32.mxu0 0.0
      %4811 = vmatmul.mubr.f32.gmra.mxu0 %v4564
      %v4812 = vpop.f32.mrf.mxu0
      %v4813 = vadd.f32 0.0, %v4812
      %v4814 = vpop.f32.mrf.mxu0
      %4815 = vmatprep.mubr.f32.mxu0 0.0
      %4816 = vmatmul.mubr.f32.gmra.mxu0 %v4567
      %v4817 = vpop.f32.mrf.mxu0
      %v4818 = vadd.f32 0.0, %v4817
      %v4819 = vpop.f32.mrf.mxu0
      %4820 = vmatprep.mubr.f32.mxu0 0.0
      %4821 = vmatmul.mubr.f32.gmra.mxu0 %v4570
      %v4822 = vpop.f32.mrf.mxu0
      %v4823 = vadd.f32 0.0, %v4822
      %v4824 = vpop.f32.mrf.mxu0
      %4825 = vmatprep.mubr.f32.mxu0 0.0
      %4826 = vmatmul.mubr.f32.gmra.mxu0 %v4573
      %v4827 = vpop.f32.mrf.mxu0
      %v4828 = vadd.f32 0.0, %v4827
      %v4829 = vpop.f32.mrf.mxu0
      %4830 = vmatprep.mubr.f32.mxu0 0.0
      %4831 = vmatmul.mubr.f32.gmra.mxu0 %v4576
      %v4832 = vpop.f32.mrf.mxu0
      %v4833 = vadd.f32 0.0, %v4832
      %v4834 = vpop.f32.mrf.mxu0
      %4835 = vmatprep.mubr.f32.mxu0 0.0
      %4836 = vmatmul.mubr.f32.gmra.mxu0 %v4579
      %v4837 = vpop.f32.mrf.mxu0
      %v4838 = vadd.f32 0.0, %v4837
      %v4839 = vpop.f32.mrf.mxu0
      %4840 = vmatprep.mubr.f32.mxu0 0.0
      %4841 = vmatmul.mubr.f32.gmra.mxu0 %v4582
      %v4842 = vpop.f32.mrf.mxu0
      %v4843 = vadd.f32 0.0, %v4842
      %v4844 = vpop.f32.mrf.mxu0
      %4845 = vmatprep.mubr.f32.mxu0 0.0
      %4846 = vmatmul.mubr.f32.gmra.mxu0 %v4585
      %v4847 = vpop.f32.mrf.mxu0
      %v4848 = vadd.f32 0.0, %v4847
      %v4849 = vpop.f32.mrf.mxu0
      %4850 = vmatprep.mubr.f32.mxu0 0.0
      %4851 = vmatmul.mubr.f32.gmra.mxu0 %v4588
      %v4852 = vpop.f32.mrf.mxu0
      %v4853 = vadd.f32 0.0, %v4852
      %v4854 = vpop.f32.mrf.mxu0
      %4855 = vmatprep.mubr.f32.mxu0 0.0
      %4856 = vmatmul.mubr.f32.gmra.mxu0 %v4591
      %v4857 = vpop.f32.mrf.mxu0
      %v4858 = vadd.f32 0.0, %v4857
      %v4859 = vpop.f32.mrf.mxu0
      %4860 = vmatprep.mubr.f32.mxu0 0.0
      %4861 = vmatmul.mubr.f32.gmra.mxu0 %v4594
      %v4862 = vpop.f32.mrf.mxu0
      %v4863 = vadd.f32 0.0, %v4862
      %v4864 = vpop.f32.mrf.mxu0
      %4865 = vmatprep.mubr.f32.mxu0 0.0
      %4866 = vmatmul.mubr.f32.gmra.mxu0 %v4597
      %v4867 = vpop.f32.mrf.mxu0
      %v4868 = vadd.f32 0.0, %v4867
      %v4869 = vpop.f32.mrf.mxu0
      %4870 = vmatprep.mubr.f32.mxu0 0.0
      %4871 = vmatmul.mubr.f32.gmra.mxu0 %v4600
      %v4872 = vpop.f32.mrf.mxu0
      %v4873 = vadd.f32 0.0, %v4872
      %v4874 = vpop.f32.mrf.mxu0
      %4875 = vmatprep.mubr.f32.mxu0 0.0
      %4876 = vmatmul.mubr.f32.gmra.mxu0 %v4603
      %v4877 = vpop.f32.mrf.mxu0
      %v4878 = vadd.f32 0.0, %v4877
      %v4879 = vpop.f32.mrf.mxu0
      %4880 = vmatprep.mubr.f32.mxu0 0.0
      %4881 = vmatmul.mubr.f32.gmra.mxu0 %v4606
      %v4882 = vpop.f32.mrf.mxu0
      %v4883 = vadd.f32 0.0, %v4882
      %v4884 = vpop.f32.mrf.mxu0
      %4885 = vmatprep.mubr.f32.mxu0 0.0
      %4886 = vmatmul.mubr.f32.gmra.mxu0 %v4609
      %v4887 = vpop.f32.mrf.mxu0
      %v4888 = vadd.f32 0.0, %v4887
      %v4889 = vpop.f32.mrf.mxu0
      %4890 = vmatprep.mubr.f32.mxu0 0.0
      %4891 = vmatmul.mubr.f32.gmra.mxu0 %v4612
      %v4892 = vpop.f32.mrf.mxu0
      %v4893 = vadd.f32 0.0, %v4892
      %v4894 = vpop.f32.mrf.mxu0
      %4895 = vmatprep.mubr.f32.mxu0 0.0
      %4896 = vmatmul.mubr.f32.gmra.mxu0 %v4615
      %v4897 = vpop.f32.mrf.mxu0
      %v4898 = vadd.f32 0.0, %v4897
      %v4899 = vpop.f32.mrf.mxu0
      %4900 = vmatprep.mubr.f32.mxu0 0.0
      %4901 = vmatmul.mubr.f32.gmra.mxu0 %v4618
      %v4902 = vpop.f32.mrf.mxu0
      %v4903 = vadd.f32 0.0, %v4902
      %v4904 = vpop.f32.mrf.mxu0
      %4905 = vmatprep.mubr.f32.mxu0 0.0
      %4906 = vmatmul.mubr.f32.gmra.mxu0 %v4621
      %v4907 = vpop.f32.mrf.mxu0
      %v4908 = vadd.f32 0.0, %v4907
      %v4909 = vpop.f32.mrf.mxu0
      %4910 = vmatprep.mubr.f32.mxu0 0.0
      %4911 = vmatmul.mubr.f32.gmra.mxu0 %v4624
      %v4912 = vpop.f32.mrf.mxu0
      %v4913 = vadd.f32 0.0, %v4912
      %v4914 = vpop.f32.mrf.mxu0
      %4915 = vmatprep.mubr.f32.mxu0 0.0
      %4916 = vmatmul.mubr.f32.gmra.mxu0 %v4627
      %v4917 = vpop.f32.mrf.mxu0
      %v4918 = vadd.f32 0.0, %v4917
      %v4919 = vpop.f32.mrf.mxu0
      %4920 = vmatprep.mubr.f32.mxu0 0.0
      %4921 = vmatmul.mubr.f32.gmra.mxu0 %v4630
      %v4922 = vpop.f32.mrf.mxu0
      %v4923 = vadd.f32 0.0, %v4922
      %v4924 = vpop.f32.mrf.mxu0
      %4925 = vmatprep.mubr.f32.mxu0 0.0
      %4926 = vmatmul.mubr.f32.gmra.mxu0 %v4633
      %v4927 = vpop.f32.mrf.mxu0
      %v4928 = vadd.f32 0.0, %v4927
      %v4929 = vpop.f32.mrf.mxu0
      %4930 = vmatprep.mubr.f32.mxu0 0.0
      %4931 = vmatmul.mubr.f32.gmra.mxu0 %v4636
      %v4932 = vpop.f32.mrf.mxu0
      %v4933 = vadd.f32 0.0, %v4932
      %v4934 = vpop.f32.mrf.mxu0
      %4935 = vdwg.mxu0
      %v4936 = vadd.f32 %v4406, %v4708
      %v4937 = vadd.f32 %v4407, %v4713
      %v4938 = vadd.f32 %v4408, %v4718
      %v4939 = vadd.f32 %v4409, %v4723
      %v4940 = vadd.f32 %v4410, %v4728
      %v4941 = vadd.f32 %v4411, %v4733
      %v4942 = vadd.f32 %v4412, %v4738
      %v4943 = vadd.f32 %v4413, %v4743
      %v4944 = vadd.f32 %v4414, %v4748
      %v4945 = vadd.f32 %v4415, %v4753
      %v4946 = vadd.f32 %v4416, %v4758
      %v4947 = vadd.f32 %v4417, %v4763
      %v4948 = vadd.f32 %v4418, %v4768
      %v4949 = vadd.f32 %v4419, %v4773
      %v4950 = vadd.f32 %v4420, %v4778
      %v4951 = vadd.f32 %v4421, %v4783
      %v4952 = vadd.f32 %v4422, %v4788
      %v4953 = vadd.f32 %v4423, %v4793
      %v4954 = vadd.f32 %v4424, %v4798
      %v4955 = vadd.f32 %v4425, %v4803
      %v4956 = vadd.f32 %v4426, %v4808
      %v4957 = vadd.f32 %v4427, %v4813
      %v4958 = vadd.f32 %v4428, %v4818
      %v4959 = vadd.f32 %v4429, %v4823
      %v4960 = vadd.f32 %v4430, %v4828
      %v4961 = vadd.f32 %v4431, %v4833
      %v4962 = vadd.f32 %v4432, %v4838
      %v4963 = vadd.f32 %v4433, %v4843
      %v4964 = vadd.f32 %v4434, %v4848
      %v4965 = vadd.f32 %v4435, %v4853
      %v4966 = vadd.f32 %v4436, %v4858
      %v4967 = vadd.f32 %v4437, %v4863
      %v4968 = vadd.f32 %v4438, %v4868
      %v4969 = vadd.f32 %v4439, %v4873
      %v4970 = vadd.f32 %v4440, %v4878
      %v4971 = vadd.f32 %v4441, %v4883
      %v4972 = vadd.f32 %v4442, %v4888
      %v4973 = vadd.f32 %v4443, %v4893
      %v4974 = vadd.f32 %v4444, %v4898
      %v4975 = vadd.f32 %v4445, %v4903
      %v4976 = vadd.f32 %v4446, %v4908
      %v4977 = vadd.f32 %v4447, %v4913
      %v4978 = vadd.f32 %v4448, %v4918
      %v4979 = vadd.f32 %v4449, %v4923
      %v4980 = vadd.f32 %v4450, %v4928
      %v4981 = vadd.f32 %v4451, %v4933
      %v4982 = vld [vmem:[%s2] sm:$0x1]
      %v4984 = vlaneseq
      %v4985 = vshrl.u32 %v4984, 7
      %v4986 = vsub.s32 0, %v4985
      %v4987 = vrot.slane %v4982, %v4986
      %v4989 = vadd.f32 %v4936, %v4987
      %v4990 = vadd.f32 %v4937, %v4987
      %v4991 = vadd.f32 %v4938, %v4987
      %v4992 = vadd.f32 %v4939, %v4987
      %v4993 = vadd.f32 %v4940, %v4987
      %v4994 = vadd.f32 %v4941, %v4987
      %v4995 = vadd.f32 %v4942, %v4987
      %v4996 = vadd.f32 %v4943, %v4987
      %v4997 = vadd.f32 %v4944, %v4987
      %v4998 = vadd.f32 %v4945, %v4987
      %v4999 = vadd.f32 %v4946, %v4987
      %v5000 = vadd.f32 %v4947, %v4987
      %v5001 = vadd.f32 %v4948, %v4987
      %v5002 = vadd.f32 %v4949, %v4987
      %v5003 = vadd.f32 %v4950, %v4987
      %v5004 = vadd.f32 %v4951, %v4987
      %v5005 = vadd.f32 %v4952, %v4987
      %v5006 = vadd.f32 %v4953, %v4987
      %v5007 = vadd.f32 %v4954, %v4987
      %v5008 = vadd.f32 %v4955, %v4987
      %v5009 = vadd.f32 %v4956, %v4987
      %v5010 = vadd.f32 %v4957, %v4987
      %v5011 = vadd.f32 %v4958, %v4987
      %v5012 = vadd.f32 %v4959, %v4987
      %v5013 = vadd.f32 %v4960, %v4987
      %v5014 = vadd.f32 %v4961, %v4987
      %v5015 = vadd.f32 %v4962, %v4987
      %v5016 = vadd.f32 %v4963, %v4987
      %v5017 = vadd.f32 %v4964, %v4987
      %v5018 = vadd.f32 %v4965, %v4987
      %v5019 = vadd.f32 %v4966, %v4987
      %v5020 = vadd.f32 %v4967, %v4987
      %v5021 = vadd.f32 %v4968, %v4987
      %v5022 = vadd.f32 %v4969, %v4987
      %v5023 = vadd.f32 %v4970, %v4987
      %v5024 = vadd.f32 %v4971, %v4987
      %v5025 = vadd.f32 %v4972, %v4987
      %v5026 = vadd.f32 %v4973, %v4987
      %v5027 = vadd.f32 %v4974, %v4987
      %v5028 = vadd.f32 %v4975, %v4987
      %v5029 = vadd.f32 %v4976, %v4987
      %v5030 = vadd.f32 %v4977, %v4987
      %v5031 = vadd.f32 %v4978, %v4987
      %v5032 = vadd.f32 %v4979, %v4987
      %v5033 = vadd.f32 %v4980, %v4987
      %v5034 = vadd.f32 %v4981, %v4987
      %v5035 = vmax.f32 %v4989, 0.0
      %v5036 = vmax.f32 %v4990, 0.0
      %v5037 = vmax.f32 %v4991, 0.0
      %v5038 = vmax.f32 %v4992, 0.0
      %v5039 = vmax.f32 %v4993, 0.0
      %v5040 = vmax.f32 %v4994, 0.0
      %v5041 = vmax.f32 %v4995, 0.0
      %v5042 = vmax.f32 %v4996, 0.0
      %v5043 = vmax.f32 %v4997, 0.0
      %v5044 = vmax.f32 %v4998, 0.0
      %v5045 = vmax.f32 %v4999, 0.0
      %v5046 = vmax.f32 %v5000, 0.0
      %v5047 = vmax.f32 %v5001, 0.0
      %v5048 = vmax.f32 %v5002, 0.0
      %v5049 = vmax.f32 %v5003, 0.0
      %v5050 = vmax.f32 %v5004, 0.0
      %v5051 = vmax.f32 %v5005, 0.0
      %v5052 = vmax.f32 %v5006, 0.0
      %v5053 = vmax.f32 %v5007, 0.0
      %v5054 = vmax.f32 %v5008, 0.0
      %v5055 = vmax.f32 %v5009, 0.0
      %v5056 = vmax.f32 %v5010, 0.0
      %v5057 = vmax.f32 %v5011, 0.0
      %v5058 = vmax.f32 %v5012, 0.0
      %v5059 = vmax.f32 %v5013, 0.0
      %v5060 = vmax.f32 %v5014, 0.0
      %v5061 = vmax.f32 %v5015, 0.0
      %v5062 = vmax.f32 %v5016, 0.0
      %v5063 = vmax.f32 %v5017, 0.0
      %v5064 = vmax.f32 %v5018, 0.0
      %v5065 = vmax.f32 %v5019, 0.0
      %v5066 = vmax.f32 %v5020, 0.0
      %v5067 = vmax.f32 %v5021, 0.0
      %v5068 = vmax.f32 %v5022, 0.0
      %v5069 = vmax.f32 %v5023, 0.0
      %v5070 = vmax.f32 %v5024, 0.0
      %v5071 = vmax.f32 %v5025, 0.0
      %v5072 = vmax.f32 %v5026, 0.0
      %v5073 = vmax.f32 %v5027, 0.0
      %v5074 = vmax.f32 %v5028, 0.0
      %v5075 = vmax.f32 %v5029, 0.0
      %v5076 = vmax.f32 %v5030, 0.0
      %v5077 = vmax.f32 %v5031, 0.0
      %v5078 = vmax.f32 %v5032, 0.0
      %v5079 = vmax.f32 %v5033, 0.0
      %v5080 = vmax.f32 %v5034, 0.0
      %v5081 = vld [vmem:[%s3] sm:$0xff]
      %v5082 = vld [vmem:[%s3 + $0x8] sm:$0xff]
      %v5083 = vld [vmem:[%s3 + $0x10] sm:$0xff]
      %v5084 = vld [vmem:[%s3 + $0x18] sm:$0xff]
      %v5085 = vld [vmem:[%s3 + $0x20] sm:$0xff]
      %v5086 = vld [vmem:[%s3 + $0x28] sm:$0xff]
      %v5087 = vld [vmem:[%s3 + $0x30] sm:$0xff]
      %v5088 = vld [vmem:[%s3 + $0x38] sm:$0xff]
      %v5089 = vld [vmem:[%s3 + $0x40] sm:$0xff]
      %v5090 = vld [vmem:[%s3 + $0x48] sm:$0xff]
      %v5091 = vld [vmem:[%s3 + $0x50] sm:$0xff]
      %v5092 = vld [vmem:[%s3 + $0x58] sm:$0xff]
      %v5093 = vld [vmem:[%s3 + $0x60] sm:$0xff]
      %v5094 = vld [vmem:[%s3 + $0x68] sm:$0xff]
      %v5095 = vld [vmem:[%s3 + $0x70] sm:$0xff]
      %v5096 = vld [vmem:[%s3 + $0x78] sm:$0xff]
      %v5097 = vld [vmem:[%s3 + $0x80] sm:$0xff]
      %v5098 = vld [vmem:[%s3 + $0x88] sm:$0xff]
      %v5099 = vld [vmem:[%s3 + $0x90] sm:$0xff]
      %v5100 = vld [vmem:[%s3 + $0x98] sm:$0xff]
      %v5101 = vld [vmem:[%s3 + $0xa0] sm:$0xff]
      %v5102 = vld [vmem:[%s3 + $0xa8] sm:$0xff]
      %v5103 = vld [vmem:[%s3 + $0xb0] sm:$0xff]
      %v5104 = vld [vmem:[%s3 + $0xb8] sm:$0xff]
      %v5105 = vld [vmem:[%s3 + $0xc0] sm:$0xff]
      %v5106 = vld [vmem:[%s3 + $0xc8] sm:$0xff]
      %v5107 = vld [vmem:[%s3 + $0xd0] sm:$0xff]
      %v5108 = vld [vmem:[%s3 + $0xd8] sm:$0xff]
      %v5109 = vld [vmem:[%s3 + $0xe0] sm:$0xff]
      %v5110 = vld [vmem:[%s3 + $0xe8] sm:$0xff]
      %v5111 = vld [vmem:[%s3 + $0xf0] sm:$0xff]
      %v5112 = vld [vmem:[%s3 + $0xf8] sm:$0xff]
      %v5113 = vld [vmem:[%s3 + $0x100] sm:$0xff]
      %v5114 = vld [vmem:[%s3 + $0x108] sm:$0xff]
      %v5115 = vld [vmem:[%s3 + $0x110] sm:$0xff]
      %v5116 = vld [vmem:[%s3 + $0x118] sm:$0xff]
      %v5117 = vld [vmem:[%s3 + $0x120] sm:$0xff]
      %v5118 = vld [vmem:[%s3 + $0x128] sm:$0xff]
      %v5119 = vld [vmem:[%s3 + $0x130] sm:$0xff]
      %v5120 = vld [vmem:[%s3 + $0x138] sm:$0xff]
      %v5121 = vld [vmem:[%s3 + $0x140] sm:$0xff]
      %v5122 = vld [vmem:[%s3 + $0x148] sm:$0xff]
      %v5123 = vld [vmem:[%s3 + $0x150] sm:$0xff]
      %v5124 = vld [vmem:[%s3 + $0x158] sm:$0xff]
      %v5125 = vld [vmem:[%s3 + $0x160] sm:$0xff]
      %v5126 = vld [vmem:[%s3 + $0x168] sm:$0xff]
      %5128 = vset.pattern.permute.xlu0 0
      %5129 = vperm.xlu0 %5128, %v5081
      %v5130 = vpop.permute.xlu0 %5129
      %5133 = vset.pattern.permute.xlu0 0
      %5134 = vperm.xlu0 %5133, %v5082
      %v5135 = vpop.permute.xlu0 %5134
      %5138 = vset.pattern.permute.xlu0 0
      %5139 = vperm.xlu0 %5138, %v5083
      %v5140 = vpop.permute.xlu0 %5139
      %5143 = vset.pattern.permute.xlu0 0
      %5144 = vperm.xlu0 %5143, %v5084
      %v5145 = vpop.permute.xlu0 %5144
      %5148 = vset.pattern.permute.xlu0 0
      %5149 = vperm.xlu0 %5148, %v5085
      %v5150 = vpop.permute.xlu0 %5149
      %5153 = vset.pattern.permute.xlu0 0
      %5154 = vperm.xlu0 %5153, %v5086
      %v5155 = vpop.permute.xlu0 %5154
      %5158 = vset.pattern.permute.xlu0 0
      %5159 = vperm.xlu0 %5158, %v5087
      %v5160 = vpop.permute.xlu0 %5159
      %5163 = vset.pattern.permute.xlu0 0
      %5164 = vperm.xlu0 %5163, %v5088
      %v5165 = vpop.permute.xlu0 %5164
      %5168 = vset.pattern.permute.xlu0 0
      %5169 = vperm.xlu0 %5168, %v5089
      %v5170 = vpop.permute.xlu0 %5169
      %5173 = vset.pattern.permute.xlu0 0
      %5174 = vperm.xlu0 %5173, %v5090
      %v5175 = vpop.permute.xlu0 %5174
      %5178 = vset.pattern.permute.xlu0 0
      %5179 = vperm.xlu0 %5178, %v5091
      %v5180 = vpop.permute.xlu0 %5179
      %5183 = vset.pattern.permute.xlu0 0
      %5184 = vperm.xlu0 %5183, %v5092
      %v5185 = vpop.permute.xlu0 %5184
      %5188 = vset.pattern.permute.xlu0 0
      %5189 = vperm.xlu0 %5188, %v5093
      %v5190 = vpop.permute.xlu0 %5189
      %5193 = vset.pattern.permute.xlu0 0
      %5194 = vperm.xlu0 %5193, %v5094
      %v5195 = vpop.permute.xlu0 %5194
      %5198 = vset.pattern.permute.xlu0 0
      %5199 = vperm.xlu0 %5198, %v5095
      %v5200 = vpop.permute.xlu0 %5199
      %5203 = vset.pattern.permute.xlu0 0
      %5204 = vperm.xlu0 %5203, %v5096
      %v5205 = vpop.permute.xlu0 %5204
      %5208 = vset.pattern.permute.xlu0 0
      %5209 = vperm.xlu0 %5208, %v5097
      %v5210 = vpop.permute.xlu0 %5209
      %5213 = vset.pattern.permute.xlu0 0
      %5214 = vperm.xlu0 %5213, %v5098
      %v5215 = vpop.permute.xlu0 %5214
      %5218 = vset.pattern.permute.xlu0 0
      %5219 = vperm.xlu0 %5218, %v5099
      %v5220 = vpop.permute.xlu0 %5219
      %5223 = vset.pattern.permute.xlu0 0
      %5224 = vperm.xlu0 %5223, %v5100
      %v5225 = vpop.permute.xlu0 %5224
      %5228 = vset.pattern.permute.xlu0 0
      %5229 = vperm.xlu0 %5228, %v5101
      %v5230 = vpop.permute.xlu0 %5229
      %5233 = vset.pattern.permute.xlu0 0
      %5234 = vperm.xlu0 %5233, %v5102
      %v5235 = vpop.permute.xlu0 %5234
      %5238 = vset.pattern.permute.xlu0 0
      %5239 = vperm.xlu0 %5238, %v5103
      %v5240 = vpop.permute.xlu0 %5239
      %5243 = vset.pattern.permute.xlu0 0
      %5244 = vperm.xlu0 %5243, %v5104
      %v5245 = vpop.permute.xlu0 %5244
      %5248 = vset.pattern.permute.xlu0 0
      %5249 = vperm.xlu0 %5248, %v5105
      %v5250 = vpop.permute.xlu0 %5249
      %5253 = vset.pattern.permute.xlu0 0
      %5254 = vperm.xlu0 %5253, %v5106
      %v5255 = vpop.permute.xlu0 %5254
      %5258 = vset.pattern.permute.xlu0 0
      %5259 = vperm.xlu0 %5258, %v5107
      %v5260 = vpop.permute.xlu0 %5259
      %5263 = vset.pattern.permute.xlu0 0
      %5264 = vperm.xlu0 %5263, %v5108
      %v5265 = vpop.permute.xlu0 %5264
      %5268 = vset.pattern.permute.xlu0 0
      %5269 = vperm.xlu0 %5268, %v5109
      %v5270 = vpop.permute.xlu0 %5269
      %5273 = vset.pattern.permute.xlu0 0
      %5274 = vperm.xlu0 %5273, %v5110
      %v5275 = vpop.permute.xlu0 %5274
      %5278 = vset.pattern.permute.xlu0 0
      %5279 = vperm.xlu0 %5278, %v5111
      %v5280 = vpop.permute.xlu0 %5279
      %5283 = vset.pattern.permute.xlu0 0
      %5284 = vperm.xlu0 %5283, %v5112
      %v5285 = vpop.permute.xlu0 %5284
      %5288 = vset.pattern.permute.xlu0 0
      %5289 = vperm.xlu0 %5288, %v5113
      %v5290 = vpop.permute.xlu0 %5289
      %5293 = vset.pattern.permute.xlu0 0
      %5294 = vperm.xlu0 %5293, %v5114
      %v5295 = vpop.permute.xlu0 %5294
      %5298 = vset.pattern.permute.xlu0 0
      %5299 = vperm.xlu0 %5298, %v5115
      %v5300 = vpop.permute.xlu0 %5299
      %5303 = vset.pattern.permute.xlu0 0
      %5304 = vperm.xlu0 %5303, %v5116
      %v5305 = vpop.permute.xlu0 %5304
      %5308 = vset.pattern.permute.xlu0 0
      %5309 = vperm.xlu0 %5308, %v5117
      %v5310 = vpop.permute.xlu0 %5309
      %5313 = vset.pattern.permute.xlu0 0
      %5314 = vperm.xlu0 %5313, %v5118
      %v5315 = vpop.permute.xlu0 %5314
      %5318 = vset.pattern.permute.xlu0 0
      %5319 = vperm.xlu0 %5318, %v5119
      %v5320 = vpop.permute.xlu0 %5319
      %5323 = vset.pattern.permute.xlu0 0
      %5324 = vperm.xlu0 %5323, %v5120
      %v5325 = vpop.permute.xlu0 %5324
      %5328 = vset.pattern.permute.xlu0 0
      %5329 = vperm.xlu0 %5328, %v5121
      %v5330 = vpop.permute.xlu0 %5329
      %5333 = vset.pattern.permute.xlu0 0
      %5334 = vperm.xlu0 %5333, %v5122
      %v5335 = vpop.permute.xlu0 %5334
      %5338 = vset.pattern.permute.xlu0 0
      %5339 = vperm.xlu0 %5338, %v5123
      %v5340 = vpop.permute.xlu0 %5339
      %5343 = vset.pattern.permute.xlu0 0
      %5344 = vperm.xlu0 %5343, %v5124
      %v5345 = vpop.permute.xlu0 %5344
      %5348 = vset.pattern.permute.xlu0 0
      %5349 = vperm.xlu0 %5348, %v5125
      %v5350 = vpop.permute.xlu0 %5349
      %5353 = vset.pattern.permute.xlu0 0
      %5354 = vperm.xlu0 %5353, %v5126
      %v5355 = vpop.permute.xlu0 %5354
      %v5357 = vmul.f32 %v5035, %v5130
      %v5358 = vmul.f32 %v5036, %v5135
      %v5359 = vmul.f32 %v5037, %v5140
      %v5360 = vmul.f32 %v5038, %v5145
      %v5361 = vmul.f32 %v5039, %v5150
      %v5362 = vmul.f32 %v5040, %v5155
      %v5363 = vmul.f32 %v5041, %v5160
      %v5364 = vmul.f32 %v5042, %v5165
      %v5365 = vmul.f32 %v5043, %v5170
      %v5366 = vmul.f32 %v5044, %v5175
      %v5367 = vmul.f32 %v5045, %v5180
      %v5368 = vmul.f32 %v5046, %v5185
      %v5369 = vmul.f32 %v5047, %v5190
      %v5370 = vmul.f32 %v5048, %v5195
      %v5371 = vmul.f32 %v5049, %v5200
      %v5372 = vmul.f32 %v5050, %v5205
      %v5373 = vmul.f32 %v5051, %v5210
      %v5374 = vmul.f32 %v5052, %v5215
      %v5375 = vmul.f32 %v5053, %v5220
      %v5376 = vmul.f32 %v5054, %v5225
      %v5377 = vmul.f32 %v5055, %v5230
      %v5378 = vmul.f32 %v5056, %v5235
      %v5379 = vmul.f32 %v5057, %v5240
      %v5380 = vmul.f32 %v5058, %v5245
      %v5381 = vmul.f32 %v5059, %v5250
      %v5382 = vmul.f32 %v5060, %v5255
      %v5383 = vmul.f32 %v5061, %v5260
      %v5384 = vmul.f32 %v5062, %v5265
      %v5385 = vmul.f32 %v5063, %v5270
      %v5386 = vmul.f32 %v5064, %v5275
      %v5387 = vmul.f32 %v5065, %v5280
      %v5388 = vmul.f32 %v5066, %v5285
      %v5389 = vmul.f32 %v5067, %v5290
      %v5390 = vmul.f32 %v5068, %v5295
      %v5391 = vmul.f32 %v5069, %v5300
      %v5392 = vmul.f32 %v5070, %v5305
      %v5393 = vmul.f32 %v5071, %v5310
      %v5394 = vmul.f32 %v5072, %v5315
      %v5395 = vmul.f32 %v5073, %v5320
      %v5396 = vmul.f32 %v5074, %v5325
      %v5397 = vmul.f32 %v5075, %v5330
      %v5398 = vmul.f32 %v5076, %v5335
      %v5399 = vmul.f32 %v5077, %v5340
      %v5400 = vmul.f32 %v5078, %v5345
      %v5401 = vmul.f32 %v5079, %v5350
      %v5402 = vmul.f32 %v5080, %v5355
      %vm5403 = vcmask 64512
      %5404 = vst.msk [vmem:[#allocation2] sm:$0xff] %vm5403, %v5357
      %5405 = vst.msk [vmem:[#allocation2 + $0x8] sm:$0xff] %vm5403, %v5358
      %5406 = vst.msk [vmem:[#allocation2 + $0x10] sm:$0xff] %vm5403, %v5359
      %5407 = vst.msk [vmem:[#allocation2 + $0x18] sm:$0xff] %vm5403, %v5360
      %5408 = vst.msk [vmem:[#allocation2 + $0x20] sm:$0xff] %vm5403, %v5361
      %5409 = vst.msk [vmem:[#allocation2 + $0x28] sm:$0xff] %vm5403, %v5362
      %5410 = vst.msk [vmem:[#allocation2 + $0x30] sm:$0xff] %vm5403, %v5363
      %5411 = vst.msk [vmem:[#allocation2 + $0x38] sm:$0xff] %vm5403, %v5364
      %5412 = vst.msk [vmem:[#allocation2 + $0x40] sm:$0xff] %vm5403, %v5365
      %5413 = vst.msk [vmem:[#allocation2 + $0x48] sm:$0xff] %vm5403, %v5366
      %5414 = vst.msk [vmem:[#allocation2 + $0x50] sm:$0xff] %vm5403, %v5367
      %5415 = vst.msk [vmem:[#allocation2 + $0x58] sm:$0xff] %vm5403, %v5368
      %5416 = vst.msk [vmem:[#allocation2 + $0x60] sm:$0xff] %vm5403, %v5369
      %5417 = vst.msk [vmem:[#allocation2 + $0x68] sm:$0xff] %vm5403, %v5370
      %5418 = vst.msk [vmem:[#allocation2 + $0x70] sm:$0xff] %vm5403, %v5371
      %5419 = vst.msk [vmem:[#allocation2 + $0x78] sm:$0xff] %vm5403, %v5372
      %5420 = vst.msk [vmem:[#allocation2 + $0x80] sm:$0xff] %vm5403, %v5373
      %5421 = vst.msk [vmem:[#allocation2 + $0x88] sm:$0xff] %vm5403, %v5374
      %5422 = vst.msk [vmem:[#allocation2 + $0x90] sm:$0xff] %vm5403, %v5375
      %5423 = vst.msk [vmem:[#allocation2 + $0x98] sm:$0xff] %vm5403, %v5376
      %5424 = vst.msk [vmem:[#allocation2 + $0xa0] sm:$0xff] %vm5403, %v5377
      %5425 = vst.msk [vmem:[#allocation2 + $0xa8] sm:$0xff] %vm5403, %v5378
      %5426 = vst.msk [vmem:[#allocation2 + $0xb0] sm:$0xff] %vm5403, %v5379
      %5427 = vst.msk [vmem:[#allocation2 + $0xb8] sm:$0xff] %vm5403, %v5380
      %5428 = vst.msk [vmem:[#allocation2 + $0xc0] sm:$0xff] %vm5403, %v5381
      %5429 = vst.msk [vmem:[#allocation2 + $0xc8] sm:$0xff] %vm5403, %v5382
      %5430 = vst.msk [vmem:[#allocation2 + $0xd0] sm:$0xff] %vm5403, %v5383
      %5431 = vst.msk [vmem:[#allocation2 + $0xd8] sm:$0xff] %vm5403, %v5384
      %5432 = vst.msk [vmem:[#allocation2 + $0xe0] sm:$0xff] %vm5403, %v5385
      %5433 = vst.msk [vmem:[#allocation2 + $0xe8] sm:$0xff] %vm5403, %v5386
      %5434 = vst.msk [vmem:[#allocation2 + $0xf0] sm:$0xff] %vm5403, %v5387
      %5435 = vst.msk [vmem:[#allocation2 + $0xf8] sm:$0xff] %vm5403, %v5388
      %5436 = vst.msk [vmem:[#allocation2 + $0x100] sm:$0xff] %vm5403, %v5389
      %5437 = vst.msk [vmem:[#allocation2 + $0x108] sm:$0xff] %vm5403, %v5390
      %5438 = vst.msk [vmem:[#allocation2 + $0x110] sm:$0xff] %vm5403, %v5391
      %5439 = vst.msk [vmem:[#allocation2 + $0x118] sm:$0xff] %vm5403, %v5392
      %5440 = vst.msk [vmem:[#allocation2 + $0x120] sm:$0xff] %vm5403, %v5393
      %5441 = vst.msk [vmem:[#allocation2 + $0x128] sm:$0xff] %vm5403, %v5394
      %5442 = vst.msk [vmem:[#allocation2 + $0x130] sm:$0xff] %vm5403, %v5395
      %5443 = vst.msk [vmem:[#allocation2 + $0x138] sm:$0xff] %vm5403, %v5396
      %5444 = vst.msk [vmem:[#allocation2 + $0x140] sm:$0xff] %vm5403, %v5397
      %5445 = vst.msk [vmem:[#allocation2 + $0x148] sm:$0xff] %vm5403, %v5398
      %5446 = vst.msk [vmem:[#allocation2 + $0x150] sm:$0xff] %vm5403, %v5399
      %5447 = vst.msk [vmem:[#allocation2 + $0x158] sm:$0xff] %vm5403, %v5400
      %5448 = vst.msk [vmem:[#allocation2 + $0x160] sm:$0xff] %vm5403, %v5401
      %5449 = vst.msk [vmem:[#allocation2 + $0x168] sm:$0xff] %vm5403, %v5402
      %v5450 = vld [vmem:[#allocation2] sm:$0xff]
      %v5451 = vld [vmem:[#allocation2 + $0x8] sm:$0xff]
      %v5452 = vld [vmem:[#allocation2 + $0x10] sm:$0xff]
      %v5453 = vld [vmem:[#allocation2 + $0x18] sm:$0xff]
      %v5454 = vld [vmem:[#allocation2 + $0x20] sm:$0xff]
      %v5455 = vld [vmem:[#allocation2 + $0x28] sm:$0xff]
      %v5456 = vld [vmem:[#allocation2 + $0x30] sm:$0xff]
      %v5457 = vld [vmem:[#allocation2 + $0x38] sm:$0xff]
      %v5458 = vld [vmem:[#allocation2 + $0x40] sm:$0xff]
      %v5459 = vld [vmem:[#allocation2 + $0x48] sm:$0xff]
      %v5460 = vld [vmem:[#allocation2 + $0x50] sm:$0xff]
      %v5461 = vld [vmem:[#allocation2 + $0x58] sm:$0xff]
      %v5462 = vld [vmem:[#allocation2 + $0x60] sm:$0xff]
      %v5463 = vld [vmem:[#allocation2 + $0x68] sm:$0xff]
      %v5464 = vld [vmem:[#allocation2 + $0x70] sm:$0xff]
      %v5465 = vld [vmem:[#allocation2 + $0x78] sm:$0xff]
      %v5466 = vld [vmem:[#allocation2 + $0x80] sm:$0xff]
      %v5467 = vld [vmem:[#allocation2 + $0x88] sm:$0xff]
      %v5468 = vld [vmem:[#allocation2 + $0x90] sm:$0xff]
      %v5469 = vld [vmem:[#allocation2 + $0x98] sm:$0xff]
      %v5470 = vld [vmem:[#allocation2 + $0xa0] sm:$0xff]
      %v5471 = vld [vmem:[#allocation2 + $0xa8] sm:$0xff]
      %v5472 = vld [vmem:[#allocation2 + $0xb0] sm:$0xff]
      %v5473 = vld [vmem:[#allocation2 + $0xb8] sm:$0xff]
      %v5474 = vld [vmem:[#allocation2 + $0xc0] sm:$0xff]
      %v5475 = vld [vmem:[#allocation2 + $0xc8] sm:$0xff]
      %v5476 = vld [vmem:[#allocation2 + $0xd0] sm:$0xff]
      %v5477 = vld [vmem:[#allocation2 + $0xd8] sm:$0xff]
      %v5478 = vld [vmem:[#allocation2 + $0xe0] sm:$0xff]
      %v5479 = vld [vmem:[#allocation2 + $0xe8] sm:$0xff]
      %v5480 = vld [vmem:[#allocation2 + $0xf0] sm:$0xff]
      %v5481 = vld [vmem:[#allocation2 + $0xf8] sm:$0xff]
      %v5482 = vld [vmem:[#allocation2 + $0x100] sm:$0xff]
      %v5483 = vld [vmem:[#allocation2 + $0x108] sm:$0xff]
      %v5484 = vld [vmem:[#allocation2 + $0x110] sm:$0xff]
      %v5485 = vld [vmem:[#allocation2 + $0x118] sm:$0xff]
      %v5486 = vld [vmem:[#allocation2 + $0x120] sm:$0xff]
      %v5487 = vld [vmem:[#allocation2 + $0x128] sm:$0xff]
      %v5488 = vld [vmem:[#allocation2 + $0x130] sm:$0xff]
      %v5489 = vld [vmem:[#allocation2 + $0x138] sm:$0xff]
      %v5490 = vld [vmem:[%s291] sm:$0xff]
      %v5491 = vld [vmem:[#allocation2 + $0x1] sm:$0xff]
      %v5492 = vld [vmem:[#allocation2 + $0x9] sm:$0xff]
      %v5493 = vld [vmem:[#allocation2 + $0x11] sm:$0xff]
      %v5494 = vld [vmem:[#allocation2 + $0x19] sm:$0xff]
      %v5495 = vld [vmem:[#allocation2 + $0x21] sm:$0xff]
      %v5496 = vld [vmem:[#allocation2 + $0x29] sm:$0xff]
      %v5497 = vld [vmem:[#allocation2 + $0x31] sm:$0xff]
      %v5498 = vld [vmem:[#allocation2 + $0x39] sm:$0xff]
      %v5499 = vld [vmem:[#allocation2 + $0x41] sm:$0xff]
      %v5500 = vld [vmem:[#allocation2 + $0x49] sm:$0xff]
      %v5501 = vld [vmem:[#allocation2 + $0x51] sm:$0xff]
      %v5502 = vld [vmem:[#allocation2 + $0x59] sm:$0xff]
      %v5503 = vld [vmem:[#allocation2 + $0x61] sm:$0xff]
      %v5504 = vld [vmem:[#allocation2 + $0x69] sm:$0xff]
      %v5505 = vld [vmem:[#allocation2 + $0x71] sm:$0xff]
      %v5506 = vld [vmem:[#allocation2 + $0x79] sm:$0xff]
      %v5507 = vld [vmem:[#allocation2 + $0x81] sm:$0xff]
      %v5508 = vld [vmem:[#allocation2 + $0x89] sm:$0xff]
      %v5509 = vld [vmem:[#allocation2 + $0x91] sm:$0xff]
      %v5510 = vld [vmem:[#allocation2 + $0x99] sm:$0xff]
      %v5511 = vld [vmem:[#allocation2 + $0xa1] sm:$0xff]
      %v5512 = vld [vmem:[#allocation2 + $0xa9] sm:$0xff]
      %v5513 = vld [vmem:[#allocation2 + $0xb1] sm:$0xff]
      %v5514 = vld [vmem:[#allocation2 + $0xb9] sm:$0xff]
      %v5515 = vld [vmem:[#allocation2 + $0xc1] sm:$0xff]
      %v5516 = vld [vmem:[#allocation2 + $0xc9] sm:$0xff]
      %v5517 = vld [vmem:[#allocation2 + $0xd1] sm:$0xff]
      %v5518 = vld [vmem:[#allocation2 + $0xd9] sm:$0xff]
      %v5519 = vld [vmem:[#allocation2 + $0xe1] sm:$0xff]
      %v5520 = vld [vmem:[#allocation2 + $0xe9] sm:$0xff]
      %v5521 = vld [vmem:[#allocation2 + $0xf1] sm:$0xff]
      %v5522 = vld [vmem:[#allocation2 + $0xf9] sm:$0xff]
      %v5523 = vld [vmem:[#allocation2 + $0x101] sm:$0xff]
      %v5524 = vld [vmem:[#allocation2 + $0x109] sm:$0xff]
      %v5525 = vld [vmem:[#allocation2 + $0x111] sm:$0xff]
      %v5526 = vld [vmem:[#allocation2 + $0x119] sm:$0xff]
      %v5527 = vld [vmem:[#allocation2 + $0x121] sm:$0xff]
      %v5528 = vld [vmem:[#allocation2 + $0x129] sm:$0xff]
      %v5529 = vld [vmem:[#allocation2 + $0x131] sm:$0xff]
      %v5530 = vld [vmem:[#allocation2 + $0x139] sm:$0xff]
      %s5531 = scalar_lea.vmem %s291, 8
      %v5532 = vld [vmem:[%s5531] sm:$0xff]
      %v5534 = vsel %vm5403, %v5491, 0
      %v5537 = vsel %vm5403, %v5492, 0
      %v5540 = vsel %vm5403, %v5493, 0
      %v5543 = vsel %vm5403, %v5494, 0
      %v5546 = vsel %vm5403, %v5495, 0
      %v5549 = vsel %vm5403, %v5496, 0
      %v5552 = vsel %vm5403, %v5497, 0
      %v5555 = vsel %vm5403, %v5498, 0
      %v5558 = vsel %vm5403, %v5499, 0
      %v5561 = vsel %vm5403, %v5500, 0
      %v5564 = vsel %vm5403, %v5501, 0
      %v5567 = vsel %vm5403, %v5502, 0
      %v5570 = vsel %vm5403, %v5503, 0
      %v5573 = vsel %vm5403, %v5504, 0
      %v5576 = vsel %vm5403, %v5505, 0
      %v5579 = vsel %vm5403, %v5506, 0
      %v5582 = vsel %vm5403, %v5507, 0
      %v5585 = vsel %vm5403, %v5508, 0
      %v5588 = vsel %vm5403, %v5509, 0
      %v5591 = vsel %vm5403, %v5510, 0
      %v5594 = vsel %vm5403, %v5511, 0
      %v5597 = vsel %vm5403, %v5512, 0
      %v5600 = vsel %vm5403, %v5513, 0
      %v5603 = vsel %vm5403, %v5514, 0
      %v5606 = vsel %vm5403, %v5515, 0
      %v5609 = vsel %vm5403, %v5516, 0
      %v5612 = vsel %vm5403, %v5517, 0
      %v5615 = vsel %vm5403, %v5518, 0
      %v5618 = vsel %vm5403, %v5519, 0
      %v5621 = vsel %vm5403, %v5520, 0
      %v5624 = vsel %vm5403, %v5521, 0
      %v5627 = vsel %vm5403, %v5522, 0
      %v5630 = vsel %vm5403, %v5523, 0
      %v5633 = vsel %vm5403, %v5524, 0
      %v5636 = vsel %vm5403, %v5525, 0
      %v5639 = vsel %vm5403, %v5526, 0
      %v5642 = vsel %vm5403, %v5527, 0
      %v5645 = vsel %vm5403, %v5528, 0
      %v5648 = vsel %vm5403, %v5529, 0
      %v5651 = vsel %vm5403, %v5530, 0
      %5653 = vmatprep.subr.mxu0 0.0
      %5654 = vmatpush1.msra.mxu0 0.0
      %5655 = vmatprep.subr.mxu0 0.0
      %5656 = vmatpush1.msra.mxu0 0.0
      %5657 = vmatprep.subr.mxu0 0.0
      %5658 = vmatpush1.msra.mxu0 0.0
      %5659 = vmatprep.subr.mxu0 0.0
      %5660 = vmatpush1.msra.mxu0 0.0
      %5661 = vmatprep.subr.mxu0 0.0
      %5662 = vmatpush1.msra.mxu0 0.0
      %5663 = vmatprep.subr.mxu0 0.0
      %5664 = vmatpush1.msra.mxu0 0.0
      %5665 = vmatprep.subr.mxu0 0.0
      %5666 = vmatpush1.msra.mxu0 0.0
      %5667 = vmatprep.subr.mxu0 0.0
      %5668 = vmatpush1.msra.mxu0 0.0
      %5669 = vmatprep.subr.mxu0 0.0
      %5670 = vmatpush1.msra.mxu0 0.0
      %5671 = vmatprep.subr.mxu0 0.0
      %5672 = vmatpush1.msra.mxu0 0.0
      %5673 = vmatprep.subr.mxu0 0.0
      %5674 = vmatpush1.msra.mxu0 0.0
      %5675 = vmatprep.subr.mxu0 0.0
      %5676 = vmatpush1.msra.mxu0 0.0
      %5677 = vmatprep.subr.mxu0 0.0
      %5678 = vmatpush1.msra.mxu0 0.0
      %5679 = vmatprep.subr.mxu0 0.0
      %5680 = vmatpush1.msra.mxu0 0.0
      %5681 = vmatprep.subr.mxu0 0.0
      %5682 = vmatpush1.msra.mxu0 0.0
      %5683 = vmatprep.subr.mxu0 0.0
      %5684 = vmatpush1.msra.mxu0 %v5532
      %5685 = vmatprep.subr.mxu0 0.0
      %5686 = vmatpush2.msra.mxu0 0.0
      %5687 = vmatprep.subr.mxu0 0.0
      %5688 = vmatpush2.msra.mxu0 0.0
      %5689 = vmatprep.subr.mxu0 0.0
      %5690 = vmatpush2.msra.mxu0 0.0
      %5691 = vmatprep.subr.mxu0 0.0
      %5692 = vmatpush2.msra.mxu0 0.0
      %5693 = vmatprep.subr.mxu0 0.0
      %5694 = vmatpush2.msra.mxu0 0.0
      %5695 = vmatprep.subr.mxu0 0.0
      %5696 = vmatpush2.msra.mxu0 0.0
      %5697 = vmatprep.subr.mxu0 0.0
      %5698 = vmatpush2.msra.mxu0 0.0
      %5699 = vmatprep.subr.mxu0 0.0
      %5700 = vmatpush2.msra.mxu0 0.0
      %5701 = vmatprep.subr.mxu0 0.0
      %5702 = vmatpush2.msra.mxu0 0.0
      %5703 = vmatprep.subr.mxu0 0.0
      %5704 = vmatpush2.msra.mxu0 0.0
      %5705 = vmatprep.subr.mxu0 0.0
      %5706 = vmatpush2.msra.mxu0 0.0
      %5707 = vmatprep.subr.mxu0 0.0
      %5708 = vmatpush2.msra.mxu0 0.0
      %5709 = vmatprep.subr.mxu0 0.0
      %5710 = vmatpush2.msra.mxu0 0.0
      %5711 = vmatprep.subr.mxu0 0.0
      %5712 = vmatpush2.msra.mxu0 0.0
      %5713 = vmatprep.subr.mxu0 0.0
      %5714 = vmatpush2.msra.mxu0 0.0
      %5715 = vmatprep.subr.mxu0 0.0
      %5716 = vmatpush2.msra.mxu0 0.0
      %5717 = vmatprep.mubr.f32.mxu0 0.0
      %5718 = vmatmul.mubr.f32.gmra.mxu0 %v5534
      %v5719 = vpop.f32.mrf.mxu0
      %v5720 = vadd.f32 0.0, %v5719
      %v5721 = vpop.f32.mrf.mxu0
      %5722 = vmatprep.mubr.f32.mxu0 0.0
      %5723 = vmatmul.mubr.f32.gmra.mxu0 %v5537
      %v5724 = vpop.f32.mrf.mxu0
      %v5725 = vadd.f32 0.0, %v5724
      %v5726 = vpop.f32.mrf.mxu0
      %5727 = vmatprep.mubr.f32.mxu0 0.0
      %5728 = vmatmul.mubr.f32.gmra.mxu0 %v5540
      %v5729 = vpop.f32.mrf.mxu0
      %v5730 = vadd.f32 0.0, %v5729
      %v5731 = vpop.f32.mrf.mxu0
      %5732 = vmatprep.mubr.f32.mxu0 0.0
      %5733 = vmatmul.mubr.f32.gmra.mxu0 %v5543
      %v5734 = vpop.f32.mrf.mxu0
      %v5735 = vadd.f32 0.0, %v5734
      %v5736 = vpop.f32.mrf.mxu0
      %5737 = vmatprep.mubr.f32.mxu0 0.0
      %5738 = vmatmul.mubr.f32.gmra.mxu0 %v5546
      %v5739 = vpop.f32.mrf.mxu0
      %v5740 = vadd.f32 0.0, %v5739
      %v5741 = vpop.f32.mrf.mxu0
      %5742 = vmatprep.mubr.f32.mxu0 0.0
      %5743 = vmatmul.mubr.f32.gmra.mxu0 %v5549
      %v5744 = vpop.f32.mrf.mxu0
      %v5745 = vadd.f32 0.0, %v5744
      %v5746 = vpop.f32.mrf.mxu0
      %5747 = vmatprep.mubr.f32.mxu0 0.0
      %5748 = vmatmul.mubr.f32.gmra.mxu0 %v5552
      %v5749 = vpop.f32.mrf.mxu0
      %v5750 = vadd.f32 0.0, %v5749
      %v5751 = vpop.f32.mrf.mxu0
      %5752 = vmatprep.mubr.f32.mxu0 0.0
      %5753 = vmatmul.mubr.f32.gmra.mxu0 %v5555
      %v5754 = vpop.f32.mrf.mxu0
      %v5755 = vadd.f32 0.0, %v5754
      %v5756 = vpop.f32.mrf.mxu0
      %5757 = vmatprep.mubr.f32.mxu0 0.0
      %5758 = vmatmul.mubr.f32.gmra.mxu0 %v5558
      %v5759 = vpop.f32.mrf.mxu0
      %v5760 = vadd.f32 0.0, %v5759
      %v5761 = vpop.f32.mrf.mxu0
      %5762 = vmatprep.mubr.f32.mxu0 0.0
      %5763 = vmatmul.mubr.f32.gmra.mxu0 %v5561
      %v5764 = vpop.f32.mrf.mxu0
      %v5765 = vadd.f32 0.0, %v5764
      %v5766 = vpop.f32.mrf.mxu0
      %5767 = vmatprep.mubr.f32.mxu0 0.0
      %5768 = vmatmul.mubr.f32.gmra.mxu0 %v5564
      %v5769 = vpop.f32.mrf.mxu0
      %v5770 = vadd.f32 0.0, %v5769
      %v5771 = vpop.f32.mrf.mxu0
      %5772 = vmatprep.mubr.f32.mxu0 0.0
      %5773 = vmatmul.mubr.f32.gmra.mxu0 %v5567
      %v5774 = vpop.f32.mrf.mxu0
      %v5775 = vadd.f32 0.0, %v5774
      %v5776 = vpop.f32.mrf.mxu0
      %5777 = vmatprep.mubr.f32.mxu0 0.0
      %5778 = vmatmul.mubr.f32.gmra.mxu0 %v5570
      %v5779 = vpop.f32.mrf.mxu0
      %v5780 = vadd.f32 0.0, %v5779
      %v5781 = vpop.f32.mrf.mxu0
      %5782 = vmatprep.mubr.f32.mxu0 0.0
      %5783 = vmatmul.mubr.f32.gmra.mxu0 %v5573
      %v5784 = vpop.f32.mrf.mxu0
      %v5785 = vadd.f32 0.0, %v5784
      %v5786 = vpop.f32.mrf.mxu0
      %5787 = vmatprep.mubr.f32.mxu0 0.0
      %5788 = vmatmul.mubr.f32.gmra.mxu0 %v5576
      %v5789 = vpop.f32.mrf.mxu0
      %v5790 = vadd.f32 0.0, %v5789
      %v5791 = vpop.f32.mrf.mxu0
      %5792 = vmatprep.mubr.f32.mxu0 0.0
      %5793 = vmatmul.mubr.f32.gmra.mxu0 %v5579
      %v5794 = vpop.f32.mrf.mxu0
      %v5795 = vadd.f32 0.0, %v5794
      %v5796 = vpop.f32.mrf.mxu0
      %5797 = vmatprep.mubr.f32.mxu0 0.0
      %5798 = vmatmul.mubr.f32.gmra.mxu0 %v5582
      %v5799 = vpop.f32.mrf.mxu0
      %v5800 = vadd.f32 0.0, %v5799
      %v5801 = vpop.f32.mrf.mxu0
      %5802 = vmatprep.mubr.f32.mxu0 0.0
      %5803 = vmatmul.mubr.f32.gmra.mxu0 %v5585
      %v5804 = vpop.f32.mrf.mxu0
      %v5805 = vadd.f32 0.0, %v5804
      %v5806 = vpop.f32.mrf.mxu0
      %5807 = vmatprep.mubr.f32.mxu0 0.0
      %5808 = vmatmul.mubr.f32.gmra.mxu0 %v5588
      %v5809 = vpop.f32.mrf.mxu0
      %v5810 = vadd.f32 0.0, %v5809
      %v5811 = vpop.f32.mrf.mxu0
      %5812 = vmatprep.mubr.f32.mxu0 0.0
      %5813 = vmatmul.mubr.f32.gmra.mxu0 %v5591
      %v5814 = vpop.f32.mrf.mxu0
      %v5815 = vadd.f32 0.0, %v5814
      %v5816 = vpop.f32.mrf.mxu0
      %5817 = vmatprep.mubr.f32.mxu0 0.0
      %5818 = vmatmul.mubr.f32.gmra.mxu0 %v5594
      %v5819 = vpop.f32.mrf.mxu0
      %v5820 = vadd.f32 0.0, %v5819
      %v5821 = vpop.f32.mrf.mxu0
      %5822 = vmatprep.mubr.f32.mxu0 0.0
      %5823 = vmatmul.mubr.f32.gmra.mxu0 %v5597
      %v5824 = vpop.f32.mrf.mxu0
      %v5825 = vadd.f32 0.0, %v5824
      %v5826 = vpop.f32.mrf.mxu0
      %5827 = vmatprep.mubr.f32.mxu0 0.0
      %5828 = vmatmul.mubr.f32.gmra.mxu0 %v5600
      %v5829 = vpop.f32.mrf.mxu0
      %v5830 = vadd.f32 0.0, %v5829
      %v5831 = vpop.f32.mrf.mxu0
      %5832 = vmatprep.mubr.f32.mxu0 0.0
      %5833 = vmatmul.mubr.f32.gmra.mxu0 %v5603
      %v5834 = vpop.f32.mrf.mxu0
      %v5835 = vadd.f32 0.0, %v5834
      %v5836 = vpop.f32.mrf.mxu0
      %5837 = vmatprep.mubr.f32.mxu0 0.0
      %5838 = vmatmul.mubr.f32.gmra.mxu0 %v5606
      %v5839 = vpop.f32.mrf.mxu0
      %v5840 = vadd.f32 0.0, %v5839
      %v5841 = vpop.f32.mrf.mxu0
      %5842 = vmatprep.mubr.f32.mxu0 0.0
      %5843 = vmatmul.mubr.f32.gmra.mxu0 %v5609
      %v5844 = vpop.f32.mrf.mxu0
      %v5845 = vadd.f32 0.0, %v5844
      %v5846 = vpop.f32.mrf.mxu0
      %5847 = vmatprep.mubr.f32.mxu0 0.0
      %5848 = vmatmul.mubr.f32.gmra.mxu0 %v5612
      %v5849 = vpop.f32.mrf.mxu0
      %v5850 = vadd.f32 0.0, %v5849
      %v5851 = vpop.f32.mrf.mxu0
      %5852 = vmatprep.mubr.f32.mxu0 0.0
      %5853 = vmatmul.mubr.f32.gmra.mxu0 %v5615
      %v5854 = vpop.f32.mrf.mxu0
      %v5855 = vadd.f32 0.0, %v5854
      %v5856 = vpop.f32.mrf.mxu0
      %5857 = vmatprep.mubr.f32.mxu0 0.0
      %5858 = vmatmul.mubr.f32.gmra.mxu0 %v5618
      %v5859 = vpop.f32.mrf.mxu0
      %v5860 = vadd.f32 0.0, %v5859
      %v5861 = vpop.f32.mrf.mxu0
      %5862 = vmatprep.mubr.f32.mxu0 0.0
      %5863 = vmatmul.mubr.f32.gmra.mxu0 %v5621
      %v5864 = vpop.f32.mrf.mxu0
      %v5865 = vadd.f32 0.0, %v5864
      %v5866 = vpop.f32.mrf.mxu0
      %5867 = vmatprep.mubr.f32.mxu0 0.0
      %5868 = vmatmul.mubr.f32.gmra.mxu0 %v5624
      %v5869 = vpop.f32.mrf.mxu0
      %v5870 = vadd.f32 0.0, %v5869
      %v5871 = vpop.f32.mrf.mxu0
      %5872 = vmatprep.mubr.f32.mxu0 0.0
      %5873 = vmatmul.mubr.f32.gmra.mxu0 %v5627
      %v5874 = vpop.f32.mrf.mxu0
      %v5875 = vadd.f32 0.0, %v5874
      %v5876 = vpop.f32.mrf.mxu0
      %5877 = vmatprep.mubr.f32.mxu0 0.0
      %5878 = vmatmul.mubr.f32.gmra.mxu0 %v5630
      %v5879 = vpop.f32.mrf.mxu0
      %v5880 = vadd.f32 0.0, %v5879
      %v5881 = vpop.f32.mrf.mxu0
      %5882 = vmatprep.mubr.f32.mxu0 0.0
      %5883 = vmatmul.mubr.f32.gmra.mxu0 %v5633
      %v5884 = vpop.f32.mrf.mxu0
      %v5885 = vadd.f32 0.0, %v5884
      %v5886 = vpop.f32.mrf.mxu0
      %5887 = vmatprep.mubr.f32.mxu0 0.0
      %5888 = vmatmul.mubr.f32.gmra.mxu0 %v5636
      %v5889 = vpop.f32.mrf.mxu0
      %v5890 = vadd.f32 0.0, %v5889
      %v5891 = vpop.f32.mrf.mxu0
      %5892 = vmatprep.mubr.f32.mxu0 0.0
      %5893 = vmatmul.mubr.f32.gmra.mxu0 %v5639
      %v5894 = vpop.f32.mrf.mxu0
      %v5895 = vadd.f32 0.0, %v5894
      %v5896 = vpop.f32.mrf.mxu0
      %5897 = vmatprep.mubr.f32.mxu0 0.0
      %5898 = vmatmul.mubr.f32.gmra.mxu0 %v5642
      %v5899 = vpop.f32.mrf.mxu0
      %v5900 = vadd.f32 0.0, %v5899
      %v5901 = vpop.f32.mrf.mxu0
      %5902 = vmatprep.mubr.f32.mxu0 0.0
      %5903 = vmatmul.mubr.f32.gmra.mxu0 %v5645
      %v5904 = vpop.f32.mrf.mxu0
      %v5905 = vadd.f32 0.0, %v5904
      %v5906 = vpop.f32.mrf.mxu0
      %5907 = vmatprep.mubr.f32.mxu0 0.0
      %5908 = vmatmul.mubr.f32.gmra.mxu0 %v5648
      %v5909 = vpop.f32.mrf.mxu0
      %v5910 = vadd.f32 0.0, %v5909
      %v5911 = vpop.f32.mrf.mxu0
      %5912 = vmatprep.mubr.f32.mxu0 0.0
      %5913 = vmatmul.mubr.f32.gmra.mxu0 %v5651
      %v5914 = vpop.f32.mrf.mxu0
      %v5915 = vadd.f32 0.0, %v5914
      %v5916 = vpop.f32.mrf.mxu0
      %5917 = vdwg.mxu0
      %v5919 = vsel %vm5403, %v5450, 0
      %v5922 = vsel %vm5403, %v5451, 0
      %v5925 = vsel %vm5403, %v5452, 0
      %v5928 = vsel %vm5403, %v5453, 0
      %v5931 = vsel %vm5403, %v5454, 0
      %v5934 = vsel %vm5403, %v5455, 0
      %v5937 = vsel %vm5403, %v5456, 0
      %v5940 = vsel %vm5403, %v5457, 0
      %v5943 = vsel %vm5403, %v5458, 0
      %v5946 = vsel %vm5403, %v5459, 0
      %v5949 = vsel %vm5403, %v5460, 0
      %v5952 = vsel %vm5403, %v5461, 0
      %v5955 = vsel %vm5403, %v5462, 0
      %v5958 = vsel %vm5403, %v5463, 0
      %v5961 = vsel %vm5403, %v5464, 0
      %v5964 = vsel %vm5403, %v5465, 0
      %v5967 = vsel %vm5403, %v5466, 0
      %v5970 = vsel %vm5403, %v5467, 0
      %v5973 = vsel %vm5403, %v5468, 0
      %v5976 = vsel %vm5403, %v5469, 0
      %v5979 = vsel %vm5403, %v5470, 0
      %v5982 = vsel %vm5403, %v5471, 0
      %v5985 = vsel %vm5403, %v5472, 0
      %v5988 = vsel %vm5403, %v5473, 0
      %v5991 = vsel %vm5403, %v5474, 0
      %v5994 = vsel %vm5403, %v5475, 0
      %v5997 = vsel %vm5403, %v5476, 0
      %v6000 = vsel %vm5403, %v5477, 0
      %v6003 = vsel %vm5403, %v5478, 0
      %v6006 = vsel %vm5403, %v5479, 0
      %v6009 = vsel %vm5403, %v5480, 0
      %v6012 = vsel %vm5403, %v5481, 0
      %v6015 = vsel %vm5403, %v5482, 0
      %v6018 = vsel %vm5403, %v5483, 0
      %v6021 = vsel %vm5403, %v5484, 0
      %v6024 = vsel %vm5403, %v5485, 0
      %v6027 = vsel %vm5403, %v5486, 0
      %v6030 = vsel %vm5403, %v5487, 0
      %v6033 = vsel %vm5403, %v5488, 0
      %v6036 = vsel %vm5403, %v5489, 0
      %6038 = vmatprep.subr.mxu0 0.0
      %6039 = vmatpush1.msra.mxu0 0.0
      %6040 = vmatprep.subr.mxu0 0.0
      %6041 = vmatpush1.msra.mxu0 0.0
      %6042 = vmatprep.subr.mxu0 0.0
      %6043 = vmatpush1.msra.mxu0 0.0
      %6044 = vmatprep.subr.mxu0 0.0
      %6045 = vmatpush1.msra.mxu0 0.0
      %6046 = vmatprep.subr.mxu0 0.0
      %6047 = vmatpush1.msra.mxu0 0.0
      %6048 = vmatprep.subr.mxu0 0.0
      %6049 = vmatpush1.msra.mxu0 0.0
      %6050 = vmatprep.subr.mxu0 0.0
      %6051 = vmatpush1.msra.mxu0 0.0
      %6052 = vmatprep.subr.mxu0 0.0
      %6053 = vmatpush1.msra.mxu0 0.0
      %6054 = vmatprep.subr.mxu0 0.0
      %6055 = vmatpush1.msra.mxu0 0.0
      %6056 = vmatprep.subr.mxu0 0.0
      %6057 = vmatpush1.msra.mxu0 0.0
      %6058 = vmatprep.subr.mxu0 0.0
      %6059 = vmatpush1.msra.mxu0 0.0
      %6060 = vmatprep.subr.mxu0 0.0
      %6061 = vmatpush1.msra.mxu0 0.0
      %6062 = vmatprep.subr.mxu0 0.0
      %6063 = vmatpush1.msra.mxu0 0.0
      %6064 = vmatprep.subr.mxu0 0.0
      %6065 = vmatpush1.msra.mxu0 0.0
      %6066 = vmatprep.subr.mxu0 0.0
      %6067 = vmatpush1.msra.mxu0 0.0
      %6068 = vmatprep.subr.mxu0 0.0
      %6069 = vmatpush1.msra.mxu0 %v5490
      %6070 = vmatprep.subr.mxu0 0.0
      %6071 = vmatpush2.msra.mxu0 0.0
      %6072 = vmatprep.subr.mxu0 0.0
      %6073 = vmatpush2.msra.mxu0 0.0
      %6074 = vmatprep.subr.mxu0 0.0
      %6075 = vmatpush2.msra.mxu0 0.0
      %6076 = vmatprep.subr.mxu0 0.0
      %6077 = vmatpush2.msra.mxu0 0.0
      %6078 = vmatprep.subr.mxu0 0.0
      %6079 = vmatpush2.msra.mxu0 0.0
      %6080 = vmatprep.subr.mxu0 0.0
      %6081 = vmatpush2.msra.mxu0 0.0
      %6082 = vmatprep.subr.mxu0 0.0
      %6083 = vmatpush2.msra.mxu0 0.0
      %6084 = vmatprep.subr.mxu0 0.0
      %6085 = vmatpush2.msra.mxu0 0.0
      %6086 = vmatprep.subr.mxu0 0.0
      %6087 = vmatpush2.msra.mxu0 0.0
      %6088 = vmatprep.subr.mxu0 0.0
      %6089 = vmatpush2.msra.mxu0 0.0
      %6090 = vmatprep.subr.mxu0 0.0
      %6091 = vmatpush2.msra.mxu0 0.0
      %6092 = vmatprep.subr.mxu0 0.0
      %6093 = vmatpush2.msra.mxu0 0.0
      %6094 = vmatprep.subr.mxu0 0.0
      %6095 = vmatpush2.msra.mxu0 0.0
      %6096 = vmatprep.subr.mxu0 0.0
      %6097 = vmatpush2.msra.mxu0 0.0
      %6098 = vmatprep.subr.mxu0 0.0
      %6099 = vmatpush2.msra.mxu0 0.0
      %6100 = vmatprep.subr.mxu0 0.0
      %6101 = vmatpush2.msra.mxu0 0.0
      %6102 = vmatprep.mubr.f32.mxu0 0.0
      %6103 = vmatmul.mubr.f32.gmra.mxu0 %v5919
      %v6104 = vpop.f32.mrf.mxu0
      %v6105 = vadd.f32 %v5720, %v6104
      %v6106 = vpop.f32.mrf.mxu0
      %6107 = vmatprep.mubr.f32.mxu0 0.0
      %6108 = vmatmul.mubr.f32.gmra.mxu0 %v5922
      %v6109 = vpop.f32.mrf.mxu0
      %v6110 = vadd.f32 %v5725, %v6109
      %v6111 = vpop.f32.mrf.mxu0
      %6112 = vmatprep.mubr.f32.mxu0 0.0
      %6113 = vmatmul.mubr.f32.gmra.mxu0 %v5925
      %v6114 = vpop.f32.mrf.mxu0
      %v6115 = vadd.f32 %v5730, %v6114
      %v6116 = vpop.f32.mrf.mxu0
      %6117 = vmatprep.mubr.f32.mxu0 0.0
      %6118 = vmatmul.mubr.f32.gmra.mxu0 %v5928
      %v6119 = vpop.f32.mrf.mxu0
      %v6120 = vadd.f32 %v5735, %v6119
      %v6121 = vpop.f32.mrf.mxu0
      %6122 = vmatprep.mubr.f32.mxu0 0.0
      %6123 = vmatmul.mubr.f32.gmra.mxu0 %v5931
      %v6124 = vpop.f32.mrf.mxu0
      %v6125 = vadd.f32 %v5740, %v6124
      %v6126 = vpop.f32.mrf.mxu0
      %6127 = vmatprep.mubr.f32.mxu0 0.0
      %6128 = vmatmul.mubr.f32.gmra.mxu0 %v5934
      %v6129 = vpop.f32.mrf.mxu0
      %v6130 = vadd.f32 %v5745, %v6129
      %v6131 = vpop.f32.mrf.mxu0
      %6132 = vmatprep.mubr.f32.mxu0 0.0
      %6133 = vmatmul.mubr.f32.gmra.mxu0 %v5937
      %v6134 = vpop.f32.mrf.mxu0
      %v6135 = vadd.f32 %v5750, %v6134
      %v6136 = vpop.f32.mrf.mxu0
      %6137 = vmatprep.mubr.f32.mxu0 0.0
      %6138 = vmatmul.mubr.f32.gmra.mxu0 %v5940
      %v6139 = vpop.f32.mrf.mxu0
      %v6140 = vadd.f32 %v5755, %v6139
      %v6141 = vpop.f32.mrf.mxu0
      %6142 = vmatprep.mubr.f32.mxu0 0.0
      %6143 = vmatmul.mubr.f32.gmra.mxu0 %v5943
      %v6144 = vpop.f32.mrf.mxu0
      %v6145 = vadd.f32 %v5760, %v6144
      %v6146 = vpop.f32.mrf.mxu0
      %6147 = vmatprep.mubr.f32.mxu0 0.0
      %6148 = vmatmul.mubr.f32.gmra.mxu0 %v5946
      %v6149 = vpop.f32.mrf.mxu0
      %v6150 = vadd.f32 %v5765, %v6149
      %v6151 = vpop.f32.mrf.mxu0
      %6152 = vmatprep.mubr.f32.mxu0 0.0
      %6153 = vmatmul.mubr.f32.gmra.mxu0 %v5949
      %v6154 = vpop.f32.mrf.mxu0
      %v6155 = vadd.f32 %v5770, %v6154
      %v6156 = vpop.f32.mrf.mxu0
      %6157 = vmatprep.mubr.f32.mxu0 0.0
      %6158 = vmatmul.mubr.f32.gmra.mxu0 %v5952
      %v6159 = vpop.f32.mrf.mxu0
      %v6160 = vadd.f32 %v5775, %v6159
      %v6161 = vpop.f32.mrf.mxu0
      %6162 = vmatprep.mubr.f32.mxu0 0.0
      %6163 = vmatmul.mubr.f32.gmra.mxu0 %v5955
      %v6164 = vpop.f32.mrf.mxu0
      %v6165 = vadd.f32 %v5780, %v6164
      %v6166 = vpop.f32.mrf.mxu0
      %6167 = vmatprep.mubr.f32.mxu0 0.0
      %6168 = vmatmul.mubr.f32.gmra.mxu0 %v5958
      %v6169 = vpop.f32.mrf.mxu0
      %v6170 = vadd.f32 %v5785, %v6169
      %v6171 = vpop.f32.mrf.mxu0
      %6172 = vmatprep.mubr.f32.mxu0 0.0
      %6173 = vmatmul.mubr.f32.gmra.mxu0 %v5961
      %v6174 = vpop.f32.mrf.mxu0
      %v6175 = vadd.f32 %v5790, %v6174
      %v6176 = vpop.f32.mrf.mxu0
      %6177 = vmatprep.mubr.f32.mxu0 0.0
      %6178 = vmatmul.mubr.f32.gmra.mxu0 %v5964
      %v6179 = vpop.f32.mrf.mxu0
      %v6180 = vadd.f32 %v5795, %v6179
      %v6181 = vpop.f32.mrf.mxu0
      %6182 = vmatprep.mubr.f32.mxu0 0.0
      %6183 = vmatmul.mubr.f32.gmra.mxu0 %v5967
      %v6184 = vpop.f32.mrf.mxu0
      %v6185 = vadd.f32 %v5800, %v6184
      %v6186 = vpop.f32.mrf.mxu0
      %6187 = vmatprep.mubr.f32.mxu0 0.0
      %6188 = vmatmul.mubr.f32.gmra.mxu0 %v5970
      %v6189 = vpop.f32.mrf.mxu0
      %v6190 = vadd.f32 %v5805, %v6189
      %v6191 = vpop.f32.mrf.mxu0
      %6192 = vmatprep.mubr.f32.mxu0 0.0
      %6193 = vmatmul.mubr.f32.gmra.mxu0 %v5973
      %v6194 = vpop.f32.mrf.mxu0
      %v6195 = vadd.f32 %v5810, %v6194
      %v6196 = vpop.f32.mrf.mxu0
      %6197 = vmatprep.mubr.f32.mxu0 0.0
      %6198 = vmatmul.mubr.f32.gmra.mxu0 %v5976
      %v6199 = vpop.f32.mrf.mxu0
      %v6200 = vadd.f32 %v5815, %v6199
      %v6201 = vpop.f32.mrf.mxu0
      %6202 = vmatprep.mubr.f32.mxu0 0.0
      %6203 = vmatmul.mubr.f32.gmra.mxu0 %v5979
      %v6204 = vpop.f32.mrf.mxu0
      %v6205 = vadd.f32 %v5820, %v6204
      %v6206 = vpop.f32.mrf.mxu0
      %6207 = vmatprep.mubr.f32.mxu0 0.0
      %6208 = vmatmul.mubr.f32.gmra.mxu0 %v5982
      %v6209 = vpop.f32.mrf.mxu0
      %v6210 = vadd.f32 %v5825, %v6209
      %v6211 = vpop.f32.mrf.mxu0
      %6212 = vmatprep.mubr.f32.mxu0 0.0
      %6213 = vmatmul.mubr.f32.gmra.mxu0 %v5985
      %v6214 = vpop.f32.mrf.mxu0
      %v6215 = vadd.f32 %v5830, %v6214
      %v6216 = vpop.f32.mrf.mxu0
      %6217 = vmatprep.mubr.f32.mxu0 0.0
      %6218 = vmatmul.mubr.f32.gmra.mxu0 %v5988
      %v6219 = vpop.f32.mrf.mxu0
      %v6220 = vadd.f32 %v5835, %v6219
      %v6221 = vpop.f32.mrf.mxu0
      %6222 = vmatprep.mubr.f32.mxu0 0.0
      %6223 = vmatmul.mubr.f32.gmra.mxu0 %v5991
      %v6224 = vpop.f32.mrf.mxu0
      %v6225 = vadd.f32 %v5840, %v6224
      %v6226 = vpop.f32.mrf.mxu0
      %6227 = vmatprep.mubr.f32.mxu0 0.0
      %6228 = vmatmul.mubr.f32.gmra.mxu0 %v5994
      %v6229 = vpop.f32.mrf.mxu0
      %v6230 = vadd.f32 %v5845, %v6229
      %v6231 = vpop.f32.mrf.mxu0
      %6232 = vmatprep.mubr.f32.mxu0 0.0
      %6233 = vmatmul.mubr.f32.gmra.mxu0 %v5997
      %v6234 = vpop.f32.mrf.mxu0
      %v6235 = vadd.f32 %v5850, %v6234
      %v6236 = vpop.f32.mrf.mxu0
      %6237 = vmatprep.mubr.f32.mxu0 0.0
      %6238 = vmatmul.mubr.f32.gmra.mxu0 %v6000
      %v6239 = vpop.f32.mrf.mxu0
      %v6240 = vadd.f32 %v5855, %v6239
      %v6241 = vpop.f32.mrf.mxu0
      %6242 = vmatprep.mubr.f32.mxu0 0.0
      %6243 = vmatmul.mubr.f32.gmra.mxu0 %v6003
      %v6244 = vpop.f32.mrf.mxu0
      %v6245 = vadd.f32 %v5860, %v6244
      %v6246 = vpop.f32.mrf.mxu0
      %6247 = vmatprep.mubr.f32.mxu0 0.0
      %6248 = vmatmul.mubr.f32.gmra.mxu0 %v6006
      %v6249 = vpop.f32.mrf.mxu0
      %v6250 = vadd.f32 %v5865, %v6249
      %v6251 = vpop.f32.mrf.mxu0
      %6252 = vmatprep.mubr.f32.mxu0 0.0
      %6253 = vmatmul.mubr.f32.gmra.mxu0 %v6009
      %v6254 = vpop.f32.mrf.mxu0
      %v6255 = vadd.f32 %v5870, %v6254
      %v6256 = vpop.f32.mrf.mxu0
      %6257 = vmatprep.mubr.f32.mxu0 0.0
      %6258 = vmatmul.mubr.f32.gmra.mxu0 %v6012
      %v6259 = vpop.f32.mrf.mxu0
      %v6260 = vadd.f32 %v5875, %v6259
      %v6261 = vpop.f32.mrf.mxu0
      %6262 = vmatprep.mubr.f32.mxu0 0.0
      %6263 = vmatmul.mubr.f32.gmra.mxu0 %v6015
      %v6264 = vpop.f32.mrf.mxu0
      %v6265 = vadd.f32 %v5880, %v6264
      %v6266 = vpop.f32.mrf.mxu0
      %6267 = vmatprep.mubr.f32.mxu0 0.0
      %6268 = vmatmul.mubr.f32.gmra.mxu0 %v6018
      %v6269 = vpop.f32.mrf.mxu0
      %v6270 = vadd.f32 %v5885, %v6269
      %v6271 = vpop.f32.mrf.mxu0
      %6272 = vmatprep.mubr.f32.mxu0 0.0
      %6273 = vmatmul.mubr.f32.gmra.mxu0 %v6021
      %v6274 = vpop.f32.mrf.mxu0
      %v6275 = vadd.f32 %v5890, %v6274
      %v6276 = vpop.f32.mrf.mxu0
      %6277 = vmatprep.mubr.f32.mxu0 0.0
      %6278 = vmatmul.mubr.f32.gmra.mxu0 %v6024
      %v6279 = vpop.f32.mrf.mxu0
      %v6280 = vadd.f32 %v5895, %v6279
      %v6281 = vpop.f32.mrf.mxu0
      %6282 = vmatprep.mubr.f32.mxu0 0.0
      %6283 = vmatmul.mubr.f32.gmra.mxu0 %v6027
      %v6284 = vpop.f32.mrf.mxu0
      %v6285 = vadd.f32 %v5900, %v6284
      %v6286 = vpop.f32.mrf.mxu0
      %6287 = vmatprep.mubr.f32.mxu0 0.0
      %6288 = vmatmul.mubr.f32.gmra.mxu0 %v6030
      %v6289 = vpop.f32.mrf.mxu0
      %v6290 = vadd.f32 %v5905, %v6289
      %v6291 = vpop.f32.mrf.mxu0
      %6292 = vmatprep.mubr.f32.mxu0 0.0
      %6293 = vmatmul.mubr.f32.gmra.mxu0 %v6033
      %v6294 = vpop.f32.mrf.mxu0
      %v6295 = vadd.f32 %v5910, %v6294
      %v6296 = vpop.f32.mrf.mxu0
      %6297 = vmatprep.mubr.f32.mxu0 0.0
      %6298 = vmatmul.mubr.f32.gmra.mxu0 %v6036
      %v6299 = vpop.f32.mrf.mxu0
      %v6300 = vadd.f32 %v5915, %v6299
      %v6301 = vpop.f32.mrf.mxu0
      %6302 = vdwg.mxu0
      %v6303 = vld [vmem:[#allocation2 + $0x2] sm:$0xff]
      %v6304 = vld [vmem:[#allocation2 + $0xa] sm:$0xff]
      %v6305 = vld [vmem:[#allocation2 + $0x12] sm:$0xff]
      %v6306 = vld [vmem:[#allocation2 + $0x1a] sm:$0xff]
      %v6307 = vld [vmem:[#allocation2 + $0x22] sm:$0xff]
      %v6308 = vld [vmem:[#allocation2 + $0x2a] sm:$0xff]
      %v6309 = vld [vmem:[#allocation2 + $0x32] sm:$0xff]
      %v6310 = vld [vmem:[#allocation2 + $0x3a] sm:$0xff]
      %v6311 = vld [vmem:[#allocation2 + $0x42] sm:$0xff]
      %v6312 = vld [vmem:[#allocation2 + $0x4a] sm:$0xff]
      %v6313 = vld [vmem:[#allocation2 + $0x52] sm:$0xff]
      %v6314 = vld [vmem:[#allocation2 + $0x5a] sm:$0xff]
      %v6315 = vld [vmem:[#allocation2 + $0x62] sm:$0xff]
      %v6316 = vld [vmem:[#allocation2 + $0x6a] sm:$0xff]
      %v6317 = vld [vmem:[#allocation2 + $0x72] sm:$0xff]
      %v6318 = vld [vmem:[#allocation2 + $0x7a] sm:$0xff]
      %v6319 = vld [vmem:[#allocation2 + $0x82] sm:$0xff]
      %v6320 = vld [vmem:[#allocation2 + $0x8a] sm:$0xff]
      %v6321 = vld [vmem:[#allocation2 + $0x92] sm:$0xff]
      %v6322 = vld [vmem:[#allocation2 + $0x9a] sm:$0xff]
      %v6323 = vld [vmem:[#allocation2 + $0xa2] sm:$0xff]
      %v6324 = vld [vmem:[#allocation2 + $0xaa] sm:$0xff]
      %v6325 = vld [vmem:[#allocation2 + $0xb2] sm:$0xff]
      %v6326 = vld [vmem:[#allocation2 + $0xba] sm:$0xff]
      %v6327 = vld [vmem:[#allocation2 + $0xc2] sm:$0xff]
      %v6328 = vld [vmem:[#allocation2 + $0xca] sm:$0xff]
      %v6329 = vld [vmem:[#allocation2 + $0xd2] sm:$0xff]
      %v6330 = vld [vmem:[#allocation2 + $0xda] sm:$0xff]
      %v6331 = vld [vmem:[#allocation2 + $0xe2] sm:$0xff]
      %v6332 = vld [vmem:[#allocation2 + $0xea] sm:$0xff]
      %v6333 = vld [vmem:[#allocation2 + $0xf2] sm:$0xff]
      %v6334 = vld [vmem:[#allocation2 + $0xfa] sm:$0xff]
      %v6335 = vld [vmem:[#allocation2 + $0x102] sm:$0xff]
      %v6336 = vld [vmem:[#allocation2 + $0x10a] sm:$0xff]
      %v6337 = vld [vmem:[#allocation2 + $0x112] sm:$0xff]
      %v6338 = vld [vmem:[#allocation2 + $0x11a] sm:$0xff]
      %v6339 = vld [vmem:[#allocation2 + $0x122] sm:$0xff]
      %v6340 = vld [vmem:[#allocation2 + $0x12a] sm:$0xff]
      %v6341 = vld [vmem:[#allocation2 + $0x132] sm:$0xff]
      %v6342 = vld [vmem:[#allocation2 + $0x13a] sm:$0xff]
      %s6343 = scalar_lea.vmem %s291, 16
      %v6344 = vld [vmem:[%s6343] sm:$0xff]
      %v6346 = vsel %vm5403, %v6303, 0
      %v6349 = vsel %vm5403, %v6304, 0
      %v6352 = vsel %vm5403, %v6305, 0
      %v6355 = vsel %vm5403, %v6306, 0
      %v6358 = vsel %vm5403, %v6307, 0
      %v6361 = vsel %vm5403, %v6308, 0
      %v6364 = vsel %vm5403, %v6309, 0
      %v6367 = vsel %vm5403, %v6310, 0
      %v6370 = vsel %vm5403, %v6311, 0
      %v6373 = vsel %vm5403, %v6312, 0
      %v6376 = vsel %vm5403, %v6313, 0
      %v6379 = vsel %vm5403, %v6314, 0
      %v6382 = vsel %vm5403, %v6315, 0
      %v6385 = vsel %vm5403, %v6316, 0
      %v6388 = vsel %vm5403, %v6317, 0
      %v6391 = vsel %vm5403, %v6318, 0
      %v6394 = vsel %vm5403, %v6319, 0
      %v6397 = vsel %vm5403, %v6320, 0
      %v6400 = vsel %vm5403, %v6321, 0
      %v6403 = vsel %vm5403, %v6322, 0
      %v6406 = vsel %vm5403, %v6323, 0
      %v6409 = vsel %vm5403, %v6324, 0
      %v6412 = vsel %vm5403, %v6325, 0
      %v6415 = vsel %vm5403, %v6326, 0
      %v6418 = vsel %vm5403, %v6327, 0
      %v6421 = vsel %vm5403, %v6328, 0
      %v6424 = vsel %vm5403, %v6329, 0
      %v6427 = vsel %vm5403, %v6330, 0
      %v6430 = vsel %vm5403, %v6331, 0
      %v6433 = vsel %vm5403, %v6332, 0
      %v6436 = vsel %vm5403, %v6333, 0
      %v6439 = vsel %vm5403, %v6334, 0
      %v6442 = vsel %vm5403, %v6335, 0
      %v6445 = vsel %vm5403, %v6336, 0
      %v6448 = vsel %vm5403, %v6337, 0
      %v6451 = vsel %vm5403, %v6338, 0
      %v6454 = vsel %vm5403, %v6339, 0
      %v6457 = vsel %vm5403, %v6340, 0
      %v6460 = vsel %vm5403, %v6341, 0
      %v6463 = vsel %vm5403, %v6342, 0
      %6465 = vmatprep.subr.mxu0 0.0
      %6466 = vmatpush1.msra.mxu0 0.0
      %6467 = vmatprep.subr.mxu0 0.0
      %6468 = vmatpush1.msra.mxu0 0.0
      %6469 = vmatprep.subr.mxu0 0.0
      %6470 = vmatpush1.msra.mxu0 0.0
      %6471 = vmatprep.subr.mxu0 0.0
      %6472 = vmatpush1.msra.mxu0 0.0
      %6473 = vmatprep.subr.mxu0 0.0
      %6474 = vmatpush1.msra.mxu0 0.0
      %6475 = vmatprep.subr.mxu0 0.0
      %6476 = vmatpush1.msra.mxu0 0.0
      %6477 = vmatprep.subr.mxu0 0.0
      %6478 = vmatpush1.msra.mxu0 0.0
      %6479 = vmatprep.subr.mxu0 0.0
      %6480 = vmatpush1.msra.mxu0 0.0
      %6481 = vmatprep.subr.mxu0 0.0
      %6482 = vmatpush1.msra.mxu0 0.0
      %6483 = vmatprep.subr.mxu0 0.0
      %6484 = vmatpush1.msra.mxu0 0.0
      %6485 = vmatprep.subr.mxu0 0.0
      %6486 = vmatpush1.msra.mxu0 0.0
      %6487 = vmatprep.subr.mxu0 0.0
      %6488 = vmatpush1.msra.mxu0 0.0
      %6489 = vmatprep.subr.mxu0 0.0
      %6490 = vmatpush1.msra.mxu0 0.0
      %6491 = vmatprep.subr.mxu0 0.0
      %6492 = vmatpush1.msra.mxu0 0.0
      %6493 = vmatprep.subr.mxu0 0.0
      %6494 = vmatpush1.msra.mxu0 0.0
      %6495 = vmatprep.subr.mxu0 0.0
      %6496 = vmatpush1.msra.mxu0 %v6344
      %6497 = vmatprep.subr.mxu0 0.0
      %6498 = vmatpush2.msra.mxu0 0.0
      %6499 = vmatprep.subr.mxu0 0.0
      %6500 = vmatpush2.msra.mxu0 0.0
      %6501 = vmatprep.subr.mxu0 0.0
      %6502 = vmatpush2.msra.mxu0 0.0
      %6503 = vmatprep.subr.mxu0 0.0
      %6504 = vmatpush2.msra.mxu0 0.0
      %6505 = vmatprep.subr.mxu0 0.0
      %6506 = vmatpush2.msra.mxu0 0.0
      %6507 = vmatprep.subr.mxu0 0.0
      %6508 = vmatpush2.msra.mxu0 0.0
      %6509 = vmatprep.subr.mxu0 0.0
      %6510 = vmatpush2.msra.mxu0 0.0
      %6511 = vmatprep.subr.mxu0 0.0
      %6512 = vmatpush2.msra.mxu0 0.0
      %6513 = vmatprep.subr.mxu0 0.0
      %6514 = vmatpush2.msra.mxu0 0.0
      %6515 = vmatprep.subr.mxu0 0.0
      %6516 = vmatpush2.msra.mxu0 0.0
      %6517 = vmatprep.subr.mxu0 0.0
      %6518 = vmatpush2.msra.mxu0 0.0
      %6519 = vmatprep.subr.mxu0 0.0
      %6520 = vmatpush2.msra.mxu0 0.0
      %6521 = vmatprep.subr.mxu0 0.0
      %6522 = vmatpush2.msra.mxu0 0.0
      %6523 = vmatprep.subr.mxu0 0.0
      %6524 = vmatpush2.msra.mxu0 0.0
      %6525 = vmatprep.subr.mxu0 0.0
      %6526 = vmatpush2.msra.mxu0 0.0
      %6527 = vmatprep.subr.mxu0 0.0
      %6528 = vmatpush2.msra.mxu0 0.0
      %6529 = vmatprep.mubr.f32.mxu0 0.0
      %6530 = vmatmul.mubr.f32.gmra.mxu0 %v6346
      %v6531 = vpop.f32.mrf.mxu0
      %v6532 = vadd.f32 0.0, %v6531
      %v6533 = vpop.f32.mrf.mxu0
      %6534 = vmatprep.mubr.f32.mxu0 0.0
      %6535 = vmatmul.mubr.f32.gmra.mxu0 %v6349
      %v6536 = vpop.f32.mrf.mxu0
      %v6537 = vadd.f32 0.0, %v6536
      %v6538 = vpop.f32.mrf.mxu0
      %6539 = vmatprep.mubr.f32.mxu0 0.0
      %6540 = vmatmul.mubr.f32.gmra.mxu0 %v6352
      %v6541 = vpop.f32.mrf.mxu0
      %v6542 = vadd.f32 0.0, %v6541
      %v6543 = vpop.f32.mrf.mxu0
      %6544 = vmatprep.mubr.f32.mxu0 0.0
      %6545 = vmatmul.mubr.f32.gmra.mxu0 %v6355
      %v6546 = vpop.f32.mrf.mxu0
      %v6547 = vadd.f32 0.0, %v6546
      %v6548 = vpop.f32.mrf.mxu0
      %6549 = vmatprep.mubr.f32.mxu0 0.0
      %6550 = vmatmul.mubr.f32.gmra.mxu0 %v6358
      %v6551 = vpop.f32.mrf.mxu0
      %v6552 = vadd.f32 0.0, %v6551
      %v6553 = vpop.f32.mrf.mxu0
      %6554 = vmatprep.mubr.f32.mxu0 0.0
      %6555 = vmatmul.mubr.f32.gmra.mxu0 %v6361
      %v6556 = vpop.f32.mrf.mxu0
      %v6557 = vadd.f32 0.0, %v6556
      %v6558 = vpop.f32.mrf.mxu0
      %6559 = vmatprep.mubr.f32.mxu0 0.0
      %6560 = vmatmul.mubr.f32.gmra.mxu0 %v6364
      %v6561 = vpop.f32.mrf.mxu0
      %v6562 = vadd.f32 0.0, %v6561
      %v6563 = vpop.f32.mrf.mxu0
      %6564 = vmatprep.mubr.f32.mxu0 0.0
      %6565 = vmatmul.mubr.f32.gmra.mxu0 %v6367
      %v6566 = vpop.f32.mrf.mxu0
      %v6567 = vadd.f32 0.0, %v6566
      %v6568 = vpop.f32.mrf.mxu0
      %6569 = vmatprep.mubr.f32.mxu0 0.0
      %6570 = vmatmul.mubr.f32.gmra.mxu0 %v6370
      %v6571 = vpop.f32.mrf.mxu0
      %v6572 = vadd.f32 0.0, %v6571
      %v6573 = vpop.f32.mrf.mxu0
      %6574 = vmatprep.mubr.f32.mxu0 0.0
      %6575 = vmatmul.mubr.f32.gmra.mxu0 %v6373
      %v6576 = vpop.f32.mrf.mxu0
      %v6577 = vadd.f32 0.0, %v6576
      %v6578 = vpop.f32.mrf.mxu0
      %6579 = vmatprep.mubr.f32.mxu0 0.0
      %6580 = vmatmul.mubr.f32.gmra.mxu0 %v6376
      %v6581 = vpop.f32.mrf.mxu0
      %v6582 = vadd.f32 0.0, %v6581
      %v6583 = vpop.f32.mrf.mxu0
      %6584 = vmatprep.mubr.f32.mxu0 0.0
      %6585 = vmatmul.mubr.f32.gmra.mxu0 %v6379
      %v6586 = vpop.f32.mrf.mxu0
      %v6587 = vadd.f32 0.0, %v6586
      %v6588 = vpop.f32.mrf.mxu0
      %6589 = vmatprep.mubr.f32.mxu0 0.0
      %6590 = vmatmul.mubr.f32.gmra.mxu0 %v6382
      %v6591 = vpop.f32.mrf.mxu0
      %v6592 = vadd.f32 0.0, %v6591
      %v6593 = vpop.f32.mrf.mxu0
      %6594 = vmatprep.mubr.f32.mxu0 0.0
      %6595 = vmatmul.mubr.f32.gmra.mxu0 %v6385
      %v6596 = vpop.f32.mrf.mxu0
      %v6597 = vadd.f32 0.0, %v6596
      %v6598 = vpop.f32.mrf.mxu0
      %6599 = vmatprep.mubr.f32.mxu0 0.0
      %6600 = vmatmul.mubr.f32.gmra.mxu0 %v6388
      %v6601 = vpop.f32.mrf.mxu0
      %v6602 = vadd.f32 0.0, %v6601
      %v6603 = vpop.f32.mrf.mxu0
      %6604 = vmatprep.mubr.f32.mxu0 0.0
      %6605 = vmatmul.mubr.f32.gmra.mxu0 %v6391
      %v6606 = vpop.f32.mrf.mxu0
      %v6607 = vadd.f32 0.0, %v6606
      %v6608 = vpop.f32.mrf.mxu0
      %6609 = vmatprep.mubr.f32.mxu0 0.0
      %6610 = vmatmul.mubr.f32.gmra.mxu0 %v6394
      %v6611 = vpop.f32.mrf.mxu0
      %v6612 = vadd.f32 0.0, %v6611
      %v6613 = vpop.f32.mrf.mxu0
      %6614 = vmatprep.mubr.f32.mxu0 0.0
      %6615 = vmatmul.mubr.f32.gmra.mxu0 %v6397
      %v6616 = vpop.f32.mrf.mxu0
      %v6617 = vadd.f32 0.0, %v6616
      %v6618 = vpop.f32.mrf.mxu0
      %6619 = vmatprep.mubr.f32.mxu0 0.0
      %6620 = vmatmul.mubr.f32.gmra.mxu0 %v6400
      %v6621 = vpop.f32.mrf.mxu0
      %v6622 = vadd.f32 0.0, %v6621
      %v6623 = vpop.f32.mrf.mxu0
      %6624 = vmatprep.mubr.f32.mxu0 0.0
      %6625 = vmatmul.mubr.f32.gmra.mxu0 %v6403
      %v6626 = vpop.f32.mrf.mxu0
      %v6627 = vadd.f32 0.0, %v6626
      %v6628 = vpop.f32.mrf.mxu0
      %6629 = vmatprep.mubr.f32.mxu0 0.0
      %6630 = vmatmul.mubr.f32.gmra.mxu0 %v6406
      %v6631 = vpop.f32.mrf.mxu0
      %v6632 = vadd.f32 0.0, %v6631
      %v6633 = vpop.f32.mrf.mxu0
      %6634 = vmatprep.mubr.f32.mxu0 0.0
      %6635 = vmatmul.mubr.f32.gmra.mxu0 %v6409
      %v6636 = vpop.f32.mrf.mxu0
      %v6637 = vadd.f32 0.0, %v6636
      %v6638 = vpop.f32.mrf.mxu0
      %6639 = vmatprep.mubr.f32.mxu0 0.0
      %6640 = vmatmul.mubr.f32.gmra.mxu0 %v6412
      %v6641 = vpop.f32.mrf.mxu0
      %v6642 = vadd.f32 0.0, %v6641
      %v6643 = vpop.f32.mrf.mxu0
      %6644 = vmatprep.mubr.f32.mxu0 0.0
      %6645 = vmatmul.mubr.f32.gmra.mxu0 %v6415
      %v6646 = vpop.f32.mrf.mxu0
      %v6647 = vadd.f32 0.0, %v6646
      %v6648 = vpop.f32.mrf.mxu0
      %6649 = vmatprep.mubr.f32.mxu0 0.0
      %6650 = vmatmul.mubr.f32.gmra.mxu0 %v6418
      %v6651 = vpop.f32.mrf.mxu0
      %v6652 = vadd.f32 0.0, %v6651
      %v6653 = vpop.f32.mrf.mxu0
      %6654 = vmatprep.mubr.f32.mxu0 0.0
      %6655 = vmatmul.mubr.f32.gmra.mxu0 %v6421
      %v6656 = vpop.f32.mrf.mxu0
      %v6657 = vadd.f32 0.0, %v6656
      %v6658 = vpop.f32.mrf.mxu0
      %6659 = vmatprep.mubr.f32.mxu0 0.0
      %6660 = vmatmul.mubr.f32.gmra.mxu0 %v6424
      %v6661 = vpop.f32.mrf.mxu0
      %v6662 = vadd.f32 0.0, %v6661
      %v6663 = vpop.f32.mrf.mxu0
      %6664 = vmatprep.mubr.f32.mxu0 0.0
      %6665 = vmatmul.mubr.f32.gmra.mxu0 %v6427
      %v6666 = vpop.f32.mrf.mxu0
      %v6667 = vadd.f32 0.0, %v6666
      %v6668 = vpop.f32.mrf.mxu0
      %6669 = vmatprep.mubr.f32.mxu0 0.0
      %6670 = vmatmul.mubr.f32.gmra.mxu0 %v6430
      %v6671 = vpop.f32.mrf.mxu0
      %v6672 = vadd.f32 0.0, %v6671
      %v6673 = vpop.f32.mrf.mxu0
      %6674 = vmatprep.mubr.f32.mxu0 0.0
      %6675 = vmatmul.mubr.f32.gmra.mxu0 %v6433
      %v6676 = vpop.f32.mrf.mxu0
      %v6677 = vadd.f32 0.0, %v6676
      %v6678 = vpop.f32.mrf.mxu0
      %6679 = vmatprep.mubr.f32.mxu0 0.0
      %6680 = vmatmul.mubr.f32.gmra.mxu0 %v6436
      %v6681 = vpop.f32.mrf.mxu0
      %v6682 = vadd.f32 0.0, %v6681
      %v6683 = vpop.f32.mrf.mxu0
      %6684 = vmatprep.mubr.f32.mxu0 0.0
      %6685 = vmatmul.mubr.f32.gmra.mxu0 %v6439
      %v6686 = vpop.f32.mrf.mxu0
      %v6687 = vadd.f32 0.0, %v6686
      %v6688 = vpop.f32.mrf.mxu0
      %6689 = vmatprep.mubr.f32.mxu0 0.0
      %6690 = vmatmul.mubr.f32.gmra.mxu0 %v6442
      %v6691 = vpop.f32.mrf.mxu0
      %v6692 = vadd.f32 0.0, %v6691
      %v6693 = vpop.f32.mrf.mxu0
      %6694 = vmatprep.mubr.f32.mxu0 0.0
      %6695 = vmatmul.mubr.f32.gmra.mxu0 %v6445
      %v6696 = vpop.f32.mrf.mxu0
      %v6697 = vadd.f32 0.0, %v6696
      %v6698 = vpop.f32.mrf.mxu0
      %6699 = vmatprep.mubr.f32.mxu0 0.0
      %6700 = vmatmul.mubr.f32.gmra.mxu0 %v6448
      %v6701 = vpop.f32.mrf.mxu0
      %v6702 = vadd.f32 0.0, %v6701
      %v6703 = vpop.f32.mrf.mxu0
      %6704 = vmatprep.mubr.f32.mxu0 0.0
      %6705 = vmatmul.mubr.f32.gmra.mxu0 %v6451
      %v6706 = vpop.f32.mrf.mxu0
      %v6707 = vadd.f32 0.0, %v6706
      %v6708 = vpop.f32.mrf.mxu0
      %6709 = vmatprep.mubr.f32.mxu0 0.0
      %6710 = vmatmul.mubr.f32.gmra.mxu0 %v6454
      %v6711 = vpop.f32.mrf.mxu0
      %v6712 = vadd.f32 0.0, %v6711
      %v6713 = vpop.f32.mrf.mxu0
      %6714 = vmatprep.mubr.f32.mxu0 0.0
      %6715 = vmatmul.mubr.f32.gmra.mxu0 %v6457
      %v6716 = vpop.f32.mrf.mxu0
      %v6717 = vadd.f32 0.0, %v6716
      %v6718 = vpop.f32.mrf.mxu0
      %6719 = vmatprep.mubr.f32.mxu0 0.0
      %6720 = vmatmul.mubr.f32.gmra.mxu0 %v6460
      %v6721 = vpop.f32.mrf.mxu0
      %v6722 = vadd.f32 0.0, %v6721
      %v6723 = vpop.f32.mrf.mxu0
      %6724 = vmatprep.mubr.f32.mxu0 0.0
      %6725 = vmatmul.mubr.f32.gmra.mxu0 %v6463
      %v6726 = vpop.f32.mrf.mxu0
      %v6727 = vadd.f32 0.0, %v6726
      %v6728 = vpop.f32.mrf.mxu0
      %6729 = vdwg.mxu0
      %v6730 = vadd.f32 %v6105, %v6532
      %v6731 = vadd.f32 %v6110, %v6537
      %v6732 = vadd.f32 %v6115, %v6542
      %v6733 = vadd.f32 %v6120, %v6547
      %v6734 = vadd.f32 %v6125, %v6552
      %v6735 = vadd.f32 %v6130, %v6557
      %v6736 = vadd.f32 %v6135, %v6562
      %v6737 = vadd.f32 %v6140, %v6567
      %v6738 = vadd.f32 %v6145, %v6572
      %v6739 = vadd.f32 %v6150, %v6577
      %v6740 = vadd.f32 %v6155, %v6582
      %v6741 = vadd.f32 %v6160, %v6587
      %v6742 = vadd.f32 %v6165, %v6592
      %v6743 = vadd.f32 %v6170, %v6597
      %v6744 = vadd.f32 %v6175, %v6602
      %v6745 = vadd.f32 %v6180, %v6607
      %v6746 = vadd.f32 %v6185, %v6612
      %v6747 = vadd.f32 %v6190, %v6617
      %v6748 = vadd.f32 %v6195, %v6622
      %v6749 = vadd.f32 %v6200, %v6627
      %v6750 = vadd.f32 %v6205, %v6632
      %v6751 = vadd.f32 %v6210, %v6637
      %v6752 = vadd.f32 %v6215, %v6642
      %v6753 = vadd.f32 %v6220, %v6647
      %v6754 = vadd.f32 %v6225, %v6652
      %v6755 = vadd.f32 %v6230, %v6657
      %v6756 = vadd.f32 %v6235, %v6662
      %v6757 = vadd.f32 %v6240, %v6667
      %v6758 = vadd.f32 %v6245, %v6672
      %v6759 = vadd.f32 %v6250, %v6677
      %v6760 = vadd.f32 %v6255, %v6682
      %v6761 = vadd.f32 %v6260, %v6687
      %v6762 = vadd.f32 %v6265, %v6692
      %v6763 = vadd.f32 %v6270, %v6697
      %v6764 = vadd.f32 %v6275, %v6702
      %v6765 = vadd.f32 %v6280, %v6707
      %v6766 = vadd.f32 %v6285, %v6712
      %v6767 = vadd.f32 %v6290, %v6717
      %v6768 = vadd.f32 %v6295, %v6722
      %v6769 = vadd.f32 %v6300, %v6727
      %v6770 = vld [vmem:[#allocation2 + $0x14] sm:$0xff]
      %v6771 = vld [vmem:[#allocation2 + $0x1c] sm:$0xff]
      %v6772 = vld [vmem:[#allocation2 + $0x24] sm:$0xff]
      %v6773 = vld [vmem:[#allocation2 + $0x2c] sm:$0xff]
      %v6774 = vld [vmem:[#allocation2 + $0x34] sm:$0xff]
      %v6775 = vld [vmem:[#allocation2 + $0x3c] sm:$0xff]
      %v6776 = vld [vmem:[#allocation2 + $0x44] sm:$0xff]
      %v6777 = vld [vmem:[#allocation2 + $0x4c] sm:$0xff]
      %v6778 = vld [vmem:[#allocation2 + $0x54] sm:$0xff]
      %v6779 = vld [vmem:[#allocation2 + $0x5c] sm:$0xff]
      %v6780 = vld [vmem:[#allocation2 + $0x64] sm:$0xff]
      %v6781 = vld [vmem:[#allocation2 + $0x6c] sm:$0xff]
      %v6782 = vld [vmem:[#allocation2 + $0x74] sm:$0xff]
      %v6783 = vld [vmem:[#allocation2 + $0x7c] sm:$0xff]
      %v6784 = vld [vmem:[#allocation2 + $0x84] sm:$0xff]
      %v6785 = vld [vmem:[#allocation2 + $0x8c] sm:$0xff]
      %v6786 = vld [vmem:[#allocation2 + $0x94] sm:$0xff]
      %v6787 = vld [vmem:[#allocation2 + $0x9c] sm:$0xff]
      %v6788 = vld [vmem:[#allocation2 + $0xa4] sm:$0xff]
      %v6789 = vld [vmem:[#allocation2 + $0xac] sm:$0xff]
      %v6790 = vld [vmem:[#allocation2 + $0xb4] sm:$0xff]
      %v6791 = vld [vmem:[#allocation2 + $0xbc] sm:$0xff]
      %v6792 = vld [vmem:[#allocation2 + $0xc4] sm:$0xff]
      %v6793 = vld [vmem:[#allocation2 + $0xcc] sm:$0xff]
      %v6794 = vld [vmem:[#allocation2 + $0xd4] sm:$0xff]
      %v6795 = vld [vmem:[#allocation2 + $0xdc] sm:$0xff]
      %v6796 = vld [vmem:[#allocation2 + $0xe4] sm:$0xff]
      %v6797 = vld [vmem:[#allocation2 + $0xec] sm:$0xff]
      %v6798 = vld [vmem:[#allocation2 + $0xf4] sm:$0xff]
      %v6799 = vld [vmem:[#allocation2 + $0xfc] sm:$0xff]
      %v6800 = vld [vmem:[#allocation2 + $0x104] sm:$0xff]
      %v6801 = vld [vmem:[#allocation2 + $0x10c] sm:$0xff]
      %v6802 = vld [vmem:[#allocation2 + $0x114] sm:$0xff]
      %v6803 = vld [vmem:[#allocation2 + $0x11c] sm:$0xff]
      %v6804 = vld [vmem:[#allocation2 + $0x124] sm:$0xff]
      %v6805 = vld [vmem:[#allocation2 + $0x12c] sm:$0xff]
      %v6806 = vld [vmem:[#allocation2 + $0x134] sm:$0xff]
      %v6807 = vld [vmem:[#allocation2 + $0x13c] sm:$0xff]
      %v6808 = vld [vmem:[#allocation2 + $0x144] sm:$0xff]
      %v6809 = vld [vmem:[#allocation2 + $0x14c] sm:$0xff]
      %s6810 = scalar_lea.vmem %s291, 24
      %v6811 = vld [vmem:[%s6810] sm:$0xff]
      %v6813 = vsel %vm5403, %v6770, 0
      %v6816 = vsel %vm5403, %v6771, 0
      %v6819 = vsel %vm5403, %v6772, 0
      %v6822 = vsel %vm5403, %v6773, 0
      %v6825 = vsel %vm5403, %v6774, 0
      %v6828 = vsel %vm5403, %v6775, 0
      %v6831 = vsel %vm5403, %v6776, 0
      %v6834 = vsel %vm5403, %v6777, 0
      %v6837 = vsel %vm5403, %v6778, 0
      %v6840 = vsel %vm5403, %v6779, 0
      %v6843 = vsel %vm5403, %v6780, 0
      %v6846 = vsel %vm5403, %v6781, 0
      %v6849 = vsel %vm5403, %v6782, 0
      %v6852 = vsel %vm5403, %v6783, 0
      %v6855 = vsel %vm5403, %v6784, 0
      %v6858 = vsel %vm5403, %v6785, 0
      %v6861 = vsel %vm5403, %v6786, 0
      %v6864 = vsel %vm5403, %v6787, 0
      %v6867 = vsel %vm5403, %v6788, 0
      %v6870 = vsel %vm5403, %v6789, 0
      %v6873 = vsel %vm5403, %v6790, 0
      %v6876 = vsel %vm5403, %v6791, 0
      %v6879 = vsel %vm5403, %v6792, 0
      %v6882 = vsel %vm5403, %v6793, 0
      %v6885 = vsel %vm5403, %v6794, 0
      %v6888 = vsel %vm5403, %v6795, 0
      %v6891 = vsel %vm5403, %v6796, 0
      %v6894 = vsel %vm5403, %v6797, 0
      %v6897 = vsel %vm5403, %v6798, 0
      %v6900 = vsel %vm5403, %v6799, 0
      %v6903 = vsel %vm5403, %v6800, 0
      %v6906 = vsel %vm5403, %v6801, 0
      %v6909 = vsel %vm5403, %v6802, 0
      %v6912 = vsel %vm5403, %v6803, 0
      %v6915 = vsel %vm5403, %v6804, 0
      %v6918 = vsel %vm5403, %v6805, 0
      %v6921 = vsel %vm5403, %v6806, 0
      %v6924 = vsel %vm5403, %v6807, 0
      %v6927 = vsel %vm5403, %v6808, 0
      %v6930 = vsel %vm5403, %v6809, 0
      %6932 = vmatprep.subr.mxu0 0.0
      %6933 = vmatpush1.msra.mxu0 0.0
      %6934 = vmatprep.subr.mxu0 0.0
      %6935 = vmatpush1.msra.mxu0 0.0
      %6936 = vmatprep.subr.mxu0 0.0
      %6937 = vmatpush1.msra.mxu0 0.0
      %6938 = vmatprep.subr.mxu0 0.0
      %6939 = vmatpush1.msra.mxu0 0.0
      %6940 = vmatprep.subr.mxu0 0.0
      %6941 = vmatpush1.msra.mxu0 0.0
      %6942 = vmatprep.subr.mxu0 0.0
      %6943 = vmatpush1.msra.mxu0 0.0
      %6944 = vmatprep.subr.mxu0 0.0
      %6945 = vmatpush1.msra.mxu0 0.0
      %6946 = vmatprep.subr.mxu0 0.0
      %6947 = vmatpush1.msra.mxu0 0.0
      %6948 = vmatprep.subr.mxu0 0.0
      %6949 = vmatpush1.msra.mxu0 0.0
      %6950 = vmatprep.subr.mxu0 0.0
      %6951 = vmatpush1.msra.mxu0 0.0
      %6952 = vmatprep.subr.mxu0 0.0
      %6953 = vmatpush1.msra.mxu0 0.0
      %6954 = vmatprep.subr.mxu0 0.0
      %6955 = vmatpush1.msra.mxu0 0.0
      %6956 = vmatprep.subr.mxu0 0.0
      %6957 = vmatpush1.msra.mxu0 0.0
      %6958 = vmatprep.subr.mxu0 0.0
      %6959 = vmatpush1.msra.mxu0 0.0
      %6960 = vmatprep.subr.mxu0 0.0
      %6961 = vmatpush1.msra.mxu0 0.0
      %6962 = vmatprep.subr.mxu0 0.0
      %6963 = vmatpush1.msra.mxu0 %v6811
      %6964 = vmatprep.subr.mxu0 0.0
      %6965 = vmatpush2.msra.mxu0 0.0
      %6966 = vmatprep.subr.mxu0 0.0
      %6967 = vmatpush2.msra.mxu0 0.0
      %6968 = vmatprep.subr.mxu0 0.0
      %6969 = vmatpush2.msra.mxu0 0.0
      %6970 = vmatprep.subr.mxu0 0.0
      %6971 = vmatpush2.msra.mxu0 0.0
      %6972 = vmatprep.subr.mxu0 0.0
      %6973 = vmatpush2.msra.mxu0 0.0
      %6974 = vmatprep.subr.mxu0 0.0
      %6975 = vmatpush2.msra.mxu0 0.0
      %6976 = vmatprep.subr.mxu0 0.0
      %6977 = vmatpush2.msra.mxu0 0.0
      %6978 = vmatprep.subr.mxu0 0.0
      %6979 = vmatpush2.msra.mxu0 0.0
      %6980 = vmatprep.subr.mxu0 0.0
      %6981 = vmatpush2.msra.mxu0 0.0
      %6982 = vmatprep.subr.mxu0 0.0
      %6983 = vmatpush2.msra.mxu0 0.0
      %6984 = vmatprep.subr.mxu0 0.0
      %6985 = vmatpush2.msra.mxu0 0.0
      %6986 = vmatprep.subr.mxu0 0.0
      %6987 = vmatpush2.msra.mxu0 0.0
      %6988 = vmatprep.subr.mxu0 0.0
      %6989 = vmatpush2.msra.mxu0 0.0
      %6990 = vmatprep.subr.mxu0 0.0
      %6991 = vmatpush2.msra.mxu0 0.0
      %6992 = vmatprep.subr.mxu0 0.0
      %6993 = vmatpush2.msra.mxu0 0.0
      %6994 = vmatprep.subr.mxu0 0.0
      %6995 = vmatpush2.msra.mxu0 0.0
      %6996 = vmatprep.mubr.f32.mxu0 0.0
      %6997 = vmatmul.mubr.f32.gmra.mxu0 %v6813
      %v6998 = vpop.f32.mrf.mxu0
      %v6999 = vadd.f32 0.0, %v6998
      %v7000 = vpop.f32.mrf.mxu0
      %7001 = vmatprep.mubr.f32.mxu0 0.0
      %7002 = vmatmul.mubr.f32.gmra.mxu0 %v6816
      %v7003 = vpop.f32.mrf.mxu0
      %v7004 = vadd.f32 0.0, %v7003
      %v7005 = vpop.f32.mrf.mxu0
      %7006 = vmatprep.mubr.f32.mxu0 0.0
      %7007 = vmatmul.mubr.f32.gmra.mxu0 %v6819
      %v7008 = vpop.f32.mrf.mxu0
      %v7009 = vadd.f32 0.0, %v7008
      %v7010 = vpop.f32.mrf.mxu0
      %7011 = vmatprep.mubr.f32.mxu0 0.0
      %7012 = vmatmul.mubr.f32.gmra.mxu0 %v6822
      %v7013 = vpop.f32.mrf.mxu0
      %v7014 = vadd.f32 0.0, %v7013
      %v7015 = vpop.f32.mrf.mxu0
      %7016 = vmatprep.mubr.f32.mxu0 0.0
      %7017 = vmatmul.mubr.f32.gmra.mxu0 %v6825
      %v7018 = vpop.f32.mrf.mxu0
      %v7019 = vadd.f32 0.0, %v7018
      %v7020 = vpop.f32.mrf.mxu0
      %7021 = vmatprep.mubr.f32.mxu0 0.0
      %7022 = vmatmul.mubr.f32.gmra.mxu0 %v6828
      %v7023 = vpop.f32.mrf.mxu0
      %v7024 = vadd.f32 0.0, %v7023
      %v7025 = vpop.f32.mrf.mxu0
      %7026 = vmatprep.mubr.f32.mxu0 0.0
      %7027 = vmatmul.mubr.f32.gmra.mxu0 %v6831
      %v7028 = vpop.f32.mrf.mxu0
      %v7029 = vadd.f32 0.0, %v7028
      %v7030 = vpop.f32.mrf.mxu0
      %7031 = vmatprep.mubr.f32.mxu0 0.0
      %7032 = vmatmul.mubr.f32.gmra.mxu0 %v6834
      %v7033 = vpop.f32.mrf.mxu0
      %v7034 = vadd.f32 0.0, %v7033
      %v7035 = vpop.f32.mrf.mxu0
      %7036 = vmatprep.mubr.f32.mxu0 0.0
      %7037 = vmatmul.mubr.f32.gmra.mxu0 %v6837
      %v7038 = vpop.f32.mrf.mxu0
      %v7039 = vadd.f32 0.0, %v7038
      %v7040 = vpop.f32.mrf.mxu0
      %7041 = vmatprep.mubr.f32.mxu0 0.0
      %7042 = vmatmul.mubr.f32.gmra.mxu0 %v6840
      %v7043 = vpop.f32.mrf.mxu0
      %v7044 = vadd.f32 0.0, %v7043
      %v7045 = vpop.f32.mrf.mxu0
      %7046 = vmatprep.mubr.f32.mxu0 0.0
      %7047 = vmatmul.mubr.f32.gmra.mxu0 %v6843
      %v7048 = vpop.f32.mrf.mxu0
      %v7049 = vadd.f32 0.0, %v7048
      %v7050 = vpop.f32.mrf.mxu0
      %7051 = vmatprep.mubr.f32.mxu0 0.0
      %7052 = vmatmul.mubr.f32.gmra.mxu0 %v6846
      %v7053 = vpop.f32.mrf.mxu0
      %v7054 = vadd.f32 0.0, %v7053
      %v7055 = vpop.f32.mrf.mxu0
      %7056 = vmatprep.mubr.f32.mxu0 0.0
      %7057 = vmatmul.mubr.f32.gmra.mxu0 %v6849
      %v7058 = vpop.f32.mrf.mxu0
      %v7059 = vadd.f32 0.0, %v7058
      %v7060 = vpop.f32.mrf.mxu0
      %7061 = vmatprep.mubr.f32.mxu0 0.0
      %7062 = vmatmul.mubr.f32.gmra.mxu0 %v6852
      %v7063 = vpop.f32.mrf.mxu0
      %v7064 = vadd.f32 0.0, %v7063
      %v7065 = vpop.f32.mrf.mxu0
      %7066 = vmatprep.mubr.f32.mxu0 0.0
      %7067 = vmatmul.mubr.f32.gmra.mxu0 %v6855
      %v7068 = vpop.f32.mrf.mxu0
      %v7069 = vadd.f32 0.0, %v7068
      %v7070 = vpop.f32.mrf.mxu0
      %7071 = vmatprep.mubr.f32.mxu0 0.0
      %7072 = vmatmul.mubr.f32.gmra.mxu0 %v6858
      %v7073 = vpop.f32.mrf.mxu0
      %v7074 = vadd.f32 0.0, %v7073
      %v7075 = vpop.f32.mrf.mxu0
      %7076 = vmatprep.mubr.f32.mxu0 0.0
      %7077 = vmatmul.mubr.f32.gmra.mxu0 %v6861
      %v7078 = vpop.f32.mrf.mxu0
      %v7079 = vadd.f32 0.0, %v7078
      %v7080 = vpop.f32.mrf.mxu0
      %7081 = vmatprep.mubr.f32.mxu0 0.0
      %7082 = vmatmul.mubr.f32.gmra.mxu0 %v6864
      %v7083 = vpop.f32.mrf.mxu0
      %v7084 = vadd.f32 0.0, %v7083
      %v7085 = vpop.f32.mrf.mxu0
      %7086 = vmatprep.mubr.f32.mxu0 0.0
      %7087 = vmatmul.mubr.f32.gmra.mxu0 %v6867
      %v7088 = vpop.f32.mrf.mxu0
      %v7089 = vadd.f32 0.0, %v7088
      %v7090 = vpop.f32.mrf.mxu0
      %7091 = vmatprep.mubr.f32.mxu0 0.0
      %7092 = vmatmul.mubr.f32.gmra.mxu0 %v6870
      %v7093 = vpop.f32.mrf.mxu0
      %v7094 = vadd.f32 0.0, %v7093
      %v7095 = vpop.f32.mrf.mxu0
      %7096 = vmatprep.mubr.f32.mxu0 0.0
      %7097 = vmatmul.mubr.f32.gmra.mxu0 %v6873
      %v7098 = vpop.f32.mrf.mxu0
      %v7099 = vadd.f32 0.0, %v7098
      %v7100 = vpop.f32.mrf.mxu0
      %7101 = vmatprep.mubr.f32.mxu0 0.0
      %7102 = vmatmul.mubr.f32.gmra.mxu0 %v6876
      %v7103 = vpop.f32.mrf.mxu0
      %v7104 = vadd.f32 0.0, %v7103
      %v7105 = vpop.f32.mrf.mxu0
      %7106 = vmatprep.mubr.f32.mxu0 0.0
      %7107 = vmatmul.mubr.f32.gmra.mxu0 %v6879
      %v7108 = vpop.f32.mrf.mxu0
      %v7109 = vadd.f32 0.0, %v7108
      %v7110 = vpop.f32.mrf.mxu0
      %7111 = vmatprep.mubr.f32.mxu0 0.0
      %7112 = vmatmul.mubr.f32.gmra.mxu0 %v6882
      %v7113 = vpop.f32.mrf.mxu0
      %v7114 = vadd.f32 0.0, %v7113
      %v7115 = vpop.f32.mrf.mxu0
      %7116 = vmatprep.mubr.f32.mxu0 0.0
      %7117 = vmatmul.mubr.f32.gmra.mxu0 %v6885
      %v7118 = vpop.f32.mrf.mxu0
      %v7119 = vadd.f32 0.0, %v7118
      %v7120 = vpop.f32.mrf.mxu0
      %7121 = vmatprep.mubr.f32.mxu0 0.0
      %7122 = vmatmul.mubr.f32.gmra.mxu0 %v6888
      %v7123 = vpop.f32.mrf.mxu0
      %v7124 = vadd.f32 0.0, %v7123
      %v7125 = vpop.f32.mrf.mxu0
      %7126 = vmatprep.mubr.f32.mxu0 0.0
      %7127 = vmatmul.mubr.f32.gmra.mxu0 %v6891
      %v7128 = vpop.f32.mrf.mxu0
      %v7129 = vadd.f32 0.0, %v7128
      %v7130 = vpop.f32.mrf.mxu0
      %7131 = vmatprep.mubr.f32.mxu0 0.0
      %7132 = vmatmul.mubr.f32.gmra.mxu0 %v6894
      %v7133 = vpop.f32.mrf.mxu0
      %v7134 = vadd.f32 0.0, %v7133
      %v7135 = vpop.f32.mrf.mxu0
      %7136 = vmatprep.mubr.f32.mxu0 0.0
      %7137 = vmatmul.mubr.f32.gmra.mxu0 %v6897
      %v7138 = vpop.f32.mrf.mxu0
      %v7139 = vadd.f32 0.0, %v7138
      %v7140 = vpop.f32.mrf.mxu0
      %7141 = vmatprep.mubr.f32.mxu0 0.0
      %7142 = vmatmul.mubr.f32.gmra.mxu0 %v6900
      %v7143 = vpop.f32.mrf.mxu0
      %v7144 = vadd.f32 0.0, %v7143
      %v7145 = vpop.f32.mrf.mxu0
      %7146 = vmatprep.mubr.f32.mxu0 0.0
      %7147 = vmatmul.mubr.f32.gmra.mxu0 %v6903
      %v7148 = vpop.f32.mrf.mxu0
      %v7149 = vadd.f32 0.0, %v7148
      %v7150 = vpop.f32.mrf.mxu0
      %7151 = vmatprep.mubr.f32.mxu0 0.0
      %7152 = vmatmul.mubr.f32.gmra.mxu0 %v6906
      %v7153 = vpop.f32.mrf.mxu0
      %v7154 = vadd.f32 0.0, %v7153
      %v7155 = vpop.f32.mrf.mxu0
      %7156 = vmatprep.mubr.f32.mxu0 0.0
      %7157 = vmatmul.mubr.f32.gmra.mxu0 %v6909
      %v7158 = vpop.f32.mrf.mxu0
      %v7159 = vadd.f32 0.0, %v7158
      %v7160 = vpop.f32.mrf.mxu0
      %7161 = vmatprep.mubr.f32.mxu0 0.0
      %7162 = vmatmul.mubr.f32.gmra.mxu0 %v6912
      %v7163 = vpop.f32.mrf.mxu0
      %v7164 = vadd.f32 0.0, %v7163
      %v7165 = vpop.f32.mrf.mxu0
      %7166 = vmatprep.mubr.f32.mxu0 0.0
      %7167 = vmatmul.mubr.f32.gmra.mxu0 %v6915
      %v7168 = vpop.f32.mrf.mxu0
      %v7169 = vadd.f32 0.0, %v7168
      %v7170 = vpop.f32.mrf.mxu0
      %7171 = vmatprep.mubr.f32.mxu0 0.0
      %7172 = vmatmul.mubr.f32.gmra.mxu0 %v6918
      %v7173 = vpop.f32.mrf.mxu0
      %v7174 = vadd.f32 0.0, %v7173
      %v7175 = vpop.f32.mrf.mxu0
      %7176 = vmatprep.mubr.f32.mxu0 0.0
      %7177 = vmatmul.mubr.f32.gmra.mxu0 %v6921
      %v7178 = vpop.f32.mrf.mxu0
      %v7179 = vadd.f32 0.0, %v7178
      %v7180 = vpop.f32.mrf.mxu0
      %7181 = vmatprep.mubr.f32.mxu0 0.0
      %7182 = vmatmul.mubr.f32.gmra.mxu0 %v6924
      %v7183 = vpop.f32.mrf.mxu0
      %v7184 = vadd.f32 0.0, %v7183
      %v7185 = vpop.f32.mrf.mxu0
      %7186 = vmatprep.mubr.f32.mxu0 0.0
      %7187 = vmatmul.mubr.f32.gmra.mxu0 %v6927
      %v7188 = vpop.f32.mrf.mxu0
      %v7189 = vadd.f32 0.0, %v7188
      %v7190 = vpop.f32.mrf.mxu0
      %7191 = vmatprep.mubr.f32.mxu0 0.0
      %7192 = vmatmul.mubr.f32.gmra.mxu0 %v6930
      %v7193 = vpop.f32.mrf.mxu0
      %v7194 = vadd.f32 0.0, %v7193
      %v7195 = vpop.f32.mrf.mxu0
      %7196 = vdwg.mxu0
      %v7197 = vadd.f32 %v6730, %v6999
      %v7198 = vadd.f32 %v6731, %v7004
      %v7199 = vadd.f32 %v6732, %v7009
      %v7200 = vadd.f32 %v6733, %v7014
      %v7201 = vadd.f32 %v6734, %v7019
      %v7202 = vadd.f32 %v6735, %v7024
      %v7203 = vadd.f32 %v6736, %v7029
      %v7204 = vadd.f32 %v6737, %v7034
      %v7205 = vadd.f32 %v6738, %v7039
      %v7206 = vadd.f32 %v6739, %v7044
      %v7207 = vadd.f32 %v6740, %v7049
      %v7208 = vadd.f32 %v6741, %v7054
      %v7209 = vadd.f32 %v6742, %v7059
      %v7210 = vadd.f32 %v6743, %v7064
      %v7211 = vadd.f32 %v6744, %v7069
      %v7212 = vadd.f32 %v6745, %v7074
      %v7213 = vadd.f32 %v6746, %v7079
      %v7214 = vadd.f32 %v6747, %v7084
      %v7215 = vadd.f32 %v6748, %v7089
      %v7216 = vadd.f32 %v6749, %v7094
      %v7217 = vadd.f32 %v6750, %v7099
      %v7218 = vadd.f32 %v6751, %v7104
      %v7219 = vadd.f32 %v6752, %v7109
      %v7220 = vadd.f32 %v6753, %v7114
      %v7221 = vadd.f32 %v6754, %v7119
      %v7222 = vadd.f32 %v6755, %v7124
      %v7223 = vadd.f32 %v6756, %v7129
      %v7224 = vadd.f32 %v6757, %v7134
      %v7225 = vadd.f32 %v6758, %v7139
      %v7226 = vadd.f32 %v6759, %v7144
      %v7227 = vadd.f32 %v6760, %v7149
      %v7228 = vadd.f32 %v6761, %v7154
      %v7229 = vadd.f32 %v6762, %v7159
      %v7230 = vadd.f32 %v6763, %v7164
      %v7231 = vadd.f32 %v6764, %v7169
      %v7232 = vadd.f32 %v6765, %v7174
      %v7233 = vadd.f32 %v6766, %v7179
      %v7234 = vadd.f32 %v6767, %v7184
      %v7235 = vadd.f32 %v6768, %v7189
      %v7236 = vadd.f32 %v6769, %v7194
      %v7237 = vld [vmem:[#allocation2 + $0x15] sm:$0xff]
      %v7238 = vld [vmem:[#allocation2 + $0x1d] sm:$0xff]
      %v7239 = vld [vmem:[#allocation2 + $0x25] sm:$0xff]
      %v7240 = vld [vmem:[#allocation2 + $0x2d] sm:$0xff]
      %v7241 = vld [vmem:[#allocation2 + $0x35] sm:$0xff]
      %v7242 = vld [vmem:[#allocation2 + $0x3d] sm:$0xff]
      %v7243 = vld [vmem:[#allocation2 + $0x45] sm:$0xff]
      %v7244 = vld [vmem:[#allocation2 + $0x4d] sm:$0xff]
      %v7245 = vld [vmem:[#allocation2 + $0x55] sm:$0xff]
      %v7246 = vld [vmem:[#allocation2 + $0x5d] sm:$0xff]
      %v7247 = vld [vmem:[#allocation2 + $0x65] sm:$0xff]
      %v7248 = vld [vmem:[#allocation2 + $0x6d] sm:$0xff]
      %v7249 = vld [vmem:[#allocation2 + $0x75] sm:$0xff]
      %v7250 = vld [vmem:[#allocation2 + $0x7d] sm:$0xff]
      %v7251 = vld [vmem:[#allocation2 + $0x85] sm:$0xff]
      %v7252 = vld [vmem:[#allocation2 + $0x8d] sm:$0xff]
      %v7253 = vld [vmem:[#allocation2 + $0x95] sm:$0xff]
      %v7254 = vld [vmem:[#allocation2 + $0x9d] sm:$0xff]
      %v7255 = vld [vmem:[#allocation2 + $0xa5] sm:$0xff]
      %v7256 = vld [vmem:[#allocation2 + $0xad] sm:$0xff]
      %v7257 = vld [vmem:[#allocation2 + $0xb5] sm:$0xff]
      %v7258 = vld [vmem:[#allocation2 + $0xbd] sm:$0xff]
      %v7259 = vld [vmem:[#allocation2 + $0xc5] sm:$0xff]
      %v7260 = vld [vmem:[#allocation2 + $0xcd] sm:$0xff]
      %v7261 = vld [vmem:[#allocation2 + $0xd5] sm:$0xff]
      %v7262 = vld [vmem:[#allocation2 + $0xdd] sm:$0xff]
      %v7263 = vld [vmem:[#allocation2 + $0xe5] sm:$0xff]
      %v7264 = vld [vmem:[#allocation2 + $0xed] sm:$0xff]
      %v7265 = vld [vmem:[#allocation2 + $0xf5] sm:$0xff]
      %v7266 = vld [vmem:[#allocation2 + $0xfd] sm:$0xff]
      %v7267 = vld [vmem:[#allocation2 + $0x105] sm:$0xff]
      %v7268 = vld [vmem:[#allocation2 + $0x10d] sm:$0xff]
      %v7269 = vld [vmem:[#allocation2 + $0x115] sm:$0xff]
      %v7270 = vld [vmem:[#allocation2 + $0x11d] sm:$0xff]
      %v7271 = vld [vmem:[#allocation2 + $0x125] sm:$0xff]
      %v7272 = vld [vmem:[#allocation2 + $0x12d] sm:$0xff]
      %v7273 = vld [vmem:[#allocation2 + $0x135] sm:$0xff]
      %v7274 = vld [vmem:[#allocation2 + $0x13d] sm:$0xff]
      %v7275 = vld [vmem:[#allocation2 + $0x145] sm:$0xff]
      %v7276 = vld [vmem:[#allocation2 + $0x14d] sm:$0xff]
      %s7277 = scalar_lea.vmem %s291, 32
      %v7278 = vld [vmem:[%s7277] sm:$0xff]
      %v7280 = vsel %vm5403, %v7237, 0
      %v7283 = vsel %vm5403, %v7238, 0
      %v7286 = vsel %vm5403, %v7239, 0
      %v7289 = vsel %vm5403, %v7240, 0
      %v7292 = vsel %vm5403, %v7241, 0
      %v7295 = vsel %vm5403, %v7242, 0
      %v7298 = vsel %vm5403, %v7243, 0
      %v7301 = vsel %vm5403, %v7244, 0
      %v7304 = vsel %vm5403, %v7245, 0
      %v7307 = vsel %vm5403, %v7246, 0
      %v7310 = vsel %vm5403, %v7247, 0
      %v7313 = vsel %vm5403, %v7248, 0
      %v7316 = vsel %vm5403, %v7249, 0
      %v7319 = vsel %vm5403, %v7250, 0
      %v7322 = vsel %vm5403, %v7251, 0
      %v7325 = vsel %vm5403, %v7252, 0
      %v7328 = vsel %vm5403, %v7253, 0
      %v7331 = vsel %vm5403, %v7254, 0
      %v7334 = vsel %vm5403, %v7255, 0
      %v7337 = vsel %vm5403, %v7256, 0
      %v7340 = vsel %vm5403, %v7257, 0
      %v7343 = vsel %vm5403, %v7258, 0
      %v7346 = vsel %vm5403, %v7259, 0
      %v7349 = vsel %vm5403, %v7260, 0
      %v7352 = vsel %vm5403, %v7261, 0
      %v7355 = vsel %vm5403, %v7262, 0
      %v7358 = vsel %vm5403, %v7263, 0
      %v7361 = vsel %vm5403, %v7264, 0
      %v7364 = vsel %vm5403, %v7265, 0
      %v7367 = vsel %vm5403, %v7266, 0
      %v7370 = vsel %vm5403, %v7267, 0
      %v7373 = vsel %vm5403, %v7268, 0
      %v7376 = vsel %vm5403, %v7269, 0
      %v7379 = vsel %vm5403, %v7270, 0
      %v7382 = vsel %vm5403, %v7271, 0
      %v7385 = vsel %vm5403, %v7272, 0
      %v7388 = vsel %vm5403, %v7273, 0
      %v7391 = vsel %vm5403, %v7274, 0
      %v7394 = vsel %vm5403, %v7275, 0
      %v7397 = vsel %vm5403, %v7276, 0
      %7399 = vmatprep.subr.mxu0 0.0
      %7400 = vmatpush1.msra.mxu0 0.0
      %7401 = vmatprep.subr.mxu0 0.0
      %7402 = vmatpush1.msra.mxu0 0.0
      %7403 = vmatprep.subr.mxu0 0.0
      %7404 = vmatpush1.msra.mxu0 0.0
      %7405 = vmatprep.subr.mxu0 0.0
      %7406 = vmatpush1.msra.mxu0 0.0
      %7407 = vmatprep.subr.mxu0 0.0
      %7408 = vmatpush1.msra.mxu0 0.0
      %7409 = vmatprep.subr.mxu0 0.0
      %7410 = vmatpush1.msra.mxu0 0.0
      %7411 = vmatprep.subr.mxu0 0.0
      %7412 = vmatpush1.msra.mxu0 0.0
      %7413 = vmatprep.subr.mxu0 0.0
      %7414 = vmatpush1.msra.mxu0 0.0
      %7415 = vmatprep.subr.mxu0 0.0
      %7416 = vmatpush1.msra.mxu0 0.0
      %7417 = vmatprep.subr.mxu0 0.0
      %7418 = vmatpush1.msra.mxu0 0.0
      %7419 = vmatprep.subr.mxu0 0.0
      %7420 = vmatpush1.msra.mxu0 0.0
      %7421 = vmatprep.subr.mxu0 0.0
      %7422 = vmatpush1.msra.mxu0 0.0
      %7423 = vmatprep.subr.mxu0 0.0
      %7424 = vmatpush1.msra.mxu0 0.0
      %7425 = vmatprep.subr.mxu0 0.0
      %7426 = vmatpush1.msra.mxu0 0.0
      %7427 = vmatprep.subr.mxu0 0.0
      %7428 = vmatpush1.msra.mxu0 0.0
      %7429 = vmatprep.subr.mxu0 0.0
      %7430 = vmatpush1.msra.mxu0 %v7278
      %7431 = vmatprep.subr.mxu0 0.0
      %7432 = vmatpush2.msra.mxu0 0.0
      %7433 = vmatprep.subr.mxu0 0.0
      %7434 = vmatpush2.msra.mxu0 0.0
      %7435 = vmatprep.subr.mxu0 0.0
      %7436 = vmatpush2.msra.mxu0 0.0
      %7437 = vmatprep.subr.mxu0 0.0
      %7438 = vmatpush2.msra.mxu0 0.0
      %7439 = vmatprep.subr.mxu0 0.0
      %7440 = vmatpush2.msra.mxu0 0.0
      %7441 = vmatprep.subr.mxu0 0.0
      %7442 = vmatpush2.msra.mxu0 0.0
      %7443 = vmatprep.subr.mxu0 0.0
      %7444 = vmatpush2.msra.mxu0 0.0
      %7445 = vmatprep.subr.mxu0 0.0
      %7446 = vmatpush2.msra.mxu0 0.0
      %7447 = vmatprep.subr.mxu0 0.0
      %7448 = vmatpush2.msra.mxu0 0.0
      %7449 = vmatprep.subr.mxu0 0.0
      %7450 = vmatpush2.msra.mxu0 0.0
      %7451 = vmatprep.subr.mxu0 0.0
      %7452 = vmatpush2.msra.mxu0 0.0
      %7453 = vmatprep.subr.mxu0 0.0
      %7454 = vmatpush2.msra.mxu0 0.0
      %7455 = vmatprep.subr.mxu0 0.0
      %7456 = vmatpush2.msra.mxu0 0.0
      %7457 = vmatprep.subr.mxu0 0.0
      %7458 = vmatpush2.msra.mxu0 0.0
      %7459 = vmatprep.subr.mxu0 0.0
      %7460 = vmatpush2.msra.mxu0 0.0
      %7461 = vmatprep.subr.mxu0 0.0
      %7462 = vmatpush2.msra.mxu0 0.0
      %7463 = vmatprep.mubr.f32.mxu0 0.0
      %7464 = vmatmul.mubr.f32.gmra.mxu0 %v7280
      %v7465 = vpop.f32.mrf.mxu0
      %v7466 = vadd.f32 0.0, %v7465
      %v7467 = vpop.f32.mrf.mxu0
      %7468 = vmatprep.mubr.f32.mxu0 0.0
      %7469 = vmatmul.mubr.f32.gmra.mxu0 %v7283
      %v7470 = vpop.f32.mrf.mxu0
      %v7471 = vadd.f32 0.0, %v7470
      %v7472 = vpop.f32.mrf.mxu0
      %7473 = vmatprep.mubr.f32.mxu0 0.0
      %7474 = vmatmul.mubr.f32.gmra.mxu0 %v7286
      %v7475 = vpop.f32.mrf.mxu0
      %v7476 = vadd.f32 0.0, %v7475
      %v7477 = vpop.f32.mrf.mxu0
      %7478 = vmatprep.mubr.f32.mxu0 0.0
      %7479 = vmatmul.mubr.f32.gmra.mxu0 %v7289
      %v7480 = vpop.f32.mrf.mxu0
      %v7481 = vadd.f32 0.0, %v7480
      %v7482 = vpop.f32.mrf.mxu0
      %7483 = vmatprep.mubr.f32.mxu0 0.0
      %7484 = vmatmul.mubr.f32.gmra.mxu0 %v7292
      %v7485 = vpop.f32.mrf.mxu0
      %v7486 = vadd.f32 0.0, %v7485
      %v7487 = vpop.f32.mrf.mxu0
      %7488 = vmatprep.mubr.f32.mxu0 0.0
      %7489 = vmatmul.mubr.f32.gmra.mxu0 %v7295
      %v7490 = vpop.f32.mrf.mxu0
      %v7491 = vadd.f32 0.0, %v7490
      %v7492 = vpop.f32.mrf.mxu0
      %7493 = vmatprep.mubr.f32.mxu0 0.0
      %7494 = vmatmul.mubr.f32.gmra.mxu0 %v7298
      %v7495 = vpop.f32.mrf.mxu0
      %v7496 = vadd.f32 0.0, %v7495
      %v7497 = vpop.f32.mrf.mxu0
      %7498 = vmatprep.mubr.f32.mxu0 0.0
      %7499 = vmatmul.mubr.f32.gmra.mxu0 %v7301
      %v7500 = vpop.f32.mrf.mxu0
      %v7501 = vadd.f32 0.0, %v7500
      %v7502 = vpop.f32.mrf.mxu0
      %7503 = vmatprep.mubr.f32.mxu0 0.0
      %7504 = vmatmul.mubr.f32.gmra.mxu0 %v7304
      %v7505 = vpop.f32.mrf.mxu0
      %v7506 = vadd.f32 0.0, %v7505
      %v7507 = vpop.f32.mrf.mxu0
      %7508 = vmatprep.mubr.f32.mxu0 0.0
      %7509 = vmatmul.mubr.f32.gmra.mxu0 %v7307
      %v7510 = vpop.f32.mrf.mxu0
      %v7511 = vadd.f32 0.0, %v7510
      %v7512 = vpop.f32.mrf.mxu0
      %7513 = vmatprep.mubr.f32.mxu0 0.0
      %7514 = vmatmul.mubr.f32.gmra.mxu0 %v7310
      %v7515 = vpop.f32.mrf.mxu0
      %v7516 = vadd.f32 0.0, %v7515
      %v7517 = vpop.f32.mrf.mxu0
      %7518 = vmatprep.mubr.f32.mxu0 0.0
      %7519 = vmatmul.mubr.f32.gmra.mxu0 %v7313
      %v7520 = vpop.f32.mrf.mxu0
      %v7521 = vadd.f32 0.0, %v7520
      %v7522 = vpop.f32.mrf.mxu0
      %7523 = vmatprep.mubr.f32.mxu0 0.0
      %7524 = vmatmul.mubr.f32.gmra.mxu0 %v7316
      %v7525 = vpop.f32.mrf.mxu0
      %v7526 = vadd.f32 0.0, %v7525
      %v7527 = vpop.f32.mrf.mxu0
      %7528 = vmatprep.mubr.f32.mxu0 0.0
      %7529 = vmatmul.mubr.f32.gmra.mxu0 %v7319
      %v7530 = vpop.f32.mrf.mxu0
      %v7531 = vadd.f32 0.0, %v7530
      %v7532 = vpop.f32.mrf.mxu0
      %7533 = vmatprep.mubr.f32.mxu0 0.0
      %7534 = vmatmul.mubr.f32.gmra.mxu0 %v7322
      %v7535 = vpop.f32.mrf.mxu0
      %v7536 = vadd.f32 0.0, %v7535
      %v7537 = vpop.f32.mrf.mxu0
      %7538 = vmatprep.mubr.f32.mxu0 0.0
      %7539 = vmatmul.mubr.f32.gmra.mxu0 %v7325
      %v7540 = vpop.f32.mrf.mxu0
      %v7541 = vadd.f32 0.0, %v7540
      %v7542 = vpop.f32.mrf.mxu0
      %7543 = vmatprep.mubr.f32.mxu0 0.0
      %7544 = vmatmul.mubr.f32.gmra.mxu0 %v7328
      %v7545 = vpop.f32.mrf.mxu0
      %v7546 = vadd.f32 0.0, %v7545
      %v7547 = vpop.f32.mrf.mxu0
      %7548 = vmatprep.mubr.f32.mxu0 0.0
      %7549 = vmatmul.mubr.f32.gmra.mxu0 %v7331
      %v7550 = vpop.f32.mrf.mxu0
      %v7551 = vadd.f32 0.0, %v7550
      %v7552 = vpop.f32.mrf.mxu0
      %7553 = vmatprep.mubr.f32.mxu0 0.0
      %7554 = vmatmul.mubr.f32.gmra.mxu0 %v7334
      %v7555 = vpop.f32.mrf.mxu0
      %v7556 = vadd.f32 0.0, %v7555
      %v7557 = vpop.f32.mrf.mxu0
      %7558 = vmatprep.mubr.f32.mxu0 0.0
      %7559 = vmatmul.mubr.f32.gmra.mxu0 %v7337
      %v7560 = vpop.f32.mrf.mxu0
      %v7561 = vadd.f32 0.0, %v7560
      %v7562 = vpop.f32.mrf.mxu0
      %7563 = vmatprep.mubr.f32.mxu0 0.0
      %7564 = vmatmul.mubr.f32.gmra.mxu0 %v7340
      %v7565 = vpop.f32.mrf.mxu0
      %v7566 = vadd.f32 0.0, %v7565
      %v7567 = vpop.f32.mrf.mxu0
      %7568 = vmatprep.mubr.f32.mxu0 0.0
      %7569 = vmatmul.mubr.f32.gmra.mxu0 %v7343
      %v7570 = vpop.f32.mrf.mxu0
      %v7571 = vadd.f32 0.0, %v7570
      %v7572 = vpop.f32.mrf.mxu0
      %7573 = vmatprep.mubr.f32.mxu0 0.0
      %7574 = vmatmul.mubr.f32.gmra.mxu0 %v7346
      %v7575 = vpop.f32.mrf.mxu0
      %v7576 = vadd.f32 0.0, %v7575
      %v7577 = vpop.f32.mrf.mxu0
      %7578 = vmatprep.mubr.f32.mxu0 0.0
      %7579 = vmatmul.mubr.f32.gmra.mxu0 %v7349
      %v7580 = vpop.f32.mrf.mxu0
      %v7581 = vadd.f32 0.0, %v7580
      %v7582 = vpop.f32.mrf.mxu0
      %7583 = vmatprep.mubr.f32.mxu0 0.0
      %7584 = vmatmul.mubr.f32.gmra.mxu0 %v7352
      %v7585 = vpop.f32.mrf.mxu0
      %v7586 = vadd.f32 0.0, %v7585
      %v7587 = vpop.f32.mrf.mxu0
      %7588 = vmatprep.mubr.f32.mxu0 0.0
      %7589 = vmatmul.mubr.f32.gmra.mxu0 %v7355
      %v7590 = vpop.f32.mrf.mxu0
      %v7591 = vadd.f32 0.0, %v7590
      %v7592 = vpop.f32.mrf.mxu0
      %7593 = vmatprep.mubr.f32.mxu0 0.0
      %7594 = vmatmul.mubr.f32.gmra.mxu0 %v7358
      %v7595 = vpop.f32.mrf.mxu0
      %v7596 = vadd.f32 0.0, %v7595
      %v7597 = vpop.f32.mrf.mxu0
      %7598 = vmatprep.mubr.f32.mxu0 0.0
      %7599 = vmatmul.mubr.f32.gmra.mxu0 %v7361
      %v7600 = vpop.f32.mrf.mxu0
      %v7601 = vadd.f32 0.0, %v7600
      %v7602 = vpop.f32.mrf.mxu0
      %7603 = vmatprep.mubr.f32.mxu0 0.0
      %7604 = vmatmul.mubr.f32.gmra.mxu0 %v7364
      %v7605 = vpop.f32.mrf.mxu0
      %v7606 = vadd.f32 0.0, %v7605
      %v7607 = vpop.f32.mrf.mxu0
      %7608 = vmatprep.mubr.f32.mxu0 0.0
      %7609 = vmatmul.mubr.f32.gmra.mxu0 %v7367
      %v7610 = vpop.f32.mrf.mxu0
      %v7611 = vadd.f32 0.0, %v7610
      %v7612 = vpop.f32.mrf.mxu0
      %7613 = vmatprep.mubr.f32.mxu0 0.0
      %7614 = vmatmul.mubr.f32.gmra.mxu0 %v7370
      %v7615 = vpop.f32.mrf.mxu0
      %v7616 = vadd.f32 0.0, %v7615
      %v7617 = vpop.f32.mrf.mxu0
      %7618 = vmatprep.mubr.f32.mxu0 0.0
      %7619 = vmatmul.mubr.f32.gmra.mxu0 %v7373
      %v7620 = vpop.f32.mrf.mxu0
      %v7621 = vadd.f32 0.0, %v7620
      %v7622 = vpop.f32.mrf.mxu0
      %7623 = vmatprep.mubr.f32.mxu0 0.0
      %7624 = vmatmul.mubr.f32.gmra.mxu0 %v7376
      %v7625 = vpop.f32.mrf.mxu0
      %v7626 = vadd.f32 0.0, %v7625
      %v7627 = vpop.f32.mrf.mxu0
      %7628 = vmatprep.mubr.f32.mxu0 0.0
      %7629 = vmatmul.mubr.f32.gmra.mxu0 %v7379
      %v7630 = vpop.f32.mrf.mxu0
      %v7631 = vadd.f32 0.0, %v7630
      %v7632 = vpop.f32.mrf.mxu0
      %7633 = vmatprep.mubr.f32.mxu0 0.0
      %7634 = vmatmul.mubr.f32.gmra.mxu0 %v7382
      %v7635 = vpop.f32.mrf.mxu0
      %v7636 = vadd.f32 0.0, %v7635
      %v7637 = vpop.f32.mrf.mxu0
      %7638 = vmatprep.mubr.f32.mxu0 0.0
      %7639 = vmatmul.mubr.f32.gmra.mxu0 %v7385
      %v7640 = vpop.f32.mrf.mxu0
      %v7641 = vadd.f32 0.0, %v7640
      %v7642 = vpop.f32.mrf.mxu0
      %7643 = vmatprep.mubr.f32.mxu0 0.0
      %7644 = vmatmul.mubr.f32.gmra.mxu0 %v7388
      %v7645 = vpop.f32.mrf.mxu0
      %v7646 = vadd.f32 0.0, %v7645
      %v7647 = vpop.f32.mrf.mxu0
      %7648 = vmatprep.mubr.f32.mxu0 0.0
      %7649 = vmatmul.mubr.f32.gmra.mxu0 %v7391
      %v7650 = vpop.f32.mrf.mxu0
      %v7651 = vadd.f32 0.0, %v7650
      %v7652 = vpop.f32.mrf.mxu0
      %7653 = vmatprep.mubr.f32.mxu0 0.0
      %7654 = vmatmul.mubr.f32.gmra.mxu0 %v7394
      %v7655 = vpop.f32.mrf.mxu0
      %v7656 = vadd.f32 0.0, %v7655
      %v7657 = vpop.f32.mrf.mxu0
      %7658 = vmatprep.mubr.f32.mxu0 0.0
      %7659 = vmatmul.mubr.f32.gmra.mxu0 %v7397
      %v7660 = vpop.f32.mrf.mxu0
      %v7661 = vadd.f32 0.0, %v7660
      %v7662 = vpop.f32.mrf.mxu0
      %7663 = vdwg.mxu0
      %v7664 = vadd.f32 %v7197, %v7466
      %v7665 = vadd.f32 %v7198, %v7471
      %v7666 = vadd.f32 %v7199, %v7476
      %v7667 = vadd.f32 %v7200, %v7481
      %v7668 = vadd.f32 %v7201, %v7486
      %v7669 = vadd.f32 %v7202, %v7491
      %v7670 = vadd.f32 %v7203, %v7496
      %v7671 = vadd.f32 %v7204, %v7501
      %v7672 = vadd.f32 %v7205, %v7506
      %v7673 = vadd.f32 %v7206, %v7511
      %v7674 = vadd.f32 %v7207, %v7516
      %v7675 = vadd.f32 %v7208, %v7521
      %v7676 = vadd.f32 %v7209, %v7526
      %v7677 = vadd.f32 %v7210, %v7531
      %v7678 = vadd.f32 %v7211, %v7536
      %v7679 = vadd.f32 %v7212, %v7541
      %v7680 = vadd.f32 %v7213, %v7546
      %v7681 = vadd.f32 %v7214, %v7551
      %v7682 = vadd.f32 %v7215, %v7556
      %v7683 = vadd.f32 %v7216, %v7561
      %v7684 = vadd.f32 %v7217, %v7566
      %v7685 = vadd.f32 %v7218, %v7571
      %v7686 = vadd.f32 %v7219, %v7576
      %v7687 = vadd.f32 %v7220, %v7581
      %v7688 = vadd.f32 %v7221, %v7586
      %v7689 = vadd.f32 %v7222, %v7591
      %v7690 = vadd.f32 %v7223, %v7596
      %v7691 = vadd.f32 %v7224, %v7601
      %v7692 = vadd.f32 %v7225, %v7606
      %v7693 = vadd.f32 %v7226, %v7611
      %v7694 = vadd.f32 %v7227, %v7616
      %v7695 = vadd.f32 %v7228, %v7621
      %v7696 = vadd.f32 %v7229, %v7626
      %v7697 = vadd.f32 %v7230, %v7631
      %v7698 = vadd.f32 %v7231, %v7636
      %v7699 = vadd.f32 %v7232, %v7641
      %v7700 = vadd.f32 %v7233, %v7646
      %v7701 = vadd.f32 %v7234, %v7651
      %v7702 = vadd.f32 %v7235, %v7656
      %v7703 = vadd.f32 %v7236, %v7661
      %v7704 = vld [vmem:[#allocation2 + $0x16] sm:$0xff]
      %v7705 = vld [vmem:[#allocation2 + $0x1e] sm:$0xff]
      %v7706 = vld [vmem:[#allocation2 + $0x26] sm:$0xff]
      %v7707 = vld [vmem:[#allocation2 + $0x2e] sm:$0xff]
      %v7708 = vld [vmem:[#allocation2 + $0x36] sm:$0xff]
      %v7709 = vld [vmem:[#allocation2 + $0x3e] sm:$0xff]
      %v7710 = vld [vmem:[#allocation2 + $0x46] sm:$0xff]
      %v7711 = vld [vmem:[#allocation2 + $0x4e] sm:$0xff]
      %v7712 = vld [vmem:[#allocation2 + $0x56] sm:$0xff]
      %v7713 = vld [vmem:[#allocation2 + $0x5e] sm:$0xff]
      %v7714 = vld [vmem:[#allocation2 + $0x66] sm:$0xff]
      %v7715 = vld [vmem:[#allocation2 + $0x6e] sm:$0xff]
      %v7716 = vld [vmem:[#allocation2 + $0x76] sm:$0xff]
      %v7717 = vld [vmem:[#allocation2 + $0x7e] sm:$0xff]
      %v7718 = vld [vmem:[#allocation2 + $0x86] sm:$0xff]
      %v7719 = vld [vmem:[#allocation2 + $0x8e] sm:$0xff]
      %v7720 = vld [vmem:[#allocation2 + $0x96] sm:$0xff]
      %v7721 = vld [vmem:[#allocation2 + $0x9e] sm:$0xff]
      %v7722 = vld [vmem:[#allocation2 + $0xa6] sm:$0xff]
      %v7723 = vld [vmem:[#allocation2 + $0xae] sm:$0xff]
      %v7724 = vld [vmem:[#allocation2 + $0xb6] sm:$0xff]
      %v7725 = vld [vmem:[#allocation2 + $0xbe] sm:$0xff]
      %v7726 = vld [vmem:[#allocation2 + $0xc6] sm:$0xff]
      %v7727 = vld [vmem:[#allocation2 + $0xce] sm:$0xff]
      %v7728 = vld [vmem:[#allocation2 + $0xd6] sm:$0xff]
      %v7729 = vld [vmem:[#allocation2 + $0xde] sm:$0xff]
      %v7730 = vld [vmem:[#allocation2 + $0xe6] sm:$0xff]
      %v7731 = vld [vmem:[#allocation2 + $0xee] sm:$0xff]
      %v7732 = vld [vmem:[#allocation2 + $0xf6] sm:$0xff]
      %v7733 = vld [vmem:[#allocation2 + $0xfe] sm:$0xff]
      %v7734 = vld [vmem:[#allocation2 + $0x106] sm:$0xff]
      %v7735 = vld [vmem:[#allocation2 + $0x10e] sm:$0xff]
      %v7736 = vld [vmem:[#allocation2 + $0x116] sm:$0xff]
      %v7737 = vld [vmem:[#allocation2 + $0x11e] sm:$0xff]
      %v7738 = vld [vmem:[#allocation2 + $0x126] sm:$0xff]
      %v7739 = vld [vmem:[#allocation2 + $0x12e] sm:$0xff]
      %v7740 = vld [vmem:[#allocation2 + $0x136] sm:$0xff]
      %v7741 = vld [vmem:[#allocation2 + $0x13e] sm:$0xff]
      %v7742 = vld [vmem:[#allocation2 + $0x146] sm:$0xff]
      %v7743 = vld [vmem:[#allocation2 + $0x14e] sm:$0xff]
      %s7744 = scalar_lea.vmem %s291, 40
      %v7745 = vld [vmem:[%s7744] sm:$0xff]
      %v7747 = vsel %vm5403, %v7704, 0
      %v7750 = vsel %vm5403, %v7705, 0
      %v7753 = vsel %vm5403, %v7706, 0
      %v7756 = vsel %vm5403, %v7707, 0
      %v7759 = vsel %vm5403, %v7708, 0
      %v7762 = vsel %vm5403, %v7709, 0
      %v7765 = vsel %vm5403, %v7710, 0
      %v7768 = vsel %vm5403, %v7711, 0
      %v7771 = vsel %vm5403, %v7712, 0
      %v7774 = vsel %vm5403, %v7713, 0
      %v7777 = vsel %vm5403, %v7714, 0
      %v7780 = vsel %vm5403, %v7715, 0
      %v7783 = vsel %vm5403, %v7716, 0
      %v7786 = vsel %vm5403, %v7717, 0
      %v7789 = vsel %vm5403, %v7718, 0
      %v7792 = vsel %vm5403, %v7719, 0
      %v7795 = vsel %vm5403, %v7720, 0
      %v7798 = vsel %vm5403, %v7721, 0
      %v7801 = vsel %vm5403, %v7722, 0
      %v7804 = vsel %vm5403, %v7723, 0
      %v7807 = vsel %vm5403, %v7724, 0
      %v7810 = vsel %vm5403, %v7725, 0
      %v7813 = vsel %vm5403, %v7726, 0
      %v7816 = vsel %vm5403, %v7727, 0
      %v7819 = vsel %vm5403, %v7728, 0
      %v7822 = vsel %vm5403, %v7729, 0
      %v7825 = vsel %vm5403, %v7730, 0
      %v7828 = vsel %vm5403, %v7731, 0
      %v7831 = vsel %vm5403, %v7732, 0
      %v7834 = vsel %vm5403, %v7733, 0
      %v7837 = vsel %vm5403, %v7734, 0
      %v7840 = vsel %vm5403, %v7735, 0
      %v7843 = vsel %vm5403, %v7736, 0
      %v7846 = vsel %vm5403, %v7737, 0
      %v7849 = vsel %vm5403, %v7738, 0
      %v7852 = vsel %vm5403, %v7739, 0
      %v7855 = vsel %vm5403, %v7740, 0
      %v7858 = vsel %vm5403, %v7741, 0
      %v7861 = vsel %vm5403, %v7742, 0
      %v7864 = vsel %vm5403, %v7743, 0
      %7866 = vmatprep.subr.mxu0 0.0
      %7867 = vmatpush1.msra.mxu0 0.0
      %7868 = vmatprep.subr.mxu0 0.0
      %7869 = vmatpush1.msra.mxu0 0.0
      %7870 = vmatprep.subr.mxu0 0.0
      %7871 = vmatpush1.msra.mxu0 0.0
      %7872 = vmatprep.subr.mxu0 0.0
      %7873 = vmatpush1.msra.mxu0 0.0
      %7874 = vmatprep.subr.mxu0 0.0
      %7875 = vmatpush1.msra.mxu0 0.0
      %7876 = vmatprep.subr.mxu0 0.0
      %7877 = vmatpush1.msra.mxu0 0.0
      %7878 = vmatprep.subr.mxu0 0.0
      %7879 = vmatpush1.msra.mxu0 0.0
      %7880 = vmatprep.subr.mxu0 0.0
      %7881 = vmatpush1.msra.mxu0 0.0
      %7882 = vmatprep.subr.mxu0 0.0
      %7883 = vmatpush1.msra.mxu0 0.0
      %7884 = vmatprep.subr.mxu0 0.0
      %7885 = vmatpush1.msra.mxu0 0.0
      %7886 = vmatprep.subr.mxu0 0.0
      %7887 = vmatpush1.msra.mxu0 0.0
      %7888 = vmatprep.subr.mxu0 0.0
      %7889 = vmatpush1.msra.mxu0 0.0
      %7890 = vmatprep.subr.mxu0 0.0
      %7891 = vmatpush1.msra.mxu0 0.0
      %7892 = vmatprep.subr.mxu0 0.0
      %7893 = vmatpush1.msra.mxu0 0.0
      %7894 = vmatprep.subr.mxu0 0.0
      %7895 = vmatpush1.msra.mxu0 0.0
      %7896 = vmatprep.subr.mxu0 0.0
      %7897 = vmatpush1.msra.mxu0 %v7745
      %7898 = vmatprep.subr.mxu0 0.0
      %7899 = vmatpush2.msra.mxu0 0.0
      %7900 = vmatprep.subr.mxu0 0.0
      %7901 = vmatpush2.msra.mxu0 0.0
      %7902 = vmatprep.subr.mxu0 0.0
      %7903 = vmatpush2.msra.mxu0 0.0
      %7904 = vmatprep.subr.mxu0 0.0
      %7905 = vmatpush2.msra.mxu0 0.0
      %7906 = vmatprep.subr.mxu0 0.0
      %7907 = vmatpush2.msra.mxu0 0.0
      %7908 = vmatprep.subr.mxu0 0.0
      %7909 = vmatpush2.msra.mxu0 0.0
      %7910 = vmatprep.subr.mxu0 0.0
      %7911 = vmatpush2.msra.mxu0 0.0
      %7912 = vmatprep.subr.mxu0 0.0
      %7913 = vmatpush2.msra.mxu0 0.0
      %7914 = vmatprep.subr.mxu0 0.0
      %7915 = vmatpush2.msra.mxu0 0.0
      %7916 = vmatprep.subr.mxu0 0.0
      %7917 = vmatpush2.msra.mxu0 0.0
      %7918 = vmatprep.subr.mxu0 0.0
      %7919 = vmatpush2.msra.mxu0 0.0
      %7920 = vmatprep.subr.mxu0 0.0
      %7921 = vmatpush2.msra.mxu0 0.0
      %7922 = vmatprep.subr.mxu0 0.0
      %7923 = vmatpush2.msra.mxu0 0.0
      %7924 = vmatprep.subr.mxu0 0.0
      %7925 = vmatpush2.msra.mxu0 0.0
      %7926 = vmatprep.subr.mxu0 0.0
      %7927 = vmatpush2.msra.mxu0 0.0
      %7928 = vmatprep.subr.mxu0 0.0
      %7929 = vmatpush2.msra.mxu0 0.0
      %7930 = vmatprep.mubr.f32.mxu0 0.0
      %7931 = vmatmul.mubr.f32.gmra.mxu0 %v7747
      %v7932 = vpop.f32.mrf.mxu0
      %v7933 = vadd.f32 0.0, %v7932
      %v7934 = vpop.f32.mrf.mxu0
      %7935 = vmatprep.mubr.f32.mxu0 0.0
      %7936 = vmatmul.mubr.f32.gmra.mxu0 %v7750
      %v7937 = vpop.f32.mrf.mxu0
      %v7938 = vadd.f32 0.0, %v7937
      %v7939 = vpop.f32.mrf.mxu0
      %7940 = vmatprep.mubr.f32.mxu0 0.0
      %7941 = vmatmul.mubr.f32.gmra.mxu0 %v7753
      %v7942 = vpop.f32.mrf.mxu0
      %v7943 = vadd.f32 0.0, %v7942
      %v7944 = vpop.f32.mrf.mxu0
      %7945 = vmatprep.mubr.f32.mxu0 0.0
      %7946 = vmatmul.mubr.f32.gmra.mxu0 %v7756
      %v7947 = vpop.f32.mrf.mxu0
      %v7948 = vadd.f32 0.0, %v7947
      %v7949 = vpop.f32.mrf.mxu0
      %7950 = vmatprep.mubr.f32.mxu0 0.0
      %7951 = vmatmul.mubr.f32.gmra.mxu0 %v7759
      %v7952 = vpop.f32.mrf.mxu0
      %v7953 = vadd.f32 0.0, %v7952
      %v7954 = vpop.f32.mrf.mxu0
      %7955 = vmatprep.mubr.f32.mxu0 0.0
      %7956 = vmatmul.mubr.f32.gmra.mxu0 %v7762
      %v7957 = vpop.f32.mrf.mxu0
      %v7958 = vadd.f32 0.0, %v7957
      %v7959 = vpop.f32.mrf.mxu0
      %7960 = vmatprep.mubr.f32.mxu0 0.0
      %7961 = vmatmul.mubr.f32.gmra.mxu0 %v7765
      %v7962 = vpop.f32.mrf.mxu0
      %v7963 = vadd.f32 0.0, %v7962
      %v7964 = vpop.f32.mrf.mxu0
      %7965 = vmatprep.mubr.f32.mxu0 0.0
      %7966 = vmatmul.mubr.f32.gmra.mxu0 %v7768
      %v7967 = vpop.f32.mrf.mxu0
      %v7968 = vadd.f32 0.0, %v7967
      %v7969 = vpop.f32.mrf.mxu0
      %7970 = vmatprep.mubr.f32.mxu0 0.0
      %7971 = vmatmul.mubr.f32.gmra.mxu0 %v7771
      %v7972 = vpop.f32.mrf.mxu0
      %v7973 = vadd.f32 0.0, %v7972
      %v7974 = vpop.f32.mrf.mxu0
      %7975 = vmatprep.mubr.f32.mxu0 0.0
      %7976 = vmatmul.mubr.f32.gmra.mxu0 %v7774
      %v7977 = vpop.f32.mrf.mxu0
      %v7978 = vadd.f32 0.0, %v7977
      %v7979 = vpop.f32.mrf.mxu0
      %7980 = vmatprep.mubr.f32.mxu0 0.0
      %7981 = vmatmul.mubr.f32.gmra.mxu0 %v7777
      %v7982 = vpop.f32.mrf.mxu0
      %v7983 = vadd.f32 0.0, %v7982
      %v7984 = vpop.f32.mrf.mxu0
      %7985 = vmatprep.mubr.f32.mxu0 0.0
      %7986 = vmatmul.mubr.f32.gmra.mxu0 %v7780
      %v7987 = vpop.f32.mrf.mxu0
      %v7988 = vadd.f32 0.0, %v7987
      %v7989 = vpop.f32.mrf.mxu0
      %7990 = vmatprep.mubr.f32.mxu0 0.0
      %7991 = vmatmul.mubr.f32.gmra.mxu0 %v7783
      %v7992 = vpop.f32.mrf.mxu0
      %v7993 = vadd.f32 0.0, %v7992
      %v7994 = vpop.f32.mrf.mxu0
      %7995 = vmatprep.mubr.f32.mxu0 0.0
      %7996 = vmatmul.mubr.f32.gmra.mxu0 %v7786
      %v7997 = vpop.f32.mrf.mxu0
      %v7998 = vadd.f32 0.0, %v7997
      %v7999 = vpop.f32.mrf.mxu0
      %8000 = vmatprep.mubr.f32.mxu0 0.0
      %8001 = vmatmul.mubr.f32.gmra.mxu0 %v7789
      %v8002 = vpop.f32.mrf.mxu0
      %v8003 = vadd.f32 0.0, %v8002
      %v8004 = vpop.f32.mrf.mxu0
      %8005 = vmatprep.mubr.f32.mxu0 0.0
      %8006 = vmatmul.mubr.f32.gmra.mxu0 %v7792
      %v8007 = vpop.f32.mrf.mxu0
      %v8008 = vadd.f32 0.0, %v8007
      %v8009 = vpop.f32.mrf.mxu0
      %8010 = vmatprep.mubr.f32.mxu0 0.0
      %8011 = vmatmul.mubr.f32.gmra.mxu0 %v7795
      %v8012 = vpop.f32.mrf.mxu0
      %v8013 = vadd.f32 0.0, %v8012
      %v8014 = vpop.f32.mrf.mxu0
      %8015 = vmatprep.mubr.f32.mxu0 0.0
      %8016 = vmatmul.mubr.f32.gmra.mxu0 %v7798
      %v8017 = vpop.f32.mrf.mxu0
      %v8018 = vadd.f32 0.0, %v8017
      %v8019 = vpop.f32.mrf.mxu0
      %8020 = vmatprep.mubr.f32.mxu0 0.0
      %8021 = vmatmul.mubr.f32.gmra.mxu0 %v7801
      %v8022 = vpop.f32.mrf.mxu0
      %v8023 = vadd.f32 0.0, %v8022
      %v8024 = vpop.f32.mrf.mxu0
      %8025 = vmatprep.mubr.f32.mxu0 0.0
      %8026 = vmatmul.mubr.f32.gmra.mxu0 %v7804
      %v8027 = vpop.f32.mrf.mxu0
      %v8028 = vadd.f32 0.0, %v8027
      %v8029 = vpop.f32.mrf.mxu0
      %8030 = vmatprep.mubr.f32.mxu0 0.0
      %8031 = vmatmul.mubr.f32.gmra.mxu0 %v7807
      %v8032 = vpop.f32.mrf.mxu0
      %v8033 = vadd.f32 0.0, %v8032
      %v8034 = vpop.f32.mrf.mxu0
      %8035 = vmatprep.mubr.f32.mxu0 0.0
      %8036 = vmatmul.mubr.f32.gmra.mxu0 %v7810
      %v8037 = vpop.f32.mrf.mxu0
      %v8038 = vadd.f32 0.0, %v8037
      %v8039 = vpop.f32.mrf.mxu0
      %8040 = vmatprep.mubr.f32.mxu0 0.0
      %8041 = vmatmul.mubr.f32.gmra.mxu0 %v7813
      %v8042 = vpop.f32.mrf.mxu0
      %v8043 = vadd.f32 0.0, %v8042
      %v8044 = vpop.f32.mrf.mxu0
      %8045 = vmatprep.mubr.f32.mxu0 0.0
      %8046 = vmatmul.mubr.f32.gmra.mxu0 %v7816
      %v8047 = vpop.f32.mrf.mxu0
      %v8048 = vadd.f32 0.0, %v8047
      %v8049 = vpop.f32.mrf.mxu0
      %8050 = vmatprep.mubr.f32.mxu0 0.0
      %8051 = vmatmul.mubr.f32.gmra.mxu0 %v7819
      %v8052 = vpop.f32.mrf.mxu0
      %v8053 = vadd.f32 0.0, %v8052
      %v8054 = vpop.f32.mrf.mxu0
      %8055 = vmatprep.mubr.f32.mxu0 0.0
      %8056 = vmatmul.mubr.f32.gmra.mxu0 %v7822
      %v8057 = vpop.f32.mrf.mxu0
      %v8058 = vadd.f32 0.0, %v8057
      %v8059 = vpop.f32.mrf.mxu0
      %8060 = vmatprep.mubr.f32.mxu0 0.0
      %8061 = vmatmul.mubr.f32.gmra.mxu0 %v7825
      %v8062 = vpop.f32.mrf.mxu0
      %v8063 = vadd.f32 0.0, %v8062
      %v8064 = vpop.f32.mrf.mxu0
      %8065 = vmatprep.mubr.f32.mxu0 0.0
      %8066 = vmatmul.mubr.f32.gmra.mxu0 %v7828
      %v8067 = vpop.f32.mrf.mxu0
      %v8068 = vadd.f32 0.0, %v8067
      %v8069 = vpop.f32.mrf.mxu0
      %8070 = vmatprep.mubr.f32.mxu0 0.0
      %8071 = vmatmul.mubr.f32.gmra.mxu0 %v7831
      %v8072 = vpop.f32.mrf.mxu0
      %v8073 = vadd.f32 0.0, %v8072
      %v8074 = vpop.f32.mrf.mxu0
      %8075 = vmatprep.mubr.f32.mxu0 0.0
      %8076 = vmatmul.mubr.f32.gmra.mxu0 %v7834
      %v8077 = vpop.f32.mrf.mxu0
      %v8078 = vadd.f32 0.0, %v8077
      %v8079 = vpop.f32.mrf.mxu0
      %8080 = vmatprep.mubr.f32.mxu0 0.0
      %8081 = vmatmul.mubr.f32.gmra.mxu0 %v7837
      %v8082 = vpop.f32.mrf.mxu0
      %v8083 = vadd.f32 0.0, %v8082
      %v8084 = vpop.f32.mrf.mxu0
      %8085 = vmatprep.mubr.f32.mxu0 0.0
      %8086 = vmatmul.mubr.f32.gmra.mxu0 %v7840
      %v8087 = vpop.f32.mrf.mxu0
      %v8088 = vadd.f32 0.0, %v8087
      %v8089 = vpop.f32.mrf.mxu0
      %8090 = vmatprep.mubr.f32.mxu0 0.0
      %8091 = vmatmul.mubr.f32.gmra.mxu0 %v7843
      %v8092 = vpop.f32.mrf.mxu0
      %v8093 = vadd.f32 0.0, %v8092
      %v8094 = vpop.f32.mrf.mxu0
      %8095 = vmatprep.mubr.f32.mxu0 0.0
      %8096 = vmatmul.mubr.f32.gmra.mxu0 %v7846
      %v8097 = vpop.f32.mrf.mxu0
      %v8098 = vadd.f32 0.0, %v8097
      %v8099 = vpop.f32.mrf.mxu0
      %8100 = vmatprep.mubr.f32.mxu0 0.0
      %8101 = vmatmul.mubr.f32.gmra.mxu0 %v7849
      %v8102 = vpop.f32.mrf.mxu0
      %v8103 = vadd.f32 0.0, %v8102
      %v8104 = vpop.f32.mrf.mxu0
      %8105 = vmatprep.mubr.f32.mxu0 0.0
      %8106 = vmatmul.mubr.f32.gmra.mxu0 %v7852
      %v8107 = vpop.f32.mrf.mxu0
      %v8108 = vadd.f32 0.0, %v8107
      %v8109 = vpop.f32.mrf.mxu0
      %8110 = vmatprep.mubr.f32.mxu0 0.0
      %8111 = vmatmul.mubr.f32.gmra.mxu0 %v7855
      %v8112 = vpop.f32.mrf.mxu0
      %v8113 = vadd.f32 0.0, %v8112
      %v8114 = vpop.f32.mrf.mxu0
      %8115 = vmatprep.mubr.f32.mxu0 0.0
      %8116 = vmatmul.mubr.f32.gmra.mxu0 %v7858
      %v8117 = vpop.f32.mrf.mxu0
      %v8118 = vadd.f32 0.0, %v8117
      %v8119 = vpop.f32.mrf.mxu0
      %8120 = vmatprep.mubr.f32.mxu0 0.0
      %8121 = vmatmul.mubr.f32.gmra.mxu0 %v7861
      %v8122 = vpop.f32.mrf.mxu0
      %v8123 = vadd.f32 0.0, %v8122
      %v8124 = vpop.f32.mrf.mxu0
      %8125 = vmatprep.mubr.f32.mxu0 0.0
      %8126 = vmatmul.mubr.f32.gmra.mxu0 %v7864
      %v8127 = vpop.f32.mrf.mxu0
      %v8128 = vadd.f32 0.0, %v8127
      %v8129 = vpop.f32.mrf.mxu0
      %8130 = vdwg.mxu0
      %v8131 = vadd.f32 %v7664, %v7933
      %v8132 = vadd.f32 %v7665, %v7938
      %v8133 = vadd.f32 %v7666, %v7943
      %v8134 = vadd.f32 %v7667, %v7948
      %v8135 = vadd.f32 %v7668, %v7953
      %v8136 = vadd.f32 %v7669, %v7958
      %v8137 = vadd.f32 %v7670, %v7963
      %v8138 = vadd.f32 %v7671, %v7968
      %v8139 = vadd.f32 %v7672, %v7973
      %v8140 = vadd.f32 %v7673, %v7978
      %v8141 = vadd.f32 %v7674, %v7983
      %v8142 = vadd.f32 %v7675, %v7988
      %v8143 = vadd.f32 %v7676, %v7993
      %v8144 = vadd.f32 %v7677, %v7998
      %v8145 = vadd.f32 %v7678, %v8003
      %v8146 = vadd.f32 %v7679, %v8008
      %v8147 = vadd.f32 %v7680, %v8013
      %v8148 = vadd.f32 %v7681, %v8018
      %v8149 = vadd.f32 %v7682, %v8023
      %v8150 = vadd.f32 %v7683, %v8028
      %v8151 = vadd.f32 %v7684, %v8033
      %v8152 = vadd.f32 %v7685, %v8038
      %v8153 = vadd.f32 %v7686, %v8043
      %v8154 = vadd.f32 %v7687, %v8048
      %v8155 = vadd.f32 %v7688, %v8053
      %v8156 = vadd.f32 %v7689, %v8058
      %v8157 = vadd.f32 %v7690, %v8063
      %v8158 = vadd.f32 %v7691, %v8068
      %v8159 = vadd.f32 %v7692, %v8073
      %v8160 = vadd.f32 %v7693, %v8078
      %v8161 = vadd.f32 %v7694, %v8083
      %v8162 = vadd.f32 %v7695, %v8088
      %v8163 = vadd.f32 %v7696, %v8093
      %v8164 = vadd.f32 %v7697, %v8098
      %v8165 = vadd.f32 %v7698, %v8103
      %v8166 = vadd.f32 %v7699, %v8108
      %v8167 = vadd.f32 %v7700, %v8113
      %v8168 = vadd.f32 %v7701, %v8118
      %v8169 = vadd.f32 %v7702, %v8123
      %v8170 = vadd.f32 %v7703, %v8128
      %v8171 = vld [vmem:[#allocation2 + $0x28] sm:$0xff]
      %v8172 = vld [vmem:[#allocation2 + $0x30] sm:$0xff]
      %v8173 = vld [vmem:[#allocation2 + $0x38] sm:$0xff]
      %v8174 = vld [vmem:[#allocation2 + $0x40] sm:$0xff]
      %v8175 = vld [vmem:[#allocation2 + $0x48] sm:$0xff]
      %v8176 = vld [vmem:[#allocation2 + $0x50] sm:$0xff]
      %v8177 = vld [vmem:[#allocation2 + $0x58] sm:$0xff]
      %v8178 = vld [vmem:[#allocation2 + $0x60] sm:$0xff]
      %v8179 = vld [vmem:[#allocation2 + $0x68] sm:$0xff]
      %v8180 = vld [vmem:[#allocation2 + $0x70] sm:$0xff]
      %v8181 = vld [vmem:[#allocation2 + $0x78] sm:$0xff]
      %v8182 = vld [vmem:[#allocation2 + $0x80] sm:$0xff]
      %v8183 = vld [vmem:[#allocation2 + $0x88] sm:$0xff]
      %v8184 = vld [vmem:[#allocation2 + $0x90] sm:$0xff]
      %v8185 = vld [vmem:[#allocation2 + $0x98] sm:$0xff]
      %v8186 = vld [vmem:[#allocation2 + $0xa0] sm:$0xff]
      %v8187 = vld [vmem:[#allocation2 + $0xa8] sm:$0xff]
      %v8188 = vld [vmem:[#allocation2 + $0xb0] sm:$0xff]
      %v8189 = vld [vmem:[#allocation2 + $0xb8] sm:$0xff]
      %v8190 = vld [vmem:[#allocation2 + $0xc0] sm:$0xff]
      %v8191 = vld [vmem:[#allocation2 + $0xc8] sm:$0xff]
      %v8192 = vld [vmem:[#allocation2 + $0xd0] sm:$0xff]
      %v8193 = vld [vmem:[#allocation2 + $0xd8] sm:$0xff]
      %v8194 = vld [vmem:[#allocation2 + $0xe0] sm:$0xff]
      %v8195 = vld [vmem:[#allocation2 + $0xe8] sm:$0xff]
      %v8196 = vld [vmem:[#allocation2 + $0xf0] sm:$0xff]
      %v8197 = vld [vmem:[#allocation2 + $0xf8] sm:$0xff]
      %v8198 = vld [vmem:[#allocation2 + $0x100] sm:$0xff]
      %v8199 = vld [vmem:[#allocation2 + $0x108] sm:$0xff]
      %v8200 = vld [vmem:[#allocation2 + $0x110] sm:$0xff]
      %v8201 = vld [vmem:[#allocation2 + $0x118] sm:$0xff]
      %v8202 = vld [vmem:[#allocation2 + $0x120] sm:$0xff]
      %v8203 = vld [vmem:[#allocation2 + $0x128] sm:$0xff]
      %v8204 = vld [vmem:[#allocation2 + $0x130] sm:$0xff]
      %v8205 = vld [vmem:[#allocation2 + $0x138] sm:$0xff]
      %v8206 = vld [vmem:[#allocation2 + $0x140] sm:$0xff]
      %v8207 = vld [vmem:[#allocation2 + $0x148] sm:$0xff]
      %v8208 = vld [vmem:[#allocation2 + $0x150] sm:$0xff]
      %v8209 = vld [vmem:[#allocation2 + $0x158] sm:$0xff]
      %v8210 = vld [vmem:[#allocation2 + $0x160] sm:$0xff]
      %s8211 = scalar_lea.vmem %s291, 48
      %v8212 = vld [vmem:[%s8211] sm:$0xff]
      %v8214 = vsel %vm5403, %v8171, 0
      %v8217 = vsel %vm5403, %v8172, 0
      %v8220 = vsel %vm5403, %v8173, 0
      %v8223 = vsel %vm5403, %v8174, 0
      %v8226 = vsel %vm5403, %v8175, 0
      %v8229 = vsel %vm5403, %v8176, 0
      %v8232 = vsel %vm5403, %v8177, 0
      %v8235 = vsel %vm5403, %v8178, 0
      %v8238 = vsel %vm5403, %v8179, 0
      %v8241 = vsel %vm5403, %v8180, 0
      %v8244 = vsel %vm5403, %v8181, 0
      %v8247 = vsel %vm5403, %v8182, 0
      %v8250 = vsel %vm5403, %v8183, 0
      %v8253 = vsel %vm5403, %v8184, 0
      %v8256 = vsel %vm5403, %v8185, 0
      %v8259 = vsel %vm5403, %v8186, 0
      %v8262 = vsel %vm5403, %v8187, 0
      %v8265 = vsel %vm5403, %v8188, 0
      %v8268 = vsel %vm5403, %v8189, 0
      %v8271 = vsel %vm5403, %v8190, 0
      %v8274 = vsel %vm5403, %v8191, 0
      %v8277 = vsel %vm5403, %v8192, 0
      %v8280 = vsel %vm5403, %v8193, 0
      %v8283 = vsel %vm5403, %v8194, 0
      %v8286 = vsel %vm5403, %v8195, 0
      %v8289 = vsel %vm5403, %v8196, 0
      %v8292 = vsel %vm5403, %v8197, 0
      %v8295 = vsel %vm5403, %v8198, 0
      %v8298 = vsel %vm5403, %v8199, 0
      %v8301 = vsel %vm5403, %v8200, 0
      %v8304 = vsel %vm5403, %v8201, 0
      %v8307 = vsel %vm5403, %v8202, 0
      %v8310 = vsel %vm5403, %v8203, 0
      %v8313 = vsel %vm5403, %v8204, 0
      %v8316 = vsel %vm5403, %v8205, 0
      %v8319 = vsel %vm5403, %v8206, 0
      %v8322 = vsel %vm5403, %v8207, 0
      %v8325 = vsel %vm5403, %v8208, 0
      %v8328 = vsel %vm5403, %v8209, 0
      %v8331 = vsel %vm5403, %v8210, 0
      %8333 = vmatprep.subr.mxu0 0.0
      %8334 = vmatpush1.msra.mxu0 0.0
      %8335 = vmatprep.subr.mxu0 0.0
      %8336 = vmatpush1.msra.mxu0 0.0
      %8337 = vmatprep.subr.mxu0 0.0
      %8338 = vmatpush1.msra.mxu0 0.0
      %8339 = vmatprep.subr.mxu0 0.0
      %8340 = vmatpush1.msra.mxu0 0.0
      %8341 = vmatprep.subr.mxu0 0.0
      %8342 = vmatpush1.msra.mxu0 0.0
      %8343 = vmatprep.subr.mxu0 0.0
      %8344 = vmatpush1.msra.mxu0 0.0
      %8345 = vmatprep.subr.mxu0 0.0
      %8346 = vmatpush1.msra.mxu0 0.0
      %8347 = vmatprep.subr.mxu0 0.0
      %8348 = vmatpush1.msra.mxu0 0.0
      %8349 = vmatprep.subr.mxu0 0.0
      %8350 = vmatpush1.msra.mxu0 0.0
      %8351 = vmatprep.subr.mxu0 0.0
      %8352 = vmatpush1.msra.mxu0 0.0
      %8353 = vmatprep.subr.mxu0 0.0
      %8354 = vmatpush1.msra.mxu0 0.0
      %8355 = vmatprep.subr.mxu0 0.0
      %8356 = vmatpush1.msra.mxu0 0.0
      %8357 = vmatprep.subr.mxu0 0.0
      %8358 = vmatpush1.msra.mxu0 0.0
      %8359 = vmatprep.subr.mxu0 0.0
      %8360 = vmatpush1.msra.mxu0 0.0
      %8361 = vmatprep.subr.mxu0 0.0
      %8362 = vmatpush1.msra.mxu0 0.0
      %8363 = vmatprep.subr.mxu0 0.0
      %8364 = vmatpush1.msra.mxu0 %v8212
      %8365 = vmatprep.subr.mxu0 0.0
      %8366 = vmatpush2.msra.mxu0 0.0
      %8367 = vmatprep.subr.mxu0 0.0
      %8368 = vmatpush2.msra.mxu0 0.0
      %8369 = vmatprep.subr.mxu0 0.0
      %8370 = vmatpush2.msra.mxu0 0.0
      %8371 = vmatprep.subr.mxu0 0.0
      %8372 = vmatpush2.msra.mxu0 0.0
      %8373 = vmatprep.subr.mxu0 0.0
      %8374 = vmatpush2.msra.mxu0 0.0
      %8375 = vmatprep.subr.mxu0 0.0
      %8376 = vmatpush2.msra.mxu0 0.0
      %8377 = vmatprep.subr.mxu0 0.0
      %8378 = vmatpush2.msra.mxu0 0.0
      %8379 = vmatprep.subr.mxu0 0.0
      %8380 = vmatpush2.msra.mxu0 0.0
      %8381 = vmatprep.subr.mxu0 0.0
      %8382 = vmatpush2.msra.mxu0 0.0
      %8383 = vmatprep.subr.mxu0 0.0
      %8384 = vmatpush2.msra.mxu0 0.0
      %8385 = vmatprep.subr.mxu0 0.0
      %8386 = vmatpush2.msra.mxu0 0.0
      %8387 = vmatprep.subr.mxu0 0.0
      %8388 = vmatpush2.msra.mxu0 0.0
      %8389 = vmatprep.subr.mxu0 0.0
      %8390 = vmatpush2.msra.mxu0 0.0
      %8391 = vmatprep.subr.mxu0 0.0
      %8392 = vmatpush2.msra.mxu0 0.0
      %8393 = vmatprep.subr.mxu0 0.0
      %8394 = vmatpush2.msra.mxu0 0.0
      %8395 = vmatprep.subr.mxu0 0.0
      %8396 = vmatpush2.msra.mxu0 0.0
      %8397 = vmatprep.mubr.f32.mxu0 0.0
      %8398 = vmatmul.mubr.f32.gmra.mxu0 %v8214
      %v8399 = vpop.f32.mrf.mxu0
      %v8400 = vadd.f32 0.0, %v8399
      %v8401 = vpop.f32.mrf.mxu0
      %8402 = vmatprep.mubr.f32.mxu0 0.0
      %8403 = vmatmul.mubr.f32.gmra.mxu0 %v8217
      %v8404 = vpop.f32.mrf.mxu0
      %v8405 = vadd.f32 0.0, %v8404
      %v8406 = vpop.f32.mrf.mxu0
      %8407 = vmatprep.mubr.f32.mxu0 0.0
      %8408 = vmatmul.mubr.f32.gmra.mxu0 %v8220
      %v8409 = vpop.f32.mrf.mxu0
      %v8410 = vadd.f32 0.0, %v8409
      %v8411 = vpop.f32.mrf.mxu0
      %8412 = vmatprep.mubr.f32.mxu0 0.0
      %8413 = vmatmul.mubr.f32.gmra.mxu0 %v8223
      %v8414 = vpop.f32.mrf.mxu0
      %v8415 = vadd.f32 0.0, %v8414
      %v8416 = vpop.f32.mrf.mxu0
      %8417 = vmatprep.mubr.f32.mxu0 0.0
      %8418 = vmatmul.mubr.f32.gmra.mxu0 %v8226
      %v8419 = vpop.f32.mrf.mxu0
      %v8420 = vadd.f32 0.0, %v8419
      %v8421 = vpop.f32.mrf.mxu0
      %8422 = vmatprep.mubr.f32.mxu0 0.0
      %8423 = vmatmul.mubr.f32.gmra.mxu0 %v8229
      %v8424 = vpop.f32.mrf.mxu0
      %v8425 = vadd.f32 0.0, %v8424
      %v8426 = vpop.f32.mrf.mxu0
      %8427 = vmatprep.mubr.f32.mxu0 0.0
      %8428 = vmatmul.mubr.f32.gmra.mxu0 %v8232
      %v8429 = vpop.f32.mrf.mxu0
      %v8430 = vadd.f32 0.0, %v8429
      %v8431 = vpop.f32.mrf.mxu0
      %8432 = vmatprep.mubr.f32.mxu0 0.0
      %8433 = vmatmul.mubr.f32.gmra.mxu0 %v8235
      %v8434 = vpop.f32.mrf.mxu0
      %v8435 = vadd.f32 0.0, %v8434
      %v8436 = vpop.f32.mrf.mxu0
      %8437 = vmatprep.mubr.f32.mxu0 0.0
      %8438 = vmatmul.mubr.f32.gmra.mxu0 %v8238
      %v8439 = vpop.f32.mrf.mxu0
      %v8440 = vadd.f32 0.0, %v8439
      %v8441 = vpop.f32.mrf.mxu0
      %8442 = vmatprep.mubr.f32.mxu0 0.0
      %8443 = vmatmul.mubr.f32.gmra.mxu0 %v8241
      %v8444 = vpop.f32.mrf.mxu0
      %v8445 = vadd.f32 0.0, %v8444
      %v8446 = vpop.f32.mrf.mxu0
      %8447 = vmatprep.mubr.f32.mxu0 0.0
      %8448 = vmatmul.mubr.f32.gmra.mxu0 %v8244
      %v8449 = vpop.f32.mrf.mxu0
      %v8450 = vadd.f32 0.0, %v8449
      %v8451 = vpop.f32.mrf.mxu0
      %8452 = vmatprep.mubr.f32.mxu0 0.0
      %8453 = vmatmul.mubr.f32.gmra.mxu0 %v8247
      %v8454 = vpop.f32.mrf.mxu0
      %v8455 = vadd.f32 0.0, %v8454
      %v8456 = vpop.f32.mrf.mxu0
      %8457 = vmatprep.mubr.f32.mxu0 0.0
      %8458 = vmatmul.mubr.f32.gmra.mxu0 %v8250
      %v8459 = vpop.f32.mrf.mxu0
      %v8460 = vadd.f32 0.0, %v8459
      %v8461 = vpop.f32.mrf.mxu0
      %8462 = vmatprep.mubr.f32.mxu0 0.0
      %8463 = vmatmul.mubr.f32.gmra.mxu0 %v8253
      %v8464 = vpop.f32.mrf.mxu0
      %v8465 = vadd.f32 0.0, %v8464
      %v8466 = vpop.f32.mrf.mxu0
      %8467 = vmatprep.mubr.f32.mxu0 0.0
      %8468 = vmatmul.mubr.f32.gmra.mxu0 %v8256
      %v8469 = vpop.f32.mrf.mxu0
      %v8470 = vadd.f32 0.0, %v8469
      %v8471 = vpop.f32.mrf.mxu0
      %8472 = vmatprep.mubr.f32.mxu0 0.0
      %8473 = vmatmul.mubr.f32.gmra.mxu0 %v8259
      %v8474 = vpop.f32.mrf.mxu0
      %v8475 = vadd.f32 0.0, %v8474
      %v8476 = vpop.f32.mrf.mxu0
      %8477 = vmatprep.mubr.f32.mxu0 0.0
      %8478 = vmatmul.mubr.f32.gmra.mxu0 %v8262
      %v8479 = vpop.f32.mrf.mxu0
      %v8480 = vadd.f32 0.0, %v8479
      %v8481 = vpop.f32.mrf.mxu0
      %8482 = vmatprep.mubr.f32.mxu0 0.0
      %8483 = vmatmul.mubr.f32.gmra.mxu0 %v8265
      %v8484 = vpop.f32.mrf.mxu0
      %v8485 = vadd.f32 0.0, %v8484
      %v8486 = vpop.f32.mrf.mxu0
      %8487 = vmatprep.mubr.f32.mxu0 0.0
      %8488 = vmatmul.mubr.f32.gmra.mxu0 %v8268
      %v8489 = vpop.f32.mrf.mxu0
      %v8490 = vadd.f32 0.0, %v8489
      %v8491 = vpop.f32.mrf.mxu0
      %8492 = vmatprep.mubr.f32.mxu0 0.0
      %8493 = vmatmul.mubr.f32.gmra.mxu0 %v8271
      %v8494 = vpop.f32.mrf.mxu0
      %v8495 = vadd.f32 0.0, %v8494
      %v8496 = vpop.f32.mrf.mxu0
      %8497 = vmatprep.mubr.f32.mxu0 0.0
      %8498 = vmatmul.mubr.f32.gmra.mxu0 %v8274
      %v8499 = vpop.f32.mrf.mxu0
      %v8500 = vadd.f32 0.0, %v8499
      %v8501 = vpop.f32.mrf.mxu0
      %8502 = vmatprep.mubr.f32.mxu0 0.0
      %8503 = vmatmul.mubr.f32.gmra.mxu0 %v8277
      %v8504 = vpop.f32.mrf.mxu0
      %v8505 = vadd.f32 0.0, %v8504
      %v8506 = vpop.f32.mrf.mxu0
      %8507 = vmatprep.mubr.f32.mxu0 0.0
      %8508 = vmatmul.mubr.f32.gmra.mxu0 %v8280
      %v8509 = vpop.f32.mrf.mxu0
      %v8510 = vadd.f32 0.0, %v8509
      %v8511 = vpop.f32.mrf.mxu0
      %8512 = vmatprep.mubr.f32.mxu0 0.0
      %8513 = vmatmul.mubr.f32.gmra.mxu0 %v8283
      %v8514 = vpop.f32.mrf.mxu0
      %v8515 = vadd.f32 0.0, %v8514
      %v8516 = vpop.f32.mrf.mxu0
      %8517 = vmatprep.mubr.f32.mxu0 0.0
      %8518 = vmatmul.mubr.f32.gmra.mxu0 %v8286
      %v8519 = vpop.f32.mrf.mxu0
      %v8520 = vadd.f32 0.0, %v8519
      %v8521 = vpop.f32.mrf.mxu0
      %8522 = vmatprep.mubr.f32.mxu0 0.0
      %8523 = vmatmul.mubr.f32.gmra.mxu0 %v8289
      %v8524 = vpop.f32.mrf.mxu0
      %v8525 = vadd.f32 0.0, %v8524
      %v8526 = vpop.f32.mrf.mxu0
      %8527 = vmatprep.mubr.f32.mxu0 0.0
      %8528 = vmatmul.mubr.f32.gmra.mxu0 %v8292
      %v8529 = vpop.f32.mrf.mxu0
      %v8530 = vadd.f32 0.0, %v8529
      %v8531 = vpop.f32.mrf.mxu0
      %8532 = vmatprep.mubr.f32.mxu0 0.0
      %8533 = vmatmul.mubr.f32.gmra.mxu0 %v8295
      %v8534 = vpop.f32.mrf.mxu0
      %v8535 = vadd.f32 0.0, %v8534
      %v8536 = vpop.f32.mrf.mxu0
      %8537 = vmatprep.mubr.f32.mxu0 0.0
      %8538 = vmatmul.mubr.f32.gmra.mxu0 %v8298
      %v8539 = vpop.f32.mrf.mxu0
      %v8540 = vadd.f32 0.0, %v8539
      %v8541 = vpop.f32.mrf.mxu0
      %8542 = vmatprep.mubr.f32.mxu0 0.0
      %8543 = vmatmul.mubr.f32.gmra.mxu0 %v8301
      %v8544 = vpop.f32.mrf.mxu0
      %v8545 = vadd.f32 0.0, %v8544
      %v8546 = vpop.f32.mrf.mxu0
      %8547 = vmatprep.mubr.f32.mxu0 0.0
      %8548 = vmatmul.mubr.f32.gmra.mxu0 %v8304
      %v8549 = vpop.f32.mrf.mxu0
      %v8550 = vadd.f32 0.0, %v8549
      %v8551 = vpop.f32.mrf.mxu0
      %8552 = vmatprep.mubr.f32.mxu0 0.0
      %8553 = vmatmul.mubr.f32.gmra.mxu0 %v8307
      %v8554 = vpop.f32.mrf.mxu0
      %v8555 = vadd.f32 0.0, %v8554
      %v8556 = vpop.f32.mrf.mxu0
      %8557 = vmatprep.mubr.f32.mxu0 0.0
      %8558 = vmatmul.mubr.f32.gmra.mxu0 %v8310
      %v8559 = vpop.f32.mrf.mxu0
      %v8560 = vadd.f32 0.0, %v8559
      %v8561 = vpop.f32.mrf.mxu0
      %8562 = vmatprep.mubr.f32.mxu0 0.0
      %8563 = vmatmul.mubr.f32.gmra.mxu0 %v8313
      %v8564 = vpop.f32.mrf.mxu0
      %v8565 = vadd.f32 0.0, %v8564
      %v8566 = vpop.f32.mrf.mxu0
      %8567 = vmatprep.mubr.f32.mxu0 0.0
      %8568 = vmatmul.mubr.f32.gmra.mxu0 %v8316
      %v8569 = vpop.f32.mrf.mxu0
      %v8570 = vadd.f32 0.0, %v8569
      %v8571 = vpop.f32.mrf.mxu0
      %8572 = vmatprep.mubr.f32.mxu0 0.0
      %8573 = vmatmul.mubr.f32.gmra.mxu0 %v8319
      %v8574 = vpop.f32.mrf.mxu0
      %v8575 = vadd.f32 0.0, %v8574
      %v8576 = vpop.f32.mrf.mxu0
      %8577 = vmatprep.mubr.f32.mxu0 0.0
      %8578 = vmatmul.mubr.f32.gmra.mxu0 %v8322
      %v8579 = vpop.f32.mrf.mxu0
      %v8580 = vadd.f32 0.0, %v8579
      %v8581 = vpop.f32.mrf.mxu0
      %8582 = vmatprep.mubr.f32.mxu0 0.0
      %8583 = vmatmul.mubr.f32.gmra.mxu0 %v8325
      %v8584 = vpop.f32.mrf.mxu0
      %v8585 = vadd.f32 0.0, %v8584
      %v8586 = vpop.f32.mrf.mxu0
      %8587 = vmatprep.mubr.f32.mxu0 0.0
      %8588 = vmatmul.mubr.f32.gmra.mxu0 %v8328
      %v8589 = vpop.f32.mrf.mxu0
      %v8590 = vadd.f32 0.0, %v8589
      %v8591 = vpop.f32.mrf.mxu0
      %8592 = vmatprep.mubr.f32.mxu0 0.0
      %8593 = vmatmul.mubr.f32.gmra.mxu0 %v8331
      %v8594 = vpop.f32.mrf.mxu0
      %v8595 = vadd.f32 0.0, %v8594
      %v8596 = vpop.f32.mrf.mxu0
      %8597 = vdwg.mxu0
      %v8598 = vadd.f32 %v8131, %v8400
      %v8599 = vadd.f32 %v8132, %v8405
      %v8600 = vadd.f32 %v8133, %v8410
      %v8601 = vadd.f32 %v8134, %v8415
      %v8602 = vadd.f32 %v8135, %v8420
      %v8603 = vadd.f32 %v8136, %v8425
      %v8604 = vadd.f32 %v8137, %v8430
      %v8605 = vadd.f32 %v8138, %v8435
      %v8606 = vadd.f32 %v8139, %v8440
      %v8607 = vadd.f32 %v8140, %v8445
      %v8608 = vadd.f32 %v8141, %v8450
      %v8609 = vadd.f32 %v8142, %v8455
      %v8610 = vadd.f32 %v8143, %v8460
      %v8611 = vadd.f32 %v8144, %v8465
      %v8612 = vadd.f32 %v8145, %v8470
      %v8613 = vadd.f32 %v8146, %v8475
      %v8614 = vadd.f32 %v8147, %v8480
      %v8615 = vadd.f32 %v8148, %v8485
      %v8616 = vadd.f32 %v8149, %v8490
      %v8617 = vadd.f32 %v8150, %v8495
      %v8618 = vadd.f32 %v8151, %v8500
      %v8619 = vadd.f32 %v8152, %v8505
      %v8620 = vadd.f32 %v8153, %v8510
      %v8621 = vadd.f32 %v8154, %v8515
      %v8622 = vadd.f32 %v8155, %v8520
      %v8623 = vadd.f32 %v8156, %v8525
      %v8624 = vadd.f32 %v8157, %v8530
      %v8625 = vadd.f32 %v8158, %v8535
      %v8626 = vadd.f32 %v8159, %v8540
      %v8627 = vadd.f32 %v8160, %v8545
      %v8628 = vadd.f32 %v8161, %v8550
      %v8629 = vadd.f32 %v8162, %v8555
      %v8630 = vadd.f32 %v8163, %v8560
      %v8631 = vadd.f32 %v8164, %v8565
      %v8632 = vadd.f32 %v8165, %v8570
      %v8633 = vadd.f32 %v8166, %v8575
      %v8634 = vadd.f32 %v8167, %v8580
      %v8635 = vadd.f32 %v8168, %v8585
      %v8636 = vadd.f32 %v8169, %v8590
      %v8637 = vadd.f32 %v8170, %v8595
      %v8638 = vld [vmem:[#allocation2 + $0x29] sm:$0xff]
      %v8639 = vld [vmem:[#allocation2 + $0x31] sm:$0xff]
      %v8640 = vld [vmem:[#allocation2 + $0x39] sm:$0xff]
      %v8641 = vld [vmem:[#allocation2 + $0x41] sm:$0xff]
      %v8642 = vld [vmem:[#allocation2 + $0x49] sm:$0xff]
      %v8643 = vld [vmem:[#allocation2 + $0x51] sm:$0xff]
      %v8644 = vld [vmem:[#allocation2 + $0x59] sm:$0xff]
      %v8645 = vld [vmem:[#allocation2 + $0x61] sm:$0xff]
      %v8646 = vld [vmem:[#allocation2 + $0x69] sm:$0xff]
      %v8647 = vld [vmem:[#allocation2 + $0x71] sm:$0xff]
      %v8648 = vld [vmem:[#allocation2 + $0x79] sm:$0xff]
      %v8649 = vld [vmem:[#allocation2 + $0x81] sm:$0xff]
      %v8650 = vld [vmem:[#allocation2 + $0x89] sm:$0xff]
      %v8651 = vld [vmem:[#allocation2 + $0x91] sm:$0xff]
      %v8652 = vld [vmem:[#allocation2 + $0x99] sm:$0xff]
      %v8653 = vld [vmem:[#allocation2 + $0xa1] sm:$0xff]
      %v8654 = vld [vmem:[#allocation2 + $0xa9] sm:$0xff]
      %v8655 = vld [vmem:[#allocation2 + $0xb1] sm:$0xff]
      %v8656 = vld [vmem:[#allocation2 + $0xb9] sm:$0xff]
      %v8657 = vld [vmem:[#allocation2 + $0xc1] sm:$0xff]
      %v8658 = vld [vmem:[#allocation2 + $0xc9] sm:$0xff]
      %v8659 = vld [vmem:[#allocation2 + $0xd1] sm:$0xff]
      %v8660 = vld [vmem:[#allocation2 + $0xd9] sm:$0xff]
      %v8661 = vld [vmem:[#allocation2 + $0xe1] sm:$0xff]
      %v8662 = vld [vmem:[#allocation2 + $0xe9] sm:$0xff]
      %v8663 = vld [vmem:[#allocation2 + $0xf1] sm:$0xff]
      %v8664 = vld [vmem:[#allocation2 + $0xf9] sm:$0xff]
      %v8665 = vld [vmem:[#allocation2 + $0x101] sm:$0xff]
      %v8666 = vld [vmem:[#allocation2 + $0x109] sm:$0xff]
      %v8667 = vld [vmem:[#allocation2 + $0x111] sm:$0xff]
      %v8668 = vld [vmem:[#allocation2 + $0x119] sm:$0xff]
      %v8669 = vld [vmem:[#allocation2 + $0x121] sm:$0xff]
      %v8670 = vld [vmem:[#allocation2 + $0x129] sm:$0xff]
      %v8671 = vld [vmem:[#allocation2 + $0x131] sm:$0xff]
      %v8672 = vld [vmem:[#allocation2 + $0x139] sm:$0xff]
      %v8673 = vld [vmem:[#allocation2 + $0x141] sm:$0xff]
      %v8674 = vld [vmem:[#allocation2 + $0x149] sm:$0xff]
      %v8675 = vld [vmem:[#allocation2 + $0x151] sm:$0xff]
      %v8676 = vld [vmem:[#allocation2 + $0x159] sm:$0xff]
      %v8677 = vld [vmem:[#allocation2 + $0x161] sm:$0xff]
      %s8678 = scalar_lea.vmem %s291, 56
      %v8679 = vld [vmem:[%s8678] sm:$0xff]
      %v8681 = vsel %vm5403, %v8638, 0
      %v8684 = vsel %vm5403, %v8639, 0
      %v8687 = vsel %vm5403, %v8640, 0
      %v8690 = vsel %vm5403, %v8641, 0
      %v8693 = vsel %vm5403, %v8642, 0
      %v8696 = vsel %vm5403, %v8643, 0
      %v8699 = vsel %vm5403, %v8644, 0
      %v8702 = vsel %vm5403, %v8645, 0
      %v8705 = vsel %vm5403, %v8646, 0
      %v8708 = vsel %vm5403, %v8647, 0
      %v8711 = vsel %vm5403, %v8648, 0
      %v8714 = vsel %vm5403, %v8649, 0
      %v8717 = vsel %vm5403, %v8650, 0
      %v8720 = vsel %vm5403, %v8651, 0
      %v8723 = vsel %vm5403, %v8652, 0
      %v8726 = vsel %vm5403, %v8653, 0
      %v8729 = vsel %vm5403, %v8654, 0
      %v8732 = vsel %vm5403, %v8655, 0
      %v8735 = vsel %vm5403, %v8656, 0
      %v8738 = vsel %vm5403, %v8657, 0
      %v8741 = vsel %vm5403, %v8658, 0
      %v8744 = vsel %vm5403, %v8659, 0
      %v8747 = vsel %vm5403, %v8660, 0
      %v8750 = vsel %vm5403, %v8661, 0
      %v8753 = vsel %vm5403, %v8662, 0
      %v8756 = vsel %vm5403, %v8663, 0
      %v8759 = vsel %vm5403, %v8664, 0
      %v8762 = vsel %vm5403, %v8665, 0
      %v8765 = vsel %vm5403, %v8666, 0
      %v8768 = vsel %vm5403, %v8667, 0
      %v8771 = vsel %vm5403, %v8668, 0
      %v8774 = vsel %vm5403, %v8669, 0
      %v8777 = vsel %vm5403, %v8670, 0
      %v8780 = vsel %vm5403, %v8671, 0
      %v8783 = vsel %vm5403, %v8672, 0
      %v8786 = vsel %vm5403, %v8673, 0
      %v8789 = vsel %vm5403, %v8674, 0
      %v8792 = vsel %vm5403, %v8675, 0
      %v8795 = vsel %vm5403, %v8676, 0
      %v8798 = vsel %vm5403, %v8677, 0
      %8800 = vmatprep.subr.mxu0 0.0
      %8801 = vmatpush1.msra.mxu0 0.0
      %8802 = vmatprep.subr.mxu0 0.0
      %8803 = vmatpush1.msra.mxu0 0.0
      %8804 = vmatprep.subr.mxu0 0.0
      %8805 = vmatpush1.msra.mxu0 0.0
      %8806 = vmatprep.subr.mxu0 0.0
      %8807 = vmatpush1.msra.mxu0 0.0
      %8808 = vmatprep.subr.mxu0 0.0
      %8809 = vmatpush1.msra.mxu0 0.0
      %8810 = vmatprep.subr.mxu0 0.0
      %8811 = vmatpush1.msra.mxu0 0.0
      %8812 = vmatprep.subr.mxu0 0.0
      %8813 = vmatpush1.msra.mxu0 0.0
      %8814 = vmatprep.subr.mxu0 0.0
      %8815 = vmatpush1.msra.mxu0 0.0
      %8816 = vmatprep.subr.mxu0 0.0
      %8817 = vmatpush1.msra.mxu0 0.0
      %8818 = vmatprep.subr.mxu0 0.0
      %8819 = vmatpush1.msra.mxu0 0.0
      %8820 = vmatprep.subr.mxu0 0.0
      %8821 = vmatpush1.msra.mxu0 0.0
      %8822 = vmatprep.subr.mxu0 0.0
      %8823 = vmatpush1.msra.mxu0 0.0
      %8824 = vmatprep.subr.mxu0 0.0
      %8825 = vmatpush1.msra.mxu0 0.0
      %8826 = vmatprep.subr.mxu0 0.0
      %8827 = vmatpush1.msra.mxu0 0.0
      %8828 = vmatprep.subr.mxu0 0.0
      %8829 = vmatpush1.msra.mxu0 0.0
      %8830 = vmatprep.subr.mxu0 0.0
      %8831 = vmatpush1.msra.mxu0 %v8679
      %8832 = vmatprep.subr.mxu0 0.0
      %8833 = vmatpush2.msra.mxu0 0.0
      %8834 = vmatprep.subr.mxu0 0.0
      %8835 = vmatpush2.msra.mxu0 0.0
      %8836 = vmatprep.subr.mxu0 0.0
      %8837 = vmatpush2.msra.mxu0 0.0
      %8838 = vmatprep.subr.mxu0 0.0
      %8839 = vmatpush2.msra.mxu0 0.0
      %8840 = vmatprep.subr.mxu0 0.0
      %8841 = vmatpush2.msra.mxu0 0.0
      %8842 = vmatprep.subr.mxu0 0.0
      %8843 = vmatpush2.msra.mxu0 0.0
      %8844 = vmatprep.subr.mxu0 0.0
      %8845 = vmatpush2.msra.mxu0 0.0
      %8846 = vmatprep.subr.mxu0 0.0
      %8847 = vmatpush2.msra.mxu0 0.0
      %8848 = vmatprep.subr.mxu0 0.0
      %8849 = vmatpush2.msra.mxu0 0.0
      %8850 = vmatprep.subr.mxu0 0.0
      %8851 = vmatpush2.msra.mxu0 0.0
      %8852 = vmatprep.subr.mxu0 0.0
      %8853 = vmatpush2.msra.mxu0 0.0
      %8854 = vmatprep.subr.mxu0 0.0
      %8855 = vmatpush2.msra.mxu0 0.0
      %8856 = vmatprep.subr.mxu0 0.0
      %8857 = vmatpush2.msra.mxu0 0.0
      %8858 = vmatprep.subr.mxu0 0.0
      %8859 = vmatpush2.msra.mxu0 0.0
      %8860 = vmatprep.subr.mxu0 0.0
      %8861 = vmatpush2.msra.mxu0 0.0
      %8862 = vmatprep.subr.mxu0 0.0
      %8863 = vmatpush2.msra.mxu0 0.0
      %8864 = vmatprep.mubr.f32.mxu0 0.0
      %8865 = vmatmul.mubr.f32.gmra.mxu0 %v8681
      %v8866 = vpop.f32.mrf.mxu0
      %v8867 = vadd.f32 0.0, %v8866
      %v8868 = vpop.f32.mrf.mxu0
      %8869 = vmatprep.mubr.f32.mxu0 0.0
      %8870 = vmatmul.mubr.f32.gmra.mxu0 %v8684
      %v8871 = vpop.f32.mrf.mxu0
      %v8872 = vadd.f32 0.0, %v8871
      %v8873 = vpop.f32.mrf.mxu0
      %8874 = vmatprep.mubr.f32.mxu0 0.0
      %8875 = vmatmul.mubr.f32.gmra.mxu0 %v8687
      %v8876 = vpop.f32.mrf.mxu0
      %v8877 = vadd.f32 0.0, %v8876
      %v8878 = vpop.f32.mrf.mxu0
      %8879 = vmatprep.mubr.f32.mxu0 0.0
      %8880 = vmatmul.mubr.f32.gmra.mxu0 %v8690
      %v8881 = vpop.f32.mrf.mxu0
      %v8882 = vadd.f32 0.0, %v8881
      %v8883 = vpop.f32.mrf.mxu0
      %8884 = vmatprep.mubr.f32.mxu0 0.0
      %8885 = vmatmul.mubr.f32.gmra.mxu0 %v8693
      %v8886 = vpop.f32.mrf.mxu0
      %v8887 = vadd.f32 0.0, %v8886
      %v8888 = vpop.f32.mrf.mxu0
      %8889 = vmatprep.mubr.f32.mxu0 0.0
      %8890 = vmatmul.mubr.f32.gmra.mxu0 %v8696
      %v8891 = vpop.f32.mrf.mxu0
      %v8892 = vadd.f32 0.0, %v8891
      %v8893 = vpop.f32.mrf.mxu0
      %8894 = vmatprep.mubr.f32.mxu0 0.0
      %8895 = vmatmul.mubr.f32.gmra.mxu0 %v8699
      %v8896 = vpop.f32.mrf.mxu0
      %v8897 = vadd.f32 0.0, %v8896
      %v8898 = vpop.f32.mrf.mxu0
      %8899 = vmatprep.mubr.f32.mxu0 0.0
      %8900 = vmatmul.mubr.f32.gmra.mxu0 %v8702
      %v8901 = vpop.f32.mrf.mxu0
      %v8902 = vadd.f32 0.0, %v8901
      %v8903 = vpop.f32.mrf.mxu0
      %8904 = vmatprep.mubr.f32.mxu0 0.0
      %8905 = vmatmul.mubr.f32.gmra.mxu0 %v8705
      %v8906 = vpop.f32.mrf.mxu0
      %v8907 = vadd.f32 0.0, %v8906
      %v8908 = vpop.f32.mrf.mxu0
      %8909 = vmatprep.mubr.f32.mxu0 0.0
      %8910 = vmatmul.mubr.f32.gmra.mxu0 %v8708
      %v8911 = vpop.f32.mrf.mxu0
      %v8912 = vadd.f32 0.0, %v8911
      %v8913 = vpop.f32.mrf.mxu0
      %8914 = vmatprep.mubr.f32.mxu0 0.0
      %8915 = vmatmul.mubr.f32.gmra.mxu0 %v8711
      %v8916 = vpop.f32.mrf.mxu0
      %v8917 = vadd.f32 0.0, %v8916
      %v8918 = vpop.f32.mrf.mxu0
      %8919 = vmatprep.mubr.f32.mxu0 0.0
      %8920 = vmatmul.mubr.f32.gmra.mxu0 %v8714
      %v8921 = vpop.f32.mrf.mxu0
      %v8922 = vadd.f32 0.0, %v8921
      %v8923 = vpop.f32.mrf.mxu0
      %8924 = vmatprep.mubr.f32.mxu0 0.0
      %8925 = vmatmul.mubr.f32.gmra.mxu0 %v8717
      %v8926 = vpop.f32.mrf.mxu0
      %v8927 = vadd.f32 0.0, %v8926
      %v8928 = vpop.f32.mrf.mxu0
      %8929 = vmatprep.mubr.f32.mxu0 0.0
      %8930 = vmatmul.mubr.f32.gmra.mxu0 %v8720
      %v8931 = vpop.f32.mrf.mxu0
      %v8932 = vadd.f32 0.0, %v8931
      %v8933 = vpop.f32.mrf.mxu0
      %8934 = vmatprep.mubr.f32.mxu0 0.0
      %8935 = vmatmul.mubr.f32.gmra.mxu0 %v8723
      %v8936 = vpop.f32.mrf.mxu0
      %v8937 = vadd.f32 0.0, %v8936
      %v8938 = vpop.f32.mrf.mxu0
      %8939 = vmatprep.mubr.f32.mxu0 0.0
      %8940 = vmatmul.mubr.f32.gmra.mxu0 %v8726
      %v8941 = vpop.f32.mrf.mxu0
      %v8942 = vadd.f32 0.0, %v8941
      %v8943 = vpop.f32.mrf.mxu0
      %8944 = vmatprep.mubr.f32.mxu0 0.0
      %8945 = vmatmul.mubr.f32.gmra.mxu0 %v8729
      %v8946 = vpop.f32.mrf.mxu0
      %v8947 = vadd.f32 0.0, %v8946
      %v8948 = vpop.f32.mrf.mxu0
      %8949 = vmatprep.mubr.f32.mxu0 0.0
      %8950 = vmatmul.mubr.f32.gmra.mxu0 %v8732
      %v8951 = vpop.f32.mrf.mxu0
      %v8952 = vadd.f32 0.0, %v8951
      %v8953 = vpop.f32.mrf.mxu0
      %8954 = vmatprep.mubr.f32.mxu0 0.0
      %8955 = vmatmul.mubr.f32.gmra.mxu0 %v8735
      %v8956 = vpop.f32.mrf.mxu0
      %v8957 = vadd.f32 0.0, %v8956
      %v8958 = vpop.f32.mrf.mxu0
      %8959 = vmatprep.mubr.f32.mxu0 0.0
      %8960 = vmatmul.mubr.f32.gmra.mxu0 %v8738
      %v8961 = vpop.f32.mrf.mxu0
      %v8962 = vadd.f32 0.0, %v8961
      %v8963 = vpop.f32.mrf.mxu0
      %8964 = vmatprep.mubr.f32.mxu0 0.0
      %8965 = vmatmul.mubr.f32.gmra.mxu0 %v8741
      %v8966 = vpop.f32.mrf.mxu0
      %v8967 = vadd.f32 0.0, %v8966
      %v8968 = vpop.f32.mrf.mxu0
      %8969 = vmatprep.mubr.f32.mxu0 0.0
      %8970 = vmatmul.mubr.f32.gmra.mxu0 %v8744
      %v8971 = vpop.f32.mrf.mxu0
      %v8972 = vadd.f32 0.0, %v8971
      %v8973 = vpop.f32.mrf.mxu0
      %8974 = vmatprep.mubr.f32.mxu0 0.0
      %8975 = vmatmul.mubr.f32.gmra.mxu0 %v8747
      %v8976 = vpop.f32.mrf.mxu0
      %v8977 = vadd.f32 0.0, %v8976
      %v8978 = vpop.f32.mrf.mxu0
      %8979 = vmatprep.mubr.f32.mxu0 0.0
      %8980 = vmatmul.mubr.f32.gmra.mxu0 %v8750
      %v8981 = vpop.f32.mrf.mxu0
      %v8982 = vadd.f32 0.0, %v8981
      %v8983 = vpop.f32.mrf.mxu0
      %8984 = vmatprep.mubr.f32.mxu0 0.0
      %8985 = vmatmul.mubr.f32.gmra.mxu0 %v8753
      %v8986 = vpop.f32.mrf.mxu0
      %v8987 = vadd.f32 0.0, %v8986
      %v8988 = vpop.f32.mrf.mxu0
      %8989 = vmatprep.mubr.f32.mxu0 0.0
      %8990 = vmatmul.mubr.f32.gmra.mxu0 %v8756
      %v8991 = vpop.f32.mrf.mxu0
      %v8992 = vadd.f32 0.0, %v8991
      %v8993 = vpop.f32.mrf.mxu0
      %8994 = vmatprep.mubr.f32.mxu0 0.0
      %8995 = vmatmul.mubr.f32.gmra.mxu0 %v8759
      %v8996 = vpop.f32.mrf.mxu0
      %v8997 = vadd.f32 0.0, %v8996
      %v8998 = vpop.f32.mrf.mxu0
      %8999 = vmatprep.mubr.f32.mxu0 0.0
      %9000 = vmatmul.mubr.f32.gmra.mxu0 %v8762
      %v9001 = vpop.f32.mrf.mxu0
      %v9002 = vadd.f32 0.0, %v9001
      %v9003 = vpop.f32.mrf.mxu0
      %9004 = vmatprep.mubr.f32.mxu0 0.0
      %9005 = vmatmul.mubr.f32.gmra.mxu0 %v8765
      %v9006 = vpop.f32.mrf.mxu0
      %v9007 = vadd.f32 0.0, %v9006
      %v9008 = vpop.f32.mrf.mxu0
      %9009 = vmatprep.mubr.f32.mxu0 0.0
      %9010 = vmatmul.mubr.f32.gmra.mxu0 %v8768
      %v9011 = vpop.f32.mrf.mxu0
      %v9012 = vadd.f32 0.0, %v9011
      %v9013 = vpop.f32.mrf.mxu0
      %9014 = vmatprep.mubr.f32.mxu0 0.0
      %9015 = vmatmul.mubr.f32.gmra.mxu0 %v8771
      %v9016 = vpop.f32.mrf.mxu0
      %v9017 = vadd.f32 0.0, %v9016
      %v9018 = vpop.f32.mrf.mxu0
      %9019 = vmatprep.mubr.f32.mxu0 0.0
      %9020 = vmatmul.mubr.f32.gmra.mxu0 %v8774
      %v9021 = vpop.f32.mrf.mxu0
      %v9022 = vadd.f32 0.0, %v9021
      %v9023 = vpop.f32.mrf.mxu0
      %9024 = vmatprep.mubr.f32.mxu0 0.0
      %9025 = vmatmul.mubr.f32.gmra.mxu0 %v8777
      %v9026 = vpop.f32.mrf.mxu0
      %v9027 = vadd.f32 0.0, %v9026
      %v9028 = vpop.f32.mrf.mxu0
      %9029 = vmatprep.mubr.f32.mxu0 0.0
      %9030 = vmatmul.mubr.f32.gmra.mxu0 %v8780
      %v9031 = vpop.f32.mrf.mxu0
      %v9032 = vadd.f32 0.0, %v9031
      %v9033 = vpop.f32.mrf.mxu0
      %9034 = vmatprep.mubr.f32.mxu0 0.0
      %9035 = vmatmul.mubr.f32.gmra.mxu0 %v8783
      %v9036 = vpop.f32.mrf.mxu0
      %v9037 = vadd.f32 0.0, %v9036
      %v9038 = vpop.f32.mrf.mxu0
      %9039 = vmatprep.mubr.f32.mxu0 0.0
      %9040 = vmatmul.mubr.f32.gmra.mxu0 %v8786
      %v9041 = vpop.f32.mrf.mxu0
      %v9042 = vadd.f32 0.0, %v9041
      %v9043 = vpop.f32.mrf.mxu0
      %9044 = vmatprep.mubr.f32.mxu0 0.0
      %9045 = vmatmul.mubr.f32.gmra.mxu0 %v8789
      %v9046 = vpop.f32.mrf.mxu0
      %v9047 = vadd.f32 0.0, %v9046
      %v9048 = vpop.f32.mrf.mxu0
      %9049 = vmatprep.mubr.f32.mxu0 0.0
      %9050 = vmatmul.mubr.f32.gmra.mxu0 %v8792
      %v9051 = vpop.f32.mrf.mxu0
      %v9052 = vadd.f32 0.0, %v9051
      %v9053 = vpop.f32.mrf.mxu0
      %9054 = vmatprep.mubr.f32.mxu0 0.0
      %9055 = vmatmul.mubr.f32.gmra.mxu0 %v8795
      %v9056 = vpop.f32.mrf.mxu0
      %v9057 = vadd.f32 0.0, %v9056
      %v9058 = vpop.f32.mrf.mxu0
      %9059 = vmatprep.mubr.f32.mxu0 0.0
      %9060 = vmatmul.mubr.f32.gmra.mxu0 %v8798
      %v9061 = vpop.f32.mrf.mxu0
      %v9062 = vadd.f32 0.0, %v9061
      %v9063 = vpop.f32.mrf.mxu0
      %9064 = vdwg.mxu0
      %v9065 = vadd.f32 %v8598, %v8867
      %v9066 = vadd.f32 %v8599, %v8872
      %v9067 = vadd.f32 %v8600, %v8877
      %v9068 = vadd.f32 %v8601, %v8882
      %v9069 = vadd.f32 %v8602, %v8887
      %v9070 = vadd.f32 %v8603, %v8892
      %v9071 = vadd.f32 %v8604, %v8897
      %v9072 = vadd.f32 %v8605, %v8902
      %v9073 = vadd.f32 %v8606, %v8907
      %v9074 = vadd.f32 %v8607, %v8912
      %v9075 = vadd.f32 %v8608, %v8917
      %v9076 = vadd.f32 %v8609, %v8922
      %v9077 = vadd.f32 %v8610, %v8927
      %v9078 = vadd.f32 %v8611, %v8932
      %v9079 = vadd.f32 %v8612, %v8937
      %v9080 = vadd.f32 %v8613, %v8942
      %v9081 = vadd.f32 %v8614, %v8947
      %v9082 = vadd.f32 %v8615, %v8952
      %v9083 = vadd.f32 %v8616, %v8957
      %v9084 = vadd.f32 %v8617, %v8962
      %v9085 = vadd.f32 %v8618, %v8967
      %v9086 = vadd.f32 %v8619, %v8972
      %v9087 = vadd.f32 %v8620, %v8977
      %v9088 = vadd.f32 %v8621, %v8982
      %v9089 = vadd.f32 %v8622, %v8987
      %v9090 = vadd.f32 %v8623, %v8992
      %v9091 = vadd.f32 %v8624, %v8997
      %v9092 = vadd.f32 %v8625, %v9002
      %v9093 = vadd.f32 %v8626, %v9007
      %v9094 = vadd.f32 %v8627, %v9012
      %v9095 = vadd.f32 %v8628, %v9017
      %v9096 = vadd.f32 %v8629, %v9022
      %v9097 = vadd.f32 %v8630, %v9027
      %v9098 = vadd.f32 %v8631, %v9032
      %v9099 = vadd.f32 %v8632, %v9037
      %v9100 = vadd.f32 %v8633, %v9042
      %v9101 = vadd.f32 %v8634, %v9047
      %v9102 = vadd.f32 %v8635, %v9052
      %v9103 = vadd.f32 %v8636, %v9057
      %v9104 = vadd.f32 %v8637, %v9062
      %v9105 = vld [vmem:[#allocation2 + $0x2a] sm:$0xff]
      %v9106 = vld [vmem:[#allocation2 + $0x32] sm:$0xff]
      %v9107 = vld [vmem:[#allocation2 + $0x3a] sm:$0xff]
      %v9108 = vld [vmem:[#allocation2 + $0x42] sm:$0xff]
      %v9109 = vld [vmem:[#allocation2 + $0x4a] sm:$0xff]
      %v9110 = vld [vmem:[#allocation2 + $0x52] sm:$0xff]
      %v9111 = vld [vmem:[#allocation2 + $0x5a] sm:$0xff]
      %v9112 = vld [vmem:[#allocation2 + $0x62] sm:$0xff]
      %v9113 = vld [vmem:[#allocation2 + $0x6a] sm:$0xff]
      %v9114 = vld [vmem:[#allocation2 + $0x72] sm:$0xff]
      %v9115 = vld [vmem:[#allocation2 + $0x7a] sm:$0xff]
      %v9116 = vld [vmem:[#allocation2 + $0x82] sm:$0xff]
      %v9117 = vld [vmem:[#allocation2 + $0x8a] sm:$0xff]
      %v9118 = vld [vmem:[#allocation2 + $0x92] sm:$0xff]
      %v9119 = vld [vmem:[#allocation2 + $0x9a] sm:$0xff]
      %v9120 = vld [vmem:[#allocation2 + $0xa2] sm:$0xff]
      %v9121 = vld [vmem:[#allocation2 + $0xaa] sm:$0xff]
      %v9122 = vld [vmem:[#allocation2 + $0xb2] sm:$0xff]
      %v9123 = vld [vmem:[#allocation2 + $0xba] sm:$0xff]
      %v9124 = vld [vmem:[#allocation2 + $0xc2] sm:$0xff]
      %v9125 = vld [vmem:[#allocation2 + $0xca] sm:$0xff]
      %v9126 = vld [vmem:[#allocation2 + $0xd2] sm:$0xff]
      %v9127 = vld [vmem:[#allocation2 + $0xda] sm:$0xff]
      %v9128 = vld [vmem:[#allocation2 + $0xe2] sm:$0xff]
      %v9129 = vld [vmem:[#allocation2 + $0xea] sm:$0xff]
      %v9130 = vld [vmem:[#allocation2 + $0xf2] sm:$0xff]
      %v9131 = vld [vmem:[#allocation2 + $0xfa] sm:$0xff]
      %v9132 = vld [vmem:[#allocation2 + $0x102] sm:$0xff]
      %v9133 = vld [vmem:[#allocation2 + $0x10a] sm:$0xff]
      %v9134 = vld [vmem:[#allocation2 + $0x112] sm:$0xff]
      %v9135 = vld [vmem:[#allocation2 + $0x11a] sm:$0xff]
      %v9136 = vld [vmem:[#allocation2 + $0x122] sm:$0xff]
      %v9137 = vld [vmem:[#allocation2 + $0x12a] sm:$0xff]
      %v9138 = vld [vmem:[#allocation2 + $0x132] sm:$0xff]
      %v9139 = vld [vmem:[#allocation2 + $0x13a] sm:$0xff]
      %v9140 = vld [vmem:[#allocation2 + $0x142] sm:$0xff]
      %v9141 = vld [vmem:[#allocation2 + $0x14a] sm:$0xff]
      %v9142 = vld [vmem:[#allocation2 + $0x152] sm:$0xff]
      %v9143 = vld [vmem:[#allocation2 + $0x15a] sm:$0xff]
      %v9144 = vld [vmem:[#allocation2 + $0x162] sm:$0xff]
      %s9145 = scalar_lea.vmem %s291, 64
      %v9146 = vld [vmem:[%s9145] sm:$0xff]
      %v9148 = vsel %vm5403, %v9105, 0
      %v9151 = vsel %vm5403, %v9106, 0
      %v9154 = vsel %vm5403, %v9107, 0
      %v9157 = vsel %vm5403, %v9108, 0
      %v9160 = vsel %vm5403, %v9109, 0
      %v9163 = vsel %vm5403, %v9110, 0
      %v9166 = vsel %vm5403, %v9111, 0
      %v9169 = vsel %vm5403, %v9112, 0
      %v9172 = vsel %vm5403, %v9113, 0
      %v9175 = vsel %vm5403, %v9114, 0
      %v9178 = vsel %vm5403, %v9115, 0
      %v9181 = vsel %vm5403, %v9116, 0
      %v9184 = vsel %vm5403, %v9117, 0
      %v9187 = vsel %vm5403, %v9118, 0
      %v9190 = vsel %vm5403, %v9119, 0
      %v9193 = vsel %vm5403, %v9120, 0
      %v9196 = vsel %vm5403, %v9121, 0
      %v9199 = vsel %vm5403, %v9122, 0
      %v9202 = vsel %vm5403, %v9123, 0
      %v9205 = vsel %vm5403, %v9124, 0
      %v9208 = vsel %vm5403, %v9125, 0
      %v9211 = vsel %vm5403, %v9126, 0
      %v9214 = vsel %vm5403, %v9127, 0
      %v9217 = vsel %vm5403, %v9128, 0
      %v9220 = vsel %vm5403, %v9129, 0
      %v9223 = vsel %vm5403, %v9130, 0
      %v9226 = vsel %vm5403, %v9131, 0
      %v9229 = vsel %vm5403, %v9132, 0
      %v9232 = vsel %vm5403, %v9133, 0
      %v9235 = vsel %vm5403, %v9134, 0
      %v9238 = vsel %vm5403, %v9135, 0
      %v9241 = vsel %vm5403, %v9136, 0
      %v9244 = vsel %vm5403, %v9137, 0
      %v9247 = vsel %vm5403, %v9138, 0
      %v9250 = vsel %vm5403, %v9139, 0
      %v9253 = vsel %vm5403, %v9140, 0
      %v9256 = vsel %vm5403, %v9141, 0
      %v9259 = vsel %vm5403, %v9142, 0
      %v9262 = vsel %vm5403, %v9143, 0
      %v9265 = vsel %vm5403, %v9144, 0
      %9267 = vmatprep.subr.mxu0 0.0
      %9268 = vmatpush1.msra.mxu0 0.0
      %9269 = vmatprep.subr.mxu0 0.0
      %9270 = vmatpush1.msra.mxu0 0.0
      %9271 = vmatprep.subr.mxu0 0.0
      %9272 = vmatpush1.msra.mxu0 0.0
      %9273 = vmatprep.subr.mxu0 0.0
      %9274 = vmatpush1.msra.mxu0 0.0
      %9275 = vmatprep.subr.mxu0 0.0
      %9276 = vmatpush1.msra.mxu0 0.0
      %9277 = vmatprep.subr.mxu0 0.0
      %9278 = vmatpush1.msra.mxu0 0.0
      %9279 = vmatprep.subr.mxu0 0.0
      %9280 = vmatpush1.msra.mxu0 0.0
      %9281 = vmatprep.subr.mxu0 0.0
      %9282 = vmatpush1.msra.mxu0 0.0
      %9283 = vmatprep.subr.mxu0 0.0
      %9284 = vmatpush1.msra.mxu0 0.0
      %9285 = vmatprep.subr.mxu0 0.0
      %9286 = vmatpush1.msra.mxu0 0.0
      %9287 = vmatprep.subr.mxu0 0.0
      %9288 = vmatpush1.msra.mxu0 0.0
      %9289 = vmatprep.subr.mxu0 0.0
      %9290 = vmatpush1.msra.mxu0 0.0
      %9291 = vmatprep.subr.mxu0 0.0
      %9292 = vmatpush1.msra.mxu0 0.0
      %9293 = vmatprep.subr.mxu0 0.0
      %9294 = vmatpush1.msra.mxu0 0.0
      %9295 = vmatprep.subr.mxu0 0.0
      %9296 = vmatpush1.msra.mxu0 0.0
      %9297 = vmatprep.subr.mxu0 0.0
      %9298 = vmatpush1.msra.mxu0 %v9146
      %9299 = vmatprep.subr.mxu0 0.0
      %9300 = vmatpush2.msra.mxu0 0.0
      %9301 = vmatprep.subr.mxu0 0.0
      %9302 = vmatpush2.msra.mxu0 0.0
      %9303 = vmatprep.subr.mxu0 0.0
      %9304 = vmatpush2.msra.mxu0 0.0
      %9305 = vmatprep.subr.mxu0 0.0
      %9306 = vmatpush2.msra.mxu0 0.0
      %9307 = vmatprep.subr.mxu0 0.0
      %9308 = vmatpush2.msra.mxu0 0.0
      %9309 = vmatprep.subr.mxu0 0.0
      %9310 = vmatpush2.msra.mxu0 0.0
      %9311 = vmatprep.subr.mxu0 0.0
      %9312 = vmatpush2.msra.mxu0 0.0
      %9313 = vmatprep.subr.mxu0 0.0
      %9314 = vmatpush2.msra.mxu0 0.0
      %9315 = vmatprep.subr.mxu0 0.0
      %9316 = vmatpush2.msra.mxu0 0.0
      %9317 = vmatprep.subr.mxu0 0.0
      %9318 = vmatpush2.msra.mxu0 0.0
      %9319 = vmatprep.subr.mxu0 0.0
      %9320 = vmatpush2.msra.mxu0 0.0
      %9321 = vmatprep.subr.mxu0 0.0
      %9322 = vmatpush2.msra.mxu0 0.0
      %9323 = vmatprep.subr.mxu0 0.0
      %9324 = vmatpush2.msra.mxu0 0.0
      %9325 = vmatprep.subr.mxu0 0.0
      %9326 = vmatpush2.msra.mxu0 0.0
      %9327 = vmatprep.subr.mxu0 0.0
      %9328 = vmatpush2.msra.mxu0 0.0
      %9329 = vmatprep.subr.mxu0 0.0
      %9330 = vmatpush2.msra.mxu0 0.0
      %9331 = vmatprep.mubr.f32.mxu0 0.0
      %9332 = vmatmul.mubr.f32.gmra.mxu0 %v9148
      %v9333 = vpop.f32.mrf.mxu0
      %v9334 = vadd.f32 0.0, %v9333
      %v9335 = vpop.f32.mrf.mxu0
      %9336 = vmatprep.mubr.f32.mxu0 0.0
      %9337 = vmatmul.mubr.f32.gmra.mxu0 %v9151
      %v9338 = vpop.f32.mrf.mxu0
      %v9339 = vadd.f32 0.0, %v9338
      %v9340 = vpop.f32.mrf.mxu0
      %9341 = vmatprep.mubr.f32.mxu0 0.0
      %9342 = vmatmul.mubr.f32.gmra.mxu0 %v9154
      %v9343 = vpop.f32.mrf.mxu0
      %v9344 = vadd.f32 0.0, %v9343
      %v9345 = vpop.f32.mrf.mxu0
      %9346 = vmatprep.mubr.f32.mxu0 0.0
      %9347 = vmatmul.mubr.f32.gmra.mxu0 %v9157
      %v9348 = vpop.f32.mrf.mxu0
      %v9349 = vadd.f32 0.0, %v9348
      %v9350 = vpop.f32.mrf.mxu0
      %9351 = vmatprep.mubr.f32.mxu0 0.0
      %9352 = vmatmul.mubr.f32.gmra.mxu0 %v9160
      %v9353 = vpop.f32.mrf.mxu0
      %v9354 = vadd.f32 0.0, %v9353
      %v9355 = vpop.f32.mrf.mxu0
      %9356 = vmatprep.mubr.f32.mxu0 0.0
      %9357 = vmatmul.mubr.f32.gmra.mxu0 %v9163
      %v9358 = vpop.f32.mrf.mxu0
      %v9359 = vadd.f32 0.0, %v9358
      %v9360 = vpop.f32.mrf.mxu0
      %9361 = vmatprep.mubr.f32.mxu0 0.0
      %9362 = vmatmul.mubr.f32.gmra.mxu0 %v9166
      %v9363 = vpop.f32.mrf.mxu0
      %v9364 = vadd.f32 0.0, %v9363
      %v9365 = vpop.f32.mrf.mxu0
      %9366 = vmatprep.mubr.f32.mxu0 0.0
      %9367 = vmatmul.mubr.f32.gmra.mxu0 %v9169
      %v9368 = vpop.f32.mrf.mxu0
      %v9369 = vadd.f32 0.0, %v9368
      %v9370 = vpop.f32.mrf.mxu0
      %9371 = vmatprep.mubr.f32.mxu0 0.0
      %9372 = vmatmul.mubr.f32.gmra.mxu0 %v9172
      %v9373 = vpop.f32.mrf.mxu0
      %v9374 = vadd.f32 0.0, %v9373
      %v9375 = vpop.f32.mrf.mxu0
      %9376 = vmatprep.mubr.f32.mxu0 0.0
      %9377 = vmatmul.mubr.f32.gmra.mxu0 %v9175
      %v9378 = vpop.f32.mrf.mxu0
      %v9379 = vadd.f32 0.0, %v9378
      %v9380 = vpop.f32.mrf.mxu0
      %9381 = vmatprep.mubr.f32.mxu0 0.0
      %9382 = vmatmul.mubr.f32.gmra.mxu0 %v9178
      %v9383 = vpop.f32.mrf.mxu0
      %v9384 = vadd.f32 0.0, %v9383
      %v9385 = vpop.f32.mrf.mxu0
      %9386 = vmatprep.mubr.f32.mxu0 0.0
      %9387 = vmatmul.mubr.f32.gmra.mxu0 %v9181
      %v9388 = vpop.f32.mrf.mxu0
      %v9389 = vadd.f32 0.0, %v9388
      %v9390 = vpop.f32.mrf.mxu0
      %9391 = vmatprep.mubr.f32.mxu0 0.0
      %9392 = vmatmul.mubr.f32.gmra.mxu0 %v9184
      %v9393 = vpop.f32.mrf.mxu0
      %v9394 = vadd.f32 0.0, %v9393
      %v9395 = vpop.f32.mrf.mxu0
      %9396 = vmatprep.mubr.f32.mxu0 0.0
      %9397 = vmatmul.mubr.f32.gmra.mxu0 %v9187
      %v9398 = vpop.f32.mrf.mxu0
      %v9399 = vadd.f32 0.0, %v9398
      %v9400 = vpop.f32.mrf.mxu0
      %9401 = vmatprep.mubr.f32.mxu0 0.0
      %9402 = vmatmul.mubr.f32.gmra.mxu0 %v9190
      %v9403 = vpop.f32.mrf.mxu0
      %v9404 = vadd.f32 0.0, %v9403
      %v9405 = vpop.f32.mrf.mxu0
      %9406 = vmatprep.mubr.f32.mxu0 0.0
      %9407 = vmatmul.mubr.f32.gmra.mxu0 %v9193
      %v9408 = vpop.f32.mrf.mxu0
      %v9409 = vadd.f32 0.0, %v9408
      %v9410 = vpop.f32.mrf.mxu0
      %9411 = vmatprep.mubr.f32.mxu0 0.0
      %9412 = vmatmul.mubr.f32.gmra.mxu0 %v9196
      %v9413 = vpop.f32.mrf.mxu0
      %v9414 = vadd.f32 0.0, %v9413
      %v9415 = vpop.f32.mrf.mxu0
      %9416 = vmatprep.mubr.f32.mxu0 0.0
      %9417 = vmatmul.mubr.f32.gmra.mxu0 %v9199
      %v9418 = vpop.f32.mrf.mxu0
      %v9419 = vadd.f32 0.0, %v9418
      %v9420 = vpop.f32.mrf.mxu0
      %9421 = vmatprep.mubr.f32.mxu0 0.0
      %9422 = vmatmul.mubr.f32.gmra.mxu0 %v9202
      %v9423 = vpop.f32.mrf.mxu0
      %v9424 = vadd.f32 0.0, %v9423
      %v9425 = vpop.f32.mrf.mxu0
      %9426 = vmatprep.mubr.f32.mxu0 0.0
      %9427 = vmatmul.mubr.f32.gmra.mxu0 %v9205
      %v9428 = vpop.f32.mrf.mxu0
      %v9429 = vadd.f32 0.0, %v9428
      %v9430 = vpop.f32.mrf.mxu0
      %9431 = vmatprep.mubr.f32.mxu0 0.0
      %9432 = vmatmul.mubr.f32.gmra.mxu0 %v9208
      %v9433 = vpop.f32.mrf.mxu0
      %v9434 = vadd.f32 0.0, %v9433
      %v9435 = vpop.f32.mrf.mxu0
      %9436 = vmatprep.mubr.f32.mxu0 0.0
      %9437 = vmatmul.mubr.f32.gmra.mxu0 %v9211
      %v9438 = vpop.f32.mrf.mxu0
      %v9439 = vadd.f32 0.0, %v9438
      %v9440 = vpop.f32.mrf.mxu0
      %9441 = vmatprep.mubr.f32.mxu0 0.0
      %9442 = vmatmul.mubr.f32.gmra.mxu0 %v9214
      %v9443 = vpop.f32.mrf.mxu0
      %v9444 = vadd.f32 0.0, %v9443
      %v9445 = vpop.f32.mrf.mxu0
      %9446 = vmatprep.mubr.f32.mxu0 0.0
      %9447 = vmatmul.mubr.f32.gmra.mxu0 %v9217
      %v9448 = vpop.f32.mrf.mxu0
      %v9449 = vadd.f32 0.0, %v9448
      %v9450 = vpop.f32.mrf.mxu0
      %9451 = vmatprep.mubr.f32.mxu0 0.0
      %9452 = vmatmul.mubr.f32.gmra.mxu0 %v9220
      %v9453 = vpop.f32.mrf.mxu0
      %v9454 = vadd.f32 0.0, %v9453
      %v9455 = vpop.f32.mrf.mxu0
      %9456 = vmatprep.mubr.f32.mxu0 0.0
      %9457 = vmatmul.mubr.f32.gmra.mxu0 %v9223
      %v9458 = vpop.f32.mrf.mxu0
      %v9459 = vadd.f32 0.0, %v9458
      %v9460 = vpop.f32.mrf.mxu0
      %9461 = vmatprep.mubr.f32.mxu0 0.0
      %9462 = vmatmul.mubr.f32.gmra.mxu0 %v9226
      %v9463 = vpop.f32.mrf.mxu0
      %v9464 = vadd.f32 0.0, %v9463
      %v9465 = vpop.f32.mrf.mxu0
      %9466 = vmatprep.mubr.f32.mxu0 0.0
      %9467 = vmatmul.mubr.f32.gmra.mxu0 %v9229
      %v9468 = vpop.f32.mrf.mxu0
      %v9469 = vadd.f32 0.0, %v9468
      %v9470 = vpop.f32.mrf.mxu0
      %9471 = vmatprep.mubr.f32.mxu0 0.0
      %9472 = vmatmul.mubr.f32.gmra.mxu0 %v9232
      %v9473 = vpop.f32.mrf.mxu0
      %v9474 = vadd.f32 0.0, %v9473
      %v9475 = vpop.f32.mrf.mxu0
      %9476 = vmatprep.mubr.f32.mxu0 0.0
      %9477 = vmatmul.mubr.f32.gmra.mxu0 %v9235
      %v9478 = vpop.f32.mrf.mxu0
      %v9479 = vadd.f32 0.0, %v9478
      %v9480 = vpop.f32.mrf.mxu0
      %9481 = vmatprep.mubr.f32.mxu0 0.0
      %9482 = vmatmul.mubr.f32.gmra.mxu0 %v9238
      %v9483 = vpop.f32.mrf.mxu0
      %v9484 = vadd.f32 0.0, %v9483
      %v9485 = vpop.f32.mrf.mxu0
      %9486 = vmatprep.mubr.f32.mxu0 0.0
      %9487 = vmatmul.mubr.f32.gmra.mxu0 %v9241
      %v9488 = vpop.f32.mrf.mxu0
      %v9489 = vadd.f32 0.0, %v9488
      %v9490 = vpop.f32.mrf.mxu0
      %9491 = vmatprep.mubr.f32.mxu0 0.0
      %9492 = vmatmul.mubr.f32.gmra.mxu0 %v9244
      %v9493 = vpop.f32.mrf.mxu0
      %v9494 = vadd.f32 0.0, %v9493
      %v9495 = vpop.f32.mrf.mxu0
      %9496 = vmatprep.mubr.f32.mxu0 0.0
      %9497 = vmatmul.mubr.f32.gmra.mxu0 %v9247
      %v9498 = vpop.f32.mrf.mxu0
      %v9499 = vadd.f32 0.0, %v9498
      %v9500 = vpop.f32.mrf.mxu0
      %9501 = vmatprep.mubr.f32.mxu0 0.0
      %9502 = vmatmul.mubr.f32.gmra.mxu0 %v9250
      %v9503 = vpop.f32.mrf.mxu0
      %v9504 = vadd.f32 0.0, %v9503
      %v9505 = vpop.f32.mrf.mxu0
      %9506 = vmatprep.mubr.f32.mxu0 0.0
      %9507 = vmatmul.mubr.f32.gmra.mxu0 %v9253
      %v9508 = vpop.f32.mrf.mxu0
      %v9509 = vadd.f32 0.0, %v9508
      %v9510 = vpop.f32.mrf.mxu0
      %9511 = vmatprep.mubr.f32.mxu0 0.0
      %9512 = vmatmul.mubr.f32.gmra.mxu0 %v9256
      %v9513 = vpop.f32.mrf.mxu0
      %v9514 = vadd.f32 0.0, %v9513
      %v9515 = vpop.f32.mrf.mxu0
      %9516 = vmatprep.mubr.f32.mxu0 0.0
      %9517 = vmatmul.mubr.f32.gmra.mxu0 %v9259
      %v9518 = vpop.f32.mrf.mxu0
      %v9519 = vadd.f32 0.0, %v9518
      %v9520 = vpop.f32.mrf.mxu0
      %9521 = vmatprep.mubr.f32.mxu0 0.0
      %9522 = vmatmul.mubr.f32.gmra.mxu0 %v9262
      %v9523 = vpop.f32.mrf.mxu0
      %v9524 = vadd.f32 0.0, %v9523
      %v9525 = vpop.f32.mrf.mxu0
      %9526 = vmatprep.mubr.f32.mxu0 0.0
      %9527 = vmatmul.mubr.f32.gmra.mxu0 %v9265
      %v9528 = vpop.f32.mrf.mxu0
      %v9529 = vadd.f32 0.0, %v9528
      %v9530 = vpop.f32.mrf.mxu0
      %9531 = vdwg.mxu0
      %v9532 = vadd.f32 %v9065, %v9334
      %v9533 = vadd.f32 %v9066, %v9339
      %v9534 = vadd.f32 %v9067, %v9344
      %v9535 = vadd.f32 %v9068, %v9349
      %v9536 = vadd.f32 %v9069, %v9354
      %v9537 = vadd.f32 %v9070, %v9359
      %v9538 = vadd.f32 %v9071, %v9364
      %v9539 = vadd.f32 %v9072, %v9369
      %v9540 = vadd.f32 %v9073, %v9374
      %v9541 = vadd.f32 %v9074, %v9379
      %v9542 = vadd.f32 %v9075, %v9384
      %v9543 = vadd.f32 %v9076, %v9389
      %v9544 = vadd.f32 %v9077, %v9394
      %v9545 = vadd.f32 %v9078, %v9399
      %v9546 = vadd.f32 %v9079, %v9404
      %v9547 = vadd.f32 %v9080, %v9409
      %v9548 = vadd.f32 %v9081, %v9414
      %v9549 = vadd.f32 %v9082, %v9419
      %v9550 = vadd.f32 %v9083, %v9424
      %v9551 = vadd.f32 %v9084, %v9429
      %v9552 = vadd.f32 %v9085, %v9434
      %v9553 = vadd.f32 %v9086, %v9439
      %v9554 = vadd.f32 %v9087, %v9444
      %v9555 = vadd.f32 %v9088, %v9449
      %v9556 = vadd.f32 %v9089, %v9454
      %v9557 = vadd.f32 %v9090, %v9459
      %v9558 = vadd.f32 %v9091, %v9464
      %v9559 = vadd.f32 %v9092, %v9469
      %v9560 = vadd.f32 %v9093, %v9474
      %v9561 = vadd.f32 %v9094, %v9479
      %v9562 = vadd.f32 %v9095, %v9484
      %v9563 = vadd.f32 %v9096, %v9489
      %v9564 = vadd.f32 %v9097, %v9494
      %v9565 = vadd.f32 %v9098, %v9499
      %v9566 = vadd.f32 %v9099, %v9504
      %v9567 = vadd.f32 %v9100, %v9509
      %v9568 = vadd.f32 %v9101, %v9514
      %v9569 = vadd.f32 %v9102, %v9519
      %v9570 = vadd.f32 %v9103, %v9524
      %v9571 = vadd.f32 %v9104, %v9529
      %v9572 = vld [vmem:[%s294] sm:$0x1]
      %v9574 = vlaneseq
      %v9575 = vshrl.u32 %v9574, 7
      %v9576 = vsub.s32 0, %v9575
      %v9577 = vrot.slane %v9572, %v9576
      %v9579 = vadd.f32 %v9532, %v9577
      %v9580 = vadd.f32 %v9533, %v9577
      %v9581 = vadd.f32 %v9534, %v9577
      %v9582 = vadd.f32 %v9535, %v9577
      %v9583 = vadd.f32 %v9536, %v9577
      %v9584 = vadd.f32 %v9537, %v9577
      %v9585 = vadd.f32 %v9538, %v9577
      %v9586 = vadd.f32 %v9539, %v9577
      %v9587 = vadd.f32 %v9540, %v9577
      %v9588 = vadd.f32 %v9541, %v9577
      %v9589 = vadd.f32 %v9542, %v9577
      %v9590 = vadd.f32 %v9543, %v9577
      %v9591 = vadd.f32 %v9544, %v9577
      %v9592 = vadd.f32 %v9545, %v9577
      %v9593 = vadd.f32 %v9546, %v9577
      %v9594 = vadd.f32 %v9547, %v9577
      %v9595 = vadd.f32 %v9548, %v9577
      %v9596 = vadd.f32 %v9549, %v9577
      %v9597 = vadd.f32 %v9550, %v9577
      %v9598 = vadd.f32 %v9551, %v9577
      %v9599 = vadd.f32 %v9552, %v9577
      %v9600 = vadd.f32 %v9553, %v9577
      %v9601 = vadd.f32 %v9554, %v9577
      %v9602 = vadd.f32 %v9555, %v9577
      %v9603 = vadd.f32 %v9556, %v9577
      %v9604 = vadd.f32 %v9557, %v9577
      %v9605 = vadd.f32 %v9558, %v9577
      %v9606 = vadd.f32 %v9559, %v9577
      %v9607 = vadd.f32 %v9560, %v9577
      %v9608 = vadd.f32 %v9561, %v9577
      %v9609 = vadd.f32 %v9562, %v9577
      %v9610 = vadd.f32 %v9563, %v9577
      %v9611 = vadd.f32 %v9564, %v9577
      %v9612 = vadd.f32 %v9565, %v9577
      %v9613 = vadd.f32 %v9566, %v9577
      %v9614 = vadd.f32 %v9567, %v9577
      %v9615 = vadd.f32 %v9568, %v9577
      %v9616 = vadd.f32 %v9569, %v9577
      %v9617 = vadd.f32 %v9570, %v9577
      %v9618 = vadd.f32 %v9571, %v9577
      %v9619 = vmax.f32 %v9579, 0.0
      %v9620 = vmax.f32 %v9580, 0.0
      %v9621 = vmax.f32 %v9581, 0.0
      %v9622 = vmax.f32 %v9582, 0.0
      %v9623 = vmax.f32 %v9583, 0.0
      %v9624 = vmax.f32 %v9584, 0.0
      %v9625 = vmax.f32 %v9585, 0.0
      %v9626 = vmax.f32 %v9586, 0.0
      %v9627 = vmax.f32 %v9587, 0.0
      %v9628 = vmax.f32 %v9588, 0.0
      %v9629 = vmax.f32 %v9589, 0.0
      %v9630 = vmax.f32 %v9590, 0.0
      %v9631 = vmax.f32 %v9591, 0.0
      %v9632 = vmax.f32 %v9592, 0.0
      %v9633 = vmax.f32 %v9593, 0.0
      %v9634 = vmax.f32 %v9594, 0.0
      %v9635 = vmax.f32 %v9595, 0.0
      %v9636 = vmax.f32 %v9596, 0.0
      %v9637 = vmax.f32 %v9597, 0.0
      %v9638 = vmax.f32 %v9598, 0.0
      %v9639 = vmax.f32 %v9599, 0.0
      %v9640 = vmax.f32 %v9600, 0.0
      %v9641 = vmax.f32 %v9601, 0.0
      %v9642 = vmax.f32 %v9602, 0.0
      %v9643 = vmax.f32 %v9603, 0.0
      %v9644 = vmax.f32 %v9604, 0.0
      %v9645 = vmax.f32 %v9605, 0.0
      %v9646 = vmax.f32 %v9606, 0.0
      %v9647 = vmax.f32 %v9607, 0.0
      %v9648 = vmax.f32 %v9608, 0.0
      %v9649 = vmax.f32 %v9609, 0.0
      %v9650 = vmax.f32 %v9610, 0.0
      %v9651 = vmax.f32 %v9611, 0.0
      %v9652 = vmax.f32 %v9612, 0.0
      %v9653 = vmax.f32 %v9613, 0.0
      %v9654 = vmax.f32 %v9614, 0.0
      %v9655 = vmax.f32 %v9615, 0.0
      %v9656 = vmax.f32 %v9616, 0.0
      %v9657 = vmax.f32 %v9617, 0.0
      %v9658 = vmax.f32 %v9618, 0.0
      %9659 = vst [vmem:[%s302] sm:$0xff] %v9619
      %9660 = vst [vmem:[%s302 + $0x8] sm:$0xff] %v9620
      %9661 = vst [vmem:[%s302 + $0x10] sm:$0xff] %v9621
      %9662 = vst [vmem:[%s302 + $0x18] sm:$0xff] %v9622
      %9663 = vst [vmem:[%s302 + $0x20] sm:$0xff] %v9623
      %9664 = vst [vmem:[%s302 + $0x28] sm:$0xff] %v9624
      %9665 = vst [vmem:[%s302 + $0x30] sm:$0xff] %v9625
      %9666 = vst [vmem:[%s302 + $0x38] sm:$0xff] %v9626
      %9667 = vst [vmem:[%s302 + $0x40] sm:$0xff] %v9627
      %9668 = vst [vmem:[%s302 + $0x48] sm:$0xff] %v9628
      %9669 = vst [vmem:[%s302 + $0x50] sm:$0xff] %v9629
      %9670 = vst [vmem:[%s302 + $0x58] sm:$0xff] %v9630
      %9671 = vst [vmem:[%s302 + $0x60] sm:$0xff] %v9631
      %9672 = vst [vmem:[%s302 + $0x68] sm:$0xff] %v9632
      %9673 = vst [vmem:[%s302 + $0x70] sm:$0xff] %v9633
      %9674 = vst [vmem:[%s302 + $0x78] sm:$0xff] %v9634
      %9675 = vst [vmem:[%s302 + $0x80] sm:$0xff] %v9635
      %9676 = vst [vmem:[%s302 + $0x88] sm:$0xff] %v9636
      %9677 = vst [vmem:[%s302 + $0x90] sm:$0xff] %v9637
      %9678 = vst [vmem:[%s302 + $0x98] sm:$0xff] %v9638
      %9679 = vst [vmem:[%s302 + $0xa0] sm:$0xff] %v9639
      %9680 = vst [vmem:[%s302 + $0xa8] sm:$0xff] %v9640
      %9681 = vst [vmem:[%s302 + $0xb0] sm:$0xff] %v9641
      %9682 = vst [vmem:[%s302 + $0xb8] sm:$0xff] %v9642
      %9683 = vst [vmem:[%s302 + $0xc0] sm:$0xff] %v9643
      %9684 = vst [vmem:[%s302 + $0xc8] sm:$0xff] %v9644
      %9685 = vst [vmem:[%s302 + $0xd0] sm:$0xff] %v9645
      %9686 = vst [vmem:[%s302 + $0xd8] sm:$0xff] %v9646
      %9687 = vst [vmem:[%s302 + $0xe0] sm:$0xff] %v9647
      %9688 = vst [vmem:[%s302 + $0xe8] sm:$0xff] %v9648
      %9689 = vst [vmem:[%s302 + $0xf0] sm:$0xff] %v9649
      %9690 = vst [vmem:[%s302 + $0xf8] sm:$0xff] %v9650
      %9691 = vst [vmem:[%s302 + $0x100] sm:$0xff] %v9651
      %9692 = vst [vmem:[%s302 + $0x108] sm:$0xff] %v9652
      %9693 = vst [vmem:[%s302 + $0x110] sm:$0xff] %v9653
      %9694 = vst [vmem:[%s302 + $0x118] sm:$0xff] %v9654
      %9695 = vst [vmem:[%s302 + $0x120] sm:$0xff] %v9655
      %9696 = vst [vmem:[%s302 + $0x128] sm:$0xff] %v9656
      %9697 = vst [vmem:[%s302 + $0x130] sm:$0xff] %v9657
      %9698 = vst [vmem:[%s302 + $0x138] sm:$0xff] %v9658
      %p9699 = scmp.lt.s32.totalorder %s21, 1
      %s9700 = scalar_select %p9699, %s21, 1
      %p9701 = scmp.lt.s32.totalorder %s22, 0
      %s9702 = scalar_select %p9701, %s22, 0
      %s9703 = smul.addr %s9700, 40
      %s9704 = sadd.s32 %s9702, %s9703
      %s9705 = smul.addr %s9704, 8
      %s9706 = scalar_lea.vmem %s6, %s9705
      // Predicated region
      $region45: #{double_conv.1} parent=43 // pred_check
        %p9707 = pneg %p190
      $region46: #{double_conv.1} parent=43 // pred_check_branch
        %9709 = sbr.rel (%p9707) target = $region48
      $region47: #{double_conv.1} parent=43 // pred_region
        _
      $region48: #{double_conv.1} parent=43 // pred_fallthru
        _
    $region44: #{double_conv.1} parent=5 // pred_fallthru
      _
    %p9710 = scmp.le.s32.totalorder 2, %s12
    // Predicated region
    $region49: #{double_conv.1} parent=5 // pred_check
      %p9711 = pneg %p9710
    $region50: #{double_conv.1} parent=5 // pred_check_branch
      %9713 = sbr.rel (%p9711) target = $region52
    $region51: #{double_conv.1} parent=5 // pred_region
      %s9714 = ssub.s32 %s12, 2
      // Predicated region
      $region53: #{double_conv.1} parent=51 // pred_check
        %p9715 = pneg %p196
      $region54: #{double_conv.1} parent=51 // pred_check_branch
        %9717 = sbr.rel (%p9715) target = $region56
      $region55: #{double_conv.1} parent=51 // pred_region
        %p9718 = scmp.lt.s32.totalorder %s23, 1
        %s9719 = scalar_select %p9718, %s23, 1
        %p9720 = scmp.lt.s32.totalorder %s24, 0
        %s9721 = scalar_select %p9720, %s24, 0
        %s9722 = smul.addr %s9719, 40
        %s9723 = sadd.s32 %s9721, %s9722
        %s9724 = smul.addr %s9723, 8
        %s9725 = scalar_lea.vmem %s6, %s9724
      $region56: #{double_conv.1} parent=51 // pred_fallthru
        _
    $region52: #{double_conv.1} parent=5 // pred_fallthru
      _
  $region6: #{double_conv.1} parent=0 // loop_footer
    %s16 = sadd.s32 1, %s12
  $region7: #{double_conv.1} parent=0 // loop_footer_branch
    %11 = sbr.rel target = $region3
  $region8: #{double_conv.1} parent=0 // loop_exit
    _

</llo_original>
